<compile_context>
chip_gen: v7x
topology: tpu7x:2x2x1
jax: 0.10.0
libtpu: 0.0.40
codegen_flags: <defaults>
</compile_context>

<pallas_src>
import functools

import jax
import jax.numpy as jnp
from jax.experimental import pallas as pl
from jax.experimental.pallas import tpu as pltpu

_EPS = 1e-5                       # nn.BatchNorm2d default eps
_VMEM_LIMIT = 48 * 1024 * 1024    # fits v7x's 64 MiB/TC; generous for v5e/v6e
_NEG = -3.0e38                    # "-inf" pad for max pooling (bf16-safe)


def _row_tile(h):
    return 8 if h % 8 == 0 else h


# ---------------------------------------------------------------------------
# In-kernel helpers (all shapes static)
# ---------------------------------------------------------------------------
def _bn_scale_shift(st, g, b, count):
    """Training-mode BN -> fused per-channel scale/shift rows (1, C)."""
    inv = 1.0 / count
    mean = st[0:1, :] * inv
    var = jnp.maximum(st[1:2, :] * inv - mean * mean, 0.0)   # clamp cancellation
    s = g * jax.lax.rsqrt(var + _EPS)
    t = b - mean * s
    return s, t


def _bn_relu_apply(y, s, t):
    """y: (H, W, C), s/t: (1, C) -> f32 BN + ReLU result."""
    c = y.shape[-1]
    out = y.astype(jnp.float32) * s.reshape(1, 1, c) + t.reshape(1, 1, c)
    return jnp.maximum(out, 0.0)


def _pad_hw(a):
    """Zero-pad (H, W, C) -> (H+2, W+2, C) entirely in VMEM/registers."""
    h, w, c = a.shape
    zc = jnp.zeros((h, 1, c), a.dtype)
    aw = jnp.concatenate([zc, a, zc], axis=1)
    zr = jnp.zeros((1, w + 2, c), a.dtype)
    return jnp.concatenate([zr, aw, zr], axis=0)


def _conv3x3_store(ap, w, y_ref, st_ref, *, H, W, cin, cout, row_tile):
    """3x3/s1/p1 conv via im2col along kx (3 MXU matmuls per ky), row-tiled so
    the f32 accumulator stays bounded; stores bf16 rows + per-image (2,C) stats."""
    ssum = None
    ssq = None
    for r0 in range(0, H, row_tile):
        th = min(row_tile, H - r0)
        acc = None
        for ky in range(3):
            rows = ap[r0 + ky:r0 + ky + th]                       # (th, W+2, cin)
            op = jnp.concatenate(
                [rows[:, 0:W], rows[:, 1:W + 1], rows[:, 2:W + 2]],
                axis=-1).reshape(th * W, 3 * cin)
            part = jnp.dot(op, w[ky].reshape(3 * cin, cout),
                           preferred_element_type=jnp.float32)
            acc = part if acc is None else acc + part             # seed w/ 1st tap
        y_ref[r0:r0 + th, :, :] = acc.reshape(th, W, cout).astype(y_ref.dtype)
        s = jnp.sum(acc, axis=0, keepdims=True)
        q = jnp.sum(acc * acc, axis=0, keepdims=True)
        ssum = s if ssum is None else ssum + s
        ssq = q if ssq is None else ssq + q
    st_ref[...] = jnp.concatenate([ssum, ssq], axis=0)


# ---------------------------------------------------------------------------
# Kernels
# ---------------------------------------------------------------------------
def _stem_kernel(x_ref, wx_ref, wp_ref,
                 yred_ref, ytail_ref, stred_ref, sttail_ref,
                 *, H, W, cin, cred, c1, c4):
    """Fused 1x1 convs [b2red|b3red|b1] on x  +  (3x3 maxpool -> pool_proj 1x1).

    Emits raw bf16 slabs + per-image f32 sum/sumsq stats (no accumulator, so
    the batch grid axis is fully parallel)."""
    x = x_ref[...]                                                # (H, W, cin) bf16
    xf = x.reshape(H * W, cin)

    acc_x = jnp.dot(xf, wx_ref[...], preferred_element_type=jnp.float32)

    acc_red = acc_x[:, :cred]
    yred_ref[...] = acc_red.reshape(H, W, cred).astype(yred_ref.dtype)
    stred_ref[...] = jnp.concatenate(
        [jnp.sum(acc_red, axis=0, keepdims=True),
         jnp.sum(acc_red * acc_red, axis=0, keepdims=True)], axis=0)

    acc_b1 = acc_x[:, cred:]
    ytail_ref[:, :, :c1] = acc_b1.reshape(H, W, c1).astype(ytail_ref.dtype)
    sttail_ref[:, :c1] = jnp.concatenate(
        [jnp.sum(acc_b1, axis=0, keepdims=True),
         jnp.sum(acc_b1 * acc_b1, axis=0, keepdims=True)], axis=0)

    # 3x3 / stride-1 / pad-1 max pool, separable, never leaves VMEM.
    neg_c = jnp.full((H, 1, cin), _NEG, x.dtype)
    xw = jnp.concatenate([neg_c, x, neg_c], axis=1)               # (H, W+2, cin)
    pw = jnp.maximum(jnp.maximum(xw[:, 0:W], xw[:, 1:W + 1]), xw[:, 2:W + 2])
    neg_r = jnp.full((1, W, cin), _NEG, x.dtype)
    ph = jnp.concatenate([neg_r, pw, neg_r], axis=0)              # (H+2, W, cin)
    pooled = jnp.maximum(jnp.maximum(ph[0:H], ph[1:H + 1]), ph[2:H + 2])

    acc_b4 = jnp.dot(pooled.reshape(H * W, cin), wp_ref[...],
                     preferred_element_type=jnp.float32)
    ytail_ref[:, :, c1:] = acc_b4.reshape(H, W, c4).astype(ytail_ref.dtype)
    sttail_ref[:, c1:] = jnp.concatenate(
        [jnp.sum(acc_b4, axis=0, keepdims=True),
         jnp.sum(acc_b4 * acc_b4, axis=0, keepdims=True)], axis=0)


def _mid_kernel(yred_ref, st_ref, g_ref, b_ref, w2_ref, w3_ref,
                y2_ref, st2_ref, y3_ref, st3_ref,
                *, H, W, c2in, c3in, c2out, c3out, count, row_tile):
    """Producer BN+ReLU on the reduce channels fused directly into branch2's
    3x3 and branch3's first 3x3 (channel split done in-register)."""
    s, t = _bn_scale_shift(st_ref[...], g_ref[...], b_ref[...], count)
    a = _bn_relu_apply(yred_ref[...], s, t).astype(jnp.bfloat16)
    _conv3x3_store(_pad_hw(a[:, :, :c2in]), w2_ref[...], y2_ref, st2_ref,
                   H=H, W=W, cin=c2in, cout=c2out, row_tile=row_tile)
    _conv3x3_store(_pad_hw(a[:, :, c2in:]), w3_ref[...], y3_ref, st3_ref,
                   H=H, W=W, cin=c3in, cout=c3out, row_tile=row_tile)


def _conv_bn_kernel(y_ref, st_ref, g_ref, b_ref, w_ref, o_ref, ost_ref,
                    *, H, W, cin, cout, count, row_tile):
    """Producer BN+ReLU fused into a 3x3 conv (branch3's second 3x3)."""
    s, t = _bn_scale_shift(st_ref[...], g_ref[...], b_ref[...], count)
    a = _bn_relu_apply(y_ref[...], s, t).astype(jnp.bfloat16)
    _conv3x3_store(_pad_hw(a), w_ref[...], o_ref, ost_ref,
                   H=H, W=W, cin=cin, cout=cout, row_tile=row_tile)


def _final_kernel(ytail_ref, y2_ref, y3_ref,
                  sttail_ref, st2_ref, st3_ref,
                  gtail_ref, btail_ref, g2_ref, b2_ref, g3_ref, b3_ref,
                  o_ref, *, c1, count):
    """Fused BN/ReLU of branch1/2/3/4 + channel concat via direct disjoint
    channel-slice stores (no in-register lane concatenation)."""
    c2 = y2_ref.shape[-1]
    c3 = y3_ref.shape[-1]

    s, t = _bn_scale_shift(sttail_ref[:, :c1], gtail_ref[:, :c1],
                           btail_ref[:, :c1], count)
    o_ref[:, :, 0:c1] = _bn_relu_apply(ytail_ref[:, :, :c1], s, t).astype(o_ref.dtype)

    s, t = _bn_scale_shift(st2_ref[...], g2_ref[...], b2_ref[...], count)
    o_ref[:, :, c1:c1 + c2] = _bn_relu_apply(y2_ref[...], s, t).astype(o_ref.dtype)

    s, t = _bn_scale_shift(st3_ref[...], g3_ref[...], b3_ref[...], count)
    o_ref[:, :, c1 + c2:c1 + c2 + c3] = _bn_relu_apply(y3_ref[...], s, t).astype(o_ref.dtype)

    s, t = _bn_scale_shift(sttail_ref[:, c1:], gtail_ref[:, c1:],
                           btail_ref[:, c1:], count)
    o_ref[:, :, c1 + c2 + c3:] = _bn_relu_apply(ytail_ref[:, :, c1:], s, t).astype(o_ref.dtype)


# ---------------------------------------------------------------------------
# pallas_call wrappers
# ---------------------------------------------------------------------------
def _stem_forward(x, w_x, w_p, cred, c1, c4):
    N, H, W, cin = x.shape
    ctail = c1 + c4
    kernel = functools.partial(_stem_kernel, H=H, W=W, cin=cin,
                               cred=cred, c1=c1, c4=c4)
    return pl.pallas_call(
        kernel,
        grid=(N,),
        in_specs=[
            pl.BlockSpec((None, H, W, cin), lambda n: (n, 0, 0, 0)),
            pl.BlockSpec((cin, cred + c1), lambda n: (0, 0)),
            pl.BlockSpec((cin, c4), lambda n: (0, 0)),
        ],
        out_specs=[
            pl.BlockSpec((None, H, W, cred), lambda n: (n, 0, 0, 0)),
            pl.BlockSpec((None, H, W, ctail), lambda n: (n, 0, 0, 0)),
            pl.BlockSpec((None, 2, cred), lambda n: (n, 0, 0)),
            pl.BlockSpec((None, 2, ctail), lambda n: (n, 0, 0)),
        ],
        out_shape=[
            jax.ShapeDtypeStruct((N, H, W, cred), jnp.bfloat16),
            jax.ShapeDtypeStruct((N, H, W, ctail), jnp.bfloat16),
            jax.ShapeDtypeStruct((N, 2, cred), jnp.float32),
            jax.ShapeDtypeStruct((N, 2, ctail), jnp.float32),
        ],
        compiler_params=pltpu.CompilerParams(
            dimension_semantics=("parallel",),
            vmem_limit_bytes=_VMEM_LIMIT),
    )(x, w_x, w_p)


def _mid_forward(y_red, st_red, g_red, b_red, w2, w3, count):
    N, H, W, cred = y_red.shape
    c2in, c2out = w2.shape[2], w2.shape[3]
    c3in, c3out = w3.shape[2], w3.shape[3]
    kernel = functools.partial(_mid_kernel, H=H, W=W, c2in=c2in, c3in=c3in,
                               c2out=c2out, c3out=c3out, count=count,
                               row_tile=_row_tile(H))
    return pl.pallas_call(
        kernel,
        grid=(N,),
        in_specs=[
            pl.BlockSpec((None, H, W, cred), lambda n: (n, 0, 0, 0)),
            pl.BlockSpec((2, cred), lambda n: (0, 0)),
            pl.BlockSpec((1, cred), lambda n: (0, 0)),
            pl.BlockSpec((1, cred), lambda n: (0, 0)),
            pl.BlockSpec((3, 3, c2in, c2out), lambda n: (0, 0, 0, 0)),
            pl.BlockSpec((3, 3, c3in, c3out), lambda n: (0, 0, 0, 0)),
        ],
        out_specs=[
            pl.BlockSpec((None, H, W, c2out), lambda n: (n, 0, 0, 0)),
            pl.BlockSpec((None, 2, c2out), lambda n: (n, 0, 0)),
            pl.BlockSpec((None, H, W, c3out), lambda n: (n, 0, 0, 0)),
            pl.BlockSpec((None, 2, c3out), lambda n: (n, 0, 0)),
        ],
        out_shape=[
            jax.ShapeDtypeStruct((N, H, W, c2out), jnp.bfloat16),
            jax.ShapeDtypeStruct((N, 2, c2out), jnp.float32),
            jax.ShapeDtypeStruct((N, H, W, c3out), jnp.bfloat16),
            jax.ShapeDtypeStruct((N, 2, c3out), jnp.float32),
        ],
        compiler_params=pltpu.CompilerParams(
            dimension_semantics=("parallel",),
            vmem_limit_bytes=_VMEM_LIMIT),
    )(y_red, st_red, g_red.reshape(1, cred), b_red.reshape(1, cred), w2, w3)


def _conv_bn_forward(y_in, st_in, gamma, beta, w, count):
    N, H, W, cin = y_in.shape
    cout = w.shape[-1]
    kernel = functools.partial(_conv_bn_kernel, H=H, W=W, cin=cin, cout=cout,
                               count=count, row_tile=_row_tile(H))
    return pl.pallas_call(
        kernel,
        grid=(N,),
        in_specs=[
            pl.BlockSpec((None, H, W, cin), lambda n: (n, 0, 0, 0)),
            pl.BlockSpec((2, cin), lambda n: (0, 0)),
            pl.BlockSpec((1, cin), lambda n: (0, 0)),
            pl.BlockSpec((1, cin), lambda n: (0, 0)),
            pl.BlockSpec((3, 3, cin, cout), lambda n: (0, 0, 0, 0)),
        ],
        out_specs=[
            pl.BlockSpec((None, H, W, cout), lambda n: (n, 0, 0, 0)),
            pl.BlockSpec((None, 2, cout), lambda n: (n, 0, 0)),
        ],
        out_shape=[
            jax.ShapeDtypeStruct((N, H, W, cout), jnp.bfloat16),
            jax.ShapeDtypeStruct((N, 2, cout), jnp.float32),
        ],
        compiler_params=pltpu.CompilerParams(
            dimension_semantics=("parallel",),
            vmem_limit_bytes=_VMEM_LIMIT),
    )(y_in, st_in, gamma.reshape(1, cin), beta.reshape(1, cin), w)


def _final_forward(y_tail, y2, y3, st_tail, st2, st3,
                   g_tail, b_tail, g2, b2, g3, b3, c1, count):
    N, H, W, ctail = y_tail.shape
    c2 = y2.shape[-1]
    c3 = y3.shape[-1]
    ctot = c1 + c2 + c3 + (ctail - c1)
    rt = _row_tile(H)
    nr = H // rt
    kernel = functools.partial(_final_kernel, c1=c1, count=count)
    return pl.pallas_call(
        kernel,
        grid=(N, nr),
        in_specs=[
            pl.BlockSpec((None, rt, W, ctail), lambda n, r: (n, r, 0, 0)),
            pl.BlockSpec((None, rt, W, c2), lambda n, r: (n, r, 0, 0)),
            pl.BlockSpec((None, rt, W, c3), lambda n, r: (n, r, 0, 0)),
            pl.BlockSpec((2, ctail), lambda n, r: (0, 0)),
            pl.BlockSpec((2, c2), lambda n, r: (0, 0)),
            pl.BlockSpec((2, c3), lambda n, r: (0, 0)),
            pl.BlockSpec((1, ctail), lambda n, r: (0, 0)),
            pl.BlockSpec((1, ctail), lambda n, r: (0, 0)),
            pl.BlockSpec((1, c2), lambda n, r: (0, 0)),
            pl.BlockSpec((1, c2), lambda n, r: (0, 0)),
            pl.BlockSpec((1, c3), lambda n, r: (0, 0)),
            pl.BlockSpec((1, c3), lambda n, r: (0, 0)),
        ],
        out_specs=pl.BlockSpec((None, rt, W, ctot), lambda n, r: (n, r, 0, 0)),
        out_shape=jax.ShapeDtypeStruct((N, H, W, ctot), jnp.float32),
        compiler_params=pltpu.CompilerParams(
            dimension_semantics=("parallel", "parallel"),
            vmem_limit_bytes=_VMEM_LIMIT),
    )(y_tail, y2, y3, st_tail, st2, st3,
      g_tail.reshape(1, ctail), b_tail.reshape(1, ctail),
      g2.reshape(1, c2), b2.reshape(1, c2),
      g3.reshape(1, c3), b3.reshape(1, c3))


# ---------------------------------------------------------------------------
# Parameter init (deterministic, synthetic) + forward
# ---------------------------------------------------------------------------
def _init_basic_conv(key, cin, cout, k):
    # Conv bias is omitted: under training-mode BatchNorm the per-channel bias
    # is exactly cancelled by the batch-mean subtraction (forward unchanged).
    kw, kg, kt = jax.random.split(key, 3)
    if k == 1:
        w = 0.1 * jax.random.normal(kw, (cin, cout), jnp.float32)
    else:
        w = 0.1 * jax.random.normal(kw, (k, k, cin, cout), jnp.float32)
    gamma = 1.0 + 0.1 * jax.random.normal(kg, (cout,), jnp.float32)
    beta = 0.1 * jax.random.normal(kt, (cout,), jnp.float32)
    return {"w": w, "gamma": gamma, "beta": beta}


def init_inception_v3a(key, in_channels, ch1x1, ch3x3red, ch3x3,
                       ch3x3redX2, ch3x3X2, pool_proj):
    ks = jax.random.split(key, 7)
    return {
        "b1":   _init_basic_conv(ks[0], in_channels, ch1x1, 1),
        "b2_1": _init_basic_conv(ks[1], in_channels, ch3x3red, 1),
        "b2_2": _init_basic_conv(ks[2], ch3x3red, ch3x3, 3),
        "b3_1": _init_basic_conv(ks[3], in_channels, ch3x3redX2, 1),
        "b3_2": _init_basic_conv(ks[4], ch3x3redX2, ch3x3X2, 3),
        "b3_3": _init_basic_conv(ks[5], ch3x3X2, ch3x3X2, 3),
        "b4":   _init_basic_conv(ks[6], in_channels, pool_proj, 1),
    }


def inception_v3a_forward(params, x_nchw):
    # NCHW -> NHWC; the bf16 cast fuses with the transpose in XLA (one HBM pass).
    x = jnp.transpose(x_nchw, (0, 2, 3, 1)).astype(jnp.bfloat16)
    N, H, W, _ = x.shape
    count = float(N * H * W)                     # BN reduces over (N, H, W)

    b1p, b21p, b22p = params["b1"], params["b2_1"], params["b2_2"]
    b31p, b32p, b33p = params["b3_1"], params["b3_2"], params["b3_3"]
    b4p = params["b4"]
    ch1x1 = b1p["w"].shape[1]
    ch3x3red = b21p["w"].shape[1]
    ch3x3redX2 = b31p["w"].shape[1]
    cred = ch3x3red + ch3x3redX2
    pool_proj = b4p["w"].shape[1]

    # --- fused stem: [b2red|b3red|b1] 1x1 convs on x + (maxpool -> pool_proj) ---
    w_x = jnp.concatenate([b21p["w"], b31p["w"], b1p["w"]],
                          axis=1).astype(jnp.bfloat16)
    w_p = b4p["w"].astype(jnp.bfloat16)
    y_red, y_tail, st_red_n, st_tail_n = _stem_forward(
        x, w_x, w_p, cred, ch1x1, pool_proj)
    st_red = jnp.sum(st_red_n, axis=0)           # tiny (2, C) reductions over N
    st_tail = jnp.sum(st_tail_n, axis=0)

    # --- branch2 3x3 + branch3 first 3x3 with producer BN/ReLU fused in ---
    g_red = jnp.concatenate([b21p["gamma"], b31p["gamma"]])
    be_red = jnp.concatenate([b21p["beta"], b31p["beta"]])
    y2, st2_n, y32, st32_n = _mid_forward(
        y_red, st_red, g_red, be_red,
        b22p["w"].astype(jnp.bfloat16), b32p["w"].astype(jnp.bfloat16), count)
    st2 = jnp.sum(st2_n, axis=0)
    st32 = jnp.sum(st32_n, axis=0)

    # --- branch3 second 3x3 with producer BN/ReLU fused in ---
    y3, st3_n = _conv_bn_forward(
        y32, st32, b32p["gamma"], b32p["beta"],
        b33p["w"].astype(jnp.bfloat16), count)
    st3 = jnp.sum(st3_n, axis=0)

    # --- final fused BN/ReLU + concat ([b1 | b2 | b3 | b4], lane-dense) ---
    g_tail = jnp.concatenate([b1p["gamma"], b4p["gamma"]])
    be_tail = jnp.concatenate([b1p["beta"], b4p["beta"]])
    out = _final_forward(
        y_tail, y2, y3, st_tail, st2, st3,
        g_tail, be_tail,
        b22p["gamma"], b22p["beta"],
        b33p["gamma"], b33p["beta"],
        ch1x1, count)
    return jnp.transpose(out, (0, 3, 1, 2))      # NHWC -> NCHW


if __name__ == "__main__":
    key = jax.random.PRNGKey(0)
    kx, kp = jax.random.split(key)
    N, Cin, H, W = 2, 4, 16, 16
    ch1x1, ch3x3red, ch3x3, ch3x3redX2, ch3x3X2, pool_proj = 8, 4, 8, 4, 8, 8

    x = jax.random.normal(kx, (N, Cin, H, W), jnp.float32)
    params = init_inception_v3a(kp, Cin, ch1x1, ch3x3red, ch3x3,
                                ch3x3redX2, ch3x3X2, pool_proj)

    fwd = jax.jit(inception_v3a_forward)
    out = fwd(params, x)
    jax.block_until_ready(out)
    assert out.shape == (N, ch1x1 + ch3x3 + ch3x3X2 + pool_proj, H, W), out.shape
    assert bool(jnp.all(jnp.isfinite(out)))
    print("KERNEL_OK")
</pallas_src>

<mosaic_0001>
module attributes {stable_mosaic.version = 11 : i64} {
  func.func @_stem_kernel(%arg0: i32, %arg1: memref<1x16x16x4xbf16, #tpu.memory_space<vmem>>, %arg2: memref<4x16xbf16, #tpu.memory_space<vmem>>, %arg3: memref<4x8xbf16, #tpu.memory_space<vmem>>, %arg4: memref<1x16x16x8xbf16, #tpu.memory_space<vmem>>, %arg5: memref<1x16x16x16xbf16, #tpu.memory_space<vmem>>, %arg6: memref<1x2x8xf32, #tpu.memory_space<vmem>>, %arg7: memref<1x2x16xf32, #tpu.memory_space<vmem>>) attributes {dimension_semantics = [#tpu.dimension_semantics<parallel>], iteration_bounds = array<i64: 2>, scalar_prefetch = 0 : i64, scratch_operands = 0 : i64, tpu.core_type = #tpu.core_type<tc>, window_params = [{transform_indices = @transform_0, window_bounds = array<i64: 1, 16, 16, 4>}, {pipeline_mode = #tpu.pipeline_mode<synchronous>, transform_indices = @transform_1, window_bounds = array<i64: 4, 16>}, {pipeline_mode = #tpu.pipeline_mode<synchronous>, transform_indices = @transform_2, window_bounds = array<i64: 4, 8>}, {transform_indices = @transform_3, window_bounds = array<i64: 1, 16, 16, 8>}, {transform_indices = @transform_4, window_bounds = array<i64: 1, 16, 16, 16>}, {transform_indices = @transform_5, window_bounds = array<i64: 1, 2, 8>}, {transform_indices = @transform_6, window_bounds = array<i64: 1, 2, 16>}]} {
    %c0 = arith.constant 0 : index
    %c0_0 = arith.constant 0 : index
    %c0_1 = arith.constant 0 : index
    %c0_2 = arith.constant 0 : index
    %0 = vector.load %arg1[%c0, %c0_0, %c0_1, %c0_2] : memref<1x16x16x4xbf16, #tpu.memory_space<vmem>>, vector<1x16x16x4xbf16>
    %1 = vector.shape_cast %0 : vector<1x16x16x4xbf16> to vector<16x16x4xbf16>
    %2 = vector.shape_cast %1 : vector<16x16x4xbf16> to vector<256x4xbf16>
    %c0_3 = arith.constant 0 : index
    %c0_4 = arith.constant 0 : index
    %3 = vector.load %arg2[%c0_3, %c0_4] : memref<4x16xbf16, #tpu.memory_space<vmem>>, vector<4x16xbf16>
    %cst = arith.constant dense<0.000000e+00> : vector<256x16xf32>
    %4 = tpu.matmul %2, %3, %cst {dimension_numbers = #tpu.dot_dimension_numbers<[1], [0], [0], [1], [0, 0, 1, 1], [], []>} : vector<256x4xbf16>, vector<4x16xbf16>, vector<256x16xf32> -> vector<256x16xf32>
    %5 = vector.extract_strided_slice %4 {offsets = [0, 0], sizes = [256, 8], strides = [1, 1]} : vector<256x16xf32> to vector<256x8xf32>
    %6 = vector.shape_cast %5 : vector<256x8xf32> to vector<16x16x8xf32>
    %7 = arith.truncf %6 : vector<16x16x8xf32> to vector<16x16x8xbf16>
    %c0_5 = arith.constant 0 : index
    %c0_6 = arith.constant 0 : index
    %c0_7 = arith.constant 0 : index
    %c0_8 = arith.constant 0 : index
    %8 = vector.load %arg4[%c0_5, %c0_6, %c0_7, %c0_8] : memref<1x16x16x8xbf16, #tpu.memory_space<vmem>>, vector<1x16x16x8xbf16>
    %9 = vector.shape_cast %8 : vector<1x16x16x8xbf16> to vector<16x16x8xbf16>
    %10 = vector.shape_cast %7 : vector<16x16x8xbf16> to vector<1x16x16x8xbf16>
    tpu.vector_store %arg4[%c0_5, %c0_6, %c0_7, %c0_8], %10 {strides = array<i32>} : memref<1x16x16x8xbf16, #tpu.memory_space<vmem>>, vector<1x16x16x8xbf16>,
    %cst_9 = arith.constant dense<0.000000e+00> : vector<8xf32>
    %11 = vector.multi_reduction <add>, %5, %cst_9 [0] : vector<256x8xf32> to vector<8xf32>
    %12 = vector.shape_cast %11 : vector<8xf32> to vector<1x8xf32>
    %13 = arith.mulf %5, %5 : vector<256x8xf32>
    %cst_10 = arith.constant dense<0.000000e+00> : vector<8xf32>
    %14 = vector.multi_reduction <add>, %13, %cst_10 [0] : vector<256x8xf32> to vector<8xf32>
    %15 = vector.shape_cast %14 : vector<8xf32> to vector<1x8xf32>
    %16 = tpu.concatenate %12, %15 in 0 : vector<1x8xf32>, vector<1x8xf32> -> vector<2x8xf32>
    %c0_11 = arith.constant 0 : index
    %c0_12 = arith.constant 0 : index
    %c0_13 = arith.constant 0 : index
    %17 = vector.load %arg6[%c0_11, %c0_12, %c0_13] : memref<1x2x8xf32, #tpu.memory_space<vmem>>, vector<1x2x8xf32>
    %18 = vector.shape_cast %17 : vector<1x2x8xf32> to vector<2x8xf32>
    %19 = vector.shape_cast %16 : vector<2x8xf32> to vector<1x2x8xf32>
    tpu.vector_store %arg6[%c0_11, %c0_12, %c0_13], %19 {strides = array<i32>} : memref<1x2x8xf32, #tpu.memory_space<vmem>>, vector<1x2x8xf32>,
    %20 = vector.extract_strided_slice %4 {offsets = [0, 8], sizes = [256, 8], strides = [1, 1]} : vector<256x16xf32> to vector<256x8xf32>
    %21 = vector.shape_cast %20 : vector<256x8xf32> to vector<16x16x8xf32>
    %22 = arith.truncf %21 : vector<16x16x8xf32> to vector<16x16x8xbf16>
    %c0_14 = arith.constant 0 : index
    %c0_15 = arith.constant 0 : index
    %c0_16 = arith.constant 0 : index
    %c0_17 = arith.constant 0 : index
    %23 = vector.load %arg5[%c0_14, %c0_15, %c0_16, %c0_17] : memref<1x16x16x16xbf16, #tpu.memory_space<vmem>>, vector<1x16x16x8xbf16>
    %24 = vector.shape_cast %23 : vector<1x16x16x8xbf16> to vector<16x16x8xbf16>
    %25 = vector.shape_cast %22 : vector<16x16x8xbf16> to vector<1x16x16x8xbf16>
    tpu.vector_store %arg5[%c0_14, %c0_15, %c0_16, %c0_17], %25 {strides = array<i32>} : memref<1x16x16x16xbf16, #tpu.memory_space<vmem>>, vector<1x16x16x8xbf16>,
    %cst_18 = arith.constant dense<0.000000e+00> : vector<8xf32>
    %26 = vector.multi_reduction <add>, %20, %cst_18 [0] : vector<256x8xf32> to vector<8xf32>
    %27 = vector.shape_cast %26 : vector<8xf32> to vector<1x8xf32>
    %28 = arith.mulf %20, %20 : vector<256x8xf32>
    %cst_19 = arith.constant dense<0.000000e+00> : vector<8xf32>
    %29 = vector.multi_reduction <add>, %28, %cst_19 [0] : vector<256x8xf32> to vector<8xf32>
    %30 = vector.shape_cast %29 : vector<8xf32> to vector<1x8xf32>
    %31 = tpu.concatenate %27, %30 in 0 : vector<1x8xf32>, vector<1x8xf32> -> vector<2x8xf32>
    %c0_20 = arith.constant 0 : index
    %c0_21 = arith.constant 0 : index
    %c0_22 = arith.constant 0 : index
    %32 = vector.load %arg7[%c0_20, %c0_21, %c0_22] : memref<1x2x16xf32, #tpu.memory_space<vmem>>, vector<1x2x8xf32>
    %33 = vector.shape_cast %32 : vector<1x2x8xf32> to vector<2x8xf32>
    %34 = vector.shape_cast %31 : vector<2x8xf32> to vector<1x2x8xf32>
    tpu.vector_store %arg7[%c0_20, %c0_21, %c0_22], %34 {strides = array<i32>} : memref<1x2x16xf32, #tpu.memory_space<vmem>>, vector<1x2x8xf32>,
    %cst_23 = arith.constant -3.004060e+38 : bf16
    %35 = vector.broadcast %cst_23 : bf16 to vector<16x1x4xbf16>
    %36 = tpu.concatenate %35, %1, %35 in 1 : vector<16x1x4xbf16>, vector<16x16x4xbf16>, vector<16x1x4xbf16> -> vector<16x18x4xbf16>
    %37 = vector.extract_strided_slice %36 {offsets = [0, 0, 0], sizes = [16, 16, 4], strides = [1, 1, 1]} : vector<16x18x4xbf16> to vector<16x16x4xbf16>
    %38 = vector.extract_strided_slice %36 {offsets = [0, 1, 0], sizes = [16, 16, 4], strides = [1, 1, 1]} : vector<16x18x4xbf16> to vector<16x16x4xbf16>
    %39 = arith.maximumf %37, %38 : vector<16x16x4xbf16>
    %40 = vector.extract_strided_slice %36 {offsets = [0, 2, 0], sizes = [16, 16, 4], strides = [1, 1, 1]} : vector<16x18x4xbf16> to vector<16x16x4xbf16>
    %41 = arith.maximumf %39, %40 : vector<16x16x4xbf16>
    %cst_24 = arith.constant -3.004060e+38 : bf16
    %42 = vector.broadcast %cst_24 : bf16 to vector<1x16x4xbf16>
    %43 = tpu.concatenate %42, %41, %42 in 0 : vector<1x16x4xbf16>, vector<16x16x4xbf16>, vector<1x16x4xbf16> -> vector<18x16x4xbf16>
    %44 = vector.extract_strided_slice %43 {offsets = [0, 0, 0], sizes = [16, 16, 4], strides = [1, 1, 1]} : vector<18x16x4xbf16> to vector<16x16x4xbf16>
    %45 = vector.extract_strided_slice %43 {offsets = [1, 0, 0], sizes = [16, 16, 4], strides = [1, 1, 1]} : vector<18x16x4xbf16> to vector<16x16x4xbf16>
    %46 = arith.maximumf %44, %45 : vector<16x16x4xbf16>
    %47 = vector.extract_strided_slice %43 {offsets = [2, 0, 0], sizes = [16, 16, 4], strides = [1, 1, 1]} : vector<18x16x4xbf16> to vector<16x16x4xbf16>
    %48 = arith.maximumf %46, %47 : vector<16x16x4xbf16>
    %49 = vector.shape_cast %48 : vector<16x16x4xbf16> to vector<256x4xbf16>
    %c0_25 = arith.constant 0 : index
    %c0_26 = arith.constant 0 : index
    %50 = vector.load %arg3[%c0_25, %c0_26] : memref<4x8xbf16, #tpu.memory_space<vmem>>, vector<4x8xbf16>
    %cst_27 = arith.constant dense<0.000000e+00> : vector<256x8xf32>
    %51 = tpu.matmul %49, %50, %cst_27 {dimension_numbers = #tpu.dot_dimension_numbers<[1], [0], [0], [1], [0, 0, 1, 1], [], []>} : vector<256x4xbf16>, vector<4x8xbf16>, vector<256x8xf32> -> vector<256x8xf32>
    %52 = vector.shape_cast %51 : vector<256x8xf32> to vector<16x16x8xf32>
    %53 = arith.truncf %52 : vector<16x16x8xf32> to vector<16x16x8xbf16>
    %c0_28 = arith.constant 0 : index
    %c0_29 = arith.constant 0 : index
    %c0_30 = arith.constant 0 : index
    %c8 = arith.constant 8 : index
    %54 = vector.load %arg5[%c0_28, %c0_29, %c0_30, %c8] : memref<1x16x16x16xbf16, #tpu.memory_space<vmem>>, vector<1x16x16x8xbf16>
    %55 = vector.shape_cast %54 : vector<1x16x16x8xbf16> to vector<16x16x8xbf16>
    %56 = vector.shape_cast %53 : vector<16x16x8xbf16> to vector<1x16x16x8xbf16>
    tpu.vector_store %arg5[%c0_28, %c0_29, %c0_30, %c8], %56 {strides = array<i32>} : memref<1x16x16x16xbf16, #tpu.memory_space<vmem>>, vector<1x16x16x8xbf16>,
    %cst_31 = arith.constant dense<0.000000e+00> : vector<8xf32>
    %57 = vector.multi_reduction <add>, %51, %cst_31 [0] : vector<256x8xf32> to vector<8xf32>
    %58 = vector.shape_cast %57 : vector<8xf32> to vector<1x8xf32>
    %59 = arith.mulf %51, %51 : vector<256x8xf32>
    %cst_32 = arith.constant dense<0.000000e+00> : vector<8xf32>
    %60 = vector.multi_reduction <add>, %59, %cst_32 [0] : vector<256x8xf32> to vector<8xf32>
    %61 = vector.shape_cast %60 : vector<8xf32> to vector<1x8xf32>
    %62 = tpu.concatenate %58, %61 in 0 : vector<1x8xf32>, vector<1x8xf32> -> vector<2x8xf32>
    %c0_33 = arith.constant 0 : index
    %c0_34 = arith.constant 0 : index
    %c8_35 = arith.constant 8 : index
    %63 = vector.load %arg7[%c0_33, %c0_34, %c8_35] : memref<1x2x16xf32, #tpu.memory_space<vmem>>, vector<1x2x8xf32>
    %64 = vector.shape_cast %63 : vector<1x2x8xf32> to vector<2x8xf32>
    %65 = vector.shape_cast %62 : vector<2x8xf32> to vector<1x2x8xf32>
    tpu.vector_store %arg7[%c0_33, %c0_34, %c8_35], %65 {strides = array<i32>} : memref<1x2x16xf32, #tpu.memory_space<vmem>>, vector<1x2x8xf32>,
    return
  }
  func.func @transform_0(%arg0: i32) -> (i32, i32, i32, i32) {
    %c0_i32 = arith.constant 0 : i32
    %c0_i32_0 = arith.constant 0 : i32
    %c0_i32_1 = arith.constant 0 : i32
    %c0_i32_2 = arith.constant 0 : i32
    return %arg0, %c0_i32, %c0_i32_0, %c0_i32_1 : i32, i32, i32, i32
  }
  func.func @transform_1(%arg0: i32) -> (i32, i32) {
    %c0_i32 = arith.constant 0 : i32
    %c0_i32_0 = arith.constant 0 : i32
    %c0_i32_1 = arith.constant 0 : i32
    return %c0_i32, %c0_i32_0 : i32, i32
  }
  func.func @transform_2(%arg0: i32) -> (i32, i32) {
    %c0_i32 = arith.constant 0 : i32
    %c0_i32_0 = arith.constant 0 : i32
    %c0_i32_1 = arith.constant 0 : i32
    return %c0_i32, %c0_i32_0 : i32, i32
  }
  func.func @transform_3(%arg0: i32) -> (i32, i32, i32, i32) {
    %c0_i32 = arith.constant 0 : i32
    %c0_i32_0 = arith.constant 0 : i32
    %c0_i32_1 = arith.constant 0 : i32
    %c0_i32_2 = arith.constant 0 : i32
    return %arg0, %c0_i32, %c0_i32_0, %c0_i32_1 : i32, i32, i32, i32
  }
  func.func @transform_4(%arg0: i32) -> (i32, i32, i32, i32) {
    %c0_i32 = arith.constant 0 : i32
    %c0_i32_0 = arith.constant 0 : i32
    %c0_i32_1 = arith.constant 0 : i32
    %c0_i32_2 = arith.constant 0 : i32
    return %arg0, %c0_i32, %c0_i32_0, %c0_i32_1 : i32, i32, i32, i32
  }
  func.func @transform_5(%arg0: i32) -> (i32, i32, i32) {
    %c0_i32 = arith.constant 0 : i32
    %c0_i32_0 = arith.constant 0 : i32
    %c0_i32_1 = arith.constant 0 : i32
    return %arg0, %c0_i32, %c0_i32_0 : i32, i32, i32
  }
  func.func @transform_6(%arg0: i32) -> (i32, i32, i32) {
    %c0_i32 = arith.constant 0 : i32
    %c0_i32_0 = arith.constant 0 : i32
    %c0_i32_1 = arith.constant 0 : i32
    return %arg0, %c0_i32, %c0_i32_0 : i32, i32, i32
  }
}

module attributes {stable_mosaic.version = 11 : i64} {
  func.func @_mid_kernel(%arg0: i32, %arg1: memref<1x16x16x8xbf16, #tpu.memory_space<vmem>>, %arg2: memref<2x8xf32, #tpu.memory_space<vmem>>, %arg3: memref<1x8xf32, #tpu.memory_space<vmem>>, %arg4: memref<1x8xf32, #tpu.memory_space<vmem>>, %arg5: memref<3x3x4x8xbf16, #tpu.memory_space<vmem>>, %arg6: memref<3x3x4x8xbf16, #tpu.memory_space<vmem>>, %arg7: memref<1x16x16x8xbf16, #tpu.memory_space<vmem>>, %arg8: memref<1x2x8xf32, #tpu.memory_space<vmem>>, %arg9: memref<1x16x16x8xbf16, #tpu.memory_space<vmem>>, %arg10: memref<1x2x8xf32, #tpu.memory_space<vmem>>) attributes {dimension_semantics = [#tpu.dimension_semantics<parallel>], iteration_bounds = array<i64: 2>, scalar_prefetch = 0 : i64, scratch_operands = 0 : i64, tpu.core_type = #tpu.core_type<tc>, window_params = [{transform_indices = @transform_0, window_bounds = array<i64: 1, 16, 16, 8>}, {pipeline_mode = #tpu.pipeline_mode<synchronous>, transform_indices = @transform_1, window_bounds = array<i64: 2, 8>}, {pipeline_mode = #tpu.pipeline_mode<synchronous>, transform_indices = @transform_2, window_bounds = array<i64: 1, 8>}, {pipeline_mode = #tpu.pipeline_mode<synchronous>, transform_indices = @transform_3, window_bounds = array<i64: 1, 8>}, {pipeline_mode = #tpu.pipeline_mode<synchronous>, transform_indices = @transform_4, window_bounds = array<i64: 3, 3, 4, 8>}, {pipeline_mode = #tpu.pipeline_mode<synchronous>, transform_indices = @transform_5, window_bounds = array<i64: 3, 3, 4, 8>}, {transform_indices = @transform_6, window_bounds = array<i64: 1, 16, 16, 8>}, {transform_indices = @transform_7, window_bounds = array<i64: 1, 2, 8>}, {transform_indices = @transform_8, window_bounds = array<i64: 1, 16, 16, 8>}, {transform_indices = @transform_9, window_bounds = array<i64: 1, 2, 8>}]} {
    %c0 = arith.constant 0 : index
    %c0_0 = arith.constant 0 : index
    %0 = vector.load %arg2[%c0, %c0_0] : memref<2x8xf32, #tpu.memory_space<vmem>>, vector<2x8xf32>
    %c0_1 = arith.constant 0 : index
    %c0_2 = arith.constant 0 : index
    %1 = vector.load %arg3[%c0_1, %c0_2] : memref<1x8xf32, #tpu.memory_space<vmem>>, vector<1x8xf32>
    %c0_3 = arith.constant 0 : index
    %c0_4 = arith.constant 0 : index
    %2 = vector.load %arg4[%c0_3, %c0_4] : memref<1x8xf32, #tpu.memory_space<vmem>>, vector<1x8xf32>
    %3 = vector.extract_strided_slice %0 {offsets = [0, 0], sizes = [1, 8], strides = [1, 1]} : vector<2x8xf32> to vector<1x8xf32>
    %cst = arith.constant 0.001953125 : f32
    %4 = vector.broadcast %cst : f32 to vector<1x8xf32>
    %5 = arith.mulf %3, %4 : vector<1x8xf32>
    %6 = vector.extract_strided_slice %0 {offsets = [1, 0], sizes = [1, 8], strides = [1, 1]} : vector<2x8xf32> to vector<1x8xf32>
    %cst_5 = arith.constant 0.001953125 : f32
    %7 = vector.broadcast %cst_5 : f32 to vector<1x8xf32>
    %8 = arith.mulf %6, %7 : vector<1x8xf32>
    %9 = arith.mulf %5, %5 : vector<1x8xf32>
    %10 = arith.subf %8, %9 : vector<1x8xf32>
    %cst_6 = arith.constant 0.000000e+00 : f32
    %11 = vector.broadcast %cst_6 : f32 to vector<1x8xf32>
    %12 = arith.maximumf %10, %11 : vector<1x8xf32>
    %cst_7 = arith.constant 9.99999974E-6 : f32
    %13 = vector.broadcast %cst_7 : f32 to vector<1x8xf32>
    %14 = arith.addf %12, %13 : vector<1x8xf32>
    %15 = math.rsqrt %14 : vector<1x8xf32>
    %16 = arith.mulf %1, %15 : vector<1x8xf32>
    %17 = arith.mulf %5, %16 : vector<1x8xf32>
    %18 = arith.subf %2, %17 : vector<1x8xf32>
    %c0_8 = arith.constant 0 : index
    %c0_9 = arith.constant 0 : index
    %c0_10 = arith.constant 0 : index
    %c0_11 = arith.constant 0 : index
    %19 = vector.load %arg1[%c0_8, %c0_9, %c0_10, %c0_11] : memref<1x16x16x8xbf16, #tpu.memory_space<vmem>>, vector<1x16x16x8xbf16>
    %20 = vector.shape_cast %19 : vector<1x16x16x8xbf16> to vector<16x16x8xbf16>
    %21 = arith.extf %20 : vector<16x16x8xbf16> to vector<16x16x8xf32>
    %22 = vector.shape_cast %16 : vector<1x8xf32> to vector<1x1x8xf32>
    %23 = vector.broadcast %22 : vector<1x1x8xf32> to vector<16x16x8xf32>
    %24 = arith.mulf %21, %23 : vector<16x16x8xf32>
    %25 = vector.shape_cast %18 : vector<1x8xf32> to vector<1x1x8xf32>
    %26 = vector.broadcast %25 : vector<1x1x8xf32> to vector<16x16x8xf32>
    %27 = arith.addf %24, %26 : vector<16x16x8xf32>
    %cst_12 = arith.constant 0.000000e+00 : f32
    %28 = vector.broadcast %cst_12 : f32 to vector<16x16x8xf32>
    %29 = arith.maximumf %27, %28 : vector<16x16x8xf32>
    %30 = arith.truncf %29 : vector<16x16x8xf32> to vector<16x16x8xbf16>
    %31 = vector.extract_strided_slice %30 {offsets = [0, 0, 0], sizes = [16, 16, 4], strides = [1, 1, 1]} : vector<16x16x8xbf16> to vector<16x16x4xbf16>
    %cst_13 = arith.constant 0.000000e+00 : bf16
    %32 = vector.broadcast %cst_13 : bf16 to vector<16x1x4xbf16>
    %33 = tpu.concatenate %32, %31, %32 in 1 : vector<16x1x4xbf16>, vector<16x16x4xbf16>, vector<16x1x4xbf16> -> vector<16x18x4xbf16>
    %cst_14 = arith.constant 0.000000e+00 : bf16
    %34 = vector.broadcast %cst_14 : bf16 to vector<1x18x4xbf16>
    %35 = tpu.concatenate %34, %33, %34 in 0 : vector<1x18x4xbf16>, vector<16x18x4xbf16>, vector<1x18x4xbf16> -> vector<18x18x4xbf16>
    %c0_15 = arith.constant 0 : index
    %c0_16 = arith.constant 0 : index
    %c0_17 = arith.constant 0 : index
    %c0_18 = arith.constant 0 : index
    %36 = vector.load %arg5[%c0_15, %c0_16, %c0_17, %c0_18] : memref<3x3x4x8xbf16, #tpu.memory_space<vmem>>, vector<3x3x4x8xbf16>
    %37 = vector.extract_strided_slice %35 {offsets = [0, 0, 0], sizes = [8, 18, 4], strides = [1, 1, 1]} : vector<18x18x4xbf16> to vector<8x18x4xbf16>
    %38 = vector.extract_strided_slice %37 {offsets = [0, 0, 0], sizes = [8, 16, 4], strides = [1, 1, 1]} : vector<8x18x4xbf16> to vector<8x16x4xbf16>
    %39 = vector.extract_strided_slice %37 {offsets = [0, 1, 0], sizes = [8, 16, 4], strides = [1, 1, 1]} : vector<8x18x4xbf16> to vector<8x16x4xbf16>
    %40 = vector.extract_strided_slice %37 {offsets = [0, 2, 0], sizes = [8, 16, 4], strides = [1, 1, 1]} : vector<8x18x4xbf16> to vector<8x16x4xbf16>
    %41 = tpu.concatenate %38, %39, %40 in 2 : vector<8x16x4xbf16>, vector<8x16x4xbf16>, vector<8x16x4xbf16> -> vector<8x16x12xbf16>
    %42 = vector.shape_cast %41 : vector<8x16x12xbf16> to vector<128x12xbf16>
    %43 = vector.extract_strided_slice %36 {offsets = [0, 0, 0, 0], sizes = [1, 3, 4, 8], strides = [1, 1, 1, 1]} : vector<3x3x4x8xbf16> to vector<1x3x4x8xbf16>
    %44 = vector.shape_cast %43 : vector<1x3x4x8xbf16> to vector<3x4x8xbf16>
    %45 = vector.shape_cast %44 : vector<3x4x8xbf16> to vector<12x8xbf16>
    %cst_19 = arith.constant dense<0.000000e+00> : vector<128x8xf32>
    %46 = tpu.matmul %42, %45, %cst_19 {dimension_numbers = #tpu.dot_dimension_numbers<[1], [0], [0], [1], [0, 0, 1, 1], [], []>} : vector<128x12xbf16>, vector<12x8xbf16>, vector<128x8xf32> -> vector<128x8xf32>
    %47 = vector.extract_strided_slice %35 {offsets = [1, 0, 0], sizes = [8, 18, 4], strides = [1, 1, 1]} : vector<18x18x4xbf16> to vector<8x18x4xbf16>
    %48 = vector.extract_strided_slice %47 {offsets = [0, 0, 0], sizes = [8, 16, 4], strides = [1, 1, 1]} : vector<8x18x4xbf16> to vector<8x16x4xbf16>
    %49 = vector.extract_strided_slice %47 {offsets = [0, 1, 0], sizes = [8, 16, 4], strides = [1, 1, 1]} : vector<8x18x4xbf16> to vector<8x16x4xbf16>
    %50 = vector.extract_strided_slice %47 {offsets = [0, 2, 0], sizes = [8, 16, 4], strides = [1, 1, 1]} : vector<8x18x4xbf16> to vector<8x16x4xbf16>
    %51 = tpu.concatenate %48, %49, %50 in 2 : vector<8x16x4xbf16>, vector<8x16x4xbf16>, vector<8x16x4xbf16> -> vector<8x16x12xbf16>
    %52 = vector.shape_cast %51 : vector<8x16x12xbf16> to vector<128x12xbf16>
    %53 = vector.extract_strided_slice %36 {offsets = [1, 0, 0, 0], sizes = [1, 3, 4, 8], strides = [1, 1, 1, 1]} : vector<3x3x4x8xbf16> to vector<1x3x4x8xbf16>
    %54 = vector.shape_cast %53 : vector<1x3x4x8xbf16> to vector<3x4x8xbf16>
    %55 = vector.shape_cast %54 : vector<3x4x8xbf16> to vector<12x8xbf16>
    %cst_20 = arith.constant dense<0.000000e+00> : vector<128x8xf32>
    %56 = tpu.matmul %52, %55, %cst_20 {dimension_numbers = #tpu.dot_dimension_numbers<[1], [0], [0], [1], [0, 0, 1, 1], [], []>} : vector<128x12xbf16>, vector<12x8xbf16>, vector<128x8xf32> -> vector<128x8xf32>
    %57 = arith.addf %46, %56 : vector<128x8xf32>
    %58 = vector.extract_strided_slice %35 {offsets = [2, 0, 0], sizes = [8, 18, 4], strides = [1, 1, 1]} : vector<18x18x4xbf16> to vector<8x18x4xbf16>
    %59 = vector.extract_strided_slice %58 {offsets = [0, 0, 0], sizes = [8, 16, 4], strides = [1, 1, 1]} : vector<8x18x4xbf16> to vector<8x16x4xbf16>
    %60 = vector.extract_strided_slice %58 {offsets = [0, 1, 0], sizes = [8, 16, 4], strides = [1, 1, 1]} : vector<8x18x4xbf16> to vector<8x16x4xbf16>
    %61 = vector.extract_strided_slice %58 {offsets = [0, 2, 0], sizes = [8, 16, 4], strides = [1, 1, 1]} : vector<8x18x4xbf16> to vector<8x16x4xbf16>
    %62 = tpu.concatenate %59, %60, %61 in 2 : vector<8x16x4xbf16>, vector<8x16x4xbf16>, vector<8x16x4xbf16> -> vector<8x16x12xbf16>
    %63 = vector.shape_cast %62 : vector<8x16x12xbf16> to vector<128x12xbf16>
    %64 = vector.extract_strided_slice %36 {offsets = [2, 0, 0, 0], sizes = [1, 3, 4, 8], strides = [1, 1, 1, 1]} : vector<3x3x4x8xbf16> to vector<1x3x4x8xbf16>
    %65 = vector.shape_cast %64 : vector<1x3x4x8xbf16> to vector<3x4x8xbf16>
    %66 = vector.shape_cast %65 : vector<3x4x8xbf16> to vector<12x8xbf16>
    %cst_21 = arith.constant dense<0.000000e+00> : vector<128x8xf32>
    %67 = tpu.matmul %63, %66, %cst_21 {dimension_numbers = #tpu.dot_dimension_numbers<[1], [0], [0], [1], [0, 0, 1, 1], [], []>} : vector<128x12xbf16>, vector<12x8xbf16>, vector<128x8xf32> -> vector<128x8xf32>
    %68 = arith.addf %57, %67 : vector<128x8xf32>
    %69 = vector.shape_cast %68 : vector<128x8xf32> to vector<8x16x8xf32>
    %70 = arith.truncf %69 : vector<8x16x8xf32> to vector<8x16x8xbf16>
    %c0_22 = arith.constant 0 : index
    %c0_23 = arith.constant 0 : index
    %c0_24 = arith.constant 0 : index
    %c0_25 = arith.constant 0 : index
    %71 = vector.load %arg7[%c0_22, %c0_23, %c0_24, %c0_25] : memref<1x16x16x8xbf16, #tpu.memory_space<vmem>>, vector<1x8x16x8xbf16>
    %72 = vector.shape_cast %71 : vector<1x8x16x8xbf16> to vector<8x16x8xbf16>
    %73 = vector.shape_cast %70 : vector<8x16x8xbf16> to vector<1x8x16x8xbf16>
    tpu.vector_store %arg7[%c0_22, %c0_23, %c0_24, %c0_25], %73 {strides = array<i32>} : memref<1x16x16x8xbf16, #tpu.memory_space<vmem>>, vector<1x8x16x8xbf16>,
    %cst_26 = arith.constant dense<0.000000e+00> : vector<8xf32>
    %74 = vector.multi_reduction <add>, %68, %cst_26 [0] : vector<128x8xf32> to vector<8xf32>
    %75 = vector.shape_cast %74 : vector<8xf32> to vector<1x8xf32>
    %76 = arith.mulf %68, %68 : vector<128x8xf32>
    %cst_27 = arith.constant dense<0.000000e+00> : vector<8xf32>
    %77 = vector.multi_reduction <add>, %76, %cst_27 [0] : vector<128x8xf32> to vector<8xf32>
    %78 = vector.shape_cast %77 : vector<8xf32> to vector<1x8xf32>
    %79 = vector.extract_strided_slice %35 {offsets = [8, 0, 0], sizes = [8, 18, 4], strides = [1, 1, 1]} : vector<18x18x4xbf16> to vector<8x18x4xbf16>
    %80 = vector.extract_strided_slice %79 {offsets = [0, 0, 0], sizes = [8, 16, 4], strides = [1, 1, 1]} : vector<8x18x4xbf16> to vector<8x16x4xbf16>
    %81 = vector.extract_strided_slice %79 {offsets = [0, 1, 0], sizes = [8, 16, 4], strides = [1, 1, 1]} : vector<8x18x4xbf16> to vector<8x16x4xbf16>
    %82 = vector.extract_strided_slice %79 {offsets = [0, 2, 0], sizes = [8, 16, 4], strides = [1, 1, 1]} : vector<8x18x4xbf16> to vector<8x16x4xbf16>
    %83 = tpu.concatenate %80, %81, %82 in 2 : vector<8x16x4xbf16>, vector<8x16x4xbf16>, vector<8x16x4xbf16> -> vector<8x16x12xbf16>
    %84 = vector.shape_cast %83 : vector<8x16x12xbf16> to vector<128x12xbf16>
    %85 = vector.extract_strided_slice %36 {offsets = [0, 0, 0, 0], sizes = [1, 3, 4, 8], strides = [1, 1, 1, 1]} : vector<3x3x4x8xbf16> to vector<1x3x4x8xbf16>
    %86 = vector.shape_cast %85 : vector<1x3x4x8xbf16> to vector<3x4x8xbf16>
    %87 = vector.shape_cast %86 : vector<3x4x8xbf16> to vector<12x8xbf16>
    %cst_28 = arith.constant dense<0.000000e+00> : vector<128x8xf32>
    %88 = tpu.matmul %84, %87, %cst_28 {dimension_numbers = #tpu.dot_dimension_numbers<[1], [0], [0], [1], [0, 0, 1, 1], [], []>} : vector<128x12xbf16>, vector<12x8xbf16>, vector<128x8xf32> -> vector<128x8xf32>
    %89 = vector.extract_strided_slice %35 {offsets = [9, 0, 0], sizes = [8, 18, 4], strides = [1, 1, 1]} : vector<18x18x4xbf16> to vector<8x18x4xbf16>
    %90 = vector.extract_strided_slice %89 {offsets = [0, 0, 0], sizes = [8, 16, 4], strides = [1, 1, 1]} : vector<8x18x4xbf16> to vector<8x16x4xbf16>
    %91 = vector.extract_strided_slice %89 {offsets = [0, 1, 0], sizes = [8, 16, 4], strides = [1, 1, 1]} : vector<8x18x4xbf16> to vector<8x16x4xbf16>
    %92 = vector.extract_strided_slice %89 {offsets = [0, 2, 0], sizes = [8, 16, 4], strides = [1, 1, 1]} : vector<8x18x4xbf16> to vector<8x16x4xbf16>
    %93 = tpu.concatenate %90, %91, %92 in 2 : vector<8x16x4xbf16>, vector<8x16x4xbf16>, vector<8x16x4xbf16> -> vector<8x16x12xbf16>
    %94 = vector.shape_cast %93 : vector<8x16x12xbf16> to vector<128x12xbf16>
    %95 = vector.extract_strided_slice %36 {offsets = [1, 0, 0, 0], sizes = [1, 3, 4, 8], strides = [1, 1, 1, 1]} : vector<3x3x4x8xbf16> to vector<1x3x4x8xbf16>
    %96 = vector.shape_cast %95 : vector<1x3x4x8xbf16> to vector<3x4x8xbf16>
    %97 = vector.shape_cast %96 : vector<3x4x8xbf16> to vector<12x8xbf16>
    %cst_29 = arith.constant dense<0.000000e+00> : vector<128x8xf32>
    %98 = tpu.matmul %94, %97, %cst_29 {dimension_numbers = #tpu.dot_dimension_numbers<[1], [0], [0], [1], [0, 0, 1, 1], [], []>} : vector<128x12xbf16>, vector<12x8xbf16>, vector<128x8xf32> -> vector<128x8xf32>
    %99 = arith.addf %88, %98 : vector<128x8xf32>
    %100 = vector.extract_strided_slice %35 {offsets = [10, 0, 0], sizes = [8, 18, 4], strides = [1, 1, 1]} : vector<18x18x4xbf16> to vector<8x18x4xbf16>
    %101 = vector.extract_strided_slice %100 {offsets = [0, 0, 0], sizes = [8, 16, 4], strides = [1, 1, 1]} : vector<8x18x4xbf16> to vector<8x16x4xbf16>
    %102 = vector.extract_strided_slice %100 {offsets = [0, 1, 0], sizes = [8, 16, 4], strides = [1, 1, 1]} : vector<8x18x4xbf16> to vector<8x16x4xbf16>
    %103 = vector.extract_strided_slice %100 {offsets = [0, 2, 0], sizes = [8, 16, 4], strides = [1, 1, 1]} : vector<8x18x4xbf16> to vector<8x16x4xbf16>
    %104 = tpu.concatenate %101, %102, %103 in 2 : vector<8x16x4xbf16>, vector<8x16x4xbf16>, vector<8x16x4xbf16> -> vector<8x16x12xbf16>
    %105 = vector.shape_cast %104 : vector<8x16x12xbf16> to vector<128x12xbf16>
    %106 = vector.extract_strided_slice %36 {offsets = [2, 0, 0, 0], sizes = [1, 3, 4, 8], strides = [1, 1, 1, 1]} : vector<3x3x4x8xbf16> to vector<1x3x4x8xbf16>
    %107 = vector.shape_cast %106 : vector<1x3x4x8xbf16> to vector<3x4x8xbf16>
    %108 = vector.shape_cast %107 : vector<3x4x8xbf16> to vector<12x8xbf16>
    %cst_30 = arith.constant dense<0.000000e+00> : vector<128x8xf32>
    %109 = tpu.matmul %105, %108, %cst_30 {dimension_numbers = #tpu.dot_dimension_numbers<[1], [0], [0], [1], [0, 0, 1, 1], [], []>} : vector<128x12xbf16>, vector<12x8xbf16>, vector<128x8xf32> -> vector<128x8xf32>
    %110 = arith.addf %99, %109 : vector<128x8xf32>
    %111 = vector.shape_cast %110 : vector<128x8xf32> to vector<8x16x8xf32>
    %112 = arith.truncf %111 : vector<8x16x8xf32> to vector<8x16x8xbf16>
    %c0_31 = arith.constant 0 : index
    %c8 = arith.constant 8 : index
    %c0_32 = arith.constant 0 : index
    %c0_33 = arith.constant 0 : index
    %113 = vector.load %arg7[%c0_31, %c8, %c0_32, %c0_33] : memref<1x16x16x8xbf16, #tpu.memory_space<vmem>>, vector<1x8x16x8xbf16>
    %114 = vector.shape_cast %113 : vector<1x8x16x8xbf16> to vector<8x16x8xbf16>
    %115 = vector.shape_cast %112 : vector<8x16x8xbf16> to vector<1x8x16x8xbf16>
    tpu.vector_store %arg7[%c0_31, %c8, %c0_32, %c0_33], %115 {strides = array<i32>} : memref<1x16x16x8xbf16, #tpu.memory_space<vmem>>, vector<1x8x16x8xbf16>,
    %cst_34 = arith.constant dense<0.000000e+00> : vector<8xf32>
    %116 = vector.multi_reduction <add>, %110, %cst_34 [0] : vector<128x8xf32> to vector<8xf32>
    %117 = vector.shape_cast %116 : vector<8xf32> to vector<1x8xf32>
    %118 = arith.mulf %110, %110 : vector<128x8xf32>
    %cst_35 = arith.constant dense<0.000000e+00> : vector<8xf32>
    %119 = vector.multi_reduction <add>, %118, %cst_35 [0] : vector<128x8xf32> to vector<8xf32>
    %120 = vector.shape_cast %119 : vector<8xf32> to vector<1x8xf32>
    %121 = arith.addf %75, %117 : vector<1x8xf32>
    %122 = arith.addf %78, %120 : vector<1x8xf32>
    %123 = tpu.concatenate %121, %122 in 0 : vector<1x8xf32>, vector<1x8xf32> -> vector<2x8xf32>
    %c0_36 = arith.constant 0 : index
    %c0_37 = arith.constant 0 : index
    %c0_38 = arith.constant 0 : index
    %124 = vector.load %arg8[%c0_36, %c0_37, %c0_38] : memref<1x2x8xf32, #tpu.memory_space<vmem>>, vector<1x2x8xf32>
    %125 = vector.shape_cast %124 : vector<1x2x8xf32> to vector<2x8xf32>
    %126 = vector.shape_cast %123 : vector<2x8xf32> to vector<1x2x8xf32>
    tpu.vector_store %arg8[%c0_36, %c0_37, %c0_38], %126 {strides = array<i32>} : memref<1x2x8xf32, #tpu.memory_space<vmem>>, vector<1x2x8xf32>,
    %127 = vector.extract_strided_slice %30 {offsets = [0, 0, 4], sizes = [16, 16, 4], strides = [1, 1, 1]} : vector<16x16x8xbf16> to vector<16x16x4xbf16>
    %cst_39 = arith.constant 0.000000e+00 : bf16
    %128 = vector.broadcast %cst_39 : bf16 to vector<16x1x4xbf16>
    %129 = tpu.concatenate %128, %127, %128 in 1 : vector<16x1x4xbf16>, vector<16x16x4xbf16>, vector<16x1x4xbf16> -> vector<16x18x4xbf16>
    %cst_40 = arith.constant 0.000000e+00 : bf16
    %130 = vector.broadcast %cst_40 : bf16 to vector<1x18x4xbf16>
    %131 = tpu.concatenate %130, %129, %130 in 0 : vector<1x18x4xbf16>, vector<16x18x4xbf16>, vector<1x18x4xbf16> -> vector<18x18x4xbf16>
    %c0_41 = arith.constant 0 : index
    %c0_42 = arith.constant 0 : index
    %c0_43 = arith.constant 0 : index
    %c0_44 = arith.constant 0 : index
    %132 = vector.load %arg6[%c0_41, %c0_42, %c0_43, %c0_44] : memref<3x3x4x8xbf16, #tpu.memory_space<vmem>>, vector<3x3x4x8xbf16>
    %133 = vector.extract_strided_slice %131 {offsets = [0, 0, 0], sizes = [8, 18, 4], strides = [1, 1, 1]} : vector<18x18x4xbf16> to vector<8x18x4xbf16>
    %134 = vector.extract_strided_slice %133 {offsets = [0, 0, 0], sizes = [8, 16, 4], strides = [1, 1, 1]} : vector<8x18x4xbf16> to vector<8x16x4xbf16>
    %135 = vector.extract_strided_slice %133 {offsets = [0, 1, 0], sizes = [8, 16, 4], strides = [1, 1, 1]} : vector<8x18x4xbf16> to vector<8x16x4xbf16>
    %136 = vector.extract_strided_slice %133 {offsets = [0, 2, 0], sizes = [8, 16, 4], strides = [1, 1, 1]} : vector<8x18x4xbf16> to vector<8x16x4xbf16>
    %137 = tpu.concatenate %134, %135, %136 in 2 : vector<8x16x4xbf16>, vector<8x16x4xbf16>, vector<8x16x4xbf16> -> vector<8x16x12xbf16>
    %138 = vector.shape_cast %137 : vector<8x16x12xbf16> to vector<128x12xbf16>
    %139 = vector.extract_strided_slice %132 {offsets = [0, 0, 0, 0], sizes = [1, 3, 4, 8], strides = [1, 1, 1, 1]} : vector<3x3x4x8xbf16> to vector<1x3x4x8xbf16>
    %140 = vector.shape_cast %139 : vector<1x3x4x8xbf16> to vector<3x4x8xbf16>
    %141 = vector.shape_cast %140 : vector<3x4x8xbf16> to vector<12x8xbf16>
    %cst_45 = arith.constant dense<0.000000e+00> : vector<128x8xf32>
    %142 = tpu.matmul %138, %141, %cst_45 {dimension_numbers = #tpu.dot_dimension_numbers<[1], [0], [0], [1], [0, 0, 1, 1], [], []>} : vector<128x12xbf16>, vector<12x8xbf16>, vector<128x8xf32> -> vector<128x8xf32>
    %143 = vector.extract_strided_slice %131 {offsets = [1, 0, 0], sizes = [8, 18, 4], strides = [1, 1, 1]} : vector<18x18x4xbf16> to vector<8x18x4xbf16>
    %144 = vector.extract_strided_slice %143 {offsets = [0, 0, 0], sizes = [8, 16, 4], strides = [1, 1, 1]} : vector<8x18x4xbf16> to vector<8x16x4xbf16>
    %145 = vector.extract_strided_slice %143 {offsets = [0, 1, 0], sizes = [8, 16, 4], strides = [1, 1, 1]} : vector<8x18x4xbf16> to vector<8x16x4xbf16>
    %146 = vector.extract_strided_slice %143 {offsets = [0, 2, 0], sizes = [8, 16, 4], strides = [1, 1, 1]} : vector<8x18x4xbf16> to vector<8x16x4xbf16>
    %147 = tpu.concatenate %144, %145, %146 in 2 : vector<8x16x4xbf16>, vector<8x16x4xbf16>, vector<8x16x4xbf16> -> vector<8x16x12xbf16>
    %148 = vector.shape_cast %147 : vector<8x16x12xbf16> to vector<128x12xbf16>
    %149 = vector.extract_strided_slice %132 {offsets = [1, 0, 0, 0], sizes = [1, 3, 4, 8], strides = [1, 1, 1, 1]} : vector<3x3x4x8xbf16> to vector<1x3x4x8xbf16>
    %150 = vector.shape_cast %149 : vector<1x3x4x8xbf16> to vector<3x4x8xbf16>
    %151 = vector.shape_cast %150 : vector<3x4x8xbf16> to vector<12x8xbf16>
    %cst_46 = arith.constant dense<0.000000e+00> : vector<128x8xf32>
    %152 = tpu.matmul %148, %151, %cst_46 {dimension_numbers = #tpu.dot_dimension_numbers<[1], [0], [0], [1], [0, 0, 1, 1], [], []>} : vector<128x12xbf16>, vector<12x8xbf16>, vector<128x8xf32> -> vector<128x8xf32>
    %153 = arith.addf %142, %152 : vector<128x8xf32>
    %154 = vector.extract_strided_slice %131 {offsets = [2, 0, 0], sizes = [8, 18, 4], strides = [1, 1, 1]} : vector<18x18x4xbf16> to vector<8x18x4xbf16>
    %155 = vector.extract_strided_slice %154 {offsets = [0, 0, 0], sizes = [8, 16, 4], strides = [1, 1, 1]} : vector<8x18x4xbf16> to vector<8x16x4xbf16>
    %156 = vector.extract_strided_slice %154 {offsets = [0, 1, 0], sizes = [8, 16, 4], strides = [1, 1, 1]} : vector<8x18x4xbf16> to vector<8x16x4xbf16>
    %157 = vector.extract_strided_slice %154 {offsets = [0, 2, 0], sizes = [8, 16, 4], strides = [1, 1, 1]} : vector<8x18x4xbf16> to vector<8x16x4xbf16>
    %158 = tpu.concatenate %155, %156, %157 in 2 : vector<8x16x4xbf16>, vector<8x16x4xbf16>, vector<8x16x4xbf16> -> vector<8x16x12xbf16>
    %159 = vector.shape_cast %158 : vector<8x16x12xbf16> to vector<128x12xbf16>
    %160 = vector.extract_strided_slice %132 {offsets = [2, 0, 0, 0], sizes = [1, 3, 4, 8], strides = [1, 1, 1, 1]} : vector<3x3x4x8xbf16> to vector<1x3x4x8xbf16>
    %161 = vector.shape_cast %160 : vector<1x3x4x8xbf16> to vector<3x4x8xbf16>
    %162 = vector.shape_cast %161 : vector<3x4x8xbf16> to vector<12x8xbf16>
    %cst_47 = arith.constant dense<0.000000e+00> : vector<128x8xf32>
    %163 = tpu.matmul %159, %162, %cst_47 {dimension_numbers = #tpu.dot_dimension_numbers<[1], [0], [0], [1], [0, 0, 1, 1], [], []>} : vector<128x12xbf16>, vector<12x8xbf16>, vector<128x8xf32> -> vector<128x8xf32>
    %164 = arith.addf %153, %163 : vector<128x8xf32>
    %165 = vector.shape_cast %164 : vector<128x8xf32> to vector<8x16x8xf32>
    %166 = arith.truncf %165 : vector<8x16x8xf32> to vector<8x16x8xbf16>
    %c0_48 = arith.constant 0 : index
    %c0_49 = arith.constant 0 : index
    %c0_50 = arith.constant 0 : index
    %c0_51 = arith.constant 0 : index
    %167 = vector.load %arg9[%c0_48, %c0_49, %c0_50, %c0_51] : memref<1x16x16x8xbf16, #tpu.memory_space<vmem>>, vector<1x8x16x8xbf16>
    %168 = vector.shape_cast %167 : vector<1x8x16x8xbf16> to vector<8x16x8xbf16>
    %169 = vector.shape_cast %166 : vector<8x16x8xbf16> to vector<1x8x16x8xbf16>
    tpu.vector_store %arg9[%c0_48, %c0_49, %c0_50, %c0_51], %169 {strides = array<i32>} : memref<1x16x16x8xbf16, #tpu.memory_space<vmem>>, vector<1x8x16x8xbf16>,
    %cst_52 = arith.constant dense<0.000000e+00> : vector<8xf32>
    %170 = vector.multi_reduction <add>, %164, %cst_52 [0] : vector<128x8xf32> to vector<8xf32>
    %171 = vector.shape_cast %170 : vector<8xf32> to vector<1x8xf32>
    %172 = arith.mulf %164, %164 : vector<128x8xf32>
    %cst_53 = arith.constant dense<0.000000e+00> : vector<8xf32>
    %173 = vector.multi_reduction <add>, %172, %cst_53 [0] : vector<128x8xf32> to vector<8xf32>
    %174 = vector.shape_cast %173 : vector<8xf32> to vector<1x8xf32>
    %175 = vector.extract_strided_slice %131 {offsets = [8, 0, 0], sizes = [8, 18, 4], strides = [1, 1, 1]} : vector<18x18x4xbf16> to vector<8x18x4xbf16>
    %176 = vector.extract_strided_slice %175 {offsets = [0, 0, 0], sizes = [8, 16, 4], strides = [1, 1, 1]} : vector<8x18x4xbf16> to vector<8x16x4xbf16>
    %177 = vector.extract_strided_slice %175 {offsets = [0, 1, 0], sizes = [8, 16, 4], strides = [1, 1, 1]} : vector<8x18x4xbf16> to vector<8x16x4xbf16>
    %178 = vector.extract_strided_slice %175 {offsets = [0, 2, 0], sizes = [8, 16, 4], strides = [1, 1, 1]} : vector<8x18x4xbf16> to vector<8x16x4xbf16>
    %179 = tpu.concatenate %176, %177, %178 in 2 : vector<8x16x4xbf16>, vector<8x16x4xbf16>, vector<8x16x4xbf16> -> vector<8x16x12xbf16>
    %180 = vector.shape_cast %179 : vector<8x16x12xbf16> to vector<128x12xbf16>
    %181 = vector.extract_strided_slice %132 {offsets = [0, 0, 0, 0], sizes = [1, 3, 4, 8], strides = [1, 1, 1, 1]} : vector<3x3x4x8xbf16> to vector<1x3x4x8xbf16>
    %182 = vector.shape_cast %181 : vector<1x3x4x8xbf16> to vector<3x4x8xbf16>
    %183 = vector.shape_cast %182 : vector<3x4x8xbf16> to vector<12x8xbf16>
    %cst_54 = arith.constant dense<0.000000e+00> : vector<128x8xf32>
    %184 = tpu.matmul %180, %183, %cst_54 {dimension_numbers = #tpu.dot_dimension_numbers<[1], [0], [0], [1], [0, 0, 1, 1], [], []>} : vector<128x12xbf16>, vector<12x8xbf16>, vector<128x8xf32> -> vector<128x8xf32>
    %185 = vector.extract_strided_slice %131 {offsets = [9, 0, 0], sizes = [8, 18, 4], strides = [1, 1, 1]} : vector<18x18x4xbf16> to vector<8x18x4xbf16>
    %186 = vector.extract_strided_slice %185 {offsets = [0, 0, 0], sizes = [8, 16, 4], strides = [1, 1, 1]} : vector<8x18x4xbf16> to vector<8x16x4xbf16>
    %187 = vector.extract_strided_slice %185 {offsets = [0, 1, 0], sizes = [8, 16, 4], strides = [1, 1, 1]} : vector<8x18x4xbf16> to vector<8x16x4xbf16>
    %188 = vector.extract_strided_slice %185 {offsets = [0, 2, 0], sizes = [8, 16, 4], strides = [1, 1, 1]} : vector<8x18x4xbf16> to vector<8x16x4xbf16>
    %189 = tpu.concatenate %186, %187, %188 in 2 : vector<8x16x4xbf16>, vector<8x16x4xbf16>, vector<8x16x4xbf16> -> vector<8x16x12xbf16>
    %190 = vector.shape_cast %189 : vector<8x16x12xbf16> to vector<128x12xbf16>
    %191 = vector.extract_strided_slice %132 {offsets = [1, 0, 0, 0], sizes = [1, 3, 4, 8], strides = [1, 1, 1, 1]} : vector<3x3x4x8xbf16> to vector<1x3x4x8xbf16>
    %192 = vector.shape_cast %191 : vector<1x3x4x8xbf16> to vector<3x4x8xbf16>
    %193 = vector.shape_cast %192 : vector<3x4x8xbf16> to vector<12x8xbf16>
    %cst_55 = arith.constant dense<0.000000e+00> : vector<128x8xf32>
    %194 = tpu.matmul %190, %193, %cst_55 {dimension_numbers = #tpu.dot_dimension_numbers<[1], [0], [0], [1], [0, 0, 1, 1], [], []>} : vector<128x12xbf16>, vector<12x8xbf16>, vector<128x8xf32> -> vector<128x8xf32>
    %195 = arith.addf %184, %194 : vector<128x8xf32>
    %196 = vector.extract_strided_slice %131 {offsets = [10, 0, 0], sizes = [8, 18, 4], strides = [1, 1, 1]} : vector<18x18x4xbf16> to vector<8x18x4xbf16>
    %197 = vector.extract_strided_slice %196 {offsets = [0, 0, 0], sizes = [8, 16, 4], strides = [1, 1, 1]} : vector<8x18x4xbf16> to vector<8x16x4xbf16>
    %198 = vector.extract_strided_slice %196 {offsets = [0, 1, 0], sizes = [8, 16, 4], strides = [1, 1, 1]} : vector<8x18x4xbf16> to vector<8x16x4xbf16>
    %199 = vector.extract_strided_slice %196 {offsets = [0, 2, 0], sizes = [8, 16, 4], strides = [1, 1, 1]} : vector<8x18x4xbf16> to vector<8x16x4xbf16>
    %200 = tpu.concatenate %197, %198, %199 in 2 : vector<8x16x4xbf16>, vector<8x16x4xbf16>, vector<8x16x4xbf16> -> vector<8x16x12xbf16>
    %201 = vector.shape_cast %200 : vector<8x16x12xbf16> to vector<128x12xbf16>
    %202 = vector.extract_strided_slice %132 {offsets = [2, 0, 0, 0], sizes = [1, 3, 4, 8], strides = [1, 1, 1, 1]} : vector<3x3x4x8xbf16> to vector<1x3x4x8xbf16>
    %203 = vector.shape_cast %202 : vector<1x3x4x8xbf16> to vector<3x4x8xbf16>
    %204 = vector.shape_cast %203 : vector<3x4x8xbf16> to vector<12x8xbf16>
    %cst_56 = arith.constant dense<0.000000e+00> : vector<128x8xf32>
    %205 = tpu.matmul %201, %204, %cst_56 {dimension_numbers = #tpu.dot_dimension_numbers<[1], [0], [0], [1], [0, 0, 1, 1], [], []>} : vector<128x12xbf16>, vector<12x8xbf16>, vector<128x8xf32> -> vector<128x8xf32>
    %206 = arith.addf %195, %205 : vector<128x8xf32>
    %207 = vector.shape_cast %206 : vector<128x8xf32> to vector<8x16x8xf32>
    %208 = arith.truncf %207 : vector<8x16x8xf32> to vector<8x16x8xbf16>
    %c0_57 = arith.constant 0 : index
    %c8_58 = arith.constant 8 : index
    %c0_59 = arith.constant 0 : index
    %c0_60 = arith.constant 0 : index
    %209 = vector.load %arg9[%c0_57, %c8_58, %c0_59, %c0_60] : memref<1x16x16x8xbf16, #tpu.memory_space<vmem>>, vector<1x8x16x8xbf16>
    %210 = vector.shape_cast %209 : vector<1x8x16x8xbf16> to vector<8x16x8xbf16>
    %211 = vector.shape_cast %208 : vector<8x16x8xbf16> to vector<1x8x16x8xbf16>
    tpu.vector_store %arg9[%c0_57, %c8_58, %c0_59, %c0_60], %211 {strides = array<i32>} : memref<1x16x16x8xbf16, #tpu.memory_space<vmem>>, vector<1x8x16x8xbf16>,
    %cst_61 = arith.constant dense<0.000000e+00> : vector<8xf32>
    %212 = vector.multi_reduction <add>, %206, %cst_61 [0] : vector<128x8xf32> to vector<8xf32>
    %213 = vector.shape_cast %212 : vector<8xf32> to vector<1x8xf32>
    %214 = arith.mulf %206, %206 : vector<128x8xf32>
    %cst_62 = arith.constant dense<0.000000e+00> : vector<8xf32>
    %215 = vector.multi_reduction <add>, %214, %cst_62 [0] : vector<128x8xf32> to vector<8xf32>
    %216 = vector.shape_cast %215 : vector<8xf32> to vector<1x8xf32>
    %217 = arith.addf %171, %213 : vector<1x8xf32>
    %218 = arith.addf %174, %216 : vector<1x8xf32>
    %219 = tpu.concatenate %217, %218 in 0 : vector<1x8xf32>, vector<1x8xf32> -> vector<2x8xf32>
    %c0_63 = arith.constant 0 : index
    %c0_64 = arith.constant 0 : index
    %c0_65 = arith.constant 0 : index
    %220 = vector.load %arg10[%c0_63, %c0_64, %c0_65] : memref<1x2x8xf32, #tpu.memory_space<vmem>>, vector<1x2x8xf32>
    %221 = vector.shape_cast %220 : vector<1x2x8xf32> to vector<2x8xf32>
    %222 = vector.shape_cast %219 : vector<2x8xf32> to vector<1x2x8xf32>
    tpu.vector_store %arg10[%c0_63, %c0_64, %c0_65], %222 {strides = array<i32>} : memref<1x2x8xf32, #tpu.memory_space<vmem>>, vector<1x2x8xf32>,
    return
  }
  func.func @transform_0(%arg0: i32) -> (i32, i32, i32, i32) {
    %c0_i32 = arith.constant 0 : i32
    %c0_i32_0 = arith.constant 0 : i32
    %c0_i32_1 = arith.constant 0 : i32
    %c0_i32_2 = arith.constant 0 : i32
    return %arg0, %c0_i32, %c0_i32_0, %c0_i32_1 : i32, i32, i32, i32
  }
  func.func @transform_1(%arg0: i32) -> (i32, i32) {
    %c0_i32 = arith.constant 0 : i32
    %c0_i32_0 = arith.constant 0 : i32
    %c0_i32_1 = arith.constant 0 : i32
    return %c0_i32, %c0_i32_0 : i32, i32
  }
  func.func @transform_2(%arg0: i32) -> (i32, i32) {
    %c0_i32 = arith.constant 0 : i32
    %c0_i32_0 = arith.constant 0 : i32
    %c0_i32_1 = arith.constant 0 : i32
    return %c0_i32, %c0_i32_0 : i32, i32
  }
  func.func @transform_3(%arg0: i32) -> (i32, i32) {
    %c0_i32 = arith.constant 0 : i32
    %c0_i32_0 = arith.constant 0 : i32
    %c0_i32_1 = arith.constant 0 : i32
    return %c0_i32, %c0_i32_0 : i32, i32
  }
  func.func @transform_4(%arg0: i32) -> (i32, i32, i32, i32) {
    %c0_i32 = arith.constant 0 : i32
    %c0_i32_0 = arith.constant 0 : i32
    %c0_i32_1 = arith.constant 0 : i32
    %c0_i32_2 = arith.constant 0 : i32
    %c0_i32_3 = arith.constant 0 : i32
    return %c0_i32, %c0_i32_0, %c0_i32_1, %c0_i32_2 : i32, i32, i32, i32
  }
  func.func @transform_5(%arg0: i32) -> (i32, i32, i32, i32) {
    %c0_i32 = arith.constant 0 : i32
    %c0_i32_0 = arith.constant 0 : i32
    %c0_i32_1 = arith.constant 0 : i32
    %c0_i32_2 = arith.constant 0 : i32
    %c0_i32_3 = arith.constant 0 : i32
    return %c0_i32, %c0_i32_0, %c0_i32_1, %c0_i32_2 : i32, i32, i32, i32
  }
  func.func @transform_6(%arg0: i32) -> (i32, i32, i32, i32) {
    %c0_i32 = arith.constant 0 : i32
    %c0_i32_0 = arith.constant 0 : i32
    %c0_i32_1 = arith.constant 0 : i32
    %c0_i32_2 = arith.constant 0 : i32
    return %arg0, %c0_i32, %c0_i32_0, %c0_i32_1 : i32, i32, i32, i32
  }
  func.func @transform_7(%arg0: i32) -> (i32, i32, i32) {
    %c0_i32 = arith.constant 0 : i32
    %c0_i32_0 = arith.constant 0 : i32
    %c0_i32_1 = arith.constant 0 : i32
    return %arg0, %c0_i32, %c0_i32_0 : i32, i32, i32
  }
  func.func @transform_8(%arg0: i32) -> (i32, i32, i32, i32) {
    %c0_i32 = arith.constant 0 : i32
    %c0_i32_0 = arith.constant 0 : i32
    %c0_i32_1 = arith.constant 0 : i32
    %c0_i32_2 = arith.constant 0 : i32
    return %arg0, %c0_i32, %c0_i32_0, %c0_i32_1 : i32, i32, i32, i32
  }
  func.func @transform_9(%arg0: i32) -> (i32, i32, i32) {
    %c0_i32 = arith.constant 0 : i32
    %c0_i32_0 = arith.constant 0 : i32
    %c0_i32_1 = arith.constant 0 : i32
    return %arg0, %c0_i32, %c0_i32_0 : i32, i32, i32
  }
}

module attributes {stable_mosaic.version = 11 : i64} {
  func.func @_conv_bn_kernel(%arg0: i32, %arg1: memref<1x16x16x8xbf16, #tpu.memory_space<vmem>>, %arg2: memref<2x8xf32, #tpu.memory_space<vmem>>, %arg3: memref<1x8xf32, #tpu.memory_space<vmem>>, %arg4: memref<1x8xf32, #tpu.memory_space<vmem>>, %arg5: memref<3x3x8x8xbf16, #tpu.memory_space<vmem>>, %arg6: memref<1x16x16x8xbf16, #tpu.memory_space<vmem>>, %arg7: memref<1x2x8xf32, #tpu.memory_space<vmem>>) attributes {dimension_semantics = [#tpu.dimension_semantics<parallel>], iteration_bounds = array<i64: 2>, scalar_prefetch = 0 : i64, scratch_operands = 0 : i64, tpu.core_type = #tpu.core_type<tc>, window_params = [{transform_indices = @transform_0, window_bounds = array<i64: 1, 16, 16, 8>}, {pipeline_mode = #tpu.pipeline_mode<synchronous>, transform_indices = @transform_1, window_bounds = array<i64: 2, 8>}, {pipeline_mode = #tpu.pipeline_mode<synchronous>, transform_indices = @transform_2, window_bounds = array<i64: 1, 8>}, {pipeline_mode = #tpu.pipeline_mode<synchronous>, transform_indices = @transform_3, window_bounds = array<i64: 1, 8>}, {pipeline_mode = #tpu.pipeline_mode<synchronous>, transform_indices = @transform_4, window_bounds = array<i64: 3, 3, 8, 8>}, {transform_indices = @transform_5, window_bounds = array<i64: 1, 16, 16, 8>}, {transform_indices = @transform_6, window_bounds = array<i64: 1, 2, 8>}]} {
    %c0 = arith.constant 0 : index
    %c0_0 = arith.constant 0 : index
    %0 = vector.load %arg2[%c0, %c0_0] : memref<2x8xf32, #tpu.memory_space<vmem>>, vector<2x8xf32>
    %c0_1 = arith.constant 0 : index
    %c0_2 = arith.constant 0 : index
    %1 = vector.load %arg3[%c0_1, %c0_2] : memref<1x8xf32, #tpu.memory_space<vmem>>, vector<1x8xf32>
    %c0_3 = arith.constant 0 : index
    %c0_4 = arith.constant 0 : index
    %2 = vector.load %arg4[%c0_3, %c0_4] : memref<1x8xf32, #tpu.memory_space<vmem>>, vector<1x8xf32>
    %3 = vector.extract_strided_slice %0 {offsets = [0, 0], sizes = [1, 8], strides = [1, 1]} : vector<2x8xf32> to vector<1x8xf32>
    %cst = arith.constant 0.001953125 : f32
    %4 = vector.broadcast %cst : f32 to vector<1x8xf32>
    %5 = arith.mulf %3, %4 : vector<1x8xf32>
    %6 = vector.extract_strided_slice %0 {offsets = [1, 0], sizes = [1, 8], strides = [1, 1]} : vector<2x8xf32> to vector<1x8xf32>
    %cst_5 = arith.constant 0.001953125 : f32
    %7 = vector.broadcast %cst_5 : f32 to vector<1x8xf32>
    %8 = arith.mulf %6, %7 : vector<1x8xf32>
    %9 = arith.mulf %5, %5 : vector<1x8xf32>
    %10 = arith.subf %8, %9 : vector<1x8xf32>
    %cst_6 = arith.constant 0.000000e+00 : f32
    %11 = vector.broadcast %cst_6 : f32 to vector<1x8xf32>
    %12 = arith.maximumf %10, %11 : vector<1x8xf32>
    %cst_7 = arith.constant 9.99999974E-6 : f32
    %13 = vector.broadcast %cst_7 : f32 to vector<1x8xf32>
    %14 = arith.addf %12, %13 : vector<1x8xf32>
    %15 = math.rsqrt %14 : vector<1x8xf32>
    %16 = arith.mulf %1, %15 : vector<1x8xf32>
    %17 = arith.mulf %5, %16 : vector<1x8xf32>
    %18 = arith.subf %2, %17 : vector<1x8xf32>
    %c0_8 = arith.constant 0 : index
    %c0_9 = arith.constant 0 : index
    %c0_10 = arith.constant 0 : index
    %c0_11 = arith.constant 0 : index
    %19 = vector.load %arg1[%c0_8, %c0_9, %c0_10, %c0_11] : memref<1x16x16x8xbf16, #tpu.memory_space<vmem>>, vector<1x16x16x8xbf16>
    %20 = vector.shape_cast %19 : vector<1x16x16x8xbf16> to vector<16x16x8xbf16>
    %21 = arith.extf %20 : vector<16x16x8xbf16> to vector<16x16x8xf32>
    %22 = vector.shape_cast %16 : vector<1x8xf32> to vector<1x1x8xf32>
    %23 = vector.broadcast %22 : vector<1x1x8xf32> to vector<16x16x8xf32>
    %24 = arith.mulf %21, %23 : vector<16x16x8xf32>
    %25 = vector.shape_cast %18 : vector<1x8xf32> to vector<1x1x8xf32>
    %26 = vector.broadcast %25 : vector<1x1x8xf32> to vector<16x16x8xf32>
    %27 = arith.addf %24, %26 : vector<16x16x8xf32>
    %cst_12 = arith.constant 0.000000e+00 : f32
    %28 = vector.broadcast %cst_12 : f32 to vector<16x16x8xf32>
    %29 = arith.maximumf %27, %28 : vector<16x16x8xf32>
    %30 = arith.truncf %29 : vector<16x16x8xf32> to vector<16x16x8xbf16>
    %cst_13 = arith.constant 0.000000e+00 : bf16
    %31 = vector.broadcast %cst_13 : bf16 to vector<16x1x8xbf16>
    %32 = tpu.concatenate %31, %30, %31 in 1 : vector<16x1x8xbf16>, vector<16x16x8xbf16>, vector<16x1x8xbf16> -> vector<16x18x8xbf16>
    %cst_14 = arith.constant 0.000000e+00 : bf16
    %33 = vector.broadcast %cst_14 : bf16 to vector<1x18x8xbf16>
    %34 = tpu.concatenate %33, %32, %33 in 0 : vector<1x18x8xbf16>, vector<16x18x8xbf16>, vector<1x18x8xbf16> -> vector<18x18x8xbf16>
    %c0_15 = arith.constant 0 : index
    %c0_16 = arith.constant 0 : index
    %c0_17 = arith.constant 0 : index
    %c0_18 = arith.constant 0 : index
    %35 = vector.load %arg5[%c0_15, %c0_16, %c0_17, %c0_18] : memref<3x3x8x8xbf16, #tpu.memory_space<vmem>>, vector<3x3x8x8xbf16>
    %36 = vector.extract_strided_slice %34 {offsets = [0, 0, 0], sizes = [8, 18, 8], strides = [1, 1, 1]} : vector<18x18x8xbf16> to vector<8x18x8xbf16>
    %37 = vector.extract_strided_slice %36 {offsets = [0, 0, 0], sizes = [8, 16, 8], strides = [1, 1, 1]} : vector<8x18x8xbf16> to vector<8x16x8xbf16>
    %38 = vector.extract_strided_slice %36 {offsets = [0, 1, 0], sizes = [8, 16, 8], strides = [1, 1, 1]} : vector<8x18x8xbf16> to vector<8x16x8xbf16>
    %39 = vector.extract_strided_slice %36 {offsets = [0, 2, 0], sizes = [8, 16, 8], strides = [1, 1, 1]} : vector<8x18x8xbf16> to vector<8x16x8xbf16>
    %40 = tpu.concatenate %37, %38, %39 in 2 : vector<8x16x8xbf16>, vector<8x16x8xbf16>, vector<8x16x8xbf16> -> vector<8x16x24xbf16>
    %41 = vector.shape_cast %40 : vector<8x16x24xbf16> to vector<128x24xbf16>
    %42 = vector.extract_strided_slice %35 {offsets = [0, 0, 0, 0], sizes = [1, 3, 8, 8], strides = [1, 1, 1, 1]} : vector<3x3x8x8xbf16> to vector<1x3x8x8xbf16>
    %43 = vector.shape_cast %42 : vector<1x3x8x8xbf16> to vector<3x8x8xbf16>
    %44 = vector.shape_cast %43 : vector<3x8x8xbf16> to vector<24x8xbf16>
    %cst_19 = arith.constant dense<0.000000e+00> : vector<128x8xf32>
    %45 = tpu.matmul %41, %44, %cst_19 {dimension_numbers = #tpu.dot_dimension_numbers<[1], [0], [0], [1], [0, 0, 1, 1], [], []>} : vector<128x24xbf16>, vector<24x8xbf16>, vector<128x8xf32> -> vector<128x8xf32>
    %46 = vector.extract_strided_slice %34 {offsets = [1, 0, 0], sizes = [8, 18, 8], strides = [1, 1, 1]} : vector<18x18x8xbf16> to vector<8x18x8xbf16>
    %47 = vector.extract_strided_slice %46 {offsets = [0, 0, 0], sizes = [8, 16, 8], strides = [1, 1, 1]} : vector<8x18x8xbf16> to vector<8x16x8xbf16>
    %48 = vector.extract_strided_slice %46 {offsets = [0, 1, 0], sizes = [8, 16, 8], strides = [1, 1, 1]} : vector<8x18x8xbf16> to vector<8x16x8xbf16>
    %49 = vector.extract_strided_slice %46 {offsets = [0, 2, 0], sizes = [8, 16, 8], strides = [1, 1, 1]} : vector<8x18x8xbf16> to vector<8x16x8xbf16>
    %50 = tpu.concatenate %47, %48, %49 in 2 : vector<8x16x8xbf16>, vector<8x16x8xbf16>, vector<8x16x8xbf16> -> vector<8x16x24xbf16>
    %51 = vector.shape_cast %50 : vector<8x16x24xbf16> to vector<128x24xbf16>
    %52 = vector.extract_strided_slice %35 {offsets = [1, 0, 0, 0], sizes = [1, 3, 8, 8], strides = [1, 1, 1, 1]} : vector<3x3x8x8xbf16> to vector<1x3x8x8xbf16>
    %53 = vector.shape_cast %52 : vector<1x3x8x8xbf16> to vector<3x8x8xbf16>
    %54 = vector.shape_cast %53 : vector<3x8x8xbf16> to vector<24x8xbf16>
    %cst_20 = arith.constant dense<0.000000e+00> : vector<128x8xf32>
    %55 = tpu.matmul %51, %54, %cst_20 {dimension_numbers = #tpu.dot_dimension_numbers<[1], [0], [0], [1], [0, 0, 1, 1], [], []>} : vector<128x24xbf16>, vector<24x8xbf16>, vector<128x8xf32> -> vector<128x8xf32>
    %56 = arith.addf %45, %55 : vector<128x8xf32>
    %57 = vector.extract_strided_slice %34 {offsets = [2, 0, 0], sizes = [8, 18, 8], strides = [1, 1, 1]} : vector<18x18x8xbf16> to vector<8x18x8xbf16>
    %58 = vector.extract_strided_slice %57 {offsets = [0, 0, 0], sizes = [8, 16, 8], strides = [1, 1, 1]} : vector<8x18x8xbf16> to vector<8x16x8xbf16>
    %59 = vector.extract_strided_slice %57 {offsets = [0, 1, 0], sizes = [8, 16, 8], strides = [1, 1, 1]} : vector<8x18x8xbf16> to vector<8x16x8xbf16>
    %60 = vector.extract_strided_slice %57 {offsets = [0, 2, 0], sizes = [8, 16, 8], strides = [1, 1, 1]} : vector<8x18x8xbf16> to vector<8x16x8xbf16>
    %61 = tpu.concatenate %58, %59, %60 in 2 : vector<8x16x8xbf16>, vector<8x16x8xbf16>, vector<8x16x8xbf16> -> vector<8x16x24xbf16>
    %62 = vector.shape_cast %61 : vector<8x16x24xbf16> to vector<128x24xbf16>
    %63 = vector.extract_strided_slice %35 {offsets = [2, 0, 0, 0], sizes = [1, 3, 8, 8], strides = [1, 1, 1, 1]} : vector<3x3x8x8xbf16> to vector<1x3x8x8xbf16>
    %64 = vector.shape_cast %63 : vector<1x3x8x8xbf16> to vector<3x8x8xbf16>
    %65 = vector.shape_cast %64 : vector<3x8x8xbf16> to vector<24x8xbf16>
    %cst_21 = arith.constant dense<0.000000e+00> : vector<128x8xf32>
    %66 = tpu.matmul %62, %65, %cst_21 {dimension_numbers = #tpu.dot_dimension_numbers<[1], [0], [0], [1], [0, 0, 1, 1], [], []>} : vector<128x24xbf16>, vector<24x8xbf16>, vector<128x8xf32> -> vector<128x8xf32>
    %67 = arith.addf %56, %66 : vector<128x8xf32>
    %68 = vector.shape_cast %67 : vector<128x8xf32> to vector<8x16x8xf32>
    %69 = arith.truncf %68 : vector<8x16x8xf32> to vector<8x16x8xbf16>
    %c0_22 = arith.constant 0 : index
    %c0_23 = arith.constant 0 : index
    %c0_24 = arith.constant 0 : index
    %c0_25 = arith.constant 0 : index
    %70 = vector.load %arg6[%c0_22, %c0_23, %c0_24, %c0_25] : memref<1x16x16x8xbf16, #tpu.memory_space<vmem>>, vector<1x8x16x8xbf16>
    %71 = vector.shape_cast %70 : vector<1x8x16x8xbf16> to vector<8x16x8xbf16>
    %72 = vector.shape_cast %69 : vector<8x16x8xbf16> to vector<1x8x16x8xbf16>
    tpu.vector_store %arg6[%c0_22, %c0_23, %c0_24, %c0_25], %72 {strides = array<i32>} : memref<1x16x16x8xbf16, #tpu.memory_space<vmem>>, vector<1x8x16x8xbf16>,
    %cst_26 = arith.constant dense<0.000000e+00> : vector<8xf32>
    %73 = vector.multi_reduction <add>, %67, %cst_26 [0] : vector<128x8xf32> to vector<8xf32>
    %74 = vector.shape_cast %73 : vector<8xf32> to vector<1x8xf32>
    %75 = arith.mulf %67, %67 : vector<128x8xf32>
    %cst_27 = arith.constant dense<0.000000e+00> : vector<8xf32>
    %76 = vector.multi_reduction <add>, %75, %cst_27 [0] : vector<128x8xf32> to vector<8xf32>
    %77 = vector.shape_cast %76 : vector<8xf32> to vector<1x8xf32>
    %78 = vector.extract_strided_slice %34 {offsets = [8, 0, 0], sizes = [8, 18, 8], strides = [1, 1, 1]} : vector<18x18x8xbf16> to vector<8x18x8xbf16>
    %79 = vector.extract_strided_slice %78 {offsets = [0, 0, 0], sizes = [8, 16, 8], strides = [1, 1, 1]} : vector<8x18x8xbf16> to vector<8x16x8xbf16>
    %80 = vector.extract_strided_slice %78 {offsets = [0, 1, 0], sizes = [8, 16, 8], strides = [1, 1, 1]} : vector<8x18x8xbf16> to vector<8x16x8xbf16>
    %81 = vector.extract_strided_slice %78 {offsets = [0, 2, 0], sizes = [8, 16, 8], strides = [1, 1, 1]} : vector<8x18x8xbf16> to vector<8x16x8xbf16>
    %82 = tpu.concatenate %79, %80, %81 in 2 : vector<8x16x8xbf16>, vector<8x16x8xbf16>, vector<8x16x8xbf16> -> vector<8x16x24xbf16>
    %83 = vector.shape_cast %82 : vector<8x16x24xbf16> to vector<128x24xbf16>
    %84 = vector.extract_strided_slice %35 {offsets = [0, 0, 0, 0], sizes = [1, 3, 8, 8], strides = [1, 1, 1, 1]} : vector<3x3x8x8xbf16> to vector<1x3x8x8xbf16>
    %85 = vector.shape_cast %84 : vector<1x3x8x8xbf16> to vector<3x8x8xbf16>
    %86 = vector.shape_cast %85 : vector<3x8x8xbf16> to vector<24x8xbf16>
    %cst_28 = arith.constant dense<0.000000e+00> : vector<128x8xf32>
    %87 = tpu.matmul %83, %86, %cst_28 {dimension_numbers = #tpu.dot_dimension_numbers<[1], [0], [0], [1], [0, 0, 1, 1], [], []>} : vector<128x24xbf16>, vector<24x8xbf16>, vector<128x8xf32> -> vector<128x8xf32>
    %88 = vector.extract_strided_slice %34 {offsets = [9, 0, 0], sizes = [8, 18, 8], strides = [1, 1, 1]} : vector<18x18x8xbf16> to vector<8x18x8xbf16>
    %89 = vector.extract_strided_slice %88 {offsets = [0, 0, 0], sizes = [8, 16, 8], strides = [1, 1, 1]} : vector<8x18x8xbf16> to vector<8x16x8xbf16>
    %90 = vector.extract_strided_slice %88 {offsets = [0, 1, 0], sizes = [8, 16, 8], strides = [1, 1, 1]} : vector<8x18x8xbf16> to vector<8x16x8xbf16>
    %91 = vector.extract_strided_slice %88 {offsets = [0, 2, 0], sizes = [8, 16, 8], strides = [1, 1, 1]} : vector<8x18x8xbf16> to vector<8x16x8xbf16>
    %92 = tpu.concatenate %89, %90, %91 in 2 : vector<8x16x8xbf16>, vector<8x16x8xbf16>, vector<8x16x8xbf16> -> vector<8x16x24xbf16>
    %93 = vector.shape_cast %92 : vector<8x16x24xbf16> to vector<128x24xbf16>
    %94 = vector.extract_strided_slice %35 {offsets = [1, 0, 0, 0], sizes = [1, 3, 8, 8], strides = [1, 1, 1, 1]} : vector<3x3x8x8xbf16> to vector<1x3x8x8xbf16>
    %95 = vector.shape_cast %94 : vector<1x3x8x8xbf16> to vector<3x8x8xbf16>
    %96 = vector.shape_cast %95 : vector<3x8x8xbf16> to vector<24x8xbf16>
    %cst_29 = arith.constant dense<0.000000e+00> : vector<128x8xf32>
    %97 = tpu.matmul %93, %96, %cst_29 {dimension_numbers = #tpu.dot_dimension_numbers<[1], [0], [0], [1], [0, 0, 1, 1], [], []>} : vector<128x24xbf16>, vector<24x8xbf16>, vector<128x8xf32> -> vector<128x8xf32>
    %98 = arith.addf %87, %97 : vector<128x8xf32>
    %99 = vector.extract_strided_slice %34 {offsets = [10, 0, 0], sizes = [8, 18, 8], strides = [1, 1, 1]} : vector<18x18x8xbf16> to vector<8x18x8xbf16>
    %100 = vector.extract_strided_slice %99 {offsets = [0, 0, 0], sizes = [8, 16, 8], strides = [1, 1, 1]} : vector<8x18x8xbf16> to vector<8x16x8xbf16>
    %101 = vector.extract_strided_slice %99 {offsets = [0, 1, 0], sizes = [8, 16, 8], strides = [1, 1, 1]} : vector<8x18x8xbf16> to vector<8x16x8xbf16>
    %102 = vector.extract_strided_slice %99 {offsets = [0, 2, 0], sizes = [8, 16, 8], strides = [1, 1, 1]} : vector<8x18x8xbf16> to vector<8x16x8xbf16>
    %103 = tpu.concatenate %100, %101, %102 in 2 : vector<8x16x8xbf16>, vector<8x16x8xbf16>, vector<8x16x8xbf16> -> vector<8x16x24xbf16>
    %104 = vector.shape_cast %103 : vector<8x16x24xbf16> to vector<128x24xbf16>
    %105 = vector.extract_strided_slice %35 {offsets = [2, 0, 0, 0], sizes = [1, 3, 8, 8], strides = [1, 1, 1, 1]} : vector<3x3x8x8xbf16> to vector<1x3x8x8xbf16>
    %106 = vector.shape_cast %105 : vector<1x3x8x8xbf16> to vector<3x8x8xbf16>
    %107 = vector.shape_cast %106 : vector<3x8x8xbf16> to vector<24x8xbf16>
    %cst_30 = arith.constant dense<0.000000e+00> : vector<128x8xf32>
    %108 = tpu.matmul %104, %107, %cst_30 {dimension_numbers = #tpu.dot_dimension_numbers<[1], [0], [0], [1], [0, 0, 1, 1], [], []>} : vector<128x24xbf16>, vector<24x8xbf16>, vector<128x8xf32> -> vector<128x8xf32>
    %109 = arith.addf %98, %108 : vector<128x8xf32>
    %110 = vector.shape_cast %109 : vector<128x8xf32> to vector<8x16x8xf32>
    %111 = arith.truncf %110 : vector<8x16x8xf32> to vector<8x16x8xbf16>
    %c0_31 = arith.constant 0 : index
    %c8 = arith.constant 8 : index
    %c0_32 = arith.constant 0 : index
    %c0_33 = arith.constant 0 : index
    %112 = vector.load %arg6[%c0_31, %c8, %c0_32, %c0_33] : memref<1x16x16x8xbf16, #tpu.memory_space<vmem>>, vector<1x8x16x8xbf16>
    %113 = vector.shape_cast %112 : vector<1x8x16x8xbf16> to vector<8x16x8xbf16>
    %114 = vector.shape_cast %111 : vector<8x16x8xbf16> to vector<1x8x16x8xbf16>
    tpu.vector_store %arg6[%c0_31, %c8, %c0_32, %c0_33], %114 {strides = array<i32>} : memref<1x16x16x8xbf16, #tpu.memory_space<vmem>>, vector<1x8x16x8xbf16>,
    %cst_34 = arith.constant dense<0.000000e+00> : vector<8xf32>
    %115 = vector.multi_reduction <add>, %109, %cst_34 [0] : vector<128x8xf32> to vector<8xf32>
    %116 = vector.shape_cast %115 : vector<8xf32> to vector<1x8xf32>
    %117 = arith.mulf %109, %109 : vector<128x8xf32>
    %cst_35 = arith.constant dense<0.000000e+00> : vector<8xf32>
    %118 = vector.multi_reduction <add>, %117, %cst_35 [0] : vector<128x8xf32> to vector<8xf32>
    %119 = vector.shape_cast %118 : vector<8xf32> to vector<1x8xf32>
    %120 = arith.addf %74, %116 : vector<1x8xf32>
    %121 = arith.addf %77, %119 : vector<1x8xf32>
    %122 = tpu.concatenate %120, %121 in 0 : vector<1x8xf32>, vector<1x8xf32> -> vector<2x8xf32>
    %c0_36 = arith.constant 0 : index
    %c0_37 = arith.constant 0 : index
    %c0_38 = arith.constant 0 : index
    %123 = vector.load %arg7[%c0_36, %c0_37, %c0_38] : memref<1x2x8xf32, #tpu.memory_space<vmem>>, vector<1x2x8xf32>
    %124 = vector.shape_cast %123 : vector<1x2x8xf32> to vector<2x8xf32>
    %125 = vector.shape_cast %122 : vector<2x8xf32> to vector<1x2x8xf32>
    tpu.vector_store %arg7[%c0_36, %c0_37, %c0_38], %125 {strides = array<i32>} : memref<1x2x8xf32, #tpu.memory_space<vmem>>, vector<1x2x8xf32>,
    return
  }
  func.func @transform_0(%arg0: i32) -> (i32, i32, i32, i32) {
    %c0_i32 = arith.constant 0 : i32
    %c0_i32_0 = arith.constant 0 : i32
    %c0_i32_1 = arith.constant 0 : i32
    %c0_i32_2 = arith.constant 0 : i32
    return %arg0, %c0_i32, %c0_i32_0, %c0_i32_1 : i32, i32, i32, i32
  }
  func.func @transform_1(%arg0: i32) -> (i32, i32) {
    %c0_i32 = arith.constant 0 : i32
    %c0_i32_0 = arith.constant 0 : i32
    %c0_i32_1 = arith.constant 0 : i32
    return %c0_i32, %c0_i32_0 : i32, i32
  }
  func.func @transform_2(%arg0: i32) -> (i32, i32) {
    %c0_i32 = arith.constant 0 : i32
    %c0_i32_0 = arith.constant 0 : i32
    %c0_i32_1 = arith.constant 0 : i32
    return %c0_i32, %c0_i32_0 : i32, i32
  }
  func.func @transform_3(%arg0: i32) -> (i32, i32) {
    %c0_i32 = arith.constant 0 : i32
    %c0_i32_0 = arith.constant 0 : i32
    %c0_i32_1 = arith.constant 0 : i32
    return %c0_i32, %c0_i32_0 : i32, i32
  }
  func.func @transform_4(%arg0: i32) -> (i32, i32, i32, i32) {
    %c0_i32 = arith.constant 0 : i32
    %c0_i32_0 = arith.constant 0 : i32
    %c0_i32_1 = arith.constant 0 : i32
    %c0_i32_2 = arith.constant 0 : i32
    %c0_i32_3 = arith.constant 0 : i32
    return %c0_i32, %c0_i32_0, %c0_i32_1, %c0_i32_2 : i32, i32, i32, i32
  }
  func.func @transform_5(%arg0: i32) -> (i32, i32, i32, i32) {
    %c0_i32 = arith.constant 0 : i32
    %c0_i32_0 = arith.constant 0 : i32
    %c0_i32_1 = arith.constant 0 : i32
    %c0_i32_2 = arith.constant 0 : i32
    return %arg0, %c0_i32, %c0_i32_0, %c0_i32_1 : i32, i32, i32, i32
  }
  func.func @transform_6(%arg0: i32) -> (i32, i32, i32) {
    %c0_i32 = arith.constant 0 : i32
    %c0_i32_0 = arith.constant 0 : i32
    %c0_i32_1 = arith.constant 0 : i32
    return %arg0, %c0_i32, %c0_i32_0 : i32, i32, i32
  }
}

module attributes {stable_mosaic.version = 11 : i64} {
  func.func @_final_kernel(%arg0: i32, %arg1: i32, %arg2: memref<1x8x16x16xbf16, #tpu.memory_space<vmem>>, %arg3: memref<1x8x16x8xbf16, #tpu.memory_space<vmem>>, %arg4: memref<1x8x16x8xbf16, #tpu.memory_space<vmem>>, %arg5: memref<2x16xf32, #tpu.memory_space<vmem>>, %arg6: memref<2x8xf32, #tpu.memory_space<vmem>>, %arg7: memref<2x8xf32, #tpu.memory_space<vmem>>, %arg8: memref<1x16xf32, #tpu.memory_space<vmem>>, %arg9: memref<1x16xf32, #tpu.memory_space<vmem>>, %arg10: memref<1x8xf32, #tpu.memory_space<vmem>>, %arg11: memref<1x8xf32, #tpu.memory_space<vmem>>, %arg12: memref<1x8xf32, #tpu.memory_space<vmem>>, %arg13: memref<1x8xf32, #tpu.memory_space<vmem>>, %arg14: memref<1x8x16x32xf32, #tpu.memory_space<vmem>>) attributes {dimension_semantics = [#tpu.dimension_semantics<parallel>, #tpu.dimension_semantics<parallel>], iteration_bounds = array<i64: 2, 2>, scalar_prefetch = 0 : i64, scratch_operands = 0 : i64, tpu.core_type = #tpu.core_type<tc>, window_params = [{transform_indices = @transform_0, window_bounds = array<i64: 1, 8, 16, 16>}, {transform_indices = @transform_1, window_bounds = array<i64: 1, 8, 16, 8>}, {transform_indices = @transform_2, window_bounds = array<i64: 1, 8, 16, 8>}, {pipeline_mode = #tpu.pipeline_mode<synchronous>, transform_indices = @transform_3, window_bounds = array<i64: 2, 16>}, {pipeline_mode = #tpu.pipeline_mode<synchronous>, transform_indices = @transform_4, window_bounds = array<i64: 2, 8>}, {pipeline_mode = #tpu.pipeline_mode<synchronous>, transform_indices = @transform_5, window_bounds = array<i64: 2, 8>}, {pipeline_mode = #tpu.pipeline_mode<synchronous>, transform_indices = @transform_6, window_bounds = array<i64: 1, 16>}, {pipeline_mode = #tpu.pipeline_mode<synchronous>, transform_indices = @transform_7, window_bounds = array<i64: 1, 16>}, {pipeline_mode = #tpu.pipeline_mode<synchronous>, transform_indices = @transform_8, window_bounds = array<i64: 1, 8>}, {pipeline_mode = #tpu.pipeline_mode<synchronous>, transform_indices = @transform_9, window_bounds = array<i64: 1, 8>}, {pipeline_mode = #tpu.pipeline_mode<synchronous>, transform_indices = @transform_10, window_bounds = array<i64: 1, 8>}, {pipeline_mode = #tpu.pipeline_mode<synchronous>, transform_indices = @transform_11, window_bounds = array<i64: 1, 8>}, {transform_indices = @transform_12, window_bounds = array<i64: 1, 8, 16, 32>}]} {
    %c0 = arith.constant 0 : index
    %c0_0 = arith.constant 0 : index
    %0 = vector.load %arg5[%c0, %c0_0] : memref<2x16xf32, #tpu.memory_space<vmem>>, vector<2x8xf32>
    %c0_1 = arith.constant 0 : index
    %c0_2 = arith.constant 0 : index
    %1 = vector.load %arg8[%c0_1, %c0_2] : memref<1x16xf32, #tpu.memory_space<vmem>>, vector<1x8xf32>
    %c0_3 = arith.constant 0 : index
    %c0_4 = arith.constant 0 : index
    %2 = vector.load %arg9[%c0_3, %c0_4] : memref<1x16xf32, #tpu.memory_space<vmem>>, vector<1x8xf32>
    %3 = vector.extract_strided_slice %0 {offsets = [0, 0], sizes = [1, 8], strides = [1, 1]} : vector<2x8xf32> to vector<1x8xf32>
    %cst = arith.constant 0.001953125 : f32
    %4 = vector.broadcast %cst : f32 to vector<1x8xf32>
    %5 = arith.mulf %3, %4 : vector<1x8xf32>
    %6 = vector.extract_strided_slice %0 {offsets = [1, 0], sizes = [1, 8], strides = [1, 1]} : vector<2x8xf32> to vector<1x8xf32>
    %cst_5 = arith.constant 0.001953125 : f32
    %7 = vector.broadcast %cst_5 : f32 to vector<1x8xf32>
    %8 = arith.mulf %6, %7 : vector<1x8xf32>
    %9 = arith.mulf %5, %5 : vector<1x8xf32>
    %10 = arith.subf %8, %9 : vector<1x8xf32>
    %cst_6 = arith.constant 0.000000e+00 : f32
    %11 = vector.broadcast %cst_6 : f32 to vector<1x8xf32>
    %12 = arith.maximumf %10, %11 : vector<1x8xf32>
    %cst_7 = arith.constant 9.99999974E-6 : f32
    %13 = vector.broadcast %cst_7 : f32 to vector<1x8xf32>
    %14 = arith.addf %12, %13 : vector<1x8xf32>
    %15 = math.rsqrt %14 : vector<1x8xf32>
    %16 = arith.mulf %1, %15 : vector<1x8xf32>
    %17 = arith.mulf %5, %16 : vector<1x8xf32>
    %18 = arith.subf %2, %17 : vector<1x8xf32>
    %c0_8 = arith.constant 0 : index
    %c0_9 = arith.constant 0 : index
    %c0_10 = arith.constant 0 : index
    %c0_11 = arith.constant 0 : index
    %19 = vector.load %arg2[%c0_8, %c0_9, %c0_10, %c0_11] : memref<1x8x16x16xbf16, #tpu.memory_space<vmem>>, vector<1x8x16x8xbf16>
    %20 = vector.shape_cast %19 : vector<1x8x16x8xbf16> to vector<8x16x8xbf16>
    %21 = arith.extf %20 : vector<8x16x8xbf16> to vector<8x16x8xf32>
    %22 = vector.shape_cast %16 : vector<1x8xf32> to vector<1x1x8xf32>
    %23 = vector.broadcast %22 : vector<1x1x8xf32> to vector<8x16x8xf32>
    %24 = arith.mulf %21, %23 : vector<8x16x8xf32>
    %25 = vector.shape_cast %18 : vector<1x8xf32> to vector<1x1x8xf32>
    %26 = vector.broadcast %25 : vector<1x1x8xf32> to vector<8x16x8xf32>
    %27 = arith.addf %24, %26 : vector<8x16x8xf32>
    %cst_12 = arith.constant 0.000000e+00 : f32
    %28 = vector.broadcast %cst_12 : f32 to vector<8x16x8xf32>
    %29 = arith.maximumf %27, %28 : vector<8x16x8xf32>
    %c0_13 = arith.constant 0 : index
    %c0_14 = arith.constant 0 : index
    %c0_15 = arith.constant 0 : index
    %c0_16 = arith.constant 0 : index
    %30 = vector.load %arg14[%c0_13, %c0_14, %c0_15, %c0_16] : memref<1x8x16x32xf32, #tpu.memory_space<vmem>>, vector<1x8x16x8xf32>
    %31 = vector.shape_cast %30 : vector<1x8x16x8xf32> to vector<8x16x8xf32>
    %32 = vector.shape_cast %29 : vector<8x16x8xf32> to vector<1x8x16x8xf32>
    tpu.vector_store %arg14[%c0_13, %c0_14, %c0_15, %c0_16], %32 {strides = array<i32>} : memref<1x8x16x32xf32, #tpu.memory_space<vmem>>, vector<1x8x16x8xf32>,
    %c0_17 = arith.constant 0 : index
    %c0_18 = arith.constant 0 : index
    %33 = vector.load %arg6[%c0_17, %c0_18] : memref<2x8xf32, #tpu.memory_space<vmem>>, vector<2x8xf32>
    %c0_19 = arith.constant 0 : index
    %c0_20 = arith.constant 0 : index
    %34 = vector.load %arg10[%c0_19, %c0_20] : memref<1x8xf32, #tpu.memory_space<vmem>>, vector<1x8xf32>
    %c0_21 = arith.constant 0 : index
    %c0_22 = arith.constant 0 : index
    %35 = vector.load %arg11[%c0_21, %c0_22] : memref<1x8xf32, #tpu.memory_space<vmem>>, vector<1x8xf32>
    %36 = vector.extract_strided_slice %33 {offsets = [0, 0], sizes = [1, 8], strides = [1, 1]} : vector<2x8xf32> to vector<1x8xf32>
    %cst_23 = arith.constant 0.001953125 : f32
    %37 = vector.broadcast %cst_23 : f32 to vector<1x8xf32>
    %38 = arith.mulf %36, %37 : vector<1x8xf32>
    %39 = vector.extract_strided_slice %33 {offsets = [1, 0], sizes = [1, 8], strides = [1, 1]} : vector<2x8xf32> to vector<1x8xf32>
    %cst_24 = arith.constant 0.001953125 : f32
    %40 = vector.broadcast %cst_24 : f32 to vector<1x8xf32>
    %41 = arith.mulf %39, %40 : vector<1x8xf32>
    %42 = arith.mulf %38, %38 : vector<1x8xf32>
    %43 = arith.subf %41, %42 : vector<1x8xf32>
    %cst_25 = arith.constant 0.000000e+00 : f32
    %44 = vector.broadcast %cst_25 : f32 to vector<1x8xf32>
    %45 = arith.maximumf %43, %44 : vector<1x8xf32>
    %cst_26 = arith.constant 9.99999974E-6 : f32
    %46 = vector.broadcast %cst_26 : f32 to vector<1x8xf32>
    %47 = arith.addf %45, %46 : vector<1x8xf32>
    %48 = math.rsqrt %47 : vector<1x8xf32>
    %49 = arith.mulf %34, %48 : vector<1x8xf32>
    %50 = arith.mulf %38, %49 : vector<1x8xf32>
    %51 = arith.subf %35, %50 : vector<1x8xf32>
    %c0_27 = arith.constant 0 : index
    %c0_28 = arith.constant 0 : index
    %c0_29 = arith.constant 0 : index
    %c0_30 = arith.constant 0 : index
    %52 = vector.load %arg3[%c0_27, %c0_28, %c0_29, %c0_30] : memref<1x8x16x8xbf16, #tpu.memory_space<vmem>>, vector<1x8x16x8xbf16>
    %53 = vector.shape_cast %52 : vector<1x8x16x8xbf16> to vector<8x16x8xbf16>
    %54 = arith.extf %53 : vector<8x16x8xbf16> to vector<8x16x8xf32>
    %55 = vector.shape_cast %49 : vector<1x8xf32> to vector<1x1x8xf32>
    %56 = vector.broadcast %55 : vector<1x1x8xf32> to vector<8x16x8xf32>
    %57 = arith.mulf %54, %56 : vector<8x16x8xf32>
    %58 = vector.shape_cast %51 : vector<1x8xf32> to vector<1x1x8xf32>
    %59 = vector.broadcast %58 : vector<1x1x8xf32> to vector<8x16x8xf32>
    %60 = arith.addf %57, %59 : vector<8x16x8xf32>
    %cst_31 = arith.constant 0.000000e+00 : f32
    %61 = vector.broadcast %cst_31 : f32 to vector<8x16x8xf32>
    %62 = arith.maximumf %60, %61 : vector<8x16x8xf32>
    %c0_32 = arith.constant 0 : index
    %c0_33 = arith.constant 0 : index
    %c0_34 = arith.constant 0 : index
    %c8 = arith.constant 8 : index
    %63 = vector.load %arg14[%c0_32, %c0_33, %c0_34, %c8] : memref<1x8x16x32xf32, #tpu.memory_space<vmem>>, vector<1x8x16x8xf32>
    %64 = vector.shape_cast %63 : vector<1x8x16x8xf32> to vector<8x16x8xf32>
    %65 = vector.shape_cast %62 : vector<8x16x8xf32> to vector<1x8x16x8xf32>
    tpu.vector_store %arg14[%c0_32, %c0_33, %c0_34, %c8], %65 {strides = array<i32>} : memref<1x8x16x32xf32, #tpu.memory_space<vmem>>, vector<1x8x16x8xf32>,
    %c0_35 = arith.constant 0 : index
    %c0_36 = arith.constant 0 : index
    %66 = vector.load %arg7[%c0_35, %c0_36] : memref<2x8xf32, #tpu.memory_space<vmem>>, vector<2x8xf32>
    %c0_37 = arith.constant 0 : index
    %c0_38 = arith.constant 0 : index
    %67 = vector.load %arg12[%c0_37, %c0_38] : memref<1x8xf32, #tpu.memory_space<vmem>>, vector<1x8xf32>
    %c0_39 = arith.constant 0 : index
    %c0_40 = arith.constant 0 : index
    %68 = vector.load %arg13[%c0_39, %c0_40] : memref<1x8xf32, #tpu.memory_space<vmem>>, vector<1x8xf32>
    %69 = vector.extract_strided_slice %66 {offsets = [0, 0], sizes = [1, 8], strides = [1, 1]} : vector<2x8xf32> to vector<1x8xf32>
    %cst_41 = arith.constant 0.001953125 : f32
    %70 = vector.broadcast %cst_41 : f32 to vector<1x8xf32>
    %71 = arith.mulf %69, %70 : vector<1x8xf32>
    %72 = vector.extract_strided_slice %66 {offsets = [1, 0], sizes = [1, 8], strides = [1, 1]} : vector<2x8xf32> to vector<1x8xf32>
    %cst_42 = arith.constant 0.001953125 : f32
    %73 = vector.broadcast %cst_42 : f32 to vector<1x8xf32>
    %74 = arith.mulf %72, %73 : vector<1x8xf32>
    %75 = arith.mulf %71, %71 : vector<1x8xf32>
    %76 = arith.subf %74, %75 : vector<1x8xf32>
    %cst_43 = arith.constant 0.000000e+00 : f32
    %77 = vector.broadcast %cst_43 : f32 to vector<1x8xf32>
    %78 = arith.maximumf %76, %77 : vector<1x8xf32>
    %cst_44 = arith.constant 9.99999974E-6 : f32
    %79 = vector.broadcast %cst_44 : f32 to vector<1x8xf32>
    %80 = arith.addf %78, %79 : vector<1x8xf32>
    %81 = math.rsqrt %80 : vector<1x8xf32>
    %82 = arith.mulf %67, %81 : vector<1x8xf32>
    %83 = arith.mulf %71, %82 : vector<1x8xf32>
    %84 = arith.subf %68, %83 : vector<1x8xf32>
    %c0_45 = arith.constant 0 : index
    %c0_46 = arith.constant 0 : index
    %c0_47 = arith.constant 0 : index
    %c0_48 = arith.constant 0 : index
    %85 = vector.load %arg4[%c0_45, %c0_46, %c0_47, %c0_48] : memref<1x8x16x8xbf16, #tpu.memory_space<vmem>>, vector<1x8x16x8xbf16>
    %86 = vector.shape_cast %85 : vector<1x8x16x8xbf16> to vector<8x16x8xbf16>
    %87 = arith.extf %86 : vector<8x16x8xbf16> to vector<8x16x8xf32>
    %88 = vector.shape_cast %82 : vector<1x8xf32> to vector<1x1x8xf32>
    %89 = vector.broadcast %88 : vector<1x1x8xf32> to vector<8x16x8xf32>
    %90 = arith.mulf %87, %89 : vector<8x16x8xf32>
    %91 = vector.shape_cast %84 : vector<1x8xf32> to vector<1x1x8xf32>
    %92 = vector.broadcast %91 : vector<1x1x8xf32> to vector<8x16x8xf32>
    %93 = arith.addf %90, %92 : vector<8x16x8xf32>
    %cst_49 = arith.constant 0.000000e+00 : f32
    %94 = vector.broadcast %cst_49 : f32 to vector<8x16x8xf32>
    %95 = arith.maximumf %93, %94 : vector<8x16x8xf32>
    %c0_50 = arith.constant 0 : index
    %c0_51 = arith.constant 0 : index
    %c0_52 = arith.constant 0 : index
    %c16 = arith.constant 16 : index
    %96 = vector.load %arg14[%c0_50, %c0_51, %c0_52, %c16] : memref<1x8x16x32xf32, #tpu.memory_space<vmem>>, vector<1x8x16x8xf32>
    %97 = vector.shape_cast %96 : vector<1x8x16x8xf32> to vector<8x16x8xf32>
    %98 = vector.shape_cast %95 : vector<8x16x8xf32> to vector<1x8x16x8xf32>
    tpu.vector_store %arg14[%c0_50, %c0_51, %c0_52, %c16], %98 {strides = array<i32>} : memref<1x8x16x32xf32, #tpu.memory_space<vmem>>, vector<1x8x16x8xf32>,
    %c0_53 = arith.constant 0 : index
    %c8_54 = arith.constant 8 : index
    %99 = vector.load %arg5[%c0_53, %c8_54] : memref<2x16xf32, #tpu.memory_space<vmem>>, vector<2x8xf32>
    %c0_55 = arith.constant 0 : index
    %c8_56 = arith.constant 8 : index
    %100 = vector.load %arg8[%c0_55, %c8_56] : memref<1x16xf32, #tpu.memory_space<vmem>>, vector<1x8xf32>
    %c0_57 = arith.constant 0 : index
    %c8_58 = arith.constant 8 : index
    %101 = vector.load %arg9[%c0_57, %c8_58] : memref<1x16xf32, #tpu.memory_space<vmem>>, vector<1x8xf32>
    %102 = vector.extract_strided_slice %99 {offsets = [0, 0], sizes = [1, 8], strides = [1, 1]} : vector<2x8xf32> to vector<1x8xf32>
    %cst_59 = arith.constant 0.001953125 : f32
    %103 = vector.broadcast %cst_59 : f32 to vector<1x8xf32>
    %104 = arith.mulf %102, %103 : vector<1x8xf32>
    %105 = vector.extract_strided_slice %99 {offsets = [1, 0], sizes = [1, 8], strides = [1, 1]} : vector<2x8xf32> to vector<1x8xf32>
    %cst_60 = arith.constant 0.001953125 : f32
    %106 = vector.broadcast %cst_60 : f32 to vector<1x8xf32>
    %107 = arith.mulf %105, %106 : vector<1x8xf32>
    %108 = arith.mulf %104, %104 : vector<1x8xf32>
    %109 = arith.subf %107, %108 : vector<1x8xf32>
    %cst_61 = arith.constant 0.000000e+00 : f32
    %110 = vector.broadcast %cst_61 : f32 to vector<1x8xf32>
    %111 = arith.maximumf %109, %110 : vector<1x8xf32>
    %cst_62 = arith.constant 9.99999974E-6 : f32
    %112 = vector.broadcast %cst_62 : f32 to vector<1x8xf32>
    %113 = arith.addf %111, %112 : vector<1x8xf32>
    %114 = math.rsqrt %113 : vector<1x8xf32>
    %115 = arith.mulf %100, %114 : vector<1x8xf32>
    %116 = arith.mulf %104, %115 : vector<1x8xf32>
    %117 = arith.subf %101, %116 : vector<1x8xf32>
    %c0_63 = arith.constant 0 : index
    %c0_64 = arith.constant 0 : index
    %c0_65 = arith.constant 0 : index
    %c8_66 = arith.constant 8 : index
    %118 = vector.load %arg2[%c0_63, %c0_64, %c0_65, %c8_66] : memref<1x8x16x16xbf16, #tpu.memory_space<vmem>>, vector<1x8x16x8xbf16>
    %119 = vector.shape_cast %118 : vector<1x8x16x8xbf16> to vector<8x16x8xbf16>
    %120 = arith.extf %119 : vector<8x16x8xbf16> to vector<8x16x8xf32>
    %121 = vector.shape_cast %115 : vector<1x8xf32> to vector<1x1x8xf32>
    %122 = vector.broadcast %121 : vector<1x1x8xf32> to vector<8x16x8xf32>
    %123 = arith.mulf %120, %122 : vector<8x16x8xf32>
    %124 = vector.shape_cast %117 : vector<1x8xf32> to vector<1x1x8xf32>
    %125 = vector.broadcast %124 : vector<1x1x8xf32> to vector<8x16x8xf32>
    %126 = arith.addf %123, %125 : vector<8x16x8xf32>
    %cst_67 = arith.constant 0.000000e+00 : f32
    %127 = vector.broadcast %cst_67 : f32 to vector<8x16x8xf32>
    %128 = arith.maximumf %126, %127 : vector<8x16x8xf32>
    %c0_68 = arith.constant 0 : index
    %c0_69 = arith.constant 0 : index
    %c0_70 = arith.constant 0 : index
    %c24 = arith.constant 24 : index
    %129 = vector.load %arg14[%c0_68, %c0_69, %c0_70, %c24] : memref<1x8x16x32xf32, #tpu.memory_space<vmem>>, vector<1x8x16x8xf32>
    %130 = vector.shape_cast %129 : vector<1x8x16x8xf32> to vector<8x16x8xf32>
    %131 = vector.shape_cast %128 : vector<8x16x8xf32> to vector<1x8x16x8xf32>
    tpu.vector_store %arg14[%c0_68, %c0_69, %c0_70, %c24], %131 {strides = array<i32>} : memref<1x8x16x32xf32, #tpu.memory_space<vmem>>, vector<1x8x16x8xf32>,
    return
  }
  func.func @transform_0(%arg0: i32, %arg1: i32) -> (i32, i32, i32, i32) {
    %c0_i32 = arith.constant 0 : i32
    %c0_i32_0 = arith.constant 0 : i32
    %c0_i32_1 = arith.constant 0 : i32
    return %arg0, %arg1, %c0_i32, %c0_i32_0 : i32, i32, i32, i32
  }
  func.func @transform_1(%arg0: i32, %arg1: i32) -> (i32, i32, i32, i32) {
    %c0_i32 = arith.constant 0 : i32
    %c0_i32_0 = arith.constant 0 : i32
    %c0_i32_1 = arith.constant 0 : i32
    return %arg0, %arg1, %c0_i32, %c0_i32_0 : i32, i32, i32, i32
  }
  func.func @transform_2(%arg0: i32, %arg1: i32) -> (i32, i32, i32, i32) {
    %c0_i32 = arith.constant 0 : i32
    %c0_i32_0 = arith.constant 0 : i32
    %c0_i32_1 = arith.constant 0 : i32
    return %arg0, %arg1, %c0_i32, %c0_i32_0 : i32, i32, i32, i32
  }
  func.func @transform_3(%arg0: i32, %arg1: i32) -> (i32, i32) {
    %c0_i32 = arith.constant 0 : i32
    %c0_i32_0 = arith.constant 0 : i32
    %c0_i32_1 = arith.constant 0 : i32
    return %c0_i32, %c0_i32_0 : i32, i32
  }
  func.func @transform_4(%arg0: i32, %arg1: i32) -> (i32, i32) {
    %c0_i32 = arith.constant 0 : i32
    %c0_i32_0 = arith.constant 0 : i32
    %c0_i32_1 = arith.constant 0 : i32
    return %c0_i32, %c0_i32_0 : i32, i32
  }
  func.func @transform_5(%arg0: i32, %arg1: i32) -> (i32, i32) {
    %c0_i32 = arith.constant 0 : i32
    %c0_i32_0 = arith.constant 0 : i32
    %c0_i32_1 = arith.constant 0 : i32
    return %c0_i32, %c0_i32_0 : i32, i32
  }
  func.func @transform_6(%arg0: i32, %arg1: i32) -> (i32, i32) {
    %c0_i32 = arith.constant 0 : i32
    %c0_i32_0 = arith.constant 0 : i32
    %c0_i32_1 = arith.constant 0 : i32
    return %c0_i32, %c0_i32_0 : i32, i32
  }
  func.func @transform_7(%arg0: i32, %arg1: i32) -> (i32, i32) {
    %c0_i32 = arith.constant 0 : i32
    %c0_i32_0 = arith.constant 0 : i32
    %c0_i32_1 = arith.constant 0 : i32
    return %c0_i32, %c0_i32_0 : i32, i32
  }
  func.func @transform_8(%arg0: i32, %arg1: i32) -> (i32, i32) {
    %c0_i32 = arith.constant 0 : i32
    %c0_i32_0 = arith.constant 0 : i32
    %c0_i32_1 = arith.constant 0 : i32
    return %c0_i32, %c0_i32_0 : i32, i32
  }
  func.func @transform_9(%arg0: i32, %arg1: i32) -> (i32, i32) {
    %c0_i32 = arith.constant 0 : i32
    %c0_i32_0 = arith.constant 0 : i32
    %c0_i32_1 = arith.constant 0 : i32
    return %c0_i32, %c0_i32_0 : i32, i32
  }
  func.func @transform_10(%arg0: i32, %arg1: i32) -> (i32, i32) {
    %c0_i32 = arith.constant 0 : i32
    %c0_i32_0 = arith.constant 0 : i32
    %c0_i32_1 = arith.constant 0 : i32
    return %c0_i32, %c0_i32_0 : i32, i32
  }
  func.func @transform_11(%arg0: i32, %arg1: i32) -> (i32, i32) {
    %c0_i32 = arith.constant 0 : i32
    %c0_i32_0 = arith.constant 0 : i32
    %c0_i32_1 = arith.constant 0 : i32
    return %c0_i32, %c0_i32_0 : i32, i32
  }
  func.func @transform_12(%arg0: i32, %arg1: i32) -> (i32, i32, i32, i32) {
    %c0_i32 = arith.constant 0 : i32
    %c0_i32_0 = arith.constant 0 : i32
    %c0_i32_1 = arith.constant 0 : i32
    return %arg0, %arg1, %c0_i32, %c0_i32_0 : i32, i32, i32, i32
  }
}

</mosaic_0001>

<llo_original>
// kernel: inception_v3a_forward.7
$region0: #{inception_v3a_forward.7}
  #allocation0 [shape = 'u32[]', space=smem, size = 0x4, offset = 0x4, fixed_abs, tag = 'smem constant byte address 0x4 - core index']
  #allocation1 [shape = 'u32[144,128]{1,0:T(1,128)}', space=vmem, size = 0x12000, scoped, tag = 'internal scratch']
  %s0 = inlined_call_operand.vmem [shape: bf16[2,16,16,16], index: 0, kind: input, shape index: {}]
  %s1 = inlined_call_operand.vmem [shape: bf16[2,16,16,8], index: 1, kind: input, shape index: {}]
  %s2 = inlined_call_operand.vmem [shape: bf16[2,16,16,8], index: 2, kind: input, shape index: {}]
  %s3 = inlined_call_operand.vmem [shape: f32[2,16], index: 3, kind: input, shape index: {}]
  %s4 = inlined_call_operand.vmem [shape: f32[2,8], index: 4, kind: input, shape index: {}]
  %s5 = inlined_call_operand.vmem [shape: f32[2,8], index: 5, kind: input, shape index: {}]
  %s6 = inlined_call_operand.vmem [shape: f32[1,16], index: 6, kind: input, shape index: {}]
  %s7 = inlined_call_operand.vmem [shape: f32[1,16], index: 7, kind: input, shape index: {}]
  %s8 = inlined_call_operand.vmem [shape: f32[1,8], index: 8, kind: input, shape index: {}]
  %s9 = inlined_call_operand.vmem [shape: f32[1,8], index: 9, kind: input, shape index: {}]
  %s10 = inlined_call_operand.vmem [shape: f32[1,8], index: 10, kind: input, shape index: {}]
  %s11 = inlined_call_operand.vmem [shape: f32[1,8], index: 11, kind: input, shape index: {}]
  %s12 = inlined_call_operand.hbm [shape: f32[2,16,16,32], index: 12, kind: output, shape index: {}]
  %s13 = sld [smem:[#allocation0]]
  $region81: #{inception_v3a_forward.7} parent=0
    _
  %s15 = ssub.s32 1, %s13
  %s16 = scalar_select 0, %s15, %s13
  $region1: #{inception_v3a_forward.7} parent=0
    #allocation2 [shape = 'u8[131072]{0}', space=vmem, size = 0x20000, scoped, tag = 'output window, operand 0']
    #allocation3 [shape = 's32[2]{0}', space=sflag, size = 0x8, scoped, tag = 'scoped memory for inception_v3a_forward.7']
    %17 = vsyncpa [#allocation3], 0
    %s18 = scalar_lea.sflag [#allocation3], 1
    %19 = vsyncpa %s18, 0
    loop: start=0, step=1, limit=6
    $region2: #{inception_v3a_forward.7} parent=1 // loop_pre_header
      _
    $region3: #{inception_v3a_forward.7} parent=1 // loop_header
      %s21 = sphi 0, %s25
      %p22 = scmp.ge.s32.totalorder %s21, 6
      %s28 = sphi 0, %s40
      %s29 = sphi 0, %s36
      %s30 = sphi 0, %s28
      %s31 = sphi 0, %s29
      %s32 = sphi 0, %s30
      %s33 = sphi 0, %s31
      %s45 = sphi 0, %s47
      %s48 = sphi 0, %s45
      %s49 = sphi 0, %s48
      %s65 = sphi 0, %s49
      %s73 = sphi 0, %s75
      %s76 = sphi 0, %s73
      %s77 = sphi 0, %s76
      %s93 = sphi 0, %s77
      %s101 = sphi 0, %s103
      %s104 = sphi 0, %s101
      %s105 = sphi 0, %s104
      %s121 = sphi 0, %s105
      %s125 = sphi 0, %s125
      %s127 = sphi 0, %s125
      %s128 = sphi 0, %s127
      %s142 = sphi 0, %s128
      %s146 = sphi 0, %s146
      %s148 = sphi 0, %s146
      %s149 = sphi 0, %s148
      %s163 = sphi 0, %s149
      %s167 = sphi 0, %s167
      %s169 = sphi 0, %s167
      %s170 = sphi 0, %s169
      %s184 = sphi 0, %s170
      %s188 = sphi 0, %s188
      %s190 = sphi 0, %s188
      %s191 = sphi 0, %s190
      %s205 = sphi 0, %s191
      %s209 = sphi 0, %s209
      %s211 = sphi 0, %s209
      %s212 = sphi 0, %s211
      %s226 = sphi 0, %s212
      %s230 = sphi 0, %s230
      %s232 = sphi 0, %s230
      %s233 = sphi 0, %s232
      %s247 = sphi 0, %s233
      %s251 = sphi 0, %s251
      %s253 = sphi 0, %s251
      %s254 = sphi 0, %s253
      %s268 = sphi 0, %s254
      %s272 = sphi 0, %s272
      %s274 = sphi 0, %s272
      %s275 = sphi 0, %s274
      %s289 = sphi 0, %s275
      %s293 = sphi 0, %s293
      %s295 = sphi 0, %s293
      %s296 = sphi 0, %s295
      %s310 = sphi 0, %s296
      %s318 = sphi 0, %s320
      %s321 = sphi 0, %s318
      %s322 = sphi 0, %s321
      %s338 = sphi 0, %s322
    $region4: #{inception_v3a_forward.7} parent=1 // loop_header_branch
      %24 = sbr.rel (%p22) target = $region8
    $region5: #{inception_v3a_forward.7} parent=1 // loop_body
      %s26 = ssub.s32 %s21, 1
      %s27 = ssub.s32 %s21, 2
      %s34 = sadd.s32 1, %s29
      %p35 = scmp.ge.s32.totalorder %s34, 2
      %s36 = scalar_select %p35, 0, %s34
      %s37 = sadd.s32 1, %s28
      %s38 = scalar_select %p35, %s37, %s28
      %p39 = scmp.ge.s32.totalorder %s38, 2
      %s40 = scalar_select %p39, 0, %s38
      %s41 = ssub.s32 %s28, %s40
      %s42 = ssub.s32 %s29, %s36
      %s43 = sor.u32 %s41, %s42
      %p44 = scmp.eq.s32.totalorder %s43, 0
      %s46 = sadd.s32 %s45, 1
      %s47 = scalar_select %p44, %s45, %s46
      %p50 = pneg %p44
      %p51 = scmp.eq.s32.totalorder %s21, 3
      %p52 = por %p50, %p51
      %p53 = scmp.ne.s32.totalorder %s45, %s48
      %p54 = scmp.eq.s32.totalorder %s21, 0
      %p55 = por %p53, %p54
      %p56 = scmp.ne.s32.totalorder %s45, %s48
      %p57 = scmp.eq.s32.totalorder %s26, 3
      %p58 = por %p56, %p57
      %p59 = scmp.ne.s32.totalorder %s48, %s49
      %p60 = scmp.eq.s32.totalorder %s26, 0
      %p61 = por %p59, %p60
      %p62 = scmp.ne.s32.totalorder %s48, %s49
      %p63 = scmp.eq.s32.totalorder %s27, 3
      %p64 = por %p62, %p63
      %p66 = scmp.ne.s32.totalorder %s49, %s65
      %p67 = scmp.eq.s32.totalorder %s27, 0
      %p68 = por %p66, %p67
      %s69 = ssub.s32 %s28, %s40
      %s70 = ssub.s32 %s29, %s36
      %s71 = sor.u32 %s69, %s70
      %p72 = scmp.eq.s32.totalorder %s71, 0
      %s74 = sadd.s32 %s73, 1
      %s75 = scalar_select %p72, %s73, %s74
      %p78 = pneg %p72
      %p79 = scmp.eq.s32.totalorder %s21, 3
      %p80 = por %p78, %p79
      %p81 = scmp.ne.s32.totalorder %s73, %s76
      %p82 = scmp.eq.s32.totalorder %s21, 0
      %p83 = por %p81, %p82
      %p84 = scmp.ne.s32.totalorder %s73, %s76
      %p85 = scmp.eq.s32.totalorder %s26, 3
      %p86 = por %p84, %p85
      %p87 = scmp.ne.s32.totalorder %s76, %s77
      %p88 = scmp.eq.s32.totalorder %s26, 0
      %p89 = por %p87, %p88
      %p90 = scmp.ne.s32.totalorder %s76, %s77
      %p91 = scmp.eq.s32.totalorder %s27, 3
      %p92 = por %p90, %p91
      %p94 = scmp.ne.s32.totalorder %s77, %s93
      %p95 = scmp.eq.s32.totalorder %s27, 0
      %p96 = por %p94, %p95
      %s97 = ssub.s32 %s28, %s40
      %s98 = ssub.s32 %s29, %s36
      %s99 = sor.u32 %s97, %s98
      %p100 = scmp.eq.s32.totalorder %s99, 0
      %s102 = sadd.s32 %s101, 1
      %s103 = scalar_select %p100, %s101, %s102
      %p106 = pneg %p100
      %p107 = scmp.eq.s32.totalorder %s21, 3
      %p108 = por %p106, %p107
      %p109 = scmp.ne.s32.totalorder %s101, %s104
      %p110 = scmp.eq.s32.totalorder %s21, 0
      %p111 = por %p109, %p110
      %p112 = scmp.ne.s32.totalorder %s101, %s104
      %p113 = scmp.eq.s32.totalorder %s26, 3
      %p114 = por %p112, %p113
      %p115 = scmp.ne.s32.totalorder %s104, %s105
      %p116 = scmp.eq.s32.totalorder %s26, 0
      %p117 = por %p115, %p116
      %p118 = scmp.ne.s32.totalorder %s104, %s105
      %p119 = scmp.eq.s32.totalorder %s27, 3
      %p120 = por %p118, %p119
      %p122 = scmp.ne.s32.totalorder %s105, %s121
      %p123 = scmp.eq.s32.totalorder %s27, 0
      %p124 = por %p122, %p123
      %s126 = sadd.s32 %s125, 1
      %p129 = scmp.eq.s32.totalorder %s21, 3
      %p130 = scmp.ne.s32.totalorder %s125, %s127
      %p131 = scmp.eq.s32.totalorder %s21, 0
      %p132 = por %p130, %p131
      %p133 = scmp.ne.s32.totalorder %s125, %s127
      %p134 = scmp.eq.s32.totalorder %s26, 3
      %p135 = por %p133, %p134
      %p136 = scmp.ne.s32.totalorder %s127, %s128
      %p137 = scmp.eq.s32.totalorder %s26, 0
      %p138 = por %p136, %p137
      %p139 = scmp.ne.s32.totalorder %s127, %s128
      %p140 = scmp.eq.s32.totalorder %s27, 3
      %p141 = por %p139, %p140
      %p143 = scmp.ne.s32.totalorder %s128, %s142
      %p144 = scmp.eq.s32.totalorder %s27, 0
      %p145 = por %p143, %p144
      %s147 = sadd.s32 %s146, 1
      %p150 = scmp.eq.s32.totalorder %s21, 3
      %p151 = scmp.ne.s32.totalorder %s146, %s148
      %p152 = scmp.eq.s32.totalorder %s21, 0
      %p153 = por %p151, %p152
      %p154 = scmp.ne.s32.totalorder %s146, %s148
      %p155 = scmp.eq.s32.totalorder %s26, 3
      %p156 = por %p154, %p155
      %p157 = scmp.ne.s32.totalorder %s148, %s149
      %p158 = scmp.eq.s32.totalorder %s26, 0
      %p159 = por %p157, %p158
      %p160 = scmp.ne.s32.totalorder %s148, %s149
      %p161 = scmp.eq.s32.totalorder %s27, 3
      %p162 = por %p160, %p161
      %p164 = scmp.ne.s32.totalorder %s149, %s163
      %p165 = scmp.eq.s32.totalorder %s27, 0
      %p166 = por %p164, %p165
      %s168 = sadd.s32 %s167, 1
      %p171 = scmp.eq.s32.totalorder %s21, 3
      %p172 = scmp.ne.s32.totalorder %s167, %s169
      %p173 = scmp.eq.s32.totalorder %s21, 0
      %p174 = por %p172, %p173
      %p175 = scmp.ne.s32.totalorder %s167, %s169
      %p176 = scmp.eq.s32.totalorder %s26, 3
      %p177 = por %p175, %p176
      %p178 = scmp.ne.s32.totalorder %s169, %s170
      %p179 = scmp.eq.s32.totalorder %s26, 0
      %p180 = por %p178, %p179
      %p181 = scmp.ne.s32.totalorder %s169, %s170
      %p182 = scmp.eq.s32.totalorder %s27, 3
      %p183 = por %p181, %p182
      %p185 = scmp.ne.s32.totalorder %s170, %s184
      %p186 = scmp.eq.s32.totalorder %s27, 0
      %p187 = por %p185, %p186
      %s189 = sadd.s32 %s188, 1
      %p192 = scmp.eq.s32.totalorder %s21, 3
      %p193 = scmp.ne.s32.totalorder %s188, %s190
      %p194 = scmp.eq.s32.totalorder %s21, 0
      %p195 = por %p193, %p194
      %p196 = scmp.ne.s32.totalorder %s188, %s190
      %p197 = scmp.eq.s32.totalorder %s26, 3
      %p198 = por %p196, %p197
      %p199 = scmp.ne.s32.totalorder %s190, %s191
      %p200 = scmp.eq.s32.totalorder %s26, 0
      %p201 = por %p199, %p200
      %p202 = scmp.ne.s32.totalorder %s190, %s191
      %p203 = scmp.eq.s32.totalorder %s27, 3
      %p204 = por %p202, %p203
      %p206 = scmp.ne.s32.totalorder %s191, %s205
      %p207 = scmp.eq.s32.totalorder %s27, 0
      %p208 = por %p206, %p207
      %s210 = sadd.s32 %s209, 1
      %p213 = scmp.eq.s32.totalorder %s21, 3
      %p214 = scmp.ne.s32.totalorder %s209, %s211
      %p215 = scmp.eq.s32.totalorder %s21, 0
      %p216 = por %p214, %p215
      %p217 = scmp.ne.s32.totalorder %s209, %s211
      %p218 = scmp.eq.s32.totalorder %s26, 3
      %p219 = por %p217, %p218
      %p220 = scmp.ne.s32.totalorder %s211, %s212
      %p221 = scmp.eq.s32.totalorder %s26, 0
      %p222 = por %p220, %p221
      %p223 = scmp.ne.s32.totalorder %s211, %s212
      %p224 = scmp.eq.s32.totalorder %s27, 3
      %p225 = por %p223, %p224
      %p227 = scmp.ne.s32.totalorder %s212, %s226
      %p228 = scmp.eq.s32.totalorder %s27, 0
      %p229 = por %p227, %p228
      %s231 = sadd.s32 %s230, 1
      %p234 = scmp.eq.s32.totalorder %s21, 3
      %p235 = scmp.ne.s32.totalorder %s230, %s232
      %p236 = scmp.eq.s32.totalorder %s21, 0
      %p237 = por %p235, %p236
      %p238 = scmp.ne.s32.totalorder %s230, %s232
      %p239 = scmp.eq.s32.totalorder %s26, 3
      %p240 = por %p238, %p239
      %p241 = scmp.ne.s32.totalorder %s232, %s233
      %p242 = scmp.eq.s32.totalorder %s26, 0
      %p243 = por %p241, %p242
      %p244 = scmp.ne.s32.totalorder %s232, %s233
      %p245 = scmp.eq.s32.totalorder %s27, 3
      %p246 = por %p244, %p245
      %p248 = scmp.ne.s32.totalorder %s233, %s247
      %p249 = scmp.eq.s32.totalorder %s27, 0
      %p250 = por %p248, %p249
      %s252 = sadd.s32 %s251, 1
      %p255 = scmp.eq.s32.totalorder %s21, 3
      %p256 = scmp.ne.s32.totalorder %s251, %s253
      %p257 = scmp.eq.s32.totalorder %s21, 0
      %p258 = por %p256, %p257
      %p259 = scmp.ne.s32.totalorder %s251, %s253
      %p260 = scmp.eq.s32.totalorder %s26, 3
      %p261 = por %p259, %p260
      %p262 = scmp.ne.s32.totalorder %s253, %s254
      %p263 = scmp.eq.s32.totalorder %s26, 0
      %p264 = por %p262, %p263
      %p265 = scmp.ne.s32.totalorder %s253, %s254
      %p266 = scmp.eq.s32.totalorder %s27, 3
      %p267 = por %p265, %p266
      %p269 = scmp.ne.s32.totalorder %s254, %s268
      %p270 = scmp.eq.s32.totalorder %s27, 0
      %p271 = por %p269, %p270
      %s273 = sadd.s32 %s272, 1
      %p276 = scmp.eq.s32.totalorder %s21, 3
      %p277 = scmp.ne.s32.totalorder %s272, %s274
      %p278 = scmp.eq.s32.totalorder %s21, 0
      %p279 = por %p277, %p278
      %p280 = scmp.ne.s32.totalorder %s272, %s274
      %p281 = scmp.eq.s32.totalorder %s26, 3
      %p282 = por %p280, %p281
      %p283 = scmp.ne.s32.totalorder %s274, %s275
      %p284 = scmp.eq.s32.totalorder %s26, 0
      %p285 = por %p283, %p284
      %p286 = scmp.ne.s32.totalorder %s274, %s275
      %p287 = scmp.eq.s32.totalorder %s27, 3
      %p288 = por %p286, %p287
      %p290 = scmp.ne.s32.totalorder %s275, %s289
      %p291 = scmp.eq.s32.totalorder %s27, 0
      %p292 = por %p290, %p291
      %s294 = sadd.s32 %s293, 1
      %p297 = scmp.eq.s32.totalorder %s21, 3
      %p298 = scmp.ne.s32.totalorder %s293, %s295
      %p299 = scmp.eq.s32.totalorder %s21, 0
      %p300 = por %p298, %p299
      %p301 = scmp.ne.s32.totalorder %s293, %s295
      %p302 = scmp.eq.s32.totalorder %s26, 3
      %p303 = por %p301, %p302
      %p304 = scmp.ne.s32.totalorder %s295, %s296
      %p305 = scmp.eq.s32.totalorder %s26, 0
      %p306 = por %p304, %p305
      %p307 = scmp.ne.s32.totalorder %s295, %s296
      %p308 = scmp.eq.s32.totalorder %s27, 3
      %p309 = por %p307, %p308
      %p311 = scmp.ne.s32.totalorder %s296, %s310
      %p312 = scmp.eq.s32.totalorder %s27, 0
      %p313 = por %p311, %p312
      %s314 = ssub.s32 %s28, %s40
      %s315 = ssub.s32 %s29, %s36
      %s316 = sor.u32 %s314, %s315
      %p317 = scmp.eq.s32.totalorder %s316, 0
      %s319 = sadd.s32 %s318, 1
      %s320 = scalar_select %p317, %s318, %s319
      %p323 = pneg %p317
      %p324 = scmp.eq.s32.totalorder %s21, 3
      %p325 = por %p323, %p324
      %p326 = scmp.ne.s32.totalorder %s318, %s321
      %p327 = scmp.eq.s32.totalorder %s21, 0
      %p328 = por %p326, %p327
      %p329 = scmp.ne.s32.totalorder %s318, %s321
      %p330 = scmp.eq.s32.totalorder %s26, 3
      %p331 = por %p329, %p330
      %p332 = scmp.ne.s32.totalorder %s321, %s322
      %p333 = scmp.eq.s32.totalorder %s26, 0
      %p334 = por %p332, %p333
      %p335 = scmp.ne.s32.totalorder %s321, %s322
      %p336 = scmp.eq.s32.totalorder %s27, 3
      %p337 = por %p335, %p336
      %p339 = scmp.ne.s32.totalorder %s322, %s338
      %p340 = scmp.eq.s32.totalorder %s27, 0
      %p341 = por %p339, %p340
      %p342 = scmp.le.s32.totalorder 1, %s21
      %p343 = scmp.lt.s32.totalorder %s21, 5
      %p344 = pnand %p342, %p343
      %p345 = pneg %p344
      // Predicated region
      $region9: #{inception_v3a_forward.7} parent=5 // pred_check
        _
      $region10: #{inception_v3a_forward.7} parent=5 // pred_check_branch
        %347 = sbr.rel (%p344) target = $region12
      $region11: #{inception_v3a_forward.7} parent=5 // pred_region
        %s348 = ssub.s32 %s21, 1
        // Predicated region
        $region13: #{inception_v3a_forward.7} parent=11 // pred_check
          %p349 = pneg %p138
        $region14: #{inception_v3a_forward.7} parent=11 // pred_check_branch
          %351 = sbr.rel (%p349) target = $region16
        $region15: #{inception_v3a_forward.7} parent=11 // pred_region
          _
        $region16: #{inception_v3a_forward.7} parent=11 // pred_fallthru
          _
        // Predicated region
        $region17: #{inception_v3a_forward.7} parent=11 // pred_check
          %p352 = pneg %p159
        $region18: #{inception_v3a_forward.7} parent=11 // pred_check_branch
          %354 = sbr.rel (%p352) target = $region20
        $region19: #{inception_v3a_forward.7} parent=11 // pred_region
          _
        $region20: #{inception_v3a_forward.7} parent=11 // pred_fallthru
          _
        // Predicated region
        $region21: #{inception_v3a_forward.7} parent=11 // pred_check
          %p355 = pneg %p180
        $region22: #{inception_v3a_forward.7} parent=11 // pred_check_branch
          %357 = sbr.rel (%p355) target = $region24
        $region23: #{inception_v3a_forward.7} parent=11 // pred_region
          _
        $region24: #{inception_v3a_forward.7} parent=11 // pred_fallthru
          _
        // Predicated region
        $region25: #{inception_v3a_forward.7} parent=11 // pred_check
          %p358 = pneg %p201
        $region26: #{inception_v3a_forward.7} parent=11 // pred_check_branch
          %360 = sbr.rel (%p358) target = $region28
        $region27: #{inception_v3a_forward.7} parent=11 // pred_region
          _
        $region28: #{inception_v3a_forward.7} parent=11 // pred_fallthru
          _
        // Predicated region
        $region29: #{inception_v3a_forward.7} parent=11 // pred_check
          %p361 = pneg %p222
        $region30: #{inception_v3a_forward.7} parent=11 // pred_check_branch
          %363 = sbr.rel (%p361) target = $region32
        $region31: #{inception_v3a_forward.7} parent=11 // pred_region
          _
        $region32: #{inception_v3a_forward.7} parent=11 // pred_fallthru
          _
        // Predicated region
        $region33: #{inception_v3a_forward.7} parent=11 // pred_check
          %p364 = pneg %p243
        $region34: #{inception_v3a_forward.7} parent=11 // pred_check_branch
          %366 = sbr.rel (%p364) target = $region36
        $region35: #{inception_v3a_forward.7} parent=11 // pred_region
          _
        $region36: #{inception_v3a_forward.7} parent=11 // pred_fallthru
          _
        // Predicated region
        $region37: #{inception_v3a_forward.7} parent=11 // pred_check
          %p367 = pneg %p264
        $region38: #{inception_v3a_forward.7} parent=11 // pred_check_branch
          %369 = sbr.rel (%p367) target = $region40
        $region39: #{inception_v3a_forward.7} parent=11 // pred_region
          _
        $region40: #{inception_v3a_forward.7} parent=11 // pred_fallthru
          _
        // Predicated region
        $region41: #{inception_v3a_forward.7} parent=11 // pred_check
          %p370 = pneg %p285
        $region42: #{inception_v3a_forward.7} parent=11 // pred_check_branch
          %372 = sbr.rel (%p370) target = $region44
        $region43: #{inception_v3a_forward.7} parent=11 // pred_region
          _
        $region44: #{inception_v3a_forward.7} parent=11 // pred_fallthru
          _
        // Predicated region
        $region45: #{inception_v3a_forward.7} parent=11 // pred_check
          %p373 = pneg %p306
        $region46: #{inception_v3a_forward.7} parent=11 // pred_check_branch
          %375 = sbr.rel (%p373) target = $region48
        $region47: #{inception_v3a_forward.7} parent=11 // pred_region
          _
        $region48: #{inception_v3a_forward.7} parent=11 // pred_fallthru
          _
      $region12: #{inception_v3a_forward.7} parent=5 // pred_fallthru
        _
      %p376 = scmp.lt.s32.totalorder %s21, 4
      // Predicated region
      $region49: #{inception_v3a_forward.7} parent=5 // pred_check
        %p377 = pneg %p376
      $region50: #{inception_v3a_forward.7} parent=5 // pred_check_branch
        %379 = sbr.rel (%p377) target = $region52
      $region51: #{inception_v3a_forward.7} parent=5 // pred_region
        // Predicated region
        $region53: #{inception_v3a_forward.7} parent=51 // pred_check
          %p380 = pneg %p55
        $region54: #{inception_v3a_forward.7} parent=51 // pred_check_branch
          %382 = sbr.rel (%p380) target = $region56
        $region55: #{inception_v3a_forward.7} parent=51 // pred_region
          %s383 = smul.u32 8, %s29
          %p384 = scmp.lt.s32.totalorder %s28, 1
          %s385 = scalar_select %p384, %s28, 1
          %p386 = scmp.lt.s32.totalorder %s383, 15
          %s387 = scalar_select %p386, %s383, 15
          %s388 = smul.addr %s387, 2
          %s389 = smul.addr %s385, 32
          %s390 = sadd.s32 %s388, %s389
          %s391 = smul.addr %s390, 4
          %s392 = scalar_lea.vmem %s0, %s391
          %s393 = smul.u32 8, %s29
        $region56: #{inception_v3a_forward.7} parent=51 // pred_fallthru
          _
        // Predicated region
        $region57: #{inception_v3a_forward.7} parent=51 // pred_check
          %p394 = pneg %p83
        $region58: #{inception_v3a_forward.7} parent=51 // pred_check_branch
          %396 = sbr.rel (%p394) target = $region60
        $region59: #{inception_v3a_forward.7} parent=51 // pred_region
          %s397 = smul.u32 8, %s29
          %p398 = scmp.lt.s32.totalorder %s28, 1
          %s399 = scalar_select %p398, %s28, 1
          %p400 = scmp.lt.s32.totalorder %s397, 15
          %s401 = scalar_select %p400, %s397, 15
          %s402 = smul.addr %s401, 2
          %s403 = smul.addr %s399, 32
          %s404 = sadd.s32 %s402, %s403
          %s405 = smul.addr %s404, 4
          %s406 = scalar_lea.vmem %s1, %s405
          %s407 = smul.u32 8, %s29
        $region60: #{inception_v3a_forward.7} parent=51 // pred_fallthru
          _
        // Predicated region
        $region61: #{inception_v3a_forward.7} parent=51 // pred_check
          %p408 = pneg %p111
        $region62: #{inception_v3a_forward.7} parent=51 // pred_check_branch
          %410 = sbr.rel (%p408) target = $region64
        $region63: #{inception_v3a_forward.7} parent=51 // pred_region
          %s411 = smul.u32 8, %s29
          %p412 = scmp.lt.s32.totalorder %s28, 1
          %s413 = scalar_select %p412, %s28, 1
          %p414 = scmp.lt.s32.totalorder %s411, 15
          %s415 = scalar_select %p414, %s411, 15
          %s416 = smul.addr %s415, 2
          %s417 = smul.addr %s413, 32
          %s418 = sadd.s32 %s416, %s417
          %s419 = smul.addr %s418, 4
          %s420 = scalar_lea.vmem %s2, %s419
          %s421 = smul.u32 8, %s29
        $region64: #{inception_v3a_forward.7} parent=51 // pred_fallthru
          _
      $region52: #{inception_v3a_forward.7} parent=5 // pred_fallthru
        _
      %p422 = scmp.le.s32.totalorder 1, %s21
      %p423 = scmp.lt.s32.totalorder %s21, 5
      %p424 = pnand %p422, %p423
      %p425 = pneg %p424
      // Predicated region
      $region65: #{inception_v3a_forward.7} parent=5 // pred_check
        _
      $region66: #{inception_v3a_forward.7} parent=5 // pred_check_branch
        %427 = sbr.rel (%p424) target = $region68
      $region67: #{inception_v3a_forward.7} parent=5 // pred_region
        %s428 = ssub.s32 %s21, 1
        %s429 = smul.u32 8, %s31
        %p430 = scmp.lt.s32.totalorder %s30, 1
        %s431 = scalar_select %p430, %s30, 1
        %p432 = scmp.lt.s32.totalorder %s429, 15
        %s433 = scalar_select %p432, %s429, 15
        %s434 = smul.addr %s433, 2
        %s435 = smul.addr %s431, 32
        %s436 = sadd.s32 %s434, %s435
        %s437 = smul.addr %s436, 4
        %s438 = scalar_lea.vmem %s0, %s437
        %p439 = pneg %p61
        %p440 = pneg %p58
        %s441 = smul.u32 8, %s31
        %p442 = scmp.lt.s32.totalorder %s30, 1
        %s443 = scalar_select %p442, %s30, 1
        %p444 = scmp.lt.s32.totalorder %s441, 15
        %s445 = scalar_select %p444, %s441, 15
        %s446 = smul.addr %s445, 2
        %s447 = smul.addr %s443, 32
        %s448 = sadd.s32 %s446, %s447
        %s449 = smul.addr %s448, 4
        %s450 = scalar_lea.vmem %s1, %s449
        %p451 = pneg %p89
        %p452 = pneg %p86
        %s453 = smul.u32 8, %s31
        %p454 = scmp.lt.s32.totalorder %s30, 1
        %s455 = scalar_select %p454, %s30, 1
        %p456 = scmp.lt.s32.totalorder %s453, 15
        %s457 = scalar_select %p456, %s453, 15
        %s458 = smul.addr %s457, 2
        %s459 = smul.addr %s455, 32
        %s460 = sadd.s32 %s458, %s459
        %s461 = smul.addr %s460, 4
        %s462 = scalar_lea.vmem %s2, %s461
        %p463 = pneg %p117
        %p464 = pneg %p114
        %p465 = pneg %p138
        %p466 = pneg %p135
        %p467 = pneg %p159
        %p468 = pneg %p156
        %p469 = pneg %p180
        %p470 = pneg %p177
        %p471 = pneg %p201
        %p472 = pneg %p198
        %p473 = pneg %p222
        %p474 = pneg %p219
        %p475 = pneg %p243
        %p476 = pneg %p240
        %p477 = pneg %p264
        %p478 = pneg %p261
        %p479 = pneg %p285
        %p480 = pneg %p282
        %p481 = pneg %p306
        %p482 = pneg %p303
        %p483 = pneg %p334
        %p484 = pneg %p331
        %s485 = sand.u32 %s321, 1
        %s486 = scalar_lea.sflag [#allocation3], %s485
        %s487 = sand.u32 %s321, 1
        %s488 = smul.addr %s487, 128
        %s489 = scalar_lea.vmem [#allocation2], %s488
        %s490 = smul.u32 8, %s31
        %p491 = scmp.lt.s32.totalorder %s30, 1
        %s492 = scalar_select %p491, %s30, 1
        %p493 = scmp.lt.s32.totalorder %s490, 15
        %s494 = scalar_select %p493, %s490, 15
        %s495 = smul.addr %s494, 2
        %s496 = smul.addr %s492, 32
        %s497 = sadd.s32 %s495, %s496
        %s498 = smul.addr %s497, 4
        %s499 = scalar_lea.vmem %s0, %s498
        %s500 = smul.u32 8, %s31
        %s501 = smul.u32 8, %s31
        %p502 = scmp.lt.s32.totalorder %s30, 1
        %s503 = scalar_select %p502, %s30, 1
        %p504 = scmp.lt.s32.totalorder %s501, 15
        %s505 = scalar_select %p504, %s501, 15
        %s506 = smul.addr %s505, 2
        %s507 = smul.addr %s503, 32
        %s508 = sadd.s32 %s506, %s507
        %s509 = smul.addr %s508, 4
        %s510 = scalar_lea.vmem %s1, %s509
        %s511 = smul.u32 8, %s31
        %s512 = smul.u32 8, %s31
        %p513 = scmp.lt.s32.totalorder %s30, 1
        %s514 = scalar_select %p513, %s30, 1
        %p515 = scmp.lt.s32.totalorder %s512, 15
        %s516 = scalar_select %p515, %s512, 15
        %s517 = smul.addr %s516, 2
        %s518 = smul.addr %s514, 32
        %s519 = sadd.s32 %s517, %s518
        %s520 = smul.addr %s519, 4
        %s521 = scalar_lea.vmem %s2, %s520
        %s522 = smul.u32 8, %s31
        %s523 = smul.u32 8, %s31
        %v524 = vld [vmem:[%s3] sm:$0x3]
        %v525 = vld [vmem:[%s6] sm:$0x1]
        %v526 = vld [vmem:[%s7] sm:$0x1]
        %v527 = vmul.f32 %v524, 0.001953125
        %v528 = vmul.f32 %v527, %v527
        %v530 = vrot.slane %v528, 7
        %v532 = vsub.f32 %v527, %v530
        %v533 = vmax.f32 %v532, 0.0
        %v534 = vadd.f32 %v533, 1e-05
        %v535 = vrsqrt.pop %v534
        %v538 = vunpack.c.l.s4 1966171168
        %v539 = vunpack.c.0.s8 %v538
        %v540 = vlaneseq
        %v541 = vshrl.u32 %v540, 7
        %v542 = vsub.s32 %v539, %v541
        %v543 = vrot.slane %v535, %v542
        %v544 = vcombine.high %v543, %v543
        %v546 = vunpack.c.l.s4 1966171168
        %v547 = vunpack.c.0.s8 %v546
        %v548 = vlaneseq
        %v549 = vshrl.u32 %v548, 7
        %v550 = vsub.s32 %v547, %v549
        %v551 = vrot.slane %v544, %v550
        %v553 = vmul.f32 %v525, %v551
        %v554 = vmul.f32 %v527, %v553
        %v555 = vsub.f32 %v526, %v554
        %v556 = vld [vmem:[%s499] sm:$0xf]
        %v557 = vld [vmem:[%s499 + $0x4] sm:$0xf]
        %v558 = vld [vmem:[%s499 + $0x8] sm:$0xf]
        %v559 = vld [vmem:[%s499 + $0xc] sm:$0xf]
        %v560 = vld [vmem:[%s499 + $0x10] sm:$0xf]
        %v561 = vld [vmem:[%s499 + $0x14] sm:$0xf]
        %v562 = vld [vmem:[%s499 + $0x18] sm:$0xf]
        %v563 = vld [vmem:[%s499 + $0x1c] sm:$0xf]
        %v564 = vld [vmem:[%s499 + $0x20] sm:$0xf]
        %v565 = vld [vmem:[%s499 + $0x24] sm:$0xf]
        %v566 = vld [vmem:[%s499 + $0x28] sm:$0xf]
        %v567 = vld [vmem:[%s499 + $0x2c] sm:$0xf]
        %v568 = vld [vmem:[%s499 + $0x30] sm:$0xf]
        %v569 = vld [vmem:[%s499 + $0x34] sm:$0xf]
        %v570 = vld [vmem:[%s499 + $0x38] sm:$0xf]
        %v571 = vld [vmem:[%s499 + $0x3c] sm:$0xf]
        %v572 = vunpack.c.l.bf16 %v556
        %v573 = vunpack.c.l.bf16 %v557
        %v574 = vunpack.c.l.bf16 %v558
        %v575 = vunpack.c.l.bf16 %v559
        %v576 = vunpack.c.l.bf16 %v560
        %v577 = vunpack.c.l.bf16 %v561
        %v578 = vunpack.c.l.bf16 %v562
        %v579 = vunpack.c.l.bf16 %v563
        %v580 = vunpack.c.l.bf16 %v564
        %v581 = vunpack.c.l.bf16 %v565
        %v582 = vunpack.c.l.bf16 %v566
        %v583 = vunpack.c.l.bf16 %v567
        %v584 = vunpack.c.l.bf16 %v568
        %v585 = vunpack.c.l.bf16 %v569
        %v586 = vunpack.c.l.bf16 %v570
        %v587 = vunpack.c.l.bf16 %v571
        %v589 = vlaneseq
        %v590 = vshrl.u32 %v589, 7
        %v591 = vsub.s32 0, %v590
        %v592 = vrot.slane %v553, %v591
        %v594 = vmul.f32 %v572, %v592
        %v595 = vmul.f32 %v573, %v592
        %v596 = vmul.f32 %v574, %v592
        %v597 = vmul.f32 %v575, %v592
        %v598 = vmul.f32 %v576, %v592
        %v599 = vmul.f32 %v577, %v592
        %v600 = vmul.f32 %v578, %v592
        %v601 = vmul.f32 %v579, %v592
        %v602 = vmul.f32 %v580, %v592
        %v603 = vmul.f32 %v581, %v592
        %v604 = vmul.f32 %v582, %v592
        %v605 = vmul.f32 %v583, %v592
        %v606 = vmul.f32 %v584, %v592
        %v607 = vmul.f32 %v585, %v592
        %v608 = vmul.f32 %v586, %v592
        %v609 = vmul.f32 %v587, %v592
        %v611 = vlaneseq
        %v612 = vshrl.u32 %v611, 7
        %v613 = vsub.s32 0, %v612
        %v614 = vrot.slane %v555, %v613
        %v616 = vadd.f32 %v594, %v614
        %v617 = vadd.f32 %v595, %v614
        %v618 = vadd.f32 %v596, %v614
        %v619 = vadd.f32 %v597, %v614
        %v620 = vadd.f32 %v598, %v614
        %v621 = vadd.f32 %v599, %v614
        %v622 = vadd.f32 %v600, %v614
        %v623 = vadd.f32 %v601, %v614
        %v624 = vadd.f32 %v602, %v614
        %v625 = vadd.f32 %v603, %v614
        %v626 = vadd.f32 %v604, %v614
        %v627 = vadd.f32 %v605, %v614
        %v628 = vadd.f32 %v606, %v614
        %v629 = vadd.f32 %v607, %v614
        %v630 = vadd.f32 %v608, %v614
        %v631 = vadd.f32 %v609, %v614
        %v632 = vmax.f32 %v616, 0.0
        %v633 = vmax.f32 %v617, 0.0
        %v634 = vmax.f32 %v618, 0.0
        %v635 = vmax.f32 %v619, 0.0
        %v636 = vmax.f32 %v620, 0.0
        %v637 = vmax.f32 %v621, 0.0
        %v638 = vmax.f32 %v622, 0.0
        %v639 = vmax.f32 %v623, 0.0
        %v640 = vmax.f32 %v624, 0.0
        %v641 = vmax.f32 %v625, 0.0
        %v642 = vmax.f32 %v626, 0.0
        %v643 = vmax.f32 %v627, 0.0
        %v644 = vmax.f32 %v628, 0.0
        %v645 = vmax.f32 %v629, 0.0
        %v646 = vmax.f32 %v630, 0.0
        %v647 = vmax.f32 %v631, 0.0
        %vm648 = vcmask 64512
        %649 = vst.msk [vmem:[%s489] sm:$0xff] %vm648, %v632
        %650 = vst.msk [vmem:[%s489 + $0x8] sm:$0xff] %vm648, %v633
        %651 = vst.msk [vmem:[%s489 + $0x10] sm:$0xff] %vm648, %v634
        %652 = vst.msk [vmem:[%s489 + $0x18] sm:$0xff] %vm648, %v635
        %653 = vst.msk [vmem:[%s489 + $0x20] sm:$0xff] %vm648, %v636
        %654 = vst.msk [vmem:[%s489 + $0x28] sm:$0xff] %vm648, %v637
        %655 = vst.msk [vmem:[%s489 + $0x30] sm:$0xff] %vm648, %v638
        %656 = vst.msk [vmem:[%s489 + $0x38] sm:$0xff] %vm648, %v639
        %657 = vst.msk [vmem:[%s489 + $0x40] sm:$0xff] %vm648, %v640
        %658 = vst.msk [vmem:[%s489 + $0x48] sm:$0xff] %vm648, %v641
        %659 = vst.msk [vmem:[%s489 + $0x50] sm:$0xff] %vm648, %v642
        %660 = vst.msk [vmem:[%s489 + $0x58] sm:$0xff] %vm648, %v643
        %661 = vst.msk [vmem:[%s489 + $0x60] sm:$0xff] %vm648, %v644
        %662 = vst.msk [vmem:[%s489 + $0x68] sm:$0xff] %vm648, %v645
        %663 = vst.msk [vmem:[%s489 + $0x70] sm:$0xff] %vm648, %v646
        %664 = vst.msk [vmem:[%s489 + $0x78] sm:$0xff] %vm648, %v647
        %v665 = vld [vmem:[%s4] sm:$0x3]
        %v666 = vld [vmem:[%s8] sm:$0x1]
        %v667 = vld [vmem:[%s9] sm:$0x1]
        %v668 = vmul.f32 %v665, 0.001953125
        %v669 = vmul.f32 %v668, %v668
        %v671 = vrot.slane %v669, 7
        %v673 = vsub.f32 %v668, %v671
        %v674 = vmax.f32 %v673, 0.0
        %v675 = vadd.f32 %v674, 1e-05
        %v676 = vrsqrt.pop %v675
        %v679 = vunpack.c.l.s4 1966171168
        %v680 = vunpack.c.0.s8 %v679
        %v681 = vlaneseq
        %v682 = vshrl.u32 %v681, 7
        %v683 = vsub.s32 %v680, %v682
        %v684 = vrot.slane %v676, %v683
        %v685 = vcombine.high %v684, %v684
        %v687 = vunpack.c.l.s4 1966171168
        %v688 = vunpack.c.0.s8 %v687
        %v689 = vlaneseq
        %v690 = vshrl.u32 %v689, 7
        %v691 = vsub.s32 %v688, %v690
        %v692 = vrot.slane %v685, %v691
        %v694 = vmul.f32 %v666, %v692
        %v695 = vmul.f32 %v668, %v694
        %v696 = vsub.f32 %v667, %v695
        %v697 = vld [vmem:[%s510] sm:$0xf]
        %v698 = vld [vmem:[%s510 + $0x4] sm:$0xf]
        %v699 = vld [vmem:[%s510 + $0x8] sm:$0xf]
        %v700 = vld [vmem:[%s510 + $0xc] sm:$0xf]
        %v701 = vld [vmem:[%s510 + $0x10] sm:$0xf]
        %v702 = vld [vmem:[%s510 + $0x14] sm:$0xf]
        %v703 = vld [vmem:[%s510 + $0x18] sm:$0xf]
        %v704 = vld [vmem:[%s510 + $0x1c] sm:$0xf]
        %v705 = vld [vmem:[%s510 + $0x20] sm:$0xf]
        %v706 = vld [vmem:[%s510 + $0x24] sm:$0xf]
        %v707 = vld [vmem:[%s510 + $0x28] sm:$0xf]
        %v708 = vld [vmem:[%s510 + $0x2c] sm:$0xf]
        %v709 = vld [vmem:[%s510 + $0x30] sm:$0xf]
        %v710 = vld [vmem:[%s510 + $0x34] sm:$0xf]
        %v711 = vld [vmem:[%s510 + $0x38] sm:$0xf]
        %v712 = vld [vmem:[%s510 + $0x3c] sm:$0xf]
        %v713 = vunpack.c.l.bf16 %v697
        %v714 = vunpack.c.l.bf16 %v698
        %v715 = vunpack.c.l.bf16 %v699
        %v716 = vunpack.c.l.bf16 %v700
        %v717 = vunpack.c.l.bf16 %v701
        %v718 = vunpack.c.l.bf16 %v702
        %v719 = vunpack.c.l.bf16 %v703
        %v720 = vunpack.c.l.bf16 %v704
        %v721 = vunpack.c.l.bf16 %v705
        %v722 = vunpack.c.l.bf16 %v706
        %v723 = vunpack.c.l.bf16 %v707
        %v724 = vunpack.c.l.bf16 %v708
        %v725 = vunpack.c.l.bf16 %v709
        %v726 = vunpack.c.l.bf16 %v710
        %v727 = vunpack.c.l.bf16 %v711
        %v728 = vunpack.c.l.bf16 %v712
        %v730 = vlaneseq
        %v731 = vshrl.u32 %v730, 7
        %v732 = vsub.s32 0, %v731
        %v733 = vrot.slane %v694, %v732
        %v735 = vmul.f32 %v713, %v733
        %v736 = vmul.f32 %v714, %v733
        %v737 = vmul.f32 %v715, %v733
        %v738 = vmul.f32 %v716, %v733
        %v739 = vmul.f32 %v717, %v733
        %v740 = vmul.f32 %v718, %v733
        %v741 = vmul.f32 %v719, %v733
        %v742 = vmul.f32 %v720, %v733
        %v743 = vmul.f32 %v721, %v733
        %v744 = vmul.f32 %v722, %v733
        %v745 = vmul.f32 %v723, %v733
        %v746 = vmul.f32 %v724, %v733
        %v747 = vmul.f32 %v725, %v733
        %v748 = vmul.f32 %v726, %v733
        %v749 = vmul.f32 %v727, %v733
        %v750 = vmul.f32 %v728, %v733
        %v752 = vlaneseq
        %v753 = vshrl.u32 %v752, 7
        %v754 = vsub.s32 0, %v753
        %v755 = vrot.slane %v696, %v754
        %v757 = vadd.f32 %v735, %v755
        %v758 = vadd.f32 %v736, %v755
        %v759 = vadd.f32 %v737, %v755
        %v760 = vadd.f32 %v738, %v755
        %v761 = vadd.f32 %v739, %v755
        %v762 = vadd.f32 %v740, %v755
        %v763 = vadd.f32 %v741, %v755
        %v764 = vadd.f32 %v742, %v755
        %v765 = vadd.f32 %v743, %v755
        %v766 = vadd.f32 %v744, %v755
        %v767 = vadd.f32 %v745, %v755
        %v768 = vadd.f32 %v746, %v755
        %v769 = vadd.f32 %v747, %v755
        %v770 = vadd.f32 %v748, %v755
        %v771 = vadd.f32 %v749, %v755
        %v772 = vadd.f32 %v750, %v755
        %v773 = vmax.f32 %v757, 0.0
        %v774 = vmax.f32 %v758, 0.0
        %v775 = vmax.f32 %v759, 0.0
        %v776 = vmax.f32 %v760, 0.0
        %v777 = vmax.f32 %v761, 0.0
        %v778 = vmax.f32 %v762, 0.0
        %v779 = vmax.f32 %v763, 0.0
        %v780 = vmax.f32 %v764, 0.0
        %v781 = vmax.f32 %v765, 0.0
        %v782 = vmax.f32 %v766, 0.0
        %v783 = vmax.f32 %v767, 0.0
        %v784 = vmax.f32 %v768, 0.0
        %v785 = vmax.f32 %v769, 0.0
        %v786 = vmax.f32 %v770, 0.0
        %v787 = vmax.f32 %v771, 0.0
        %v788 = vmax.f32 %v772, 0.0
        %805 = vrot.lane.b32.xlu0 %v773, 8
        %v806 = vpop.permute.xlu0 %805
        %807 = vrot.lane.b32.xlu0 %v774, 8
        %v808 = vpop.permute.xlu0 %807
        %809 = vrot.lane.b32.xlu0 %v775, 8
        %v810 = vpop.permute.xlu0 %809
        %811 = vrot.lane.b32.xlu0 %v776, 8
        %v812 = vpop.permute.xlu0 %811
        %813 = vrot.lane.b32.xlu0 %v777, 8
        %v814 = vpop.permute.xlu0 %813
        %815 = vrot.lane.b32.xlu0 %v778, 8
        %v816 = vpop.permute.xlu0 %815
        %817 = vrot.lane.b32.xlu0 %v779, 8
        %v818 = vpop.permute.xlu0 %817
        %819 = vrot.lane.b32.xlu0 %v780, 8
        %v820 = vpop.permute.xlu0 %819
        %821 = vrot.lane.b32.xlu0 %v781, 8
        %v822 = vpop.permute.xlu0 %821
        %823 = vrot.lane.b32.xlu0 %v782, 8
        %v824 = vpop.permute.xlu0 %823
        %825 = vrot.lane.b32.xlu0 %v783, 8
        %v826 = vpop.permute.xlu0 %825
        %827 = vrot.lane.b32.xlu0 %v784, 8
        %v828 = vpop.permute.xlu0 %827
        %829 = vrot.lane.b32.xlu0 %v785, 8
        %v830 = vpop.permute.xlu0 %829
        %831 = vrot.lane.b32.xlu0 %v786, 8
        %v832 = vpop.permute.xlu0 %831
        %833 = vrot.lane.b32.xlu0 %v787, 8
        %v834 = vpop.permute.xlu0 %833
        %835 = vrot.lane.b32.xlu0 %v788, 8
        %v836 = vpop.permute.xlu0 %835
        %vm853 = vcmask 130112
        %854 = vst.msk [vmem:[%s489] sm:$0xff] %vm853, %v806
        %855 = vst.msk [vmem:[%s489 + $0x8] sm:$0xff] %vm853, %v808
        %856 = vst.msk [vmem:[%s489 + $0x10] sm:$0xff] %vm853, %v810
        %857 = vst.msk [vmem:[%s489 + $0x18] sm:$0xff] %vm853, %v812
        %858 = vst.msk [vmem:[%s489 + $0x20] sm:$0xff] %vm853, %v814
        %859 = vst.msk [vmem:[%s489 + $0x28] sm:$0xff] %vm853, %v816
        %860 = vst.msk [vmem:[%s489 + $0x30] sm:$0xff] %vm853, %v818
        %861 = vst.msk [vmem:[%s489 + $0x38] sm:$0xff] %vm853, %v820
        %862 = vst.msk [vmem:[%s489 + $0x40] sm:$0xff] %vm853, %v822
        %863 = vst.msk [vmem:[%s489 + $0x48] sm:$0xff] %vm853, %v824
        %864 = vst.msk [vmem:[%s489 + $0x50] sm:$0xff] %vm853, %v826
        %865 = vst.msk [vmem:[%s489 + $0x58] sm:$0xff] %vm853, %v828
        %866 = vst.msk [vmem:[%s489 + $0x60] sm:$0xff] %vm853, %v830
        %867 = vst.msk [vmem:[%s489 + $0x68] sm:$0xff] %vm853, %v832
        %868 = vst.msk [vmem:[%s489 + $0x70] sm:$0xff] %vm853, %v834
        %869 = vst.msk [vmem:[%s489 + $0x78] sm:$0xff] %vm853, %v836
        %v870 = vld [vmem:[%s5] sm:$0x3]
        %v871 = vld [vmem:[%s10] sm:$0x1]
        %v872 = vld [vmem:[%s11] sm:$0x1]
        %v873 = vmul.f32 %v870, 0.001953125
        %v874 = vmul.f32 %v873, %v873
        %v876 = vrot.slane %v874, 7
        %v878 = vsub.f32 %v873, %v876
        %v879 = vmax.f32 %v878, 0.0
        %v880 = vadd.f32 %v879, 1e-05
        %v881 = vrsqrt.pop %v880
        %v884 = vunpack.c.l.s4 1966171168
        %v885 = vunpack.c.0.s8 %v884
        %v886 = vlaneseq
        %v887 = vshrl.u32 %v886, 7
        %v888 = vsub.s32 %v885, %v887
        %v889 = vrot.slane %v881, %v888
        %v890 = vcombine.high %v889, %v889
        %v892 = vunpack.c.l.s4 1966171168
        %v893 = vunpack.c.0.s8 %v892
        %v894 = vlaneseq
        %v895 = vshrl.u32 %v894, 7
        %v896 = vsub.s32 %v893, %v895
        %v897 = vrot.slane %v890, %v896
        %v899 = vmul.f32 %v871, %v897
        %v900 = vmul.f32 %v873, %v899
        %v901 = vsub.f32 %v872, %v900
        %v902 = vld [vmem:[%s521] sm:$0xf]
        %v903 = vld [vmem:[%s521 + $0x4] sm:$0xf]
        %v904 = vld [vmem:[%s521 + $0x8] sm:$0xf]
        %v905 = vld [vmem:[%s521 + $0xc] sm:$0xf]
        %v906 = vld [vmem:[%s521 + $0x10] sm:$0xf]
        %v907 = vld [vmem:[%s521 + $0x14] sm:$0xf]
        %v908 = vld [vmem:[%s521 + $0x18] sm:$0xf]
        %v909 = vld [vmem:[%s521 + $0x1c] sm:$0xf]
        %v910 = vld [vmem:[%s521 + $0x20] sm:$0xf]
        %v911 = vld [vmem:[%s521 + $0x24] sm:$0xf]
        %v912 = vld [vmem:[%s521 + $0x28] sm:$0xf]
        %v913 = vld [vmem:[%s521 + $0x2c] sm:$0xf]
        %v914 = vld [vmem:[%s521 + $0x30] sm:$0xf]
        %v915 = vld [vmem:[%s521 + $0x34] sm:$0xf]
        %v916 = vld [vmem:[%s521 + $0x38] sm:$0xf]
        %v917 = vld [vmem:[%s521 + $0x3c] sm:$0xf]
        %v918 = vunpack.c.l.bf16 %v902
        %v919 = vunpack.c.l.bf16 %v903
        %v920 = vunpack.c.l.bf16 %v904
        %v921 = vunpack.c.l.bf16 %v905
        %v922 = vunpack.c.l.bf16 %v906
        %v923 = vunpack.c.l.bf16 %v907
        %v924 = vunpack.c.l.bf16 %v908
        %v925 = vunpack.c.l.bf16 %v909
        %v926 = vunpack.c.l.bf16 %v910
        %v927 = vunpack.c.l.bf16 %v911
        %v928 = vunpack.c.l.bf16 %v912
        %v929 = vunpack.c.l.bf16 %v913
        %v930 = vunpack.c.l.bf16 %v914
        %v931 = vunpack.c.l.bf16 %v915
        %v932 = vunpack.c.l.bf16 %v916
        %v933 = vunpack.c.l.bf16 %v917
        %v935 = vlaneseq
        %v936 = vshrl.u32 %v935, 7
        %v937 = vsub.s32 0, %v936
        %v938 = vrot.slane %v899, %v937
        %v940 = vmul.f32 %v918, %v938
        %v941 = vmul.f32 %v919, %v938
        %v942 = vmul.f32 %v920, %v938
        %v943 = vmul.f32 %v921, %v938
        %v944 = vmul.f32 %v922, %v938
        %v945 = vmul.f32 %v923, %v938
        %v946 = vmul.f32 %v924, %v938
        %v947 = vmul.f32 %v925, %v938
        %v948 = vmul.f32 %v926, %v938
        %v949 = vmul.f32 %v927, %v938
        %v950 = vmul.f32 %v928, %v938
        %v951 = vmul.f32 %v929, %v938
        %v952 = vmul.f32 %v930, %v938
        %v953 = vmul.f32 %v931, %v938
        %v954 = vmul.f32 %v932, %v938
        %v955 = vmul.f32 %v933, %v938
        %v957 = vlaneseq
        %v958 = vshrl.u32 %v957, 7
        %v959 = vsub.s32 0, %v958
        %v960 = vrot.slane %v901, %v959
        %v962 = vadd.f32 %v940, %v960
        %v963 = vadd.f32 %v941, %v960
        %v964 = vadd.f32 %v942, %v960
        %v965 = vadd.f32 %v943, %v960
        %v966 = vadd.f32 %v944, %v960
        %v967 = vadd.f32 %v945, %v960
        %v968 = vadd.f32 %v946, %v960
        %v969 = vadd.f32 %v947, %v960
        %v970 = vadd.f32 %v948, %v960
        %v971 = vadd.f32 %v949, %v960
        %v972 = vadd.f32 %v950, %v960
        %v973 = vadd.f32 %v951, %v960
        %v974 = vadd.f32 %v952, %v960
        %v975 = vadd.f32 %v953, %v960
        %v976 = vadd.f32 %v954, %v960
        %v977 = vadd.f32 %v955, %v960
        %v978 = vmax.f32 %v962, 0.0
        %v979 = vmax.f32 %v963, 0.0
        %v980 = vmax.f32 %v964, 0.0
        %v981 = vmax.f32 %v965, 0.0
        %v982 = vmax.f32 %v966, 0.0
        %v983 = vmax.f32 %v967, 0.0
        %v984 = vmax.f32 %v968, 0.0
        %v985 = vmax.f32 %v969, 0.0
        %v986 = vmax.f32 %v970, 0.0
        %v987 = vmax.f32 %v971, 0.0
        %v988 = vmax.f32 %v972, 0.0
        %v989 = vmax.f32 %v973, 0.0
        %v990 = vmax.f32 %v974, 0.0
        %v991 = vmax.f32 %v975, 0.0
        %v992 = vmax.f32 %v976, 0.0
        %v993 = vmax.f32 %v977, 0.0
        %1010 = vrot.lane.b32.xlu0 %v978, 16
        %v1011 = vpop.permute.xlu0 %1010
        %1012 = vrot.lane.b32.xlu0 %v979, 16
        %v1013 = vpop.permute.xlu0 %1012
        %1014 = vrot.lane.b32.xlu0 %v980, 16
        %v1015 = vpop.permute.xlu0 %1014
        %1016 = vrot.lane.b32.xlu0 %v981, 16
        %v1017 = vpop.permute.xlu0 %1016
        %1018 = vrot.lane.b32.xlu0 %v982, 16
        %v1019 = vpop.permute.xlu0 %1018
        %1020 = vrot.lane.b32.xlu0 %v983, 16
        %v1021 = vpop.permute.xlu0 %1020
        %1022 = vrot.lane.b32.xlu0 %v984, 16
        %v1023 = vpop.permute.xlu0 %1022
        %1024 = vrot.lane.b32.xlu0 %v985, 16
        %v1025 = vpop.permute.xlu0 %1024
        %1026 = vrot.lane.b32.xlu0 %v986, 16
        %v1027 = vpop.permute.xlu0 %1026
        %1028 = vrot.lane.b32.xlu0 %v987, 16
        %v1029 = vpop.permute.xlu0 %1028
        %1030 = vrot.lane.b32.xlu0 %v988, 16
        %v1031 = vpop.permute.xlu0 %1030
        %1032 = vrot.lane.b32.xlu0 %v989, 16
        %v1033 = vpop.permute.xlu0 %1032
        %1034 = vrot.lane.b32.xlu0 %v990, 16
        %v1035 = vpop.permute.xlu0 %1034
        %1036 = vrot.lane.b32.xlu0 %v991, 16
        %v1037 = vpop.permute.xlu0 %1036
        %1038 = vrot.lane.b32.xlu0 %v992, 16
        %v1039 = vpop.permute.xlu0 %1038
        %1040 = vrot.lane.b32.xlu0 %v993, 16
        %v1041 = vpop.permute.xlu0 %1040
        %vm1058 = vcmask 195712
        %1059 = vst.msk [vmem:[%s489] sm:$0xff] %vm1058, %v1011
        %1060 = vst.msk [vmem:[%s489 + $0x8] sm:$0xff] %vm1058, %v1013
        %1061 = vst.msk [vmem:[%s489 + $0x10] sm:$0xff] %vm1058, %v1015
        %1062 = vst.msk [vmem:[%s489 + $0x18] sm:$0xff] %vm1058, %v1017
        %1063 = vst.msk [vmem:[%s489 + $0x20] sm:$0xff] %vm1058, %v1019
        %1064 = vst.msk [vmem:[%s489 + $0x28] sm:$0xff] %vm1058, %v1021
        %1065 = vst.msk [vmem:[%s489 + $0x30] sm:$0xff] %vm1058, %v1023
        %1066 = vst.msk [vmem:[%s489 + $0x38] sm:$0xff] %vm1058, %v1025
        %1067 = vst.msk [vmem:[%s489 + $0x40] sm:$0xff] %vm1058, %v1027
        %1068 = vst.msk [vmem:[%s489 + $0x48] sm:$0xff] %vm1058, %v1029
        %1069 = vst.msk [vmem:[%s489 + $0x50] sm:$0xff] %vm1058, %v1031
        %1070 = vst.msk [vmem:[%s489 + $0x58] sm:$0xff] %vm1058, %v1033
        %1071 = vst.msk [vmem:[%s489 + $0x60] sm:$0xff] %vm1058, %v1035
        %1072 = vst.msk [vmem:[%s489 + $0x68] sm:$0xff] %vm1058, %v1037
        %1073 = vst.msk [vmem:[%s489 + $0x70] sm:$0xff] %vm1058, %v1039
        %1074 = vst.msk [vmem:[%s489 + $0x78] sm:$0xff] %vm1058, %v1041
        %v1075 = vld [vmem:[%s3] sm:$0x3]
        %v1076 = vld [vmem:[%s6] sm:$0x1]
        %v1077 = vld [vmem:[%s7] sm:$0x1]
        %v1078 = vmul.f32 %v1075, 0.001953125
        %v1079 = vmul.f32 %v1078, %v1078
        %v1081 = vrot.slane %v1079, 7
        %v1083 = vsub.f32 %v1078, %v1081
        %v1084 = vmax.f32 %v1083, 0.0
        %v1085 = vadd.f32 %v1084, 1e-05
        %v1086 = vrsqrt.pop %v1085
        %v1089 = vunpack.c.l.s4 1966171168
        %v1090 = vunpack.c.0.s8 %v1089
        %v1091 = vlaneseq
        %v1092 = vshrl.u32 %v1091, 7
        %v1093 = vsub.s32 %v1090, %v1092
        %v1094 = vrot.slane %v1086, %v1093
        %v1095 = vcombine.high %v1094, %v1094
        %v1097 = vunpack.c.l.s4 1966171168
        %v1098 = vunpack.c.0.s8 %v1097
        %v1099 = vlaneseq
        %v1100 = vshrl.u32 %v1099, 7
        %v1101 = vsub.s32 %v1098, %v1100
        %v1102 = vrot.slane %v1095, %v1101
        %v1104 = vmul.f32 %v1076, %v1102
        %v1105 = vmul.f32 %v1078, %v1104
        %v1106 = vsub.f32 %v1077, %v1105
        %v1107 = vld [vmem:[%s499] sm:$0xf]
        %v1108 = vld [vmem:[%s499 + $0x4] sm:$0xf]
        %v1109 = vld [vmem:[%s499 + $0x8] sm:$0xf]
        %v1110 = vld [vmem:[%s499 + $0xc] sm:$0xf]
        %v1111 = vld [vmem:[%s499 + $0x10] sm:$0xf]
        %v1112 = vld [vmem:[%s499 + $0x14] sm:$0xf]
        %v1113 = vld [vmem:[%s499 + $0x18] sm:$0xf]
        %v1114 = vld [vmem:[%s499 + $0x1c] sm:$0xf]
        %v1115 = vld [vmem:[%s499 + $0x20] sm:$0xf]
        %v1116 = vld [vmem:[%s499 + $0x24] sm:$0xf]
        %v1117 = vld [vmem:[%s499 + $0x28] sm:$0xf]
        %v1118 = vld [vmem:[%s499 + $0x2c] sm:$0xf]
        %v1119 = vld [vmem:[%s499 + $0x30] sm:$0xf]
        %v1120 = vld [vmem:[%s499 + $0x34] sm:$0xf]
        %v1121 = vld [vmem:[%s499 + $0x38] sm:$0xf]
        %v1122 = vld [vmem:[%s499 + $0x3c] sm:$0xf]
        %v1123 = vunpack.c.l.bf16 %v1107
        %v1124 = vunpack.c.l.bf16 %v1108
        %v1125 = vunpack.c.l.bf16 %v1109
        %v1126 = vunpack.c.l.bf16 %v1110
        %v1127 = vunpack.c.l.bf16 %v1111
        %v1128 = vunpack.c.l.bf16 %v1112
        %v1129 = vunpack.c.l.bf16 %v1113
        %v1130 = vunpack.c.l.bf16 %v1114
        %v1131 = vunpack.c.l.bf16 %v1115
        %v1132 = vunpack.c.l.bf16 %v1116
        %v1133 = vunpack.c.l.bf16 %v1117
        %v1134 = vunpack.c.l.bf16 %v1118
        %v1135 = vunpack.c.l.bf16 %v1119
        %v1136 = vunpack.c.l.bf16 %v1120
        %v1137 = vunpack.c.l.bf16 %v1121
        %v1138 = vunpack.c.l.bf16 %v1122
        %v1140 = vlaneseq
        %v1141 = vshrl.u32 %v1140, 7
        %v1142 = vsub.s32 0, %v1141
        %v1143 = vrot.slane %v1104, %v1142
        %v1145 = vmul.f32 %v1123, %v1143
        %v1146 = vmul.f32 %v1124, %v1143
        %v1147 = vmul.f32 %v1125, %v1143
        %v1148 = vmul.f32 %v1126, %v1143
        %v1149 = vmul.f32 %v1127, %v1143
        %v1150 = vmul.f32 %v1128, %v1143
        %v1151 = vmul.f32 %v1129, %v1143
        %v1152 = vmul.f32 %v1130, %v1143
        %v1153 = vmul.f32 %v1131, %v1143
        %v1154 = vmul.f32 %v1132, %v1143
        %v1155 = vmul.f32 %v1133, %v1143
        %v1156 = vmul.f32 %v1134, %v1143
        %v1157 = vmul.f32 %v1135, %v1143
        %v1158 = vmul.f32 %v1136, %v1143
        %v1159 = vmul.f32 %v1137, %v1143
        %v1160 = vmul.f32 %v1138, %v1143
        %v1162 = vlaneseq
        %v1163 = vshrl.u32 %v1162, 7
        %v1164 = vsub.s32 0, %v1163
        %v1165 = vrot.slane %v1106, %v1164
        %v1167 = vadd.f32 %v1145, %v1165
        %v1168 = vadd.f32 %v1146, %v1165
        %v1169 = vadd.f32 %v1147, %v1165
        %v1170 = vadd.f32 %v1148, %v1165
        %v1171 = vadd.f32 %v1149, %v1165
        %v1172 = vadd.f32 %v1150, %v1165
        %v1173 = vadd.f32 %v1151, %v1165
        %v1174 = vadd.f32 %v1152, %v1165
        %v1175 = vadd.f32 %v1153, %v1165
        %v1176 = vadd.f32 %v1154, %v1165
        %v1177 = vadd.f32 %v1155, %v1165
        %v1178 = vadd.f32 %v1156, %v1165
        %v1179 = vadd.f32 %v1157, %v1165
        %v1180 = vadd.f32 %v1158, %v1165
        %v1181 = vadd.f32 %v1159, %v1165
        %v1182 = vadd.f32 %v1160, %v1165
        %v1183 = vmax.f32 %v1167, 0.0
        %v1184 = vmax.f32 %v1168, 0.0
        %v1185 = vmax.f32 %v1169, 0.0
        %v1186 = vmax.f32 %v1170, 0.0
        %v1187 = vmax.f32 %v1171, 0.0
        %v1188 = vmax.f32 %v1172, 0.0
        %v1189 = vmax.f32 %v1173, 0.0
        %v1190 = vmax.f32 %v1174, 0.0
        %v1191 = vmax.f32 %v1175, 0.0
        %v1192 = vmax.f32 %v1176, 0.0
        %v1193 = vmax.f32 %v1177, 0.0
        %v1194 = vmax.f32 %v1178, 0.0
        %v1195 = vmax.f32 %v1179, 0.0
        %v1196 = vmax.f32 %v1180, 0.0
        %v1197 = vmax.f32 %v1181, 0.0
        %v1198 = vmax.f32 %v1182, 0.0
        %1215 = vrot.lane.b32.xlu0 %v1183, 16
        %v1216 = vpop.permute.xlu0 %1215
        %1217 = vrot.lane.b32.xlu0 %v1184, 16
        %v1218 = vpop.permute.xlu0 %1217
        %1219 = vrot.lane.b32.xlu0 %v1185, 16
        %v1220 = vpop.permute.xlu0 %1219
        %1221 = vrot.lane.b32.xlu0 %v1186, 16
        %v1222 = vpop.permute.xlu0 %1221
        %1223 = vrot.lane.b32.xlu0 %v1187, 16
        %v1224 = vpop.permute.xlu0 %1223
        %1225 = vrot.lane.b32.xlu0 %v1188, 16
        %v1226 = vpop.permute.xlu0 %1225
        %1227 = vrot.lane.b32.xlu0 %v1189, 16
        %v1228 = vpop.permute.xlu0 %1227
        %1229 = vrot.lane.b32.xlu0 %v1190, 16
        %v1230 = vpop.permute.xlu0 %1229
        %1231 = vrot.lane.b32.xlu0 %v1191, 16
        %v1232 = vpop.permute.xlu0 %1231
        %1233 = vrot.lane.b32.xlu0 %v1192, 16
        %v1234 = vpop.permute.xlu0 %1233
        %1235 = vrot.lane.b32.xlu0 %v1193, 16
        %v1236 = vpop.permute.xlu0 %1235
        %1237 = vrot.lane.b32.xlu0 %v1194, 16
        %v1238 = vpop.permute.xlu0 %1237
        %1239 = vrot.lane.b32.xlu0 %v1195, 16
        %v1240 = vpop.permute.xlu0 %1239
        %1241 = vrot.lane.b32.xlu0 %v1196, 16
        %v1242 = vpop.permute.xlu0 %1241
        %1243 = vrot.lane.b32.xlu0 %v1197, 16
        %v1244 = vpop.permute.xlu0 %1243
        %1245 = vrot.lane.b32.xlu0 %v1198, 16
        %v1246 = vpop.permute.xlu0 %1245
        %vm1263 = vcmask 261312
        %1264 = vst.msk [vmem:[%s489] sm:$0xff] %vm1263, %v1216
        %1265 = vst.msk [vmem:[%s489 + $0x8] sm:$0xff] %vm1263, %v1218
        %1266 = vst.msk [vmem:[%s489 + $0x10] sm:$0xff] %vm1263, %v1220
        %1267 = vst.msk [vmem:[%s489 + $0x18] sm:$0xff] %vm1263, %v1222
        %1268 = vst.msk [vmem:[%s489 + $0x20] sm:$0xff] %vm1263, %v1224
        %1269 = vst.msk [vmem:[%s489 + $0x28] sm:$0xff] %vm1263, %v1226
        %1270 = vst.msk [vmem:[%s489 + $0x30] sm:$0xff] %vm1263, %v1228
        %1271 = vst.msk [vmem:[%s489 + $0x38] sm:$0xff] %vm1263, %v1230
        %1272 = vst.msk [vmem:[%s489 + $0x40] sm:$0xff] %vm1263, %v1232
        %1273 = vst.msk [vmem:[%s489 + $0x48] sm:$0xff] %vm1263, %v1234
        %1274 = vst.msk [vmem:[%s489 + $0x50] sm:$0xff] %vm1263, %v1236
        %1275 = vst.msk [vmem:[%s489 + $0x58] sm:$0xff] %vm1263, %v1238
        %1276 = vst.msk [vmem:[%s489 + $0x60] sm:$0xff] %vm1263, %v1240
        %1277 = vst.msk [vmem:[%s489 + $0x68] sm:$0xff] %vm1263, %v1242
        %1278 = vst.msk [vmem:[%s489 + $0x70] sm:$0xff] %vm1263, %v1244
        %1279 = vst.msk [vmem:[%s489 + $0x78] sm:$0xff] %vm1263, %v1246
        %s1280 = sand.u32 %s321, 1
        %s1281 = scalar_lea.sflag [#allocation3], %s1280
        %s1282 = sand.u32 %s321, 1
        %s1283 = smul.addr %s1282, 128
        %s1284 = scalar_lea.vmem [#allocation2], %s1283
        // Predicated region
        $region69: #{inception_v3a_forward.7} parent=67 // pred_check
          %p1285 = pneg %p331
        $region70: #{inception_v3a_forward.7} parent=67 // pred_check_branch
          %1287 = sbr.rel (%p1285) target = $region72
        $region71: #{inception_v3a_forward.7} parent=67 // pred_region
          %s1288 = smul.u32 8, %s31
          %s1290 = ssub.s32 2048, 2048
          %1291 = vsyncadd %s1281, %s1290
          %s1292 = smul.addr %s1288, 2
          %s1293 = smul.addr %s30, 32
          %s1294 = sadd.s32 %s1292, %s1293
          %s1295 = smul.addr %s1294, 128
          %s1296 = scalar_lea.hbm %s12, %s1295
          %s1297 = sshll.u32 %s1284, 4
          %s1298 = int_to_ptr.vmem [resolvable:$true] %s1297
          %1303 = dma.vmem_to_hbm [thread:$0]  %s1298, 2048, %s1296, %s1281, 128, 128, 8
        $region72: #{inception_v3a_forward.7} parent=67 // pred_fallthru
          _
      $region68: #{inception_v3a_forward.7} parent=5 // pred_fallthru
        _
      %p1304 = scmp.le.s32.totalorder 2, %s21
      // Predicated region
      $region73: #{inception_v3a_forward.7} parent=5 // pred_check
        %p1305 = pneg %p1304
      $region74: #{inception_v3a_forward.7} parent=5 // pred_check_branch
        %1307 = sbr.rel (%p1305) target = $region76
      $region75: #{inception_v3a_forward.7} parent=5 // pred_region
        %s1308 = ssub.s32 %s21, 2
        // Predicated region
        $region77: #{inception_v3a_forward.7} parent=75 // pred_check
          %p1309 = pneg %p337
        $region78: #{inception_v3a_forward.7} parent=75 // pred_check_branch
          %1311 = sbr.rel (%p1309) target = $region80
        $region79: #{inception_v3a_forward.7} parent=75 // pred_region
          %s1312 = sand.u32 %s322, 1
          %s1313 = scalar_lea.sflag [#allocation3], %s1312
          %s1314 = sand.u32 %s322, 1
          %s1315 = smul.addr %s1314, 128
          %s1316 = scalar_lea.vmem [#allocation2], %s1315
          %1317 = dma.done %s1313, 2048
        $region80: #{inception_v3a_forward.7} parent=75 // pred_fallthru
          _
      $region76: #{inception_v3a_forward.7} parent=5 // pred_fallthru
        _
    $region6: #{inception_v3a_forward.7} parent=1 // loop_footer
      %s25 = sadd.s32 1, %s21
    $region7: #{inception_v3a_forward.7} parent=1 // loop_footer_branch
      %20 = sbr.rel target = $region3
    $region8: #{inception_v3a_forward.7} parent=1 // loop_exit
      _
    %1318 = vsyncpa [#allocation3], 1
    %s1319 = scalar_lea.sflag [#allocation3], 1
    %1320 = vsyncpa %s1319, 1

// kernel: inception_v3a_forward.4
$region0: #{inception_v3a_forward.4}
  #allocation0 [shape = 'u32[]', space=smem, size = 0x4, offset = 0x4, fixed_abs, tag = 'smem constant byte address 0x4 - core index']
  #allocation1 [shape = 'u32[144,128]{1,0:T(1,128)}', space=vmem, size = 0x12000, scoped, tag = 'internal scratch']
  %s0 = inlined_call_operand.vmem [shape: bf16[2,16,16,4], index: 0, kind: input, shape index: {}]
  %s1 = inlined_call_operand.vmem [shape: bf16[4,16], index: 1, kind: input, shape index: {}]
  %s2 = inlined_call_operand.vmem [shape: bf16[4,8], index: 2, kind: input, shape index: {}]
  %s3 = inlined_call_operand.vmem [shape: bf16[2,16,16,8], index: 3, kind: output, shape index: {0}]
  %s4 = inlined_call_operand.vmem [shape: bf16[2,16,16,16], index: 4, kind: output, shape index: {1}]
  %s5 = inlined_call_operand.vmem [shape: f32[2,2,8], index: 5, kind: output, shape index: {2}]
  %s6 = inlined_call_operand.vmem [shape: f32[2,2,16], index: 6, kind: output, shape index: {3}]
  %7 = xla_tuple %s3, %s4, %s5, %s6
  %s8 = sld [smem:[#allocation0]]
  $region69: #{inception_v3a_forward.4} parent=0
    _
  %s10 = ssub.s32 1, %s8
  %s11 = scalar_select 0, %s10, %s8
  loop: start=0, step=1, limit=4
  $region2: #{inception_v3a_forward.4} parent=0 // loop_pre_header
    _
  $region3: #{inception_v3a_forward.4} parent=0 // loop_header
    %s13 = sphi 0, %s17
    %p14 = scmp.ge.s32.totalorder %s13, 4
    %s23 = sphi 0, %s25
    %s26 = sphi 0, %s23
    %s27 = sphi 0, %s26
    %s43 = sphi 0, %s27
    %s47 = sphi 0, %s47
    %s49 = sphi 0, %s47
    %s50 = sphi 0, %s49
    %s64 = sphi 0, %s50
    %s68 = sphi 0, %s68
    %s70 = sphi 0, %s68
    %s71 = sphi 0, %s70
    %s85 = sphi 0, %s71
    %s91 = sphi 0, %s93
    %s94 = sphi 0, %s91
    %s95 = sphi 0, %s94
    %s111 = sphi 0, %s95
    %s117 = sphi 0, %s119
    %s120 = sphi 0, %s117
    %s121 = sphi 0, %s120
    %s137 = sphi 0, %s121
    %s143 = sphi 0, %s145
    %s146 = sphi 0, %s143
    %s147 = sphi 0, %s146
    %s163 = sphi 0, %s147
    %s169 = sphi 0, %s171
    %s172 = sphi 0, %s169
    %s173 = sphi 0, %s172
    %s189 = sphi 0, %s173
  $region4: #{inception_v3a_forward.4} parent=0 // loop_header_branch
    %16 = sbr.rel (%p14) target = $region8
  $region5: #{inception_v3a_forward.4} parent=0 // loop_body
    %s18 = ssub.s32 %s13, 1
    %s19 = ssub.s32 %s13, 2
    %s20 = sadd.s32 %s13, 1
    %s21 = ssub.s32 %s13, %s20
    %p22 = scmp.eq.s32.totalorder %s21, 0
    %s24 = sadd.s32 %s23, 1
    %s25 = scalar_select %p22, %s23, %s24
    %p28 = pneg %p22
    %p29 = scmp.eq.s32.totalorder %s13, 1
    %p30 = por %p28, %p29
    %p31 = scmp.ne.s32.totalorder %s23, %s26
    %p32 = scmp.eq.s32.totalorder %s13, 0
    %p33 = por %p31, %p32
    %p34 = scmp.ne.s32.totalorder %s23, %s26
    %p35 = scmp.eq.s32.totalorder %s18, 1
    %p36 = por %p34, %p35
    %p37 = scmp.ne.s32.totalorder %s26, %s27
    %p38 = scmp.eq.s32.totalorder %s18, 0
    %p39 = por %p37, %p38
    %p40 = scmp.ne.s32.totalorder %s26, %s27
    %p41 = scmp.eq.s32.totalorder %s19, 1
    %p42 = por %p40, %p41
    %p44 = scmp.ne.s32.totalorder %s27, %s43
    %p45 = scmp.eq.s32.totalorder %s19, 0
    %p46 = por %p44, %p45
    %s48 = sadd.s32 %s47, 1
    %p51 = scmp.eq.s32.totalorder %s13, 1
    %p52 = scmp.ne.s32.totalorder %s47, %s49
    %p53 = scmp.eq.s32.totalorder %s13, 0
    %p54 = por %p52, %p53
    %p55 = scmp.ne.s32.totalorder %s47, %s49
    %p56 = scmp.eq.s32.totalorder %s18, 1
    %p57 = por %p55, %p56
    %p58 = scmp.ne.s32.totalorder %s49, %s50
    %p59 = scmp.eq.s32.totalorder %s18, 0
    %p60 = por %p58, %p59
    %p61 = scmp.ne.s32.totalorder %s49, %s50
    %p62 = scmp.eq.s32.totalorder %s19, 1
    %p63 = por %p61, %p62
    %p65 = scmp.ne.s32.totalorder %s50, %s64
    %p66 = scmp.eq.s32.totalorder %s19, 0
    %p67 = por %p65, %p66
    %s69 = sadd.s32 %s68, 1
    %p72 = scmp.eq.s32.totalorder %s13, 1
    %p73 = scmp.ne.s32.totalorder %s68, %s70
    %p74 = scmp.eq.s32.totalorder %s13, 0
    %p75 = por %p73, %p74
    %p76 = scmp.ne.s32.totalorder %s68, %s70
    %p77 = scmp.eq.s32.totalorder %s18, 1
    %p78 = por %p76, %p77
    %p79 = scmp.ne.s32.totalorder %s70, %s71
    %p80 = scmp.eq.s32.totalorder %s18, 0
    %p81 = por %p79, %p80
    %p82 = scmp.ne.s32.totalorder %s70, %s71
    %p83 = scmp.eq.s32.totalorder %s19, 1
    %p84 = por %p82, %p83
    %p86 = scmp.ne.s32.totalorder %s71, %s85
    %p87 = scmp.eq.s32.totalorder %s19, 0
    %p88 = por %p86, %p87
    %s89 = ssub.s32 %s13, %s20
    %p90 = scmp.eq.s32.totalorder %s89, 0
    %s92 = sadd.s32 %s91, 1
    %s93 = scalar_select %p90, %s91, %s92
    %p96 = pneg %p90
    %p97 = scmp.eq.s32.totalorder %s13, 1
    %p98 = por %p96, %p97
    %p99 = scmp.ne.s32.totalorder %s91, %s94
    %p100 = scmp.eq.s32.totalorder %s13, 0
    %p101 = por %p99, %p100
    %p102 = scmp.ne.s32.totalorder %s91, %s94
    %p103 = scmp.eq.s32.totalorder %s18, 1
    %p104 = por %p102, %p103
    %p105 = scmp.ne.s32.totalorder %s94, %s95
    %p106 = scmp.eq.s32.totalorder %s18, 0
    %p107 = por %p105, %p106
    %p108 = scmp.ne.s32.totalorder %s94, %s95
    %p109 = scmp.eq.s32.totalorder %s19, 1
    %p110 = por %p108, %p109
    %p112 = scmp.ne.s32.totalorder %s95, %s111
    %p113 = scmp.eq.s32.totalorder %s19, 0
    %p114 = por %p112, %p113
    %s115 = ssub.s32 %s13, %s20
    %p116 = scmp.eq.s32.totalorder %s115, 0
    %s118 = sadd.s32 %s117, 1
    %s119 = scalar_select %p116, %s117, %s118
    %p122 = pneg %p116
    %p123 = scmp.eq.s32.totalorder %s13, 1
    %p124 = por %p122, %p123
    %p125 = scmp.ne.s32.totalorder %s117, %s120
    %p126 = scmp.eq.s32.totalorder %s13, 0
    %p127 = por %p125, %p126
    %p128 = scmp.ne.s32.totalorder %s117, %s120
    %p129 = scmp.eq.s32.totalorder %s18, 1
    %p130 = por %p128, %p129
    %p131 = scmp.ne.s32.totalorder %s120, %s121
    %p132 = scmp.eq.s32.totalorder %s18, 0
    %p133 = por %p131, %p132
    %p134 = scmp.ne.s32.totalorder %s120, %s121
    %p135 = scmp.eq.s32.totalorder %s19, 1
    %p136 = por %p134, %p135
    %p138 = scmp.ne.s32.totalorder %s121, %s137
    %p139 = scmp.eq.s32.totalorder %s19, 0
    %p140 = por %p138, %p139
    %s141 = ssub.s32 %s13, %s20
    %p142 = scmp.eq.s32.totalorder %s141, 0
    %s144 = sadd.s32 %s143, 1
    %s145 = scalar_select %p142, %s143, %s144
    %p148 = pneg %p142
    %p149 = scmp.eq.s32.totalorder %s13, 1
    %p150 = por %p148, %p149
    %p151 = scmp.ne.s32.totalorder %s143, %s146
    %p152 = scmp.eq.s32.totalorder %s13, 0
    %p153 = por %p151, %p152
    %p154 = scmp.ne.s32.totalorder %s143, %s146
    %p155 = scmp.eq.s32.totalorder %s18, 1
    %p156 = por %p154, %p155
    %p157 = scmp.ne.s32.totalorder %s146, %s147
    %p158 = scmp.eq.s32.totalorder %s18, 0
    %p159 = por %p157, %p158
    %p160 = scmp.ne.s32.totalorder %s146, %s147
    %p161 = scmp.eq.s32.totalorder %s19, 1
    %p162 = por %p160, %p161
    %p164 = scmp.ne.s32.totalorder %s147, %s163
    %p165 = scmp.eq.s32.totalorder %s19, 0
    %p166 = por %p164, %p165
    %s167 = ssub.s32 %s13, %s20
    %p168 = scmp.eq.s32.totalorder %s167, 0
    %s170 = sadd.s32 %s169, 1
    %s171 = scalar_select %p168, %s169, %s170
    %p174 = pneg %p168
    %p175 = scmp.eq.s32.totalorder %s13, 1
    %p176 = por %p174, %p175
    %p177 = scmp.ne.s32.totalorder %s169, %s172
    %p178 = scmp.eq.s32.totalorder %s13, 0
    %p179 = por %p177, %p178
    %p180 = scmp.ne.s32.totalorder %s169, %s172
    %p181 = scmp.eq.s32.totalorder %s18, 1
    %p182 = por %p180, %p181
    %p183 = scmp.ne.s32.totalorder %s172, %s173
    %p184 = scmp.eq.s32.totalorder %s18, 0
    %p185 = por %p183, %p184
    %p186 = scmp.ne.s32.totalorder %s172, %s173
    %p187 = scmp.eq.s32.totalorder %s19, 1
    %p188 = por %p186, %p187
    %p190 = scmp.ne.s32.totalorder %s173, %s189
    %p191 = scmp.eq.s32.totalorder %s19, 0
    %p192 = por %p190, %p191
    %p193 = scmp.le.s32.totalorder 1, %s13
    %p194 = scmp.lt.s32.totalorder %s13, 3
    %p195 = pnand %p193, %p194
    %p196 = pneg %p195
    // Predicated region
    $region9: #{inception_v3a_forward.4} parent=5 // pred_check
      _
    $region10: #{inception_v3a_forward.4} parent=5 // pred_check_branch
      %198 = sbr.rel (%p195) target = $region12
    $region11: #{inception_v3a_forward.4} parent=5 // pred_region
      %s199 = ssub.s32 %s13, 1
      // Predicated region
      $region13: #{inception_v3a_forward.4} parent=11 // pred_check
        %p200 = pneg %p60
      $region14: #{inception_v3a_forward.4} parent=11 // pred_check_branch
        %202 = sbr.rel (%p200) target = $region16
      $region15: #{inception_v3a_forward.4} parent=11 // pred_region
        _
      $region16: #{inception_v3a_forward.4} parent=11 // pred_fallthru
        _
      // Predicated region
      $region17: #{inception_v3a_forward.4} parent=11 // pred_check
        %p203 = pneg %p81
      $region18: #{inception_v3a_forward.4} parent=11 // pred_check_branch
        %205 = sbr.rel (%p203) target = $region20
      $region19: #{inception_v3a_forward.4} parent=11 // pred_region
        _
      $region20: #{inception_v3a_forward.4} parent=11 // pred_fallthru
        _
    $region12: #{inception_v3a_forward.4} parent=5 // pred_fallthru
      _
    %p206 = scmp.lt.s32.totalorder %s13, 2
    // Predicated region
    $region21: #{inception_v3a_forward.4} parent=5 // pred_check
      %p207 = pneg %p206
    $region22: #{inception_v3a_forward.4} parent=5 // pred_check_branch
      %209 = sbr.rel (%p207) target = $region24
    $region23: #{inception_v3a_forward.4} parent=5 // pred_region
      // Predicated region
      $region25: #{inception_v3a_forward.4} parent=23 // pred_check
        %p210 = pneg %p33
      $region26: #{inception_v3a_forward.4} parent=23 // pred_check_branch
        %212 = sbr.rel (%p210) target = $region28
      $region27: #{inception_v3a_forward.4} parent=23 // pred_region
        %p213 = scmp.lt.s32.totalorder %s13, 1
        %s214 = scalar_select %p213, %s13, 1
        %s215 = smul.addr %s214, 32
        %s216 = smul.addr %s215, 4
        %s217 = scalar_lea.vmem %s0, %s216
      $region28: #{inception_v3a_forward.4} parent=23 // pred_fallthru
        _
    $region24: #{inception_v3a_forward.4} parent=5 // pred_fallthru
      _
    %p218 = scmp.le.s32.totalorder 1, %s13
    %p219 = scmp.lt.s32.totalorder %s13, 3
    %p220 = pnand %p218, %p219
    %p221 = pneg %p220
    // Predicated region
    $region29: #{inception_v3a_forward.4} parent=5 // pred_check
      _
    $region30: #{inception_v3a_forward.4} parent=5 // pred_check_branch
      %223 = sbr.rel (%p220) target = $region32
    $region31: #{inception_v3a_forward.4} parent=5 // pred_region
      %s224 = ssub.s32 %s13, 1
      %p225 = scmp.lt.s32.totalorder %s18, 1
      %s226 = scalar_select %p225, %s18, 1
      %s227 = smul.addr %s226, 32
      %s228 = smul.addr %s227, 4
      %s229 = scalar_lea.vmem %s0, %s228
      %p230 = pneg %p39
      %p231 = pneg %p36
      %p232 = pneg %p60
      %p233 = pneg %p57
      %p234 = pneg %p81
      %p235 = pneg %p78
      %p236 = pneg %p107
      %p237 = pneg %p104
      %p238 = scmp.lt.s32.totalorder %s18, 1
      %s239 = scalar_select %p238, %s18, 1
      %s240 = smul.addr %s239, 32
      %s241 = smul.addr %s240, 4
      %s242 = scalar_lea.vmem %s3, %s241
      %p243 = pneg %p133
      %p244 = pneg %p130
      %p245 = scmp.lt.s32.totalorder %s18, 1
      %s246 = scalar_select %p245, %s18, 1
      %s247 = smul.addr %s246, 32
      %s248 = smul.addr %s247, 4
      %s249 = scalar_lea.vmem %s4, %s248
      %p250 = pneg %p159
      %p251 = pneg %p156
      %p252 = scmp.lt.s32.totalorder %s18, 1
      %s253 = scalar_select %p252, %s18, 1
      %s254 = smul.addr %s253, 2
      %s255 = scalar_lea.vmem %s5, %s254
      %p256 = pneg %p185
      %p257 = pneg %p182
      %p258 = scmp.lt.s32.totalorder %s18, 1
      %s259 = scalar_select %p258, %s18, 1
      %s260 = smul.addr %s259, 2
      %s261 = scalar_lea.vmem %s6, %s260
      %p262 = scmp.lt.s32.totalorder %s18, 1
      %s263 = scalar_select %p262, %s18, 1
      %s264 = smul.addr %s263, 32
      %s265 = smul.addr %s264, 4
      %s266 = scalar_lea.vmem %s0, %s265
      %p267 = scmp.lt.s32.totalorder %s18, 1
      %s268 = scalar_select %p267, %s18, 1
      %s269 = smul.addr %s268, 32
      %s270 = smul.addr %s269, 4
      %s271 = scalar_lea.vmem %s3, %s270
      %p272 = scmp.lt.s32.totalorder %s18, 1
      %s273 = scalar_select %p272, %s18, 1
      %s274 = smul.addr %s273, 32
      %s275 = smul.addr %s274, 4
      %s276 = scalar_lea.vmem %s4, %s275
      %p277 = scmp.lt.s32.totalorder %s18, 1
      %s278 = scalar_select %p277, %s18, 1
      %s279 = smul.addr %s278, 2
      %s280 = scalar_lea.vmem %s5, %s279
      %p281 = scmp.lt.s32.totalorder %s18, 1
      %s282 = scalar_select %p281, %s18, 1
      %s283 = smul.addr %s282, 2
      %s284 = scalar_lea.vmem %s6, %s283
      %v287 = vld [vmem:[%s266] sm:$0xf]
      %v288 = vld [vmem:[%s266 + $0x4] sm:$0xf]
      %v289 = vld [vmem:[%s266 + $0x8] sm:$0xf]
      %v290 = vld [vmem:[%s266 + $0xc] sm:$0xf]
      %v291 = vld [vmem:[%s266 + $0x10] sm:$0xf]
      %v292 = vld [vmem:[%s266 + $0x14] sm:$0xf]
      %v293 = vld [vmem:[%s266 + $0x18] sm:$0xf]
      %v294 = vld [vmem:[%s266 + $0x1c] sm:$0xf]
      %v295 = vld [vmem:[%s266 + $0x20] sm:$0xf]
      %v296 = vld [vmem:[%s266 + $0x24] sm:$0xf]
      %v297 = vld [vmem:[%s266 + $0x28] sm:$0xf]
      %v298 = vld [vmem:[%s266 + $0x2c] sm:$0xf]
      %v299 = vld [vmem:[%s266 + $0x30] sm:$0xf]
      %v300 = vld [vmem:[%s266 + $0x34] sm:$0xf]
      %v301 = vld [vmem:[%s266 + $0x38] sm:$0xf]
      %v302 = vld [vmem:[%s266 + $0x3c] sm:$0xf]
      %v303 = vld [vmem:[%s266 + $0x40] sm:$0xf]
      %v304 = vld [vmem:[%s266 + $0x44] sm:$0xf]
      %v305 = vld [vmem:[%s266 + $0x48] sm:$0xf]
      %v306 = vld [vmem:[%s266 + $0x4c] sm:$0xf]
      %v307 = vld [vmem:[%s266 + $0x50] sm:$0xf]
      %v308 = vld [vmem:[%s266 + $0x54] sm:$0xf]
      %v309 = vld [vmem:[%s266 + $0x58] sm:$0xf]
      %v310 = vld [vmem:[%s266 + $0x5c] sm:$0xf]
      %v311 = vld [vmem:[%s266 + $0x60] sm:$0xf]
      %v312 = vld [vmem:[%s266 + $0x64] sm:$0xf]
      %v313 = vld [vmem:[%s266 + $0x68] sm:$0xf]
      %v314 = vld [vmem:[%s266 + $0x6c] sm:$0xf]
      %v315 = vld [vmem:[%s266 + $0x70] sm:$0xf]
      %v316 = vld [vmem:[%s266 + $0x74] sm:$0xf]
      %v317 = vld [vmem:[%s266 + $0x78] sm:$0xf]
      %v318 = vld [vmem:[%s266 + $0x7c] sm:$0xf]
      %v319 = vld [vmem:[%s1] sm:$0x3]
      %v352 = vunpack.c.l.b16 %v287
      %v353 = vunpack.c.l.b16 %v288
      %v354 = vunpack.c.l.b16 %v289
      %v355 = vunpack.c.l.b16 %v290
      %v356 = vunpack.c.l.b16 %v291
      %v357 = vunpack.c.l.b16 %v292
      %v358 = vunpack.c.l.b16 %v293
      %v359 = vunpack.c.l.b16 %v294
      %v360 = vunpack.c.l.b16 %v295
      %v361 = vunpack.c.l.b16 %v296
      %v362 = vunpack.c.l.b16 %v297
      %v363 = vunpack.c.l.b16 %v298
      %v364 = vunpack.c.l.b16 %v299
      %v365 = vunpack.c.l.b16 %v300
      %v366 = vunpack.c.l.b16 %v301
      %v367 = vunpack.c.l.b16 %v302
      %v368 = vunpack.c.l.b16 %v303
      %v369 = vunpack.c.l.b16 %v304
      %v370 = vunpack.c.l.b16 %v305
      %v371 = vunpack.c.l.b16 %v306
      %v372 = vunpack.c.l.b16 %v307
      %v373 = vunpack.c.l.b16 %v308
      %v374 = vunpack.c.l.b16 %v309
      %v375 = vunpack.c.l.b16 %v310
      %v376 = vunpack.c.l.b16 %v311
      %v377 = vunpack.c.l.b16 %v312
      %v378 = vunpack.c.l.b16 %v313
      %v379 = vunpack.c.l.b16 %v314
      %v380 = vunpack.c.l.b16 %v315
      %v381 = vunpack.c.l.b16 %v316
      %v382 = vunpack.c.l.b16 %v317
      %v383 = vunpack.c.l.b16 %v318
      %v384 = vpack.c.b16 %v353, %v352
      %v385 = vpack.c.b16 %v355, %v354
      %v386 = vpack.c.b16 %v357, %v356
      %v387 = vpack.c.b16 %v359, %v358
      %v388 = vpack.c.b16 %v361, %v360
      %v389 = vpack.c.b16 %v363, %v362
      %v390 = vpack.c.b16 %v365, %v364
      %v391 = vpack.c.b16 %v367, %v366
      %v392 = vpack.c.b16 %v369, %v368
      %v393 = vpack.c.b16 %v371, %v370
      %v394 = vpack.c.b16 %v373, %v372
      %v395 = vpack.c.b16 %v375, %v374
      %v396 = vpack.c.b16 %v377, %v376
      %v397 = vpack.c.b16 %v379, %v378
      %v398 = vpack.c.b16 %v381, %v380
      %v399 = vpack.c.b16 %v383, %v382
      %vm400 = vcmask 31744
      %v402 = vsel %vm400, %v384, 0
      %v405 = vsel %vm400, %v385, 0
      %v408 = vsel %vm400, %v386, 0
      %v411 = vsel %vm400, %v387, 0
      %v414 = vsel %vm400, %v388, 0
      %v417 = vsel %vm400, %v389, 0
      %v420 = vsel %vm400, %v390, 0
      %v423 = vsel %vm400, %v391, 0
      %v426 = vsel %vm400, %v392, 0
      %v429 = vsel %vm400, %v393, 0
      %v432 = vsel %vm400, %v394, 0
      %v435 = vsel %vm400, %v395, 0
      %v438 = vsel %vm400, %v396, 0
      %v441 = vsel %vm400, %v397, 0
      %v444 = vsel %vm400, %v398, 0
      %v447 = vsel %vm400, %v399, 0
      %vm449 = vcmask 1041408
      %v451 = vsel %vm449, %v319, 0
      %453 = vmatprep.subr.bf16.mxu0 0
      %454 = vmatpush1.bf16.msra.mxu0 %v451
      %455 = vmatprep.subr.bf16.mxu0 0
      %456 = vmatpush1.bf16.msra.mxu0 0
      %457 = vmatprep.subr.bf16.mxu0 0
      %458 = vmatpush1.bf16.msra.mxu0 0
      %459 = vmatprep.subr.bf16.mxu0 0
      %460 = vmatpush1.bf16.msra.mxu0 0
      %461 = vmatprep.subr.bf16.mxu0 0
      %462 = vmatpush1.bf16.msra.mxu0 0
      %463 = vmatprep.subr.bf16.mxu0 0
      %464 = vmatpush1.bf16.msra.mxu0 0
      %465 = vmatprep.subr.bf16.mxu0 0
      %466 = vmatpush1.bf16.msra.mxu0 0
      %467 = vmatprep.subr.bf16.mxu0 0
      %468 = vmatpush1.bf16.msra.mxu0 0
      %469 = vmatprep.subr.bf16.mxu0 0
      %470 = vmatpush1.bf16.msra.mxu0 0
      %471 = vmatprep.subr.bf16.mxu0 0
      %472 = vmatpush1.bf16.msra.mxu0 0
      %473 = vmatprep.subr.bf16.mxu0 0
      %474 = vmatpush1.bf16.msra.mxu0 0
      %475 = vmatprep.subr.bf16.mxu0 0
      %476 = vmatpush1.bf16.msra.mxu0 0
      %477 = vmatprep.subr.bf16.mxu0 0
      %478 = vmatpush1.bf16.msra.mxu0 0
      %479 = vmatprep.subr.bf16.mxu0 0
      %480 = vmatpush1.bf16.msra.mxu0 0
      %481 = vmatprep.subr.bf16.mxu0 0
      %482 = vmatpush1.bf16.msra.mxu0 0
      %483 = vmatprep.subr.bf16.mxu0 0
      %484 = vmatpush1.bf16.msra.mxu0 0
      %485 = vmatprep.mubr.bf16.mxu0 0
      %486 = vmatmul.mubr.bf16.gmra.mrb[0].mxu0 %v402
      %v487 = vpop.f32.mrb[0].mxu0
      %v488 = vadd.f32 0.0, %v487
      %v489 = vpop.f32.mrb[0].mxu0
      %v490 = vpop.f32.mrb[0].mxu0
      %v491 = vadd.f32 0.0, %v490
      %v492 = vpop.f32.mrb[0].mxu0
      %493 = vmatprep.mubr.bf16.mxu0 0
      %494 = vmatmul.mubr.bf16.gmra.mrb[0].mxu0 %v405
      %v495 = vpop.f32.mrb[0].mxu0
      %v496 = vadd.f32 0.0, %v495
      %v497 = vpop.f32.mrb[0].mxu0
      %v498 = vpop.f32.mrb[0].mxu0
      %v499 = vadd.f32 0.0, %v498
      %v500 = vpop.f32.mrb[0].mxu0
      %501 = vmatprep.mubr.bf16.mxu0 0
      %502 = vmatmul.mubr.bf16.gmra.mrb[0].mxu0 %v408
      %v503 = vpop.f32.mrb[0].mxu0
      %v504 = vadd.f32 0.0, %v503
      %v505 = vpop.f32.mrb[0].mxu0
      %v506 = vpop.f32.mrb[0].mxu0
      %v507 = vadd.f32 0.0, %v506
      %v508 = vpop.f32.mrb[0].mxu0
      %509 = vmatprep.mubr.bf16.mxu0 0
      %510 = vmatmul.mubr.bf16.gmra.mrb[0].mxu0 %v411
      %v511 = vpop.f32.mrb[0].mxu0
      %v512 = vadd.f32 0.0, %v511
      %v513 = vpop.f32.mrb[0].mxu0
      %v514 = vpop.f32.mrb[0].mxu0
      %v515 = vadd.f32 0.0, %v514
      %v516 = vpop.f32.mrb[0].mxu0
      %517 = vmatprep.mubr.bf16.mxu0 0
      %518 = vmatmul.mubr.bf16.gmra.mrb[0].mxu0 %v414
      %v519 = vpop.f32.mrb[0].mxu0
      %v520 = vadd.f32 0.0, %v519
      %v521 = vpop.f32.mrb[0].mxu0
      %v522 = vpop.f32.mrb[0].mxu0
      %v523 = vadd.f32 0.0, %v522
      %v524 = vpop.f32.mrb[0].mxu0
      %525 = vmatprep.mubr.bf16.mxu0 0
      %526 = vmatmul.mubr.bf16.gmra.mrb[0].mxu0 %v417
      %v527 = vpop.f32.mrb[0].mxu0
      %v528 = vadd.f32 0.0, %v527
      %v529 = vpop.f32.mrb[0].mxu0
      %v530 = vpop.f32.mrb[0].mxu0
      %v531 = vadd.f32 0.0, %v530
      %v532 = vpop.f32.mrb[0].mxu0
      %533 = vmatprep.mubr.bf16.mxu0 0
      %534 = vmatmul.mubr.bf16.gmra.mrb[0].mxu0 %v420
      %v535 = vpop.f32.mrb[0].mxu0
      %v536 = vadd.f32 0.0, %v535
      %v537 = vpop.f32.mrb[0].mxu0
      %v538 = vpop.f32.mrb[0].mxu0
      %v539 = vadd.f32 0.0, %v538
      %v540 = vpop.f32.mrb[0].mxu0
      %541 = vmatprep.mubr.bf16.mxu0 0
      %542 = vmatmul.mubr.bf16.gmra.mrb[0].mxu0 %v423
      %v543 = vpop.f32.mrb[0].mxu0
      %v544 = vadd.f32 0.0, %v543
      %v545 = vpop.f32.mrb[0].mxu0
      %v546 = vpop.f32.mrb[0].mxu0
      %v547 = vadd.f32 0.0, %v546
      %v548 = vpop.f32.mrb[0].mxu0
      %549 = vmatprep.mubr.bf16.mxu0 0
      %550 = vmatmul.mubr.bf16.gmra.mrb[0].mxu0 %v426
      %v551 = vpop.f32.mrb[0].mxu0
      %v552 = vadd.f32 0.0, %v551
      %v553 = vpop.f32.mrb[0].mxu0
      %v554 = vpop.f32.mrb[0].mxu0
      %v555 = vadd.f32 0.0, %v554
      %v556 = vpop.f32.mrb[0].mxu0
      %557 = vmatprep.mubr.bf16.mxu0 0
      %558 = vmatmul.mubr.bf16.gmra.mrb[0].mxu0 %v429
      %v559 = vpop.f32.mrb[0].mxu0
      %v560 = vadd.f32 0.0, %v559
      %v561 = vpop.f32.mrb[0].mxu0
      %v562 = vpop.f32.mrb[0].mxu0
      %v563 = vadd.f32 0.0, %v562
      %v564 = vpop.f32.mrb[0].mxu0
      %565 = vmatprep.mubr.bf16.mxu0 0
      %566 = vmatmul.mubr.bf16.gmra.mrb[0].mxu0 %v432
      %v567 = vpop.f32.mrb[0].mxu0
      %v568 = vadd.f32 0.0, %v567
      %v569 = vpop.f32.mrb[0].mxu0
      %v570 = vpop.f32.mrb[0].mxu0
      %v571 = vadd.f32 0.0, %v570
      %v572 = vpop.f32.mrb[0].mxu0
      %573 = vmatprep.mubr.bf16.mxu0 0
      %574 = vmatmul.mubr.bf16.gmra.mrb[0].mxu0 %v435
      %v575 = vpop.f32.mrb[0].mxu0
      %v576 = vadd.f32 0.0, %v575
      %v577 = vpop.f32.mrb[0].mxu0
      %v578 = vpop.f32.mrb[0].mxu0
      %v579 = vadd.f32 0.0, %v578
      %v580 = vpop.f32.mrb[0].mxu0
      %581 = vmatprep.mubr.bf16.mxu0 0
      %582 = vmatmul.mubr.bf16.gmra.mrb[0].mxu0 %v438
      %v583 = vpop.f32.mrb[0].mxu0
      %v584 = vadd.f32 0.0, %v583
      %v585 = vpop.f32.mrb[0].mxu0
      %v586 = vpop.f32.mrb[0].mxu0
      %v587 = vadd.f32 0.0, %v586
      %v588 = vpop.f32.mrb[0].mxu0
      %589 = vmatprep.mubr.bf16.mxu0 0
      %590 = vmatmul.mubr.bf16.gmra.mrb[0].mxu0 %v441
      %v591 = vpop.f32.mrb[0].mxu0
      %v592 = vadd.f32 0.0, %v591
      %v593 = vpop.f32.mrb[0].mxu0
      %v594 = vpop.f32.mrb[0].mxu0
      %v595 = vadd.f32 0.0, %v594
      %v596 = vpop.f32.mrb[0].mxu0
      %597 = vmatprep.mubr.bf16.mxu0 0
      %598 = vmatmul.mubr.bf16.gmra.mrb[0].mxu0 %v444
      %v599 = vpop.f32.mrb[0].mxu0
      %v600 = vadd.f32 0.0, %v599
      %v601 = vpop.f32.mrb[0].mxu0
      %v602 = vpop.f32.mrb[0].mxu0
      %v603 = vadd.f32 0.0, %v602
      %v604 = vpop.f32.mrb[0].mxu0
      %605 = vmatprep.mubr.bf16.mxu0 0
      %606 = vmatmul.mubr.bf16.gmra.mrb[0].mxu0 %v447
      %v607 = vpop.f32.mrb[0].mxu0
      %v608 = vadd.f32 0.0, %v607
      %v609 = vpop.f32.mrb[0].mxu0
      %v610 = vpop.f32.mrb[0].mxu0
      %v611 = vadd.f32 0.0, %v610
      %v612 = vpop.f32.mrb[0].mxu0
      %613 = vdwg.mxu0
      %v614 = vpack.c.bf16 %v491, %v488
      %v615 = vpack.c.bf16 %v499, %v496
      %v616 = vpack.c.bf16 %v507, %v504
      %v617 = vpack.c.bf16 %v515, %v512
      %v618 = vpack.c.bf16 %v523, %v520
      %v619 = vpack.c.bf16 %v531, %v528
      %v620 = vpack.c.bf16 %v539, %v536
      %v621 = vpack.c.bf16 %v547, %v544
      %v622 = vpack.c.bf16 %v555, %v552
      %v623 = vpack.c.bf16 %v563, %v560
      %v624 = vpack.c.bf16 %v571, %v568
      %v625 = vpack.c.bf16 %v579, %v576
      %v626 = vpack.c.bf16 %v587, %v584
      %v627 = vpack.c.bf16 %v595, %v592
      %v628 = vpack.c.bf16 %v603, %v600
      %v629 = vpack.c.bf16 %v611, %v608
      %v646 = vunpack.c.l.b16 %v614
      %v647 = vunpack.c.h.b16 %v614
      %v648 = vunpack.c.l.b16 %v615
      %v649 = vunpack.c.h.b16 %v615
      %v650 = vunpack.c.l.b16 %v616
      %v651 = vunpack.c.h.b16 %v616
      %v652 = vunpack.c.l.b16 %v617
      %v653 = vunpack.c.h.b16 %v617
      %v654 = vunpack.c.l.b16 %v618
      %v655 = vunpack.c.h.b16 %v618
      %v656 = vunpack.c.l.b16 %v619
      %v657 = vunpack.c.h.b16 %v619
      %v658 = vunpack.c.l.b16 %v620
      %v659 = vunpack.c.h.b16 %v620
      %v660 = vunpack.c.l.b16 %v621
      %v661 = vunpack.c.h.b16 %v621
      %v662 = vunpack.c.l.b16 %v622
      %v663 = vunpack.c.h.b16 %v622
      %v664 = vunpack.c.l.b16 %v623
      %v665 = vunpack.c.h.b16 %v623
      %v666 = vunpack.c.l.b16 %v624
      %v667 = vunpack.c.h.b16 %v624
      %v668 = vunpack.c.l.b16 %v625
      %v669 = vunpack.c.h.b16 %v625
      %v670 = vunpack.c.l.b16 %v626
      %v671 = vunpack.c.h.b16 %v626
      %v672 = vunpack.c.l.b16 %v627
      %v673 = vunpack.c.h.b16 %v627
      %v674 = vunpack.c.l.b16 %v628
      %v675 = vunpack.c.h.b16 %v628
      %v676 = vunpack.c.l.b16 %v629
      %v677 = vunpack.c.h.b16 %v629
      %v678 = vpack.c.b16 %v646, %v646
      %v679 = vpack.c.b16 %v647, %v647
      %v680 = vpack.c.b16 %v648, %v648
      %v681 = vpack.c.b16 %v649, %v649
      %v682 = vpack.c.b16 %v650, %v650
      %v683 = vpack.c.b16 %v651, %v651
      %v684 = vpack.c.b16 %v652, %v652
      %v685 = vpack.c.b16 %v653, %v653
      %v686 = vpack.c.b16 %v654, %v654
      %v687 = vpack.c.b16 %v655, %v655
      %v688 = vpack.c.b16 %v656, %v656
      %v689 = vpack.c.b16 %v657, %v657
      %v690 = vpack.c.b16 %v658, %v658
      %v691 = vpack.c.b16 %v659, %v659
      %v692 = vpack.c.b16 %v660, %v660
      %v693 = vpack.c.b16 %v661, %v661
      %v694 = vpack.c.b16 %v662, %v662
      %v695 = vpack.c.b16 %v663, %v663
      %v696 = vpack.c.b16 %v664, %v664
      %v697 = vpack.c.b16 %v665, %v665
      %v698 = vpack.c.b16 %v666, %v666
      %v699 = vpack.c.b16 %v667, %v667
      %v700 = vpack.c.b16 %v668, %v668
      %v701 = vpack.c.b16 %v669, %v669
      %v702 = vpack.c.b16 %v670, %v670
      %v703 = vpack.c.b16 %v671, %v671
      %v704 = vpack.c.b16 %v672, %v672
      %v705 = vpack.c.b16 %v673, %v673
      %v706 = vpack.c.b16 %v674, %v674
      %v707 = vpack.c.b16 %v675, %v675
      %v708 = vpack.c.b16 %v676, %v676
      %v709 = vpack.c.b16 %v677, %v677
      %vm742 = vcmask 60416
      %743 = vst.msk [vmem:[%s271] sm:$0xf] %vm742, %v678
      %744 = vst.msk [vmem:[%s271 + $0x4] sm:$0xf] %vm742, %v679
      %745 = vst.msk [vmem:[%s271 + $0x8] sm:$0xf] %vm742, %v680
      %746 = vst.msk [vmem:[%s271 + $0xc] sm:$0xf] %vm742, %v681
      %747 = vst.msk [vmem:[%s271 + $0x10] sm:$0xf] %vm742, %v682
      %748 = vst.msk [vmem:[%s271 + $0x14] sm:$0xf] %vm742, %v683
      %749 = vst.msk [vmem:[%s271 + $0x18] sm:$0xf] %vm742, %v684
      %750 = vst.msk [vmem:[%s271 + $0x1c] sm:$0xf] %vm742, %v685
      %751 = vst.msk [vmem:[%s271 + $0x20] sm:$0xf] %vm742, %v686
      %752 = vst.msk [vmem:[%s271 + $0x24] sm:$0xf] %vm742, %v687
      %753 = vst.msk [vmem:[%s271 + $0x28] sm:$0xf] %vm742, %v688
      %754 = vst.msk [vmem:[%s271 + $0x2c] sm:$0xf] %vm742, %v689
      %755 = vst.msk [vmem:[%s271 + $0x30] sm:$0xf] %vm742, %v690
      %756 = vst.msk [vmem:[%s271 + $0x34] sm:$0xf] %vm742, %v691
      %757 = vst.msk [vmem:[%s271 + $0x38] sm:$0xf] %vm742, %v692
      %758 = vst.msk [vmem:[%s271 + $0x3c] sm:$0xf] %vm742, %v693
      %759 = vst.msk [vmem:[%s271 + $0x40] sm:$0xf] %vm742, %v694
      %760 = vst.msk [vmem:[%s271 + $0x44] sm:$0xf] %vm742, %v695
      %761 = vst.msk [vmem:[%s271 + $0x48] sm:$0xf] %vm742, %v696
      %762 = vst.msk [vmem:[%s271 + $0x4c] sm:$0xf] %vm742, %v697
      %763 = vst.msk [vmem:[%s271 + $0x50] sm:$0xf] %vm742, %v698
      %764 = vst.msk [vmem:[%s271 + $0x54] sm:$0xf] %vm742, %v699
      %765 = vst.msk [vmem:[%s271 + $0x58] sm:$0xf] %vm742, %v700
      %766 = vst.msk [vmem:[%s271 + $0x5c] sm:$0xf] %vm742, %v701
      %767 = vst.msk [vmem:[%s271 + $0x60] sm:$0xf] %vm742, %v702
      %768 = vst.msk [vmem:[%s271 + $0x64] sm:$0xf] %vm742, %v703
      %769 = vst.msk [vmem:[%s271 + $0x68] sm:$0xf] %vm742, %v704
      %770 = vst.msk [vmem:[%s271 + $0x6c] sm:$0xf] %vm742, %v705
      %771 = vst.msk [vmem:[%s271 + $0x70] sm:$0xf] %vm742, %v706
      %772 = vst.msk [vmem:[%s271 + $0x74] sm:$0xf] %vm742, %v707
      %773 = vst.msk [vmem:[%s271 + $0x78] sm:$0xf] %vm742, %v708
      %774 = vst.msk [vmem:[%s271 + $0x7c] sm:$0xf] %vm742, %v709
      %vm775 = vcmask 64512
      %v776 = vsel %vm775, %v488, 0.0
      %v777 = vsel %vm775, %v491, 0.0
      %v778 = vadd.f32 %v776, %v777
      %v779 = vsel %vm775, %v496, 0.0
      %v780 = vadd.f32 %v778, %v779
      %v781 = vsel %vm775, %v499, 0.0
      %v782 = vadd.f32 %v780, %v781
      %v783 = vsel %vm775, %v504, 0.0
      %v784 = vadd.f32 %v782, %v783
      %v785 = vsel %vm775, %v507, 0.0
      %v786 = vadd.f32 %v784, %v785
      %v787 = vsel %vm775, %v512, 0.0
      %v788 = vadd.f32 %v786, %v787
      %v789 = vsel %vm775, %v515, 0.0
      %v790 = vadd.f32 %v788, %v789
      %v791 = vsel %vm775, %v520, 0.0
      %v792 = vadd.f32 %v790, %v791
      %v793 = vsel %vm775, %v523, 0.0
      %v794 = vadd.f32 %v792, %v793
      %v795 = vsel %vm775, %v528, 0.0
      %v796 = vadd.f32 %v794, %v795
      %v797 = vsel %vm775, %v531, 0.0
      %v798 = vadd.f32 %v796, %v797
      %v799 = vsel %vm775, %v536, 0.0
      %v800 = vadd.f32 %v798, %v799
      %v801 = vsel %vm775, %v539, 0.0
      %v802 = vadd.f32 %v800, %v801
      %v803 = vsel %vm775, %v544, 0.0
      %v804 = vadd.f32 %v802, %v803
      %v805 = vsel %vm775, %v547, 0.0
      %v806 = vadd.f32 %v804, %v805
      %v807 = vsel %vm775, %v552, 0.0
      %v808 = vadd.f32 %v806, %v807
      %v809 = vsel %vm775, %v555, 0.0
      %v810 = vadd.f32 %v808, %v809
      %v811 = vsel %vm775, %v560, 0.0
      %v812 = vadd.f32 %v810, %v811
      %v813 = vsel %vm775, %v563, 0.0
      %v814 = vadd.f32 %v812, %v813
      %v815 = vsel %vm775, %v568, 0.0
      %v816 = vadd.f32 %v814, %v815
      %v817 = vsel %vm775, %v571, 0.0
      %v818 = vadd.f32 %v816, %v817
      %v819 = vsel %vm775, %v576, 0.0
      %v820 = vadd.f32 %v818, %v819
      %v821 = vsel %vm775, %v579, 0.0
      %v822 = vadd.f32 %v820, %v821
      %v823 = vsel %vm775, %v584, 0.0
      %v824 = vadd.f32 %v822, %v823
      %v825 = vsel %vm775, %v587, 0.0
      %v826 = vadd.f32 %v824, %v825
      %v827 = vsel %vm775, %v592, 0.0
      %v828 = vadd.f32 %v826, %v827
      %v829 = vsel %vm775, %v595, 0.0
      %v830 = vadd.f32 %v828, %v829
      %v831 = vsel %vm775, %v600, 0.0
      %v832 = vadd.f32 %v830, %v831
      %v833 = vsel %vm775, %v603, 0.0
      %v834 = vadd.f32 %v832, %v833
      %v835 = vsel %vm775, %v608, 0.0
      %v836 = vadd.f32 %v834, %v835
      %v837 = vsel %vm775, %v611, 0.0
      %v838 = vadd.f32 %v836, %v837
      %v839 = vrot.slane %v838, 4
      %v840 = vadd.f32 %v838, %v839
      %v841 = vrot.slane %v840, 2
      %v842 = vadd.f32 %v840, %v841
      %v843 = vrot.slane %v842, 1
      %v844 = vadd.f32 %v842, %v843
      %v845 = vmul.f32 %v488, %v488
      %v846 = vmul.f32 %v491, %v491
      %v847 = vmul.f32 %v496, %v496
      %v848 = vmul.f32 %v499, %v499
      %v849 = vmul.f32 %v504, %v504
      %v850 = vmul.f32 %v507, %v507
      %v851 = vmul.f32 %v512, %v512
      %v852 = vmul.f32 %v515, %v515
      %v853 = vmul.f32 %v520, %v520
      %v854 = vmul.f32 %v523, %v523
      %v855 = vmul.f32 %v528, %v528
      %v856 = vmul.f32 %v531, %v531
      %v857 = vmul.f32 %v536, %v536
      %v858 = vmul.f32 %v539, %v539
      %v859 = vmul.f32 %v544, %v544
      %v860 = vmul.f32 %v547, %v547
      %v861 = vmul.f32 %v552, %v552
      %v862 = vmul.f32 %v555, %v555
      %v863 = vmul.f32 %v560, %v560
      %v864 = vmul.f32 %v563, %v563
      %v865 = vmul.f32 %v568, %v568
      %v866 = vmul.f32 %v571, %v571
      %v867 = vmul.f32 %v576, %v576
      %v868 = vmul.f32 %v579, %v579
      %v869 = vmul.f32 %v584, %v584
      %v870 = vmul.f32 %v587, %v587
      %v871 = vmul.f32 %v592, %v592
      %v872 = vmul.f32 %v595, %v595
      %v873 = vmul.f32 %v600, %v600
      %v874 = vmul.f32 %v603, %v603
      %v875 = vmul.f32 %v608, %v608
      %v876 = vmul.f32 %v611, %v611
      %v877 = vsel %vm775, %v845, 0.0
      %v878 = vsel %vm775, %v846, 0.0
      %v879 = vadd.f32 %v877, %v878
      %v880 = vsel %vm775, %v847, 0.0
      %v881 = vadd.f32 %v879, %v880
      %v882 = vsel %vm775, %v848, 0.0
      %v883 = vadd.f32 %v881, %v882
      %v884 = vsel %vm775, %v849, 0.0
      %v885 = vadd.f32 %v883, %v884
      %v886 = vsel %vm775, %v850, 0.0
      %v887 = vadd.f32 %v885, %v886
      %v888 = vsel %vm775, %v851, 0.0
      %v889 = vadd.f32 %v887, %v888
      %v890 = vsel %vm775, %v852, 0.0
      %v891 = vadd.f32 %v889, %v890
      %v892 = vsel %vm775, %v853, 0.0
      %v893 = vadd.f32 %v891, %v892
      %v894 = vsel %vm775, %v854, 0.0
      %v895 = vadd.f32 %v893, %v894
      %v896 = vsel %vm775, %v855, 0.0
      %v897 = vadd.f32 %v895, %v896
      %v898 = vsel %vm775, %v856, 0.0
      %v899 = vadd.f32 %v897, %v898
      %v900 = vsel %vm775, %v857, 0.0
      %v901 = vadd.f32 %v899, %v900
      %v902 = vsel %vm775, %v858, 0.0
      %v903 = vadd.f32 %v901, %v902
      %v904 = vsel %vm775, %v859, 0.0
      %v905 = vadd.f32 %v903, %v904
      %v906 = vsel %vm775, %v860, 0.0
      %v907 = vadd.f32 %v905, %v906
      %v908 = vsel %vm775, %v861, 0.0
      %v909 = vadd.f32 %v907, %v908
      %v910 = vsel %vm775, %v862, 0.0
      %v911 = vadd.f32 %v909, %v910
      %v912 = vsel %vm775, %v863, 0.0
      %v913 = vadd.f32 %v911, %v912
      %v914 = vsel %vm775, %v864, 0.0
      %v915 = vadd.f32 %v913, %v914
      %v916 = vsel %vm775, %v865, 0.0
      %v917 = vadd.f32 %v915, %v916
      %v918 = vsel %vm775, %v866, 0.0
      %v919 = vadd.f32 %v917, %v918
      %v920 = vsel %vm775, %v867, 0.0
      %v921 = vadd.f32 %v919, %v920
      %v922 = vsel %vm775, %v868, 0.0
      %v923 = vadd.f32 %v921, %v922
      %v924 = vsel %vm775, %v869, 0.0
      %v925 = vadd.f32 %v923, %v924
      %v926 = vsel %vm775, %v870, 0.0
      %v927 = vadd.f32 %v925, %v926
      %v928 = vsel %vm775, %v871, 0.0
      %v929 = vadd.f32 %v927, %v928
      %v930 = vsel %vm775, %v872, 0.0
      %v931 = vadd.f32 %v929, %v930
      %v932 = vsel %vm775, %v873, 0.0
      %v933 = vadd.f32 %v931, %v932
      %v934 = vsel %vm775, %v874, 0.0
      %v935 = vadd.f32 %v933, %v934
      %v936 = vsel %vm775, %v875, 0.0
      %v937 = vadd.f32 %v935, %v936
      %v938 = vsel %vm775, %v876, 0.0
      %v939 = vadd.f32 %v937, %v938
      %v940 = vrot.slane %v939, 4
      %v941 = vadd.f32 %v939, %v940
      %v942 = vrot.slane %v941, 2
      %v943 = vadd.f32 %v941, %v942
      %v944 = vrot.slane %v943, 1
      %v945 = vadd.f32 %v943, %v944
      %vm946 = vcmask 1040384
      %v947 = vsel %vm946, %v844, %v945
      %vm948 = vcmask 58368
      %949 = vst.msk [vmem:[%s280] sm:$0x3] %vm948, %v947
      %950 = vrot.lane.b32.xlu0 %v678, 120
      %v951 = vpop.permute.xlu0 %950
      %952 = vrot.lane.b32.xlu0 %v679, 120
      %v953 = vpop.permute.xlu0 %952
      %954 = vrot.lane.b32.xlu0 %v680, 120
      %v955 = vpop.permute.xlu0 %954
      %956 = vrot.lane.b32.xlu0 %v681, 120
      %v957 = vpop.permute.xlu0 %956
      %958 = vrot.lane.b32.xlu0 %v682, 120
      %v959 = vpop.permute.xlu0 %958
      %960 = vrot.lane.b32.xlu0 %v683, 120
      %v961 = vpop.permute.xlu0 %960
      %962 = vrot.lane.b32.xlu0 %v684, 120
      %v963 = vpop.permute.xlu0 %962
      %964 = vrot.lane.b32.xlu0 %v685, 120
      %v965 = vpop.permute.xlu0 %964
      %966 = vrot.lane.b32.xlu0 %v686, 120
      %v967 = vpop.permute.xlu0 %966
      %968 = vrot.lane.b32.xlu0 %v687, 120
      %v969 = vpop.permute.xlu0 %968
      %970 = vrot.lane.b32.xlu0 %v688, 120
      %v971 = vpop.permute.xlu0 %970
      %972 = vrot.lane.b32.xlu0 %v689, 120
      %v973 = vpop.permute.xlu0 %972
      %974 = vrot.lane.b32.xlu0 %v690, 120
      %v975 = vpop.permute.xlu0 %974
      %976 = vrot.lane.b32.xlu0 %v691, 120
      %v977 = vpop.permute.xlu0 %976
      %978 = vrot.lane.b32.xlu0 %v692, 120
      %v979 = vpop.permute.xlu0 %978
      %980 = vrot.lane.b32.xlu0 %v693, 120
      %v981 = vpop.permute.xlu0 %980
      %982 = vrot.lane.b32.xlu0 %v694, 120
      %v983 = vpop.permute.xlu0 %982
      %984 = vrot.lane.b32.xlu0 %v695, 120
      %v985 = vpop.permute.xlu0 %984
      %986 = vrot.lane.b32.xlu0 %v696, 120
      %v987 = vpop.permute.xlu0 %986
      %988 = vrot.lane.b32.xlu0 %v697, 120
      %v989 = vpop.permute.xlu0 %988
      %990 = vrot.lane.b32.xlu0 %v698, 120
      %v991 = vpop.permute.xlu0 %990
      %992 = vrot.lane.b32.xlu0 %v699, 120
      %v993 = vpop.permute.xlu0 %992
      %994 = vrot.lane.b32.xlu0 %v700, 120
      %v995 = vpop.permute.xlu0 %994
      %996 = vrot.lane.b32.xlu0 %v701, 120
      %v997 = vpop.permute.xlu0 %996
      %998 = vrot.lane.b32.xlu0 %v702, 120
      %v999 = vpop.permute.xlu0 %998
      %1000 = vrot.lane.b32.xlu0 %v703, 120
      %v1001 = vpop.permute.xlu0 %1000
      %1002 = vrot.lane.b32.xlu0 %v704, 120
      %v1003 = vpop.permute.xlu0 %1002
      %1004 = vrot.lane.b32.xlu0 %v705, 120
      %v1005 = vpop.permute.xlu0 %1004
      %1006 = vrot.lane.b32.xlu0 %v706, 120
      %v1007 = vpop.permute.xlu0 %1006
      %1008 = vrot.lane.b32.xlu0 %v707, 120
      %v1009 = vpop.permute.xlu0 %1008
      %1010 = vrot.lane.b32.xlu0 %v708, 120
      %v1011 = vpop.permute.xlu0 %1010
      %1012 = vrot.lane.b32.xlu0 %v709, 120
      %v1013 = vpop.permute.xlu0 %1012
      %1046 = vst.msk [vmem:[%s276] sm:$0xf] %vm742, %v951
      %1047 = vst.msk [vmem:[%s276 + $0x4] sm:$0xf] %vm742, %v953
      %1048 = vst.msk [vmem:[%s276 + $0x8] sm:$0xf] %vm742, %v955
      %1049 = vst.msk [vmem:[%s276 + $0xc] sm:$0xf] %vm742, %v957
      %1050 = vst.msk [vmem:[%s276 + $0x10] sm:$0xf] %vm742, %v959
      %1051 = vst.msk [vmem:[%s276 + $0x14] sm:$0xf] %vm742, %v961
      %1052 = vst.msk [vmem:[%s276 + $0x18] sm:$0xf] %vm742, %v963
      %1053 = vst.msk [vmem:[%s276 + $0x1c] sm:$0xf] %vm742, %v965
      %1054 = vst.msk [vmem:[%s276 + $0x20] sm:$0xf] %vm742, %v967
      %1055 = vst.msk [vmem:[%s276 + $0x24] sm:$0xf] %vm742, %v969
      %1056 = vst.msk [vmem:[%s276 + $0x28] sm:$0xf] %vm742, %v971
      %1057 = vst.msk [vmem:[%s276 + $0x2c] sm:$0xf] %vm742, %v973
      %1058 = vst.msk [vmem:[%s276 + $0x30] sm:$0xf] %vm742, %v975
      %1059 = vst.msk [vmem:[%s276 + $0x34] sm:$0xf] %vm742, %v977
      %1060 = vst.msk [vmem:[%s276 + $0x38] sm:$0xf] %vm742, %v979
      %1061 = vst.msk [vmem:[%s276 + $0x3c] sm:$0xf] %vm742, %v981
      %1062 = vst.msk [vmem:[%s276 + $0x40] sm:$0xf] %vm742, %v983
      %1063 = vst.msk [vmem:[%s276 + $0x44] sm:$0xf] %vm742, %v985
      %1064 = vst.msk [vmem:[%s276 + $0x48] sm:$0xf] %vm742, %v987
      %1065 = vst.msk [vmem:[%s276 + $0x4c] sm:$0xf] %vm742, %v989
      %1066 = vst.msk [vmem:[%s276 + $0x50] sm:$0xf] %vm742, %v991
      %1067 = vst.msk [vmem:[%s276 + $0x54] sm:$0xf] %vm742, %v993
      %1068 = vst.msk [vmem:[%s276 + $0x58] sm:$0xf] %vm742, %v995
      %1069 = vst.msk [vmem:[%s276 + $0x5c] sm:$0xf] %vm742, %v997
      %1070 = vst.msk [vmem:[%s276 + $0x60] sm:$0xf] %vm742, %v999
      %1071 = vst.msk [vmem:[%s276 + $0x64] sm:$0xf] %vm742, %v1001
      %1072 = vst.msk [vmem:[%s276 + $0x68] sm:$0xf] %vm742, %v1003
      %1073 = vst.msk [vmem:[%s276 + $0x6c] sm:$0xf] %vm742, %v1005
      %1074 = vst.msk [vmem:[%s276 + $0x70] sm:$0xf] %vm742, %v1007
      %1075 = vst.msk [vmem:[%s276 + $0x74] sm:$0xf] %vm742, %v1009
      %1076 = vst.msk [vmem:[%s276 + $0x78] sm:$0xf] %vm742, %v1011
      %1077 = vst.msk [vmem:[%s276 + $0x7c] sm:$0xf] %vm742, %v1013
      %vm1078 = vcmask 130112
      %v1079 = vsel %vm1078, %v488, 0.0
      %v1080 = vsel %vm1078, %v491, 0.0
      %v1081 = vadd.f32 %v1079, %v1080
      %v1082 = vsel %vm1078, %v496, 0.0
      %v1083 = vadd.f32 %v1081, %v1082
      %v1084 = vsel %vm1078, %v499, 0.0
      %v1085 = vadd.f32 %v1083, %v1084
      %v1086 = vsel %vm1078, %v504, 0.0
      %v1087 = vadd.f32 %v1085, %v1086
      %v1088 = vsel %vm1078, %v507, 0.0
      %v1089 = vadd.f32 %v1087, %v1088
      %v1090 = vsel %vm1078, %v512, 0.0
      %v1091 = vadd.f32 %v1089, %v1090
      %v1092 = vsel %vm1078, %v515, 0.0
      %v1093 = vadd.f32 %v1091, %v1092
      %v1094 = vsel %vm1078, %v520, 0.0
      %v1095 = vadd.f32 %v1093, %v1094
      %v1096 = vsel %vm1078, %v523, 0.0
      %v1097 = vadd.f32 %v1095, %v1096
      %v1098 = vsel %vm1078, %v528, 0.0
      %v1099 = vadd.f32 %v1097, %v1098
      %v1100 = vsel %vm1078, %v531, 0.0
      %v1101 = vadd.f32 %v1099, %v1100
      %v1102 = vsel %vm1078, %v536, 0.0
      %v1103 = vadd.f32 %v1101, %v1102
      %v1104 = vsel %vm1078, %v539, 0.0
      %v1105 = vadd.f32 %v1103, %v1104
      %v1106 = vsel %vm1078, %v544, 0.0
      %v1107 = vadd.f32 %v1105, %v1106
      %v1108 = vsel %vm1078, %v547, 0.0
      %v1109 = vadd.f32 %v1107, %v1108
      %v1110 = vsel %vm1078, %v552, 0.0
      %v1111 = vadd.f32 %v1109, %v1110
      %v1112 = vsel %vm1078, %v555, 0.0
      %v1113 = vadd.f32 %v1111, %v1112
      %v1114 = vsel %vm1078, %v560, 0.0
      %v1115 = vadd.f32 %v1113, %v1114
      %v1116 = vsel %vm1078, %v563, 0.0
      %v1117 = vadd.f32 %v1115, %v1116
      %v1118 = vsel %vm1078, %v568, 0.0
      %v1119 = vadd.f32 %v1117, %v1118
      %v1120 = vsel %vm1078, %v571, 0.0
      %v1121 = vadd.f32 %v1119, %v1120
      %v1122 = vsel %vm1078, %v576, 0.0
      %v1123 = vadd.f32 %v1121, %v1122
      %v1124 = vsel %vm1078, %v579, 0.0
      %v1125 = vadd.f32 %v1123, %v1124
      %v1126 = vsel %vm1078, %v584, 0.0
      %v1127 = vadd.f32 %v1125, %v1126
      %v1128 = vsel %vm1078, %v587, 0.0
      %v1129 = vadd.f32 %v1127, %v1128
      %v1130 = vsel %vm1078, %v592, 0.0
      %v1131 = vadd.f32 %v1129, %v1130
      %v1132 = vsel %vm1078, %v595, 0.0
      %v1133 = vadd.f32 %v1131, %v1132
      %v1134 = vsel %vm1078, %v600, 0.0
      %v1135 = vadd.f32 %v1133, %v1134
      %v1136 = vsel %vm1078, %v603, 0.0
      %v1137 = vadd.f32 %v1135, %v1136
      %v1138 = vsel %vm1078, %v608, 0.0
      %v1139 = vadd.f32 %v1137, %v1138
      %v1140 = vsel %vm1078, %v611, 0.0
      %v1141 = vadd.f32 %v1139, %v1140
      %v1142 = vrot.slane %v1141, 4
      %v1143 = vadd.f32 %v1141, %v1142
      %v1144 = vrot.slane %v1143, 2
      %v1145 = vadd.f32 %v1143, %v1144
      %v1146 = vrot.slane %v1145, 1
      %v1147 = vadd.f32 %v1145, %v1146
      %v1148 = vsel %vm1078, %v845, 0.0
      %v1149 = vsel %vm1078, %v846, 0.0
      %v1150 = vadd.f32 %v1148, %v1149
      %v1151 = vsel %vm1078, %v847, 0.0
      %v1152 = vadd.f32 %v1150, %v1151
      %v1153 = vsel %vm1078, %v848, 0.0
      %v1154 = vadd.f32 %v1152, %v1153
      %v1155 = vsel %vm1078, %v849, 0.0
      %v1156 = vadd.f32 %v1154, %v1155
      %v1157 = vsel %vm1078, %v850, 0.0
      %v1158 = vadd.f32 %v1156, %v1157
      %v1159 = vsel %vm1078, %v851, 0.0
      %v1160 = vadd.f32 %v1158, %v1159
      %v1161 = vsel %vm1078, %v852, 0.0
      %v1162 = vadd.f32 %v1160, %v1161
      %v1163 = vsel %vm1078, %v853, 0.0
      %v1164 = vadd.f32 %v1162, %v1163
      %v1165 = vsel %vm1078, %v854, 0.0
      %v1166 = vadd.f32 %v1164, %v1165
      %v1167 = vsel %vm1078, %v855, 0.0
      %v1168 = vadd.f32 %v1166, %v1167
      %v1169 = vsel %vm1078, %v856, 0.0
      %v1170 = vadd.f32 %v1168, %v1169
      %v1171 = vsel %vm1078, %v857, 0.0
      %v1172 = vadd.f32 %v1170, %v1171
      %v1173 = vsel %vm1078, %v858, 0.0
      %v1174 = vadd.f32 %v1172, %v1173
      %v1175 = vsel %vm1078, %v859, 0.0
      %v1176 = vadd.f32 %v1174, %v1175
      %v1177 = vsel %vm1078, %v860, 0.0
      %v1178 = vadd.f32 %v1176, %v1177
      %v1179 = vsel %vm1078, %v861, 0.0
      %v1180 = vadd.f32 %v1178, %v1179
      %v1181 = vsel %vm1078, %v862, 0.0
      %v1182 = vadd.f32 %v1180, %v1181
      %v1183 = vsel %vm1078, %v863, 0.0
      %v1184 = vadd.f32 %v1182, %v1183
      %v1185 = vsel %vm1078, %v864, 0.0
      %v1186 = vadd.f32 %v1184, %v1185
      %v1187 = vsel %vm1078, %v865, 0.0
      %v1188 = vadd.f32 %v1186, %v1187
      %v1189 = vsel %vm1078, %v866, 0.0
      %v1190 = vadd.f32 %v1188, %v1189
      %v1191 = vsel %vm1078, %v867, 0.0
      %v1192 = vadd.f32 %v1190, %v1191
      %v1193 = vsel %vm1078, %v868, 0.0
      %v1194 = vadd.f32 %v1192, %v1193
      %v1195 = vsel %vm1078, %v869, 0.0
      %v1196 = vadd.f32 %v1194, %v1195
      %v1197 = vsel %vm1078, %v870, 0.0
      %v1198 = vadd.f32 %v1196, %v1197
      %v1199 = vsel %vm1078, %v871, 0.0
      %v1200 = vadd.f32 %v1198, %v1199
      %v1201 = vsel %vm1078, %v872, 0.0
      %v1202 = vadd.f32 %v1200, %v1201
      %v1203 = vsel %vm1078, %v873, 0.0
      %v1204 = vadd.f32 %v1202, %v1203
      %v1205 = vsel %vm1078, %v874, 0.0
      %v1206 = vadd.f32 %v1204, %v1205
      %v1207 = vsel %vm1078, %v875, 0.0
      %v1208 = vadd.f32 %v1206, %v1207
      %v1209 = vsel %vm1078, %v876, 0.0
      %v1210 = vadd.f32 %v1208, %v1209
      %v1211 = vrot.slane %v1210, 4
      %v1212 = vadd.f32 %v1210, %v1211
      %v1213 = vrot.slane %v1212, 2
      %v1214 = vadd.f32 %v1212, %v1213
      %v1215 = vrot.slane %v1214, 1
      %v1216 = vadd.f32 %v1214, %v1215
      %v1217 = vsel %vm946, %v1147, %v1216
      %1219 = vrot.lane.b32.xlu0 %v1217, 120
      %v1220 = vpop.permute.xlu0 %1219
      %1222 = vst.msk [vmem:[%s284] sm:$0x3] %vm948, %v1220
      %v1223 = vshrl.u32 %v384, 16
      %v1225 = vrot.slane %v1223, 7
      %v1226 = vshll.u32 %v384, 16
      %v1228 = vor.u32 %v1225, %v1226
      %v1229 = vshrl.u32 %v385, 16
      %v1231 = vrot.slane %v1229, 7
      %v1232 = vshll.u32 %v385, 16
      %v1234 = vor.u32 %v1231, %v1232
      %v1235 = vshrl.u32 %v386, 16
      %v1237 = vrot.slane %v1235, 7
      %v1238 = vshll.u32 %v386, 16
      %v1240 = vor.u32 %v1237, %v1238
      %v1241 = vshrl.u32 %v387, 16
      %v1243 = vrot.slane %v1241, 7
      %v1244 = vshll.u32 %v387, 16
      %v1246 = vor.u32 %v1243, %v1244
      %v1247 = vshrl.u32 %v388, 16
      %v1249 = vrot.slane %v1247, 7
      %v1250 = vshll.u32 %v388, 16
      %v1252 = vor.u32 %v1249, %v1250
      %v1253 = vshrl.u32 %v389, 16
      %v1255 = vrot.slane %v1253, 7
      %v1256 = vshll.u32 %v389, 16
      %v1258 = vor.u32 %v1255, %v1256
      %v1259 = vshrl.u32 %v390, 16
      %v1261 = vrot.slane %v1259, 7
      %v1262 = vshll.u32 %v390, 16
      %v1264 = vor.u32 %v1261, %v1262
      %v1265 = vshrl.u32 %v391, 16
      %v1267 = vrot.slane %v1265, 7
      %v1268 = vshll.u32 %v391, 16
      %v1270 = vor.u32 %v1267, %v1268
      %v1271 = vshrl.u32 %v392, 16
      %v1273 = vrot.slane %v1271, 7
      %v1274 = vshll.u32 %v392, 16
      %v1276 = vor.u32 %v1273, %v1274
      %v1277 = vshrl.u32 %v393, 16
      %v1279 = vrot.slane %v1277, 7
      %v1280 = vshll.u32 %v393, 16
      %v1282 = vor.u32 %v1279, %v1280
      %v1283 = vshrl.u32 %v394, 16
      %v1285 = vrot.slane %v1283, 7
      %v1286 = vshll.u32 %v394, 16
      %v1288 = vor.u32 %v1285, %v1286
      %v1289 = vshrl.u32 %v395, 16
      %v1291 = vrot.slane %v1289, 7
      %v1292 = vshll.u32 %v395, 16
      %v1294 = vor.u32 %v1291, %v1292
      %v1295 = vshrl.u32 %v396, 16
      %v1297 = vrot.slane %v1295, 7
      %v1298 = vshll.u32 %v396, 16
      %v1300 = vor.u32 %v1297, %v1298
      %v1301 = vshrl.u32 %v397, 16
      %v1303 = vrot.slane %v1301, 7
      %v1304 = vshll.u32 %v397, 16
      %v1306 = vor.u32 %v1303, %v1304
      %v1307 = vshrl.u32 %v398, 16
      %v1309 = vrot.slane %v1307, 7
      %v1310 = vshll.u32 %v398, 16
      %v1312 = vor.u32 %v1309, %v1310
      %v1313 = vshrl.u32 %v399, 16
      %v1315 = vrot.slane %v1313, 7
      %v1316 = vshll.u32 %v399, 16
      %v1318 = vor.u32 %v1315, %v1316
      %vm1351 = vcmask 1040384
      %vm1352 = vsmask.f32 256
      %vm1353 = vmand %vm1351, %vm1352
      %v1354 = vsel %vm1353, 4284677986, %v1228
      %v1355 = vsel %vm1353, 4284677986, %v1234
      %v1356 = vsel %vm1353, 4284677986, %v1240
      %v1357 = vsel %vm1353, 4284677986, %v1246
      %v1358 = vsel %vm1353, 4284677986, %v1252
      %v1359 = vsel %vm1353, 4284677986, %v1258
      %v1360 = vsel %vm1353, 4284677986, %v1264
      %v1361 = vsel %vm1353, 4284677986, %v1270
      %v1362 = vsel %vm1353, 4284677986, %v1276
      %v1363 = vsel %vm1353, 4284677986, %v1282
      %v1364 = vsel %vm1353, 4284677986, %v1288
      %v1365 = vsel %vm1353, 4284677986, %v1294
      %v1366 = vsel %vm1353, 4284677986, %v1300
      %v1367 = vsel %vm1353, 4284677986, %v1306
      %v1368 = vsel %vm1353, 4284677986, %v1312
      %v1369 = vsel %vm1353, 4284677986, %v1318
      %v1370 = vsel %vm1353, %v1225, 4284677986
      %v1371 = vsel %vm1353, %v1231, 4284677986
      %v1372 = vsel %vm1353, %v1237, 4284677986
      %v1373 = vsel %vm1353, %v1243, 4284677986
      %v1374 = vsel %vm1353, %v1249, 4284677986
      %v1375 = vsel %vm1353, %v1255, 4284677986
      %v1376 = vsel %vm1353, %v1261, 4284677986
      %v1377 = vsel %vm1353, %v1267, 4284677986
      %v1378 = vsel %vm1353, %v1273, 4284677986
      %v1379 = vsel %vm1353, %v1279, 4284677986
      %v1380 = vsel %vm1353, %v1285, 4284677986
      %v1381 = vsel %vm1353, %v1291, 4284677986
      %v1382 = vsel %vm1353, %v1297, 4284677986
      %v1383 = vsel %vm1353, %v1303, 4284677986
      %v1384 = vsel %vm1353, %v1309, 4284677986
      %v1385 = vsel %vm1353, %v1315, 4284677986
      %vm1386 = vsmask.f32 7424
      %v1388 = vshrl.u32 %v1354, 16
      %v1390 = vshll.u32 %v1354, 16
      %v1392 = vrot.slane %v1390, 1
      %v1393 = vor.u32 %v1388, %v1392
      %v1395 = vshll.u32 %v1370, 16
      %v1397 = vrot.slane %v1395, 1
      %v1398 = vsel %vm1386, %v1393, %v1397
      %v1400 = vshrl.u32 %v1355, 16
      %v1402 = vshll.u32 %v1355, 16
      %v1404 = vrot.slane %v1402, 1
      %v1405 = vor.u32 %v1400, %v1404
      %v1407 = vshll.u32 %v1371, 16
      %v1409 = vrot.slane %v1407, 1
      %v1410 = vsel %vm1386, %v1405, %v1409
      %v1412 = vshrl.u32 %v1356, 16
      %v1414 = vshll.u32 %v1356, 16
      %v1416 = vrot.slane %v1414, 1
      %v1417 = vor.u32 %v1412, %v1416
      %v1419 = vshll.u32 %v1372, 16
      %v1421 = vrot.slane %v1419, 1
      %v1422 = vsel %vm1386, %v1417, %v1421
      %v1424 = vshrl.u32 %v1357, 16
      %v1426 = vshll.u32 %v1357, 16
      %v1428 = vrot.slane %v1426, 1
      %v1429 = vor.u32 %v1424, %v1428
      %v1431 = vshll.u32 %v1373, 16
      %v1433 = vrot.slane %v1431, 1
      %v1434 = vsel %vm1386, %v1429, %v1433
      %v1436 = vshrl.u32 %v1358, 16
      %v1438 = vshll.u32 %v1358, 16
      %v1440 = vrot.slane %v1438, 1
      %v1441 = vor.u32 %v1436, %v1440
      %v1443 = vshll.u32 %v1374, 16
      %v1445 = vrot.slane %v1443, 1
      %v1446 = vsel %vm1386, %v1441, %v1445
      %v1448 = vshrl.u32 %v1359, 16
      %v1450 = vshll.u32 %v1359, 16
      %v1452 = vrot.slane %v1450, 1
      %v1453 = vor.u32 %v1448, %v1452
      %v1455 = vshll.u32 %v1375, 16
      %v1457 = vrot.slane %v1455, 1
      %v1458 = vsel %vm1386, %v1453, %v1457
      %v1460 = vshrl.u32 %v1360, 16
      %v1462 = vshll.u32 %v1360, 16
      %v1464 = vrot.slane %v1462, 1
      %v1465 = vor.u32 %v1460, %v1464
      %v1467 = vshll.u32 %v1376, 16
      %v1469 = vrot.slane %v1467, 1
      %v1470 = vsel %vm1386, %v1465, %v1469
      %v1472 = vshrl.u32 %v1361, 16
      %v1474 = vshll.u32 %v1361, 16
      %v1476 = vrot.slane %v1474, 1
      %v1477 = vor.u32 %v1472, %v1476
      %v1479 = vshll.u32 %v1377, 16
      %v1481 = vrot.slane %v1479, 1
      %v1482 = vsel %vm1386, %v1477, %v1481
      %v1484 = vshrl.u32 %v1362, 16
      %v1486 = vshll.u32 %v1362, 16
      %v1488 = vrot.slane %v1486, 1
      %v1489 = vor.u32 %v1484, %v1488
      %v1491 = vshll.u32 %v1378, 16
      %v1493 = vrot.slane %v1491, 1
      %v1494 = vsel %vm1386, %v1489, %v1493
      %v1496 = vshrl.u32 %v1363, 16
      %v1498 = vshll.u32 %v1363, 16
      %v1500 = vrot.slane %v1498, 1
      %v1501 = vor.u32 %v1496, %v1500
      %v1503 = vshll.u32 %v1379, 16
      %v1505 = vrot.slane %v1503, 1
      %v1506 = vsel %vm1386, %v1501, %v1505
      %v1508 = vshrl.u32 %v1364, 16
      %v1510 = vshll.u32 %v1364, 16
      %v1512 = vrot.slane %v1510, 1
      %v1513 = vor.u32 %v1508, %v1512
      %v1515 = vshll.u32 %v1380, 16
      %v1517 = vrot.slane %v1515, 1
      %v1518 = vsel %vm1386, %v1513, %v1517
      %v1520 = vshrl.u32 %v1365, 16
      %v1522 = vshll.u32 %v1365, 16
      %v1524 = vrot.slane %v1522, 1
      %v1525 = vor.u32 %v1520, %v1524
      %v1527 = vshll.u32 %v1381, 16
      %v1529 = vrot.slane %v1527, 1
      %v1530 = vsel %vm1386, %v1525, %v1529
      %v1532 = vshrl.u32 %v1366, 16
      %v1534 = vshll.u32 %v1366, 16
      %v1536 = vrot.slane %v1534, 1
      %v1537 = vor.u32 %v1532, %v1536
      %v1539 = vshll.u32 %v1382, 16
      %v1541 = vrot.slane %v1539, 1
      %v1542 = vsel %vm1386, %v1537, %v1541
      %v1544 = vshrl.u32 %v1367, 16
      %v1546 = vshll.u32 %v1367, 16
      %v1548 = vrot.slane %v1546, 1
      %v1549 = vor.u32 %v1544, %v1548
      %v1551 = vshll.u32 %v1383, 16
      %v1553 = vrot.slane %v1551, 1
      %v1554 = vsel %vm1386, %v1549, %v1553
      %v1556 = vshrl.u32 %v1368, 16
      %v1558 = vshll.u32 %v1368, 16
      %v1560 = vrot.slane %v1558, 1
      %v1561 = vor.u32 %v1556, %v1560
      %v1563 = vshll.u32 %v1384, 16
      %v1565 = vrot.slane %v1563, 1
      %v1566 = vsel %vm1386, %v1561, %v1565
      %v1568 = vshrl.u32 %v1369, 16
      %v1570 = vshll.u32 %v1369, 16
      %v1572 = vrot.slane %v1570, 1
      %v1573 = vor.u32 %v1568, %v1572
      %v1575 = vshll.u32 %v1385, 16
      %v1577 = vrot.slane %v1575, 1
      %v1578 = vsel %vm1386, %v1573, %v1577
      %v1595 = vmax.bf16 %v1354, %v1398
      %v1596 = vmax.bf16 %v1355, %v1410
      %v1597 = vmax.bf16 %v1356, %v1422
      %v1598 = vmax.bf16 %v1357, %v1434
      %v1599 = vmax.bf16 %v1358, %v1446
      %v1600 = vmax.bf16 %v1359, %v1458
      %v1601 = vmax.bf16 %v1360, %v1470
      %v1602 = vmax.bf16 %v1361, %v1482
      %v1603 = vmax.bf16 %v1362, %v1494
      %v1604 = vmax.bf16 %v1363, %v1506
      %v1605 = vmax.bf16 %v1364, %v1518
      %v1606 = vmax.bf16 %v1365, %v1530
      %v1607 = vmax.bf16 %v1366, %v1542
      %v1608 = vmax.bf16 %v1367, %v1554
      %v1609 = vmax.bf16 %v1368, %v1566
      %v1610 = vmax.bf16 %v1369, %v1578
      %vm1643 = vcmask 1046528
      %v1644 = vrot.slane %v1354, 1
      %v1645 = vrot.slane %v1370, 1
      %v1646 = vsel %vm1643, %v1644, %v1645
      %v1647 = vrot.slane %v1355, 1
      %v1648 = vrot.slane %v1371, 1
      %v1649 = vsel %vm1643, %v1647, %v1648
      %v1650 = vrot.slane %v1356, 1
      %v1651 = vrot.slane %v1372, 1
      %v1652 = vsel %vm1643, %v1650, %v1651
      %v1653 = vrot.slane %v1357, 1
      %v1654 = vrot.slane %v1373, 1
      %v1655 = vsel %vm1643, %v1653, %v1654
      %v1656 = vrot.slane %v1358, 1
      %v1657 = vrot.slane %v1374, 1
      %v1658 = vsel %vm1643, %v1656, %v1657
      %v1659 = vrot.slane %v1359, 1
      %v1660 = vrot.slane %v1375, 1
      %v1661 = vsel %vm1643, %v1659, %v1660
      %v1662 = vrot.slane %v1360, 1
      %v1663 = vrot.slane %v1376, 1
      %v1664 = vsel %vm1643, %v1662, %v1663
      %v1665 = vrot.slane %v1361, 1
      %v1666 = vrot.slane %v1377, 1
      %v1667 = vsel %vm1643, %v1665, %v1666
      %v1668 = vrot.slane %v1362, 1
      %v1669 = vrot.slane %v1378, 1
      %v1670 = vsel %vm1643, %v1668, %v1669
      %v1671 = vrot.slane %v1363, 1
      %v1672 = vrot.slane %v1379, 1
      %v1673 = vsel %vm1643, %v1671, %v1672
      %v1674 = vrot.slane %v1364, 1
      %v1675 = vrot.slane %v1380, 1
      %v1676 = vsel %vm1643, %v1674, %v1675
      %v1677 = vrot.slane %v1365, 1
      %v1678 = vrot.slane %v1381, 1
      %v1679 = vsel %vm1643, %v1677, %v1678
      %v1680 = vrot.slane %v1366, 1
      %v1681 = vrot.slane %v1382, 1
      %v1682 = vsel %vm1643, %v1680, %v1681
      %v1683 = vrot.slane %v1367, 1
      %v1684 = vrot.slane %v1383, 1
      %v1685 = vsel %vm1643, %v1683, %v1684
      %v1686 = vrot.slane %v1368, 1
      %v1687 = vrot.slane %v1384, 1
      %v1688 = vsel %vm1643, %v1686, %v1687
      %v1689 = vrot.slane %v1369, 1
      %v1690 = vrot.slane %v1385, 1
      %v1691 = vsel %vm1643, %v1689, %v1690
      %v1708 = vmax.bf16 %v1595, %v1646
      %v1709 = vmax.bf16 %v1596, %v1649
      %v1710 = vmax.bf16 %v1597, %v1652
      %v1711 = vmax.bf16 %v1598, %v1655
      %v1712 = vmax.bf16 %v1599, %v1658
      %v1713 = vmax.bf16 %v1600, %v1661
      %v1714 = vmax.bf16 %v1601, %v1664
      %v1715 = vmax.bf16 %v1602, %v1667
      %v1716 = vmax.bf16 %v1603, %v1670
      %v1717 = vmax.bf16 %v1604, %v1673
      %v1718 = vmax.bf16 %v1605, %v1676
      %v1719 = vmax.bf16 %v1606, %v1679
      %v1720 = vmax.bf16 %v1607, %v1682
      %v1721 = vmax.bf16 %v1608, %v1685
      %v1722 = vmax.bf16 %v1609, %v1688
      %v1723 = vmax.bf16 %v1610, %v1691
      %v1724 = vmax.bf16 %v1708, 4284677986
      %v1725 = vmax.bf16 %v1708, %v1709
      %v1726 = vmax.bf16 %v1709, %v1710
      %v1727 = vmax.bf16 %v1710, %v1711
      %v1728 = vmax.bf16 %v1711, %v1712
      %v1729 = vmax.bf16 %v1712, %v1713
      %v1730 = vmax.bf16 %v1713, %v1714
      %v1731 = vmax.bf16 %v1714, %v1715
      %v1732 = vmax.bf16 %v1715, %v1716
      %v1733 = vmax.bf16 %v1716, %v1717
      %v1734 = vmax.bf16 %v1717, %v1718
      %v1735 = vmax.bf16 %v1718, %v1719
      %v1736 = vmax.bf16 %v1719, %v1720
      %v1737 = vmax.bf16 %v1720, %v1721
      %v1738 = vmax.bf16 %v1721, %v1722
      %v1739 = vmax.bf16 %v1722, %v1723
      %v1740 = vmax.bf16 %v1724, %v1709
      %v1741 = vmax.bf16 %v1725, %v1710
      %v1742 = vmax.bf16 %v1726, %v1711
      %v1743 = vmax.bf16 %v1727, %v1712
      %v1744 = vmax.bf16 %v1728, %v1713
      %v1745 = vmax.bf16 %v1729, %v1714
      %v1746 = vmax.bf16 %v1730, %v1715
      %v1747 = vmax.bf16 %v1731, %v1716
      %v1748 = vmax.bf16 %v1732, %v1717
      %v1749 = vmax.bf16 %v1733, %v1718
      %v1750 = vmax.bf16 %v1734, %v1719
      %v1751 = vmax.bf16 %v1735, %v1720
      %v1752 = vmax.bf16 %v1736, %v1721
      %v1753 = vmax.bf16 %v1737, %v1722
      %v1754 = vmax.bf16 %v1738, %v1723
      %v1755 = vmax.bf16 %v1739, 4284677986
      %v1756 = vld [vmem:[%s2] sm:$0x3]
      %v1758 = vsel %vm400, %v1740, 0
      %v1761 = vsel %vm400, %v1741, 0
      %v1764 = vsel %vm400, %v1742, 0
      %v1767 = vsel %vm400, %v1743, 0
      %v1770 = vsel %vm400, %v1744, 0
      %v1773 = vsel %vm400, %v1745, 0
      %v1776 = vsel %vm400, %v1746, 0
      %v1779 = vsel %vm400, %v1747, 0
      %v1782 = vsel %vm400, %v1748, 0
      %v1785 = vsel %vm400, %v1749, 0
      %v1788 = vsel %vm400, %v1750, 0
      %v1791 = vsel %vm400, %v1751, 0
      %v1794 = vsel %vm400, %v1752, 0
      %v1797 = vsel %vm400, %v1753, 0
      %v1800 = vsel %vm400, %v1754, 0
      %v1803 = vsel %vm400, %v1755, 0
      %v1806 = vsel %vm449, %v1756, 0
      %1808 = vmatprep.subr.bf16.mxu0 0
      %1809 = vmatpush1.bf16.msra.mxu0 %v1806
      %1810 = vmatprep.subr.bf16.mxu0 0
      %1811 = vmatpush1.bf16.msra.mxu0 0
      %1812 = vmatprep.subr.bf16.mxu0 0
      %1813 = vmatpush1.bf16.msra.mxu0 0
      %1814 = vmatprep.subr.bf16.mxu0 0
      %1815 = vmatpush1.bf16.msra.mxu0 0
      %1816 = vmatprep.subr.bf16.mxu0 0
      %1817 = vmatpush1.bf16.msra.mxu0 0
      %1818 = vmatprep.subr.bf16.mxu0 0
      %1819 = vmatpush1.bf16.msra.mxu0 0
      %1820 = vmatprep.subr.bf16.mxu0 0
      %1821 = vmatpush1.bf16.msra.mxu0 0
      %1822 = vmatprep.subr.bf16.mxu0 0
      %1823 = vmatpush1.bf16.msra.mxu0 0
      %1824 = vmatprep.subr.bf16.mxu0 0
      %1825 = vmatpush1.bf16.msra.mxu0 0
      %1826 = vmatprep.subr.bf16.mxu0 0
      %1827 = vmatpush1.bf16.msra.mxu0 0
      %1828 = vmatprep.subr.bf16.mxu0 0
      %1829 = vmatpush1.bf16.msra.mxu0 0
      %1830 = vmatprep.subr.bf16.mxu0 0
      %1831 = vmatpush1.bf16.msra.mxu0 0
      %1832 = vmatprep.subr.bf16.mxu0 0
      %1833 = vmatpush1.bf16.msra.mxu0 0
      %1834 = vmatprep.subr.bf16.mxu0 0
      %1835 = vmatpush1.bf16.msra.mxu0 0
      %1836 = vmatprep.subr.bf16.mxu0 0
      %1837 = vmatpush1.bf16.msra.mxu0 0
      %1838 = vmatprep.subr.bf16.mxu0 0
      %1839 = vmatpush1.bf16.msra.mxu0 0
      %1840 = vmatprep.mubr.bf16.mxu0 0
      %1841 = vmatmul.mubr.bf16.gmra.mrb[0].mxu0 %v1758
      %v1842 = vpop.f32.mrb[0].mxu0
      %v1843 = vadd.f32 0.0, %v1842
      %v1844 = vpop.f32.mrb[0].mxu0
      %v1845 = vpop.f32.mrb[0].mxu0
      %v1846 = vadd.f32 0.0, %v1845
      %v1847 = vpop.f32.mrb[0].mxu0
      %1848 = vmatprep.mubr.bf16.mxu0 0
      %1849 = vmatmul.mubr.bf16.gmra.mrb[0].mxu0 %v1761
      %v1850 = vpop.f32.mrb[0].mxu0
      %v1851 = vadd.f32 0.0, %v1850
      %v1852 = vpop.f32.mrb[0].mxu0
      %v1853 = vpop.f32.mrb[0].mxu0
      %v1854 = vadd.f32 0.0, %v1853
      %v1855 = vpop.f32.mrb[0].mxu0
      %1856 = vmatprep.mubr.bf16.mxu0 0
      %1857 = vmatmul.mubr.bf16.gmra.mrb[0].mxu0 %v1764
      %v1858 = vpop.f32.mrb[0].mxu0
      %v1859 = vadd.f32 0.0, %v1858
      %v1860 = vpop.f32.mrb[0].mxu0
      %v1861 = vpop.f32.mrb[0].mxu0
      %v1862 = vadd.f32 0.0, %v1861
      %v1863 = vpop.f32.mrb[0].mxu0
      %1864 = vmatprep.mubr.bf16.mxu0 0
      %1865 = vmatmul.mubr.bf16.gmra.mrb[0].mxu0 %v1767
      %v1866 = vpop.f32.mrb[0].mxu0
      %v1867 = vadd.f32 0.0, %v1866
      %v1868 = vpop.f32.mrb[0].mxu0
      %v1869 = vpop.f32.mrb[0].mxu0
      %v1870 = vadd.f32 0.0, %v1869
      %v1871 = vpop.f32.mrb[0].mxu0
      %1872 = vmatprep.mubr.bf16.mxu0 0
      %1873 = vmatmul.mubr.bf16.gmra.mrb[0].mxu0 %v1770
      %v1874 = vpop.f32.mrb[0].mxu0
      %v1875 = vadd.f32 0.0, %v1874
      %v1876 = vpop.f32.mrb[0].mxu0
      %v1877 = vpop.f32.mrb[0].mxu0
      %v1878 = vadd.f32 0.0, %v1877
      %v1879 = vpop.f32.mrb[0].mxu0
      %1880 = vmatprep.mubr.bf16.mxu0 0
      %1881 = vmatmul.mubr.bf16.gmra.mrb[0].mxu0 %v1773
      %v1882 = vpop.f32.mrb[0].mxu0
      %v1883 = vadd.f32 0.0, %v1882
      %v1884 = vpop.f32.mrb[0].mxu0
      %v1885 = vpop.f32.mrb[0].mxu0
      %v1886 = vadd.f32 0.0, %v1885
      %v1887 = vpop.f32.mrb[0].mxu0
      %1888 = vmatprep.mubr.bf16.mxu0 0
      %1889 = vmatmul.mubr.bf16.gmra.mrb[0].mxu0 %v1776
      %v1890 = vpop.f32.mrb[0].mxu0
      %v1891 = vadd.f32 0.0, %v1890
      %v1892 = vpop.f32.mrb[0].mxu0
      %v1893 = vpop.f32.mrb[0].mxu0
      %v1894 = vadd.f32 0.0, %v1893
      %v1895 = vpop.f32.mrb[0].mxu0
      %1896 = vmatprep.mubr.bf16.mxu0 0
      %1897 = vmatmul.mubr.bf16.gmra.mrb[0].mxu0 %v1779
      %v1898 = vpop.f32.mrb[0].mxu0
      %v1899 = vadd.f32 0.0, %v1898
      %v1900 = vpop.f32.mrb[0].mxu0
      %v1901 = vpop.f32.mrb[0].mxu0
      %v1902 = vadd.f32 0.0, %v1901
      %v1903 = vpop.f32.mrb[0].mxu0
      %1904 = vmatprep.mubr.bf16.mxu0 0
      %1905 = vmatmul.mubr.bf16.gmra.mrb[0].mxu0 %v1782
      %v1906 = vpop.f32.mrb[0].mxu0
      %v1907 = vadd.f32 0.0, %v1906
      %v1908 = vpop.f32.mrb[0].mxu0
      %v1909 = vpop.f32.mrb[0].mxu0
      %v1910 = vadd.f32 0.0, %v1909
      %v1911 = vpop.f32.mrb[0].mxu0
      %1912 = vmatprep.mubr.bf16.mxu0 0
      %1913 = vmatmul.mubr.bf16.gmra.mrb[0].mxu0 %v1785
      %v1914 = vpop.f32.mrb[0].mxu0
      %v1915 = vadd.f32 0.0, %v1914
      %v1916 = vpop.f32.mrb[0].mxu0
      %v1917 = vpop.f32.mrb[0].mxu0
      %v1918 = vadd.f32 0.0, %v1917
      %v1919 = vpop.f32.mrb[0].mxu0
      %1920 = vmatprep.mubr.bf16.mxu0 0
      %1921 = vmatmul.mubr.bf16.gmra.mrb[0].mxu0 %v1788
      %v1922 = vpop.f32.mrb[0].mxu0
      %v1923 = vadd.f32 0.0, %v1922
      %v1924 = vpop.f32.mrb[0].mxu0
      %v1925 = vpop.f32.mrb[0].mxu0
      %v1926 = vadd.f32 0.0, %v1925
      %v1927 = vpop.f32.mrb[0].mxu0
      %1928 = vmatprep.mubr.bf16.mxu0 0
      %1929 = vmatmul.mubr.bf16.gmra.mrb[0].mxu0 %v1791
      %v1930 = vpop.f32.mrb[0].mxu0
      %v1931 = vadd.f32 0.0, %v1930
      %v1932 = vpop.f32.mrb[0].mxu0
      %v1933 = vpop.f32.mrb[0].mxu0
      %v1934 = vadd.f32 0.0, %v1933
      %v1935 = vpop.f32.mrb[0].mxu0
      %1936 = vmatprep.mubr.bf16.mxu0 0
      %1937 = vmatmul.mubr.bf16.gmra.mrb[0].mxu0 %v1794
      %v1938 = vpop.f32.mrb[0].mxu0
      %v1939 = vadd.f32 0.0, %v1938
      %v1940 = vpop.f32.mrb[0].mxu0
      %v1941 = vpop.f32.mrb[0].mxu0
      %v1942 = vadd.f32 0.0, %v1941
      %v1943 = vpop.f32.mrb[0].mxu0
      %1944 = vmatprep.mubr.bf16.mxu0 0
      %1945 = vmatmul.mubr.bf16.gmra.mrb[0].mxu0 %v1797
      %v1946 = vpop.f32.mrb[0].mxu0
      %v1947 = vadd.f32 0.0, %v1946
      %v1948 = vpop.f32.mrb[0].mxu0
      %v1949 = vpop.f32.mrb[0].mxu0
      %v1950 = vadd.f32 0.0, %v1949
      %v1951 = vpop.f32.mrb[0].mxu0
      %1952 = vmatprep.mubr.bf16.mxu0 0
      %1953 = vmatmul.mubr.bf16.gmra.mrb[0].mxu0 %v1800
      %v1954 = vpop.f32.mrb[0].mxu0
      %v1955 = vadd.f32 0.0, %v1954
      %v1956 = vpop.f32.mrb[0].mxu0
      %v1957 = vpop.f32.mrb[0].mxu0
      %v1958 = vadd.f32 0.0, %v1957
      %v1959 = vpop.f32.mrb[0].mxu0
      %1960 = vmatprep.mubr.bf16.mxu0 0
      %1961 = vmatmul.mubr.bf16.gmra.mrb[0].mxu0 %v1803
      %v1962 = vpop.f32.mrb[0].mxu0
      %v1963 = vadd.f32 0.0, %v1962
      %v1964 = vpop.f32.mrb[0].mxu0
      %v1965 = vpop.f32.mrb[0].mxu0
      %v1966 = vadd.f32 0.0, %v1965
      %v1967 = vpop.f32.mrb[0].mxu0
      %1968 = vdwg.mxu0
      %v1969 = vpack.c.bf16 %v1846, %v1843
      %v1970 = vpack.c.bf16 %v1854, %v1851
      %v1971 = vpack.c.bf16 %v1862, %v1859
      %v1972 = vpack.c.bf16 %v1870, %v1867
      %v1973 = vpack.c.bf16 %v1878, %v1875
      %v1974 = vpack.c.bf16 %v1886, %v1883
      %v1975 = vpack.c.bf16 %v1894, %v1891
      %v1976 = vpack.c.bf16 %v1902, %v1899
      %v1977 = vpack.c.bf16 %v1910, %v1907
      %v1978 = vpack.c.bf16 %v1918, %v1915
      %v1979 = vpack.c.bf16 %v1926, %v1923
      %v1980 = vpack.c.bf16 %v1934, %v1931
      %v1981 = vpack.c.bf16 %v1942, %v1939
      %v1982 = vpack.c.bf16 %v1950, %v1947
      %v1983 = vpack.c.bf16 %v1958, %v1955
      %v1984 = vpack.c.bf16 %v1966, %v1963
      %v2001 = vunpack.c.l.b16 %v1969
      %v2002 = vunpack.c.h.b16 %v1969
      %v2003 = vunpack.c.l.b16 %v1970
      %v2004 = vunpack.c.h.b16 %v1970
      %v2005 = vunpack.c.l.b16 %v1971
      %v2006 = vunpack.c.h.b16 %v1971
      %v2007 = vunpack.c.l.b16 %v1972
      %v2008 = vunpack.c.h.b16 %v1972
      %v2009 = vunpack.c.l.b16 %v1973
      %v2010 = vunpack.c.h.b16 %v1973
      %v2011 = vunpack.c.l.b16 %v1974
      %v2012 = vunpack.c.h.b16 %v1974
      %v2013 = vunpack.c.l.b16 %v1975
      %v2014 = vunpack.c.h.b16 %v1975
      %v2015 = vunpack.c.l.b16 %v1976
      %v2016 = vunpack.c.h.b16 %v1976
      %v2017 = vunpack.c.l.b16 %v1977
      %v2018 = vunpack.c.h.b16 %v1977
      %v2019 = vunpack.c.l.b16 %v1978
      %v2020 = vunpack.c.h.b16 %v1978
      %v2021 = vunpack.c.l.b16 %v1979
      %v2022 = vunpack.c.h.b16 %v1979
      %v2023 = vunpack.c.l.b16 %v1980
      %v2024 = vunpack.c.h.b16 %v1980
      %v2025 = vunpack.c.l.b16 %v1981
      %v2026 = vunpack.c.h.b16 %v1981
      %v2027 = vunpack.c.l.b16 %v1982
      %v2028 = vunpack.c.h.b16 %v1982
      %v2029 = vunpack.c.l.b16 %v1983
      %v2030 = vunpack.c.h.b16 %v1983
      %v2031 = vunpack.c.l.b16 %v1984
      %v2032 = vunpack.c.h.b16 %v1984
      %v2033 = vpack.c.b16 %v2001, %v2001
      %v2034 = vpack.c.b16 %v2002, %v2002
      %v2035 = vpack.c.b16 %v2003, %v2003
      %v2036 = vpack.c.b16 %v2004, %v2004
      %v2037 = vpack.c.b16 %v2005, %v2005
      %v2038 = vpack.c.b16 %v2006, %v2006
      %v2039 = vpack.c.b16 %v2007, %v2007
      %v2040 = vpack.c.b16 %v2008, %v2008
      %v2041 = vpack.c.b16 %v2009, %v2009
      %v2042 = vpack.c.b16 %v2010, %v2010
      %v2043 = vpack.c.b16 %v2011, %v2011
      %v2044 = vpack.c.b16 %v2012, %v2012
      %v2045 = vpack.c.b16 %v2013, %v2013
      %v2046 = vpack.c.b16 %v2014, %v2014
      %v2047 = vpack.c.b16 %v2015, %v2015
      %v2048 = vpack.c.b16 %v2016, %v2016
      %v2049 = vpack.c.b16 %v2017, %v2017
      %v2050 = vpack.c.b16 %v2018, %v2018
      %v2051 = vpack.c.b16 %v2019, %v2019
      %v2052 = vpack.c.b16 %v2020, %v2020
      %v2053 = vpack.c.b16 %v2021, %v2021
      %v2054 = vpack.c.b16 %v2022, %v2022
      %v2055 = vpack.c.b16 %v2023, %v2023
      %v2056 = vpack.c.b16 %v2024, %v2024
      %v2057 = vpack.c.b16 %v2025, %v2025
      %v2058 = vpack.c.b16 %v2026, %v2026
      %v2059 = vpack.c.b16 %v2027, %v2027
      %v2060 = vpack.c.b16 %v2028, %v2028
      %v2061 = vpack.c.b16 %v2029, %v2029
      %v2062 = vpack.c.b16 %v2030, %v2030
      %v2063 = vpack.c.b16 %v2031, %v2031
      %v2064 = vpack.c.b16 %v2032, %v2032
      %2065 = vrot.lane.b32.xlu0 %v2033, 8
      %v2066 = vpop.permute.xlu0 %2065
      %2067 = vrot.lane.b32.xlu0 %v2034, 8
      %v2068 = vpop.permute.xlu0 %2067
      %2069 = vrot.lane.b32.xlu0 %v2035, 8
      %v2070 = vpop.permute.xlu0 %2069
      %2071 = vrot.lane.b32.xlu0 %v2036, 8
      %v2072 = vpop.permute.xlu0 %2071
      %2073 = vrot.lane.b32.xlu0 %v2037, 8
      %v2074 = vpop.permute.xlu0 %2073
      %2075 = vrot.lane.b32.xlu0 %v2038, 8
      %v2076 = vpop.permute.xlu0 %2075
      %2077 = vrot.lane.b32.xlu0 %v2039, 8
      %v2078 = vpop.permute.xlu0 %2077
      %2079 = vrot.lane.b32.xlu0 %v2040, 8
      %v2080 = vpop.permute.xlu0 %2079
      %2081 = vrot.lane.b32.xlu0 %v2041, 8
      %v2082 = vpop.permute.xlu0 %2081
      %2083 = vrot.lane.b32.xlu0 %v2042, 8
      %v2084 = vpop.permute.xlu0 %2083
      %2085 = vrot.lane.b32.xlu0 %v2043, 8
      %v2086 = vpop.permute.xlu0 %2085
      %2087 = vrot.lane.b32.xlu0 %v2044, 8
      %v2088 = vpop.permute.xlu0 %2087
      %2089 = vrot.lane.b32.xlu0 %v2045, 8
      %v2090 = vpop.permute.xlu0 %2089
      %2091 = vrot.lane.b32.xlu0 %v2046, 8
      %v2092 = vpop.permute.xlu0 %2091
      %2093 = vrot.lane.b32.xlu0 %v2047, 8
      %v2094 = vpop.permute.xlu0 %2093
      %2095 = vrot.lane.b32.xlu0 %v2048, 8
      %v2096 = vpop.permute.xlu0 %2095
      %2097 = vrot.lane.b32.xlu0 %v2049, 8
      %v2098 = vpop.permute.xlu0 %2097
      %2099 = vrot.lane.b32.xlu0 %v2050, 8
      %v2100 = vpop.permute.xlu0 %2099
      %2101 = vrot.lane.b32.xlu0 %v2051, 8
      %v2102 = vpop.permute.xlu0 %2101
      %2103 = vrot.lane.b32.xlu0 %v2052, 8
      %v2104 = vpop.permute.xlu0 %2103
      %2105 = vrot.lane.b32.xlu0 %v2053, 8
      %v2106 = vpop.permute.xlu0 %2105
      %2107 = vrot.lane.b32.xlu0 %v2054, 8
      %v2108 = vpop.permute.xlu0 %2107
      %2109 = vrot.lane.b32.xlu0 %v2055, 8
      %v2110 = vpop.permute.xlu0 %2109
      %2111 = vrot.lane.b32.xlu0 %v2056, 8
      %v2112 = vpop.permute.xlu0 %2111
      %2113 = vrot.lane.b32.xlu0 %v2057, 8
      %v2114 = vpop.permute.xlu0 %2113
      %2115 = vrot.lane.b32.xlu0 %v2058, 8
      %v2116 = vpop.permute.xlu0 %2115
      %2117 = vrot.lane.b32.xlu0 %v2059, 8
      %v2118 = vpop.permute.xlu0 %2117
      %2119 = vrot.lane.b32.xlu0 %v2060, 8
      %v2120 = vpop.permute.xlu0 %2119
      %2121 = vrot.lane.b32.xlu0 %v2061, 8
      %v2122 = vpop.permute.xlu0 %2121
      %2123 = vrot.lane.b32.xlu0 %v2062, 8
      %v2124 = vpop.permute.xlu0 %2123
      %2125 = vrot.lane.b32.xlu0 %v2063, 8
      %v2126 = vpop.permute.xlu0 %2125
      %2127 = vrot.lane.b32.xlu0 %v2064, 8
      %v2128 = vpop.permute.xlu0 %2127
      %vm2161 = vcmask 126016
      %2162 = vst.msk [vmem:[%s276] sm:$0xf] %vm2161, %v2066
      %2163 = vst.msk [vmem:[%s276 + $0x4] sm:$0xf] %vm2161, %v2068
      %2164 = vst.msk [vmem:[%s276 + $0x8] sm:$0xf] %vm2161, %v2070
      %2165 = vst.msk [vmem:[%s276 + $0xc] sm:$0xf] %vm2161, %v2072
      %2166 = vst.msk [vmem:[%s276 + $0x10] sm:$0xf] %vm2161, %v2074
      %2167 = vst.msk [vmem:[%s276 + $0x14] sm:$0xf] %vm2161, %v2076
      %2168 = vst.msk [vmem:[%s276 + $0x18] sm:$0xf] %vm2161, %v2078
      %2169 = vst.msk [vmem:[%s276 + $0x1c] sm:$0xf] %vm2161, %v2080
      %2170 = vst.msk [vmem:[%s276 + $0x20] sm:$0xf] %vm2161, %v2082
      %2171 = vst.msk [vmem:[%s276 + $0x24] sm:$0xf] %vm2161, %v2084
      %2172 = vst.msk [vmem:[%s276 + $0x28] sm:$0xf] %vm2161, %v2086
      %2173 = vst.msk [vmem:[%s276 + $0x2c] sm:$0xf] %vm2161, %v2088
      %2174 = vst.msk [vmem:[%s276 + $0x30] sm:$0xf] %vm2161, %v2090
      %2175 = vst.msk [vmem:[%s276 + $0x34] sm:$0xf] %vm2161, %v2092
      %2176 = vst.msk [vmem:[%s276 + $0x38] sm:$0xf] %vm2161, %v2094
      %2177 = vst.msk [vmem:[%s276 + $0x3c] sm:$0xf] %vm2161, %v2096
      %2178 = vst.msk [vmem:[%s276 + $0x40] sm:$0xf] %vm2161, %v2098
      %2179 = vst.msk [vmem:[%s276 + $0x44] sm:$0xf] %vm2161, %v2100
      %2180 = vst.msk [vmem:[%s276 + $0x48] sm:$0xf] %vm2161, %v2102
      %2181 = vst.msk [vmem:[%s276 + $0x4c] sm:$0xf] %vm2161, %v2104
      %2182 = vst.msk [vmem:[%s276 + $0x50] sm:$0xf] %vm2161, %v2106
      %2183 = vst.msk [vmem:[%s276 + $0x54] sm:$0xf] %vm2161, %v2108
      %2184 = vst.msk [vmem:[%s276 + $0x58] sm:$0xf] %vm2161, %v2110
      %2185 = vst.msk [vmem:[%s276 + $0x5c] sm:$0xf] %vm2161, %v2112
      %2186 = vst.msk [vmem:[%s276 + $0x60] sm:$0xf] %vm2161, %v2114
      %2187 = vst.msk [vmem:[%s276 + $0x64] sm:$0xf] %vm2161, %v2116
      %2188 = vst.msk [vmem:[%s276 + $0x68] sm:$0xf] %vm2161, %v2118
      %2189 = vst.msk [vmem:[%s276 + $0x6c] sm:$0xf] %vm2161, %v2120
      %2190 = vst.msk [vmem:[%s276 + $0x70] sm:$0xf] %vm2161, %v2122
      %2191 = vst.msk [vmem:[%s276 + $0x74] sm:$0xf] %vm2161, %v2124
      %2192 = vst.msk [vmem:[%s276 + $0x78] sm:$0xf] %vm2161, %v2126
      %2193 = vst.msk [vmem:[%s276 + $0x7c] sm:$0xf] %vm2161, %v2128
      %v2194 = vsel %vm775, %v1843, 0.0
      %v2195 = vsel %vm775, %v1846, 0.0
      %v2196 = vadd.f32 %v2194, %v2195
      %v2197 = vsel %vm775, %v1851, 0.0
      %v2198 = vadd.f32 %v2196, %v2197
      %v2199 = vsel %vm775, %v1854, 0.0
      %v2200 = vadd.f32 %v2198, %v2199
      %v2201 = vsel %vm775, %v1859, 0.0
      %v2202 = vadd.f32 %v2200, %v2201
      %v2203 = vsel %vm775, %v1862, 0.0
      %v2204 = vadd.f32 %v2202, %v2203
      %v2205 = vsel %vm775, %v1867, 0.0
      %v2206 = vadd.f32 %v2204, %v2205
      %v2207 = vsel %vm775, %v1870, 0.0
      %v2208 = vadd.f32 %v2206, %v2207
      %v2209 = vsel %vm775, %v1875, 0.0
      %v2210 = vadd.f32 %v2208, %v2209
      %v2211 = vsel %vm775, %v1878, 0.0
      %v2212 = vadd.f32 %v2210, %v2211
      %v2213 = vsel %vm775, %v1883, 0.0
      %v2214 = vadd.f32 %v2212, %v2213
      %v2215 = vsel %vm775, %v1886, 0.0
      %v2216 = vadd.f32 %v2214, %v2215
      %v2217 = vsel %vm775, %v1891, 0.0
      %v2218 = vadd.f32 %v2216, %v2217
      %v2219 = vsel %vm775, %v1894, 0.0
      %v2220 = vadd.f32 %v2218, %v2219
      %v2221 = vsel %vm775, %v1899, 0.0
      %v2222 = vadd.f32 %v2220, %v2221
      %v2223 = vsel %vm775, %v1902, 0.0
      %v2224 = vadd.f32 %v2222, %v2223
      %v2225 = vsel %vm775, %v1907, 0.0
      %v2226 = vadd.f32 %v2224, %v2225
      %v2227 = vsel %vm775, %v1910, 0.0
      %v2228 = vadd.f32 %v2226, %v2227
      %v2229 = vsel %vm775, %v1915, 0.0
      %v2230 = vadd.f32 %v2228, %v2229
      %v2231 = vsel %vm775, %v1918, 0.0
      %v2232 = vadd.f32 %v2230, %v2231
      %v2233 = vsel %vm775, %v1923, 0.0
      %v2234 = vadd.f32 %v2232, %v2233
      %v2235 = vsel %vm775, %v1926, 0.0
      %v2236 = vadd.f32 %v2234, %v2235
      %v2237 = vsel %vm775, %v1931, 0.0
      %v2238 = vadd.f32 %v2236, %v2237
      %v2239 = vsel %vm775, %v1934, 0.0
      %v2240 = vadd.f32 %v2238, %v2239
      %v2241 = vsel %vm775, %v1939, 0.0
      %v2242 = vadd.f32 %v2240, %v2241
      %v2243 = vsel %vm775, %v1942, 0.0
      %v2244 = vadd.f32 %v2242, %v2243
      %v2245 = vsel %vm775, %v1947, 0.0
      %v2246 = vadd.f32 %v2244, %v2245
      %v2247 = vsel %vm775, %v1950, 0.0
      %v2248 = vadd.f32 %v2246, %v2247
      %v2249 = vsel %vm775, %v1955, 0.0
      %v2250 = vadd.f32 %v2248, %v2249
      %v2251 = vsel %vm775, %v1958, 0.0
      %v2252 = vadd.f32 %v2250, %v2251
      %v2253 = vsel %vm775, %v1963, 0.0
      %v2254 = vadd.f32 %v2252, %v2253
      %v2255 = vsel %vm775, %v1966, 0.0
      %v2256 = vadd.f32 %v2254, %v2255
      %v2257 = vrot.slane %v2256, 4
      %v2258 = vadd.f32 %v2256, %v2257
      %v2259 = vrot.slane %v2258, 2
      %v2260 = vadd.f32 %v2258, %v2259
      %v2261 = vrot.slane %v2260, 1
      %v2262 = vadd.f32 %v2260, %v2261
      %v2263 = vmul.f32 %v1843, %v1843
      %v2264 = vmul.f32 %v1846, %v1846
      %v2265 = vmul.f32 %v1851, %v1851
      %v2266 = vmul.f32 %v1854, %v1854
      %v2267 = vmul.f32 %v1859, %v1859
      %v2268 = vmul.f32 %v1862, %v1862
      %v2269 = vmul.f32 %v1867, %v1867
      %v2270 = vmul.f32 %v1870, %v1870
      %v2271 = vmul.f32 %v1875, %v1875
      %v2272 = vmul.f32 %v1878, %v1878
      %v2273 = vmul.f32 %v1883, %v1883
      %v2274 = vmul.f32 %v1886, %v1886
      %v2275 = vmul.f32 %v1891, %v1891
      %v2276 = vmul.f32 %v1894, %v1894
      %v2277 = vmul.f32 %v1899, %v1899
      %v2278 = vmul.f32 %v1902, %v1902
      %v2279 = vmul.f32 %v1907, %v1907
      %v2280 = vmul.f32 %v1910, %v1910
      %v2281 = vmul.f32 %v1915, %v1915
      %v2282 = vmul.f32 %v1918, %v1918
      %v2283 = vmul.f32 %v1923, %v1923
      %v2284 = vmul.f32 %v1926, %v1926
      %v2285 = vmul.f32 %v1931, %v1931
      %v2286 = vmul.f32 %v1934, %v1934
      %v2287 = vmul.f32 %v1939, %v1939
      %v2288 = vmul.f32 %v1942, %v1942
      %v2289 = vmul.f32 %v1947, %v1947
      %v2290 = vmul.f32 %v1950, %v1950
      %v2291 = vmul.f32 %v1955, %v1955
      %v2292 = vmul.f32 %v1958, %v1958
      %v2293 = vmul.f32 %v1963, %v1963
      %v2294 = vmul.f32 %v1966, %v1966
      %v2295 = vsel %vm775, %v2263, 0.0
      %v2296 = vsel %vm775, %v2264, 0.0
      %v2297 = vadd.f32 %v2295, %v2296
      %v2298 = vsel %vm775, %v2265, 0.0
      %v2299 = vadd.f32 %v2297, %v2298
      %v2300 = vsel %vm775, %v2266, 0.0
      %v2301 = vadd.f32 %v2299, %v2300
      %v2302 = vsel %vm775, %v2267, 0.0
      %v2303 = vadd.f32 %v2301, %v2302
      %v2304 = vsel %vm775, %v2268, 0.0
      %v2305 = vadd.f32 %v2303, %v2304
      %v2306 = vsel %vm775, %v2269, 0.0
      %v2307 = vadd.f32 %v2305, %v2306
      %v2308 = vsel %vm775, %v2270, 0.0
      %v2309 = vadd.f32 %v2307, %v2308
      %v2310 = vsel %vm775, %v2271, 0.0
      %v2311 = vadd.f32 %v2309, %v2310
      %v2312 = vsel %vm775, %v2272, 0.0
      %v2313 = vadd.f32 %v2311, %v2312
      %v2314 = vsel %vm775, %v2273, 0.0
      %v2315 = vadd.f32 %v2313, %v2314
      %v2316 = vsel %vm775, %v2274, 0.0
      %v2317 = vadd.f32 %v2315, %v2316
      %v2318 = vsel %vm775, %v2275, 0.0
      %v2319 = vadd.f32 %v2317, %v2318
      %v2320 = vsel %vm775, %v2276, 0.0
      %v2321 = vadd.f32 %v2319, %v2320
      %v2322 = vsel %vm775, %v2277, 0.0
      %v2323 = vadd.f32 %v2321, %v2322
      %v2324 = vsel %vm775, %v2278, 0.0
      %v2325 = vadd.f32 %v2323, %v2324
      %v2326 = vsel %vm775, %v2279, 0.0
      %v2327 = vadd.f32 %v2325, %v2326
      %v2328 = vsel %vm775, %v2280, 0.0
      %v2329 = vadd.f32 %v2327, %v2328
      %v2330 = vsel %vm775, %v2281, 0.0
      %v2331 = vadd.f32 %v2329, %v2330
      %v2332 = vsel %vm775, %v2282, 0.0
      %v2333 = vadd.f32 %v2331, %v2332
      %v2334 = vsel %vm775, %v2283, 0.0
      %v2335 = vadd.f32 %v2333, %v2334
      %v2336 = vsel %vm775, %v2284, 0.0
      %v2337 = vadd.f32 %v2335, %v2336
      %v2338 = vsel %vm775, %v2285, 0.0
      %v2339 = vadd.f32 %v2337, %v2338
      %v2340 = vsel %vm775, %v2286, 0.0
      %v2341 = vadd.f32 %v2339, %v2340
      %v2342 = vsel %vm775, %v2287, 0.0
      %v2343 = vadd.f32 %v2341, %v2342
      %v2344 = vsel %vm775, %v2288, 0.0
      %v2345 = vadd.f32 %v2343, %v2344
      %v2346 = vsel %vm775, %v2289, 0.0
      %v2347 = vadd.f32 %v2345, %v2346
      %v2348 = vsel %vm775, %v2290, 0.0
      %v2349 = vadd.f32 %v2347, %v2348
      %v2350 = vsel %vm775, %v2291, 0.0
      %v2351 = vadd.f32 %v2349, %v2350
      %v2352 = vsel %vm775, %v2292, 0.0
      %v2353 = vadd.f32 %v2351, %v2352
      %v2354 = vsel %vm775, %v2293, 0.0
      %v2355 = vadd.f32 %v2353, %v2354
      %v2356 = vsel %vm775, %v2294, 0.0
      %v2357 = vadd.f32 %v2355, %v2356
      %v2358 = vrot.slane %v2357, 4
      %v2359 = vadd.f32 %v2357, %v2358
      %v2360 = vrot.slane %v2359, 2
      %v2361 = vadd.f32 %v2359, %v2360
      %v2362 = vrot.slane %v2361, 1
      %v2363 = vadd.f32 %v2361, %v2362
      %v2364 = vsel %vm946, %v2262, %v2363
      %2366 = vrot.lane.b32.xlu0 %v2364, 8
      %v2367 = vpop.permute.xlu0 %2366
      %vm2369 = vcmask 123968
      %2370 = vst.msk [vmem:[%s284] sm:$0x3] %vm2369, %v2367
      %p2371 = scmp.lt.s32.totalorder %s18, 1
      %s2372 = scalar_select %p2371, %s18, 1
      %s2373 = smul.addr %s2372, 32
      %s2374 = smul.addr %s2373, 4
      %s2375 = scalar_lea.vmem %s3, %s2374
      %p2376 = scmp.lt.s32.totalorder %s18, 1
      %s2377 = scalar_select %p2376, %s18, 1
      %s2378 = smul.addr %s2377, 32
      %s2379 = smul.addr %s2378, 4
      %s2380 = scalar_lea.vmem %s4, %s2379
      %p2381 = scmp.lt.s32.totalorder %s18, 1
      %s2382 = scalar_select %p2381, %s18, 1
      %s2383 = smul.addr %s2382, 2
      %s2384 = scalar_lea.vmem %s5, %s2383
      %p2385 = scmp.lt.s32.totalorder %s18, 1
      %s2386 = scalar_select %p2385, %s18, 1
      %s2387 = smul.addr %s2386, 2
      %s2388 = scalar_lea.vmem %s6, %s2387
      // Predicated region
      $region33: #{inception_v3a_forward.4} parent=31 // pred_check
        %p2389 = pneg %p104
      $region34: #{inception_v3a_forward.4} parent=31 // pred_check_branch
        %2391 = sbr.rel (%p2389) target = $region36
      $region35: #{inception_v3a_forward.4} parent=31 // pred_region
        _
      $region36: #{inception_v3a_forward.4} parent=31 // pred_fallthru
        _
      // Predicated region
      $region37: #{inception_v3a_forward.4} parent=31 // pred_check
        %p2392 = pneg %p130
      $region38: #{inception_v3a_forward.4} parent=31 // pred_check_branch
        %2394 = sbr.rel (%p2392) target = $region40
      $region39: #{inception_v3a_forward.4} parent=31 // pred_region
        _
      $region40: #{inception_v3a_forward.4} parent=31 // pred_fallthru
        _
      // Predicated region
      $region41: #{inception_v3a_forward.4} parent=31 // pred_check
        %p2395 = pneg %p156
      $region42: #{inception_v3a_forward.4} parent=31 // pred_check_branch
        %2397 = sbr.rel (%p2395) target = $region44
      $region43: #{inception_v3a_forward.4} parent=31 // pred_region
        _
      $region44: #{inception_v3a_forward.4} parent=31 // pred_fallthru
        _
      // Predicated region
      $region45: #{inception_v3a_forward.4} parent=31 // pred_check
        %p2398 = pneg %p182
      $region46: #{inception_v3a_forward.4} parent=31 // pred_check_branch
        %2400 = sbr.rel (%p2398) target = $region48
      $region47: #{inception_v3a_forward.4} parent=31 // pred_region
        _
      $region48: #{inception_v3a_forward.4} parent=31 // pred_fallthru
        _
    $region32: #{inception_v3a_forward.4} parent=5 // pred_fallthru
      _
    %p2401 = scmp.le.s32.totalorder 2, %s13
    // Predicated region
    $region49: #{inception_v3a_forward.4} parent=5 // pred_check
      %p2402 = pneg %p2401
    $region50: #{inception_v3a_forward.4} parent=5 // pred_check_branch
      %2404 = sbr.rel (%p2402) target = $region52
    $region51: #{inception_v3a_forward.4} parent=5 // pred_region
      %s2405 = ssub.s32 %s13, 2
      // Predicated region
      $region53: #{inception_v3a_forward.4} parent=51 // pred_check
        %p2406 = pneg %p110
      $region54: #{inception_v3a_forward.4} parent=51 // pred_check_branch
        %2408 = sbr.rel (%p2406) target = $region56
      $region55: #{inception_v3a_forward.4} parent=51 // pred_region
        %p2409 = scmp.lt.s32.totalorder %s19, 1
        %s2410 = scalar_select %p2409, %s19, 1
        %s2411 = smul.addr %s2410, 32
        %s2412 = smul.addr %s2411, 4
        %s2413 = scalar_lea.vmem %s3, %s2412
      $region56: #{inception_v3a_forward.4} parent=51 // pred_fallthru
        _
      // Predicated region
      $region57: #{inception_v3a_forward.4} parent=51 // pred_check
        %p2414 = pneg %p136
      $region58: #{inception_v3a_forward.4} parent=51 // pred_check_branch
        %2416 = sbr.rel (%p2414) target = $region60
      $region59: #{inception_v3a_forward.4} parent=51 // pred_region
        %p2417 = scmp.lt.s32.totalorder %s19, 1
        %s2418 = scalar_select %p2417, %s19, 1
        %s2419 = smul.addr %s2418, 32
        %s2420 = smul.addr %s2419, 4
        %s2421 = scalar_lea.vmem %s4, %s2420
      $region60: #{inception_v3a_forward.4} parent=51 // pred_fallthru
        _
      // Predicated region
      $region61: #{inception_v3a_forward.4} parent=51 // pred_check
        %p2422 = pneg %p162
      $region62: #{inception_v3a_forward.4} parent=51 // pred_check_branch
        %2424 = sbr.rel (%p2422) target = $region64
      $region63: #{inception_v3a_forward.4} parent=51 // pred_region
        %p2425 = scmp.lt.s32.totalorder %s19, 1
        %s2426 = scalar_select %p2425, %s19, 1
        %s2427 = smul.addr %s2426, 2
        %s2428 = scalar_lea.vmem %s5, %s2427
      $region64: #{inception_v3a_forward.4} parent=51 // pred_fallthru
        _
      // Predicated region
      $region65: #{inception_v3a_forward.4} parent=51 // pred_check
        %p2429 = pneg %p188
      $region66: #{inception_v3a_forward.4} parent=51 // pred_check_branch
        %2431 = sbr.rel (%p2429) target = $region68
      $region67: #{inception_v3a_forward.4} parent=51 // pred_region
        %p2432 = scmp.lt.s32.totalorder %s19, 1
        %s2433 = scalar_select %p2432, %s19, 1
        %s2434 = smul.addr %s2433, 2
        %s2435 = scalar_lea.vmem %s6, %s2434
      $region68: #{inception_v3a_forward.4} parent=51 // pred_fallthru
        _
    $region52: #{inception_v3a_forward.4} parent=5 // pred_fallthru
      _
  $region6: #{inception_v3a_forward.4} parent=0 // loop_footer
    %s17 = sadd.s32 1, %s13
  $region7: #{inception_v3a_forward.4} parent=0 // loop_footer_branch
    %12 = sbr.rel target = $region3
  $region8: #{inception_v3a_forward.4} parent=0 // loop_exit
    _

// kernel: inception_v3a_forward.6
$region0: #{inception_v3a_forward.6}
  #allocation0 [shape = 'u32[]', space=smem, size = 0x4, offset = 0x4, fixed_abs, tag = 'smem constant byte address 0x4 - core index']
  #allocation1 [shape = 'u32[144,128]{1,0:T(1,128)}', space=vmem, size = 0x12000, scoped, tag = 'internal scratch']
  %s0 = inlined_call_operand.vmem [shape: bf16[2,16,16,8], index: 0, kind: input, shape index: {}]
  %s1 = inlined_call_operand.vmem [shape: f32[2,8], index: 1, kind: input, shape index: {}]
  %s2 = inlined_call_operand.vmem [shape: f32[1,8], index: 2, kind: input, shape index: {}]
  %s3 = inlined_call_operand.vmem [shape: f32[1,8], index: 3, kind: input, shape index: {}]
  %s4 = inlined_call_operand.vmem [shape: bf16[3,3,8,8], index: 4, kind: input, shape index: {}]
  %s5 = inlined_call_operand.vmem [shape: bf16[2,16,16,8], index: 5, kind: output, shape index: {0}]
  %s6 = inlined_call_operand.vmem [shape: f32[2,2,8], index: 6, kind: output, shape index: {1}]
  %7 = xla_tuple %s5, %s6
  %s8 = sld [smem:[#allocation0]]
  $region61: #{inception_v3a_forward.6} parent=0
    _
  %s10 = ssub.s32 1, %s8
  %s11 = scalar_select 0, %s10, %s8
  loop: start=0, step=1, limit=4
  $region2: #{inception_v3a_forward.6} parent=0 // loop_pre_header
    _
  $region3: #{inception_v3a_forward.6} parent=0 // loop_header
    %s13 = sphi 0, %s17
    %p14 = scmp.ge.s32.totalorder %s13, 4
    %s23 = sphi 0, %s25
    %s26 = sphi 0, %s23
    %s27 = sphi 0, %s26
    %s43 = sphi 0, %s27
    %s47 = sphi 0, %s47
    %s49 = sphi 0, %s47
    %s50 = sphi 0, %s49
    %s64 = sphi 0, %s50
    %s68 = sphi 0, %s68
    %s70 = sphi 0, %s68
    %s71 = sphi 0, %s70
    %s85 = sphi 0, %s71
    %s89 = sphi 0, %s89
    %s91 = sphi 0, %s89
    %s92 = sphi 0, %s91
    %s106 = sphi 0, %s92
    %s110 = sphi 0, %s110
    %s112 = sphi 0, %s110
    %s113 = sphi 0, %s112
    %s127 = sphi 0, %s113
    %s133 = sphi 0, %s135
    %s136 = sphi 0, %s133
    %s137 = sphi 0, %s136
    %s153 = sphi 0, %s137
    %s159 = sphi 0, %s161
    %s162 = sphi 0, %s159
    %s163 = sphi 0, %s162
    %s179 = sphi 0, %s163
  $region4: #{inception_v3a_forward.6} parent=0 // loop_header_branch
    %16 = sbr.rel (%p14) target = $region8
  $region5: #{inception_v3a_forward.6} parent=0 // loop_body
    %s18 = ssub.s32 %s13, 1
    %s19 = ssub.s32 %s13, 2
    %s20 = sadd.s32 %s13, 1
    %s21 = ssub.s32 %s13, %s20
    %p22 = scmp.eq.s32.totalorder %s21, 0
    %s24 = sadd.s32 %s23, 1
    %s25 = scalar_select %p22, %s23, %s24
    %p28 = pneg %p22
    %p29 = scmp.eq.s32.totalorder %s13, 1
    %p30 = por %p28, %p29
    %p31 = scmp.ne.s32.totalorder %s23, %s26
    %p32 = scmp.eq.s32.totalorder %s13, 0
    %p33 = por %p31, %p32
    %p34 = scmp.ne.s32.totalorder %s23, %s26
    %p35 = scmp.eq.s32.totalorder %s18, 1
    %p36 = por %p34, %p35
    %p37 = scmp.ne.s32.totalorder %s26, %s27
    %p38 = scmp.eq.s32.totalorder %s18, 0
    %p39 = por %p37, %p38
    %p40 = scmp.ne.s32.totalorder %s26, %s27
    %p41 = scmp.eq.s32.totalorder %s19, 1
    %p42 = por %p40, %p41
    %p44 = scmp.ne.s32.totalorder %s27, %s43
    %p45 = scmp.eq.s32.totalorder %s19, 0
    %p46 = por %p44, %p45
    %s48 = sadd.s32 %s47, 1
    %p51 = scmp.eq.s32.totalorder %s13, 1
    %p52 = scmp.ne.s32.totalorder %s47, %s49
    %p53 = scmp.eq.s32.totalorder %s13, 0
    %p54 = por %p52, %p53
    %p55 = scmp.ne.s32.totalorder %s47, %s49
    %p56 = scmp.eq.s32.totalorder %s18, 1
    %p57 = por %p55, %p56
    %p58 = scmp.ne.s32.totalorder %s49, %s50
    %p59 = scmp.eq.s32.totalorder %s18, 0
    %p60 = por %p58, %p59
    %p61 = scmp.ne.s32.totalorder %s49, %s50
    %p62 = scmp.eq.s32.totalorder %s19, 1
    %p63 = por %p61, %p62
    %p65 = scmp.ne.s32.totalorder %s50, %s64
    %p66 = scmp.eq.s32.totalorder %s19, 0
    %p67 = por %p65, %p66
    %s69 = sadd.s32 %s68, 1
    %p72 = scmp.eq.s32.totalorder %s13, 1
    %p73 = scmp.ne.s32.totalorder %s68, %s70
    %p74 = scmp.eq.s32.totalorder %s13, 0
    %p75 = por %p73, %p74
    %p76 = scmp.ne.s32.totalorder %s68, %s70
    %p77 = scmp.eq.s32.totalorder %s18, 1
    %p78 = por %p76, %p77
    %p79 = scmp.ne.s32.totalorder %s70, %s71
    %p80 = scmp.eq.s32.totalorder %s18, 0
    %p81 = por %p79, %p80
    %p82 = scmp.ne.s32.totalorder %s70, %s71
    %p83 = scmp.eq.s32.totalorder %s19, 1
    %p84 = por %p82, %p83
    %p86 = scmp.ne.s32.totalorder %s71, %s85
    %p87 = scmp.eq.s32.totalorder %s19, 0
    %p88 = por %p86, %p87
    %s90 = sadd.s32 %s89, 1
    %p93 = scmp.eq.s32.totalorder %s13, 1
    %p94 = scmp.ne.s32.totalorder %s89, %s91
    %p95 = scmp.eq.s32.totalorder %s13, 0
    %p96 = por %p94, %p95
    %p97 = scmp.ne.s32.totalorder %s89, %s91
    %p98 = scmp.eq.s32.totalorder %s18, 1
    %p99 = por %p97, %p98
    %p100 = scmp.ne.s32.totalorder %s91, %s92
    %p101 = scmp.eq.s32.totalorder %s18, 0
    %p102 = por %p100, %p101
    %p103 = scmp.ne.s32.totalorder %s91, %s92
    %p104 = scmp.eq.s32.totalorder %s19, 1
    %p105 = por %p103, %p104
    %p107 = scmp.ne.s32.totalorder %s92, %s106
    %p108 = scmp.eq.s32.totalorder %s19, 0
    %p109 = por %p107, %p108
    %s111 = sadd.s32 %s110, 1
    %p114 = scmp.eq.s32.totalorder %s13, 1
    %p115 = scmp.ne.s32.totalorder %s110, %s112
    %p116 = scmp.eq.s32.totalorder %s13, 0
    %p117 = por %p115, %p116
    %p118 = scmp.ne.s32.totalorder %s110, %s112
    %p119 = scmp.eq.s32.totalorder %s18, 1
    %p120 = por %p118, %p119
    %p121 = scmp.ne.s32.totalorder %s112, %s113
    %p122 = scmp.eq.s32.totalorder %s18, 0
    %p123 = por %p121, %p122
    %p124 = scmp.ne.s32.totalorder %s112, %s113
    %p125 = scmp.eq.s32.totalorder %s19, 1
    %p126 = por %p124, %p125
    %p128 = scmp.ne.s32.totalorder %s113, %s127
    %p129 = scmp.eq.s32.totalorder %s19, 0
    %p130 = por %p128, %p129
    %s131 = ssub.s32 %s13, %s20
    %p132 = scmp.eq.s32.totalorder %s131, 0
    %s134 = sadd.s32 %s133, 1
    %s135 = scalar_select %p132, %s133, %s134
    %p138 = pneg %p132
    %p139 = scmp.eq.s32.totalorder %s13, 1
    %p140 = por %p138, %p139
    %p141 = scmp.ne.s32.totalorder %s133, %s136
    %p142 = scmp.eq.s32.totalorder %s13, 0
    %p143 = por %p141, %p142
    %p144 = scmp.ne.s32.totalorder %s133, %s136
    %p145 = scmp.eq.s32.totalorder %s18, 1
    %p146 = por %p144, %p145
    %p147 = scmp.ne.s32.totalorder %s136, %s137
    %p148 = scmp.eq.s32.totalorder %s18, 0
    %p149 = por %p147, %p148
    %p150 = scmp.ne.s32.totalorder %s136, %s137
    %p151 = scmp.eq.s32.totalorder %s19, 1
    %p152 = por %p150, %p151
    %p154 = scmp.ne.s32.totalorder %s137, %s153
    %p155 = scmp.eq.s32.totalorder %s19, 0
    %p156 = por %p154, %p155
    %s157 = ssub.s32 %s13, %s20
    %p158 = scmp.eq.s32.totalorder %s157, 0
    %s160 = sadd.s32 %s159, 1
    %s161 = scalar_select %p158, %s159, %s160
    %p164 = pneg %p158
    %p165 = scmp.eq.s32.totalorder %s13, 1
    %p166 = por %p164, %p165
    %p167 = scmp.ne.s32.totalorder %s159, %s162
    %p168 = scmp.eq.s32.totalorder %s13, 0
    %p169 = por %p167, %p168
    %p170 = scmp.ne.s32.totalorder %s159, %s162
    %p171 = scmp.eq.s32.totalorder %s18, 1
    %p172 = por %p170, %p171
    %p173 = scmp.ne.s32.totalorder %s162, %s163
    %p174 = scmp.eq.s32.totalorder %s18, 0
    %p175 = por %p173, %p174
    %p176 = scmp.ne.s32.totalorder %s162, %s163
    %p177 = scmp.eq.s32.totalorder %s19, 1
    %p178 = por %p176, %p177
    %p180 = scmp.ne.s32.totalorder %s163, %s179
    %p181 = scmp.eq.s32.totalorder %s19, 0
    %p182 = por %p180, %p181
    %p183 = scmp.le.s32.totalorder 1, %s13
    %p184 = scmp.lt.s32.totalorder %s13, 3
    %p185 = pnand %p183, %p184
    %p186 = pneg %p185
    // Predicated region
    $region9: #{inception_v3a_forward.6} parent=5 // pred_check
      _
    $region10: #{inception_v3a_forward.6} parent=5 // pred_check_branch
      %188 = sbr.rel (%p185) target = $region12
    $region11: #{inception_v3a_forward.6} parent=5 // pred_region
      %s189 = ssub.s32 %s13, 1
      // Predicated region
      $region13: #{inception_v3a_forward.6} parent=11 // pred_check
        %p190 = pneg %p60
      $region14: #{inception_v3a_forward.6} parent=11 // pred_check_branch
        %192 = sbr.rel (%p190) target = $region16
      $region15: #{inception_v3a_forward.6} parent=11 // pred_region
        _
      $region16: #{inception_v3a_forward.6} parent=11 // pred_fallthru
        _
      // Predicated region
      $region17: #{inception_v3a_forward.6} parent=11 // pred_check
        %p193 = pneg %p81
      $region18: #{inception_v3a_forward.6} parent=11 // pred_check_branch
        %195 = sbr.rel (%p193) target = $region20
      $region19: #{inception_v3a_forward.6} parent=11 // pred_region
        _
      $region20: #{inception_v3a_forward.6} parent=11 // pred_fallthru
        _
      // Predicated region
      $region21: #{inception_v3a_forward.6} parent=11 // pred_check
        %p196 = pneg %p102
      $region22: #{inception_v3a_forward.6} parent=11 // pred_check_branch
        %198 = sbr.rel (%p196) target = $region24
      $region23: #{inception_v3a_forward.6} parent=11 // pred_region
        _
      $region24: #{inception_v3a_forward.6} parent=11 // pred_fallthru
        _
      // Predicated region
      $region25: #{inception_v3a_forward.6} parent=11 // pred_check
        %p199 = pneg %p123
      $region26: #{inception_v3a_forward.6} parent=11 // pred_check_branch
        %201 = sbr.rel (%p199) target = $region28
      $region27: #{inception_v3a_forward.6} parent=11 // pred_region
        _
      $region28: #{inception_v3a_forward.6} parent=11 // pred_fallthru
        _
    $region12: #{inception_v3a_forward.6} parent=5 // pred_fallthru
      _
    %p202 = scmp.lt.s32.totalorder %s13, 2
    // Predicated region
    $region29: #{inception_v3a_forward.6} parent=5 // pred_check
      %p203 = pneg %p202
    $region30: #{inception_v3a_forward.6} parent=5 // pred_check_branch
      %205 = sbr.rel (%p203) target = $region32
    $region31: #{inception_v3a_forward.6} parent=5 // pred_region
      // Predicated region
      $region33: #{inception_v3a_forward.6} parent=31 // pred_check
        %p206 = pneg %p33
      $region34: #{inception_v3a_forward.6} parent=31 // pred_check_branch
        %208 = sbr.rel (%p206) target = $region36
      $region35: #{inception_v3a_forward.6} parent=31 // pred_region
        %p209 = scmp.lt.s32.totalorder %s13, 1
        %s210 = scalar_select %p209, %s13, 1
        %s211 = smul.addr %s210, 32
        %s212 = smul.addr %s211, 4
        %s213 = scalar_lea.vmem %s0, %s212
      $region36: #{inception_v3a_forward.6} parent=31 // pred_fallthru
        _
    $region32: #{inception_v3a_forward.6} parent=5 // pred_fallthru
      _
    %p214 = scmp.le.s32.totalorder 1, %s13
    %p215 = scmp.lt.s32.totalorder %s13, 3
    %p216 = pnand %p214, %p215
    %p217 = pneg %p216
    // Predicated region
    $region37: #{inception_v3a_forward.6} parent=5 // pred_check
      _
    $region38: #{inception_v3a_forward.6} parent=5 // pred_check_branch
      %219 = sbr.rel (%p216) target = $region40
    $region39: #{inception_v3a_forward.6} parent=5 // pred_region
      %s220 = ssub.s32 %s13, 1
      %p221 = scmp.lt.s32.totalorder %s18, 1
      %s222 = scalar_select %p221, %s18, 1
      %s223 = smul.addr %s222, 32
      %s224 = smul.addr %s223, 4
      %s225 = scalar_lea.vmem %s0, %s224
      %p226 = pneg %p39
      %p227 = pneg %p36
      %p228 = pneg %p60
      %p229 = pneg %p57
      %p230 = pneg %p81
      %p231 = pneg %p78
      %p232 = pneg %p102
      %p233 = pneg %p99
      %p234 = pneg %p123
      %p235 = pneg %p120
      %p236 = pneg %p149
      %p237 = pneg %p146
      %p238 = scmp.lt.s32.totalorder %s18, 1
      %s239 = scalar_select %p238, %s18, 1
      %s240 = smul.addr %s239, 32
      %s241 = smul.addr %s240, 4
      %s242 = scalar_lea.vmem %s5, %s241
      %p243 = pneg %p175
      %p244 = pneg %p172
      %p245 = scmp.lt.s32.totalorder %s18, 1
      %s246 = scalar_select %p245, %s18, 1
      %s247 = smul.addr %s246, 2
      %s248 = scalar_lea.vmem %s6, %s247
      %p249 = scmp.lt.s32.totalorder %s18, 1
      %s250 = scalar_select %p249, %s18, 1
      %s251 = smul.addr %s250, 32
      %s252 = smul.addr %s251, 4
      %s253 = scalar_lea.vmem %s0, %s252
      %p254 = scmp.lt.s32.totalorder %s18, 1
      %s255 = scalar_select %p254, %s18, 1
      %s256 = smul.addr %s255, 32
      %s257 = smul.addr %s256, 4
      %s258 = scalar_lea.vmem %s5, %s257
      %p259 = scmp.lt.s32.totalorder %s18, 1
      %s260 = scalar_select %p259, %s18, 1
      %s261 = smul.addr %s260, 2
      %s262 = scalar_lea.vmem %s6, %s261
      %v264 = vld [vmem:[%s1] sm:$0x3]
      %v265 = vld [vmem:[%s2] sm:$0x1]
      %v266 = vld [vmem:[%s3] sm:$0x1]
      %v267 = vmul.f32 %v264, 0.001953125
      %v268 = vmul.f32 %v267, %v267
      %v270 = vrot.slane %v268, 7
      %v272 = vsub.f32 %v267, %v270
      %v273 = vmax.f32 %v272, 0.0
      %v274 = vadd.f32 %v273, 1e-05
      %v275 = vrsqrt.pop %v274
      %v278 = vunpack.c.l.s4 1966171168
      %v279 = vunpack.c.0.s8 %v278
      %v280 = vlaneseq
      %v281 = vshrl.u32 %v280, 7
      %v282 = vsub.s32 %v279, %v281
      %v283 = vrot.slane %v275, %v282
      %v284 = vcombine.high %v283, %v283
      %v286 = vunpack.c.l.s4 1966171168
      %v287 = vunpack.c.0.s8 %v286
      %v288 = vlaneseq
      %v289 = vshrl.u32 %v288, 7
      %v290 = vsub.s32 %v287, %v289
      %v291 = vrot.slane %v284, %v290
      %v293 = vmul.f32 %v265, %v291
      %v294 = vmul.f32 %v267, %v293
      %v295 = vsub.f32 %v266, %v294
      %v296 = vld [vmem:[%s253] sm:$0xf]
      %v297 = vld [vmem:[%s253 + $0x4] sm:$0xf]
      %v298 = vld [vmem:[%s253 + $0x8] sm:$0xf]
      %v299 = vld [vmem:[%s253 + $0xc] sm:$0xf]
      %v300 = vld [vmem:[%s253 + $0x10] sm:$0xf]
      %v301 = vld [vmem:[%s253 + $0x14] sm:$0xf]
      %v302 = vld [vmem:[%s253 + $0x18] sm:$0xf]
      %v303 = vld [vmem:[%s253 + $0x1c] sm:$0xf]
      %v304 = vld [vmem:[%s253 + $0x20] sm:$0xf]
      %v305 = vld [vmem:[%s253 + $0x24] sm:$0xf]
      %v306 = vld [vmem:[%s253 + $0x28] sm:$0xf]
      %v307 = vld [vmem:[%s253 + $0x2c] sm:$0xf]
      %v308 = vld [vmem:[%s253 + $0x30] sm:$0xf]
      %v309 = vld [vmem:[%s253 + $0x34] sm:$0xf]
      %v310 = vld [vmem:[%s253 + $0x38] sm:$0xf]
      %v311 = vld [vmem:[%s253 + $0x3c] sm:$0xf]
      %v312 = vld [vmem:[%s253 + $0x40] sm:$0xf]
      %v313 = vld [vmem:[%s253 + $0x44] sm:$0xf]
      %v314 = vld [vmem:[%s253 + $0x48] sm:$0xf]
      %v315 = vld [vmem:[%s253 + $0x4c] sm:$0xf]
      %v316 = vld [vmem:[%s253 + $0x50] sm:$0xf]
      %v317 = vld [vmem:[%s253 + $0x54] sm:$0xf]
      %v318 = vld [vmem:[%s253 + $0x58] sm:$0xf]
      %v319 = vld [vmem:[%s253 + $0x5c] sm:$0xf]
      %v320 = vld [vmem:[%s253 + $0x60] sm:$0xf]
      %v321 = vld [vmem:[%s253 + $0x64] sm:$0xf]
      %v322 = vld [vmem:[%s253 + $0x68] sm:$0xf]
      %v323 = vld [vmem:[%s253 + $0x6c] sm:$0xf]
      %v324 = vld [vmem:[%s253 + $0x70] sm:$0xf]
      %v325 = vld [vmem:[%s253 + $0x74] sm:$0xf]
      %v326 = vld [vmem:[%s253 + $0x78] sm:$0xf]
      %v327 = vld [vmem:[%s253 + $0x7c] sm:$0xf]
      %v328 = vunpack.c.l.bf16 %v296
      %v329 = vunpack.c.l.bf16 %v297
      %v330 = vunpack.c.l.bf16 %v298
      %v331 = vunpack.c.l.bf16 %v299
      %v332 = vunpack.c.l.bf16 %v300
      %v333 = vunpack.c.l.bf16 %v301
      %v334 = vunpack.c.l.bf16 %v302
      %v335 = vunpack.c.l.bf16 %v303
      %v336 = vunpack.c.l.bf16 %v304
      %v337 = vunpack.c.l.bf16 %v305
      %v338 = vunpack.c.l.bf16 %v306
      %v339 = vunpack.c.l.bf16 %v307
      %v340 = vunpack.c.l.bf16 %v308
      %v341 = vunpack.c.l.bf16 %v309
      %v342 = vunpack.c.l.bf16 %v310
      %v343 = vunpack.c.l.bf16 %v311
      %v344 = vunpack.c.l.bf16 %v312
      %v345 = vunpack.c.l.bf16 %v313
      %v346 = vunpack.c.l.bf16 %v314
      %v347 = vunpack.c.l.bf16 %v315
      %v348 = vunpack.c.l.bf16 %v316
      %v349 = vunpack.c.l.bf16 %v317
      %v350 = vunpack.c.l.bf16 %v318
      %v351 = vunpack.c.l.bf16 %v319
      %v352 = vunpack.c.l.bf16 %v320
      %v353 = vunpack.c.l.bf16 %v321
      %v354 = vunpack.c.l.bf16 %v322
      %v355 = vunpack.c.l.bf16 %v323
      %v356 = vunpack.c.l.bf16 %v324
      %v357 = vunpack.c.l.bf16 %v325
      %v358 = vunpack.c.l.bf16 %v326
      %v359 = vunpack.c.l.bf16 %v327
      %v361 = vlaneseq
      %v362 = vshrl.u32 %v361, 7
      %v363 = vsub.s32 0, %v362
      %v364 = vrot.slane %v293, %v363
      %v366 = vmul.f32 %v328, %v364
      %v367 = vmul.f32 %v329, %v364
      %v368 = vmul.f32 %v330, %v364
      %v369 = vmul.f32 %v331, %v364
      %v370 = vmul.f32 %v332, %v364
      %v371 = vmul.f32 %v333, %v364
      %v372 = vmul.f32 %v334, %v364
      %v373 = vmul.f32 %v335, %v364
      %v374 = vmul.f32 %v336, %v364
      %v375 = vmul.f32 %v337, %v364
      %v376 = vmul.f32 %v338, %v364
      %v377 = vmul.f32 %v339, %v364
      %v378 = vmul.f32 %v340, %v364
      %v379 = vmul.f32 %v341, %v364
      %v380 = vmul.f32 %v342, %v364
      %v381 = vmul.f32 %v343, %v364
      %v382 = vmul.f32 %v344, %v364
      %v383 = vmul.f32 %v345, %v364
      %v384 = vmul.f32 %v346, %v364
      %v385 = vmul.f32 %v347, %v364
      %v386 = vmul.f32 %v348, %v364
      %v387 = vmul.f32 %v349, %v364
      %v388 = vmul.f32 %v350, %v364
      %v389 = vmul.f32 %v351, %v364
      %v390 = vmul.f32 %v352, %v364
      %v391 = vmul.f32 %v353, %v364
      %v392 = vmul.f32 %v354, %v364
      %v393 = vmul.f32 %v355, %v364
      %v394 = vmul.f32 %v356, %v364
      %v395 = vmul.f32 %v357, %v364
      %v396 = vmul.f32 %v358, %v364
      %v397 = vmul.f32 %v359, %v364
      %v399 = vlaneseq
      %v400 = vshrl.u32 %v399, 7
      %v401 = vsub.s32 0, %v400
      %v402 = vrot.slane %v295, %v401
      %v404 = vadd.f32 %v366, %v402
      %v405 = vadd.f32 %v367, %v402
      %v406 = vadd.f32 %v368, %v402
      %v407 = vadd.f32 %v369, %v402
      %v408 = vadd.f32 %v370, %v402
      %v409 = vadd.f32 %v371, %v402
      %v410 = vadd.f32 %v372, %v402
      %v411 = vadd.f32 %v373, %v402
      %v412 = vadd.f32 %v374, %v402
      %v413 = vadd.f32 %v375, %v402
      %v414 = vadd.f32 %v376, %v402
      %v415 = vadd.f32 %v377, %v402
      %v416 = vadd.f32 %v378, %v402
      %v417 = vadd.f32 %v379, %v402
      %v418 = vadd.f32 %v380, %v402
      %v419 = vadd.f32 %v381, %v402
      %v420 = vadd.f32 %v382, %v402
      %v421 = vadd.f32 %v383, %v402
      %v422 = vadd.f32 %v384, %v402
      %v423 = vadd.f32 %v385, %v402
      %v424 = vadd.f32 %v386, %v402
      %v425 = vadd.f32 %v387, %v402
      %v426 = vadd.f32 %v388, %v402
      %v427 = vadd.f32 %v389, %v402
      %v428 = vadd.f32 %v390, %v402
      %v429 = vadd.f32 %v391, %v402
      %v430 = vadd.f32 %v392, %v402
      %v431 = vadd.f32 %v393, %v402
      %v432 = vadd.f32 %v394, %v402
      %v433 = vadd.f32 %v395, %v402
      %v434 = vadd.f32 %v396, %v402
      %v435 = vadd.f32 %v397, %v402
      %v436 = vmax.f32 %v404, 0.0
      %v437 = vmax.f32 %v405, 0.0
      %v438 = vmax.f32 %v406, 0.0
      %v439 = vmax.f32 %v407, 0.0
      %v440 = vmax.f32 %v408, 0.0
      %v441 = vmax.f32 %v409, 0.0
      %v442 = vmax.f32 %v410, 0.0
      %v443 = vmax.f32 %v411, 0.0
      %v444 = vmax.f32 %v412, 0.0
      %v445 = vmax.f32 %v413, 0.0
      %v446 = vmax.f32 %v414, 0.0
      %v447 = vmax.f32 %v415, 0.0
      %v448 = vmax.f32 %v416, 0.0
      %v449 = vmax.f32 %v417, 0.0
      %v450 = vmax.f32 %v418, 0.0
      %v451 = vmax.f32 %v419, 0.0
      %v452 = vmax.f32 %v420, 0.0
      %v453 = vmax.f32 %v421, 0.0
      %v454 = vmax.f32 %v422, 0.0
      %v455 = vmax.f32 %v423, 0.0
      %v456 = vmax.f32 %v424, 0.0
      %v457 = vmax.f32 %v425, 0.0
      %v458 = vmax.f32 %v426, 0.0
      %v459 = vmax.f32 %v427, 0.0
      %v460 = vmax.f32 %v428, 0.0
      %v461 = vmax.f32 %v429, 0.0
      %v462 = vmax.f32 %v430, 0.0
      %v463 = vmax.f32 %v431, 0.0
      %v464 = vmax.f32 %v432, 0.0
      %v465 = vmax.f32 %v433, 0.0
      %v466 = vmax.f32 %v434, 0.0
      %v467 = vmax.f32 %v435, 0.0
      %v468 = vpack.c.bf16 %v437, %v436
      %v469 = vpack.c.bf16 %v439, %v438
      %v470 = vpack.c.bf16 %v441, %v440
      %v471 = vpack.c.bf16 %v443, %v442
      %v472 = vpack.c.bf16 %v445, %v444
      %v473 = vpack.c.bf16 %v447, %v446
      %v474 = vpack.c.bf16 %v449, %v448
      %v475 = vpack.c.bf16 %v451, %v450
      %v476 = vpack.c.bf16 %v453, %v452
      %v477 = vpack.c.bf16 %v455, %v454
      %v478 = vpack.c.bf16 %v457, %v456
      %v479 = vpack.c.bf16 %v459, %v458
      %v480 = vpack.c.bf16 %v461, %v460
      %v481 = vpack.c.bf16 %v463, %v462
      %v482 = vpack.c.bf16 %v465, %v464
      %v483 = vpack.c.bf16 %v467, %v466
      %v485 = vshrl.u32 %v468, 16
      %v487 = vrot.slane %v485, 7
      %v488 = vshll.u32 %v468, 16
      %v490 = vor.u32 %v487, %v488
      %v492 = vshrl.u32 %v469, 16
      %v494 = vrot.slane %v492, 7
      %v495 = vshll.u32 %v469, 16
      %v497 = vor.u32 %v494, %v495
      %v499 = vshrl.u32 %v470, 16
      %v501 = vrot.slane %v499, 7
      %v502 = vshll.u32 %v470, 16
      %v504 = vor.u32 %v501, %v502
      %v506 = vshrl.u32 %v471, 16
      %v508 = vrot.slane %v506, 7
      %v509 = vshll.u32 %v471, 16
      %v511 = vor.u32 %v508, %v509
      %v513 = vshrl.u32 %v472, 16
      %v515 = vrot.slane %v513, 7
      %v516 = vshll.u32 %v472, 16
      %v518 = vor.u32 %v515, %v516
      %v520 = vshrl.u32 %v473, 16
      %v522 = vrot.slane %v520, 7
      %v523 = vshll.u32 %v473, 16
      %v525 = vor.u32 %v522, %v523
      %v527 = vshrl.u32 %v474, 16
      %v529 = vrot.slane %v527, 7
      %v530 = vshll.u32 %v474, 16
      %v532 = vor.u32 %v529, %v530
      %v534 = vshrl.u32 %v475, 16
      %v536 = vrot.slane %v534, 7
      %v537 = vshll.u32 %v475, 16
      %v539 = vor.u32 %v536, %v537
      %v541 = vshrl.u32 %v476, 16
      %v543 = vrot.slane %v541, 7
      %v544 = vshll.u32 %v476, 16
      %v546 = vor.u32 %v543, %v544
      %v548 = vshrl.u32 %v477, 16
      %v550 = vrot.slane %v548, 7
      %v551 = vshll.u32 %v477, 16
      %v553 = vor.u32 %v550, %v551
      %v555 = vshrl.u32 %v478, 16
      %v557 = vrot.slane %v555, 7
      %v558 = vshll.u32 %v478, 16
      %v560 = vor.u32 %v557, %v558
      %v562 = vshrl.u32 %v479, 16
      %v564 = vrot.slane %v562, 7
      %v565 = vshll.u32 %v479, 16
      %v567 = vor.u32 %v564, %v565
      %v569 = vshrl.u32 %v480, 16
      %v571 = vrot.slane %v569, 7
      %v572 = vshll.u32 %v480, 16
      %v574 = vor.u32 %v571, %v572
      %v576 = vshrl.u32 %v481, 16
      %v578 = vrot.slane %v576, 7
      %v579 = vshll.u32 %v481, 16
      %v581 = vor.u32 %v578, %v579
      %v583 = vshrl.u32 %v482, 16
      %v585 = vrot.slane %v583, 7
      %v586 = vshll.u32 %v482, 16
      %v588 = vor.u32 %v585, %v586
      %v590 = vshrl.u32 %v483, 16
      %v592 = vrot.slane %v590, 7
      %v593 = vshll.u32 %v483, 16
      %v595 = vor.u32 %v592, %v593
      %vm628 = vcmask 1040384
      %vm629 = vsmask.f32 256
      %vm630 = vmand %vm628, %vm629
      %v631 = vsel %vm630, 0, %v490
      %v632 = vsel %vm630, 0, %v497
      %v633 = vsel %vm630, 0, %v504
      %v634 = vsel %vm630, 0, %v511
      %v635 = vsel %vm630, 0, %v518
      %v636 = vsel %vm630, 0, %v525
      %v637 = vsel %vm630, 0, %v532
      %v638 = vsel %vm630, 0, %v539
      %v639 = vsel %vm630, 0, %v546
      %v640 = vsel %vm630, 0, %v553
      %v641 = vsel %vm630, 0, %v560
      %v642 = vsel %vm630, 0, %v567
      %v643 = vsel %vm630, 0, %v574
      %v644 = vsel %vm630, 0, %v581
      %v645 = vsel %vm630, 0, %v588
      %v646 = vsel %vm630, 0, %v595
      %v647 = vsel %vm630, %v487, 0
      %v648 = vsel %vm630, %v494, 0
      %v649 = vsel %vm630, %v501, 0
      %v650 = vsel %vm630, %v508, 0
      %v651 = vsel %vm630, %v515, 0
      %v652 = vsel %vm630, %v522, 0
      %v653 = vsel %vm630, %v529, 0
      %v654 = vsel %vm630, %v536, 0
      %v655 = vsel %vm630, %v543, 0
      %v656 = vsel %vm630, %v550, 0
      %v657 = vsel %vm630, %v557, 0
      %v658 = vsel %vm630, %v564, 0
      %v659 = vsel %vm630, %v571, 0
      %v660 = vsel %vm630, %v578, 0
      %v661 = vsel %vm630, %v585, 0
      %v662 = vsel %vm630, %v592, 0
      %v663 = vld [vmem:[%s4] sm:$0xf]
      %v664 = vld [vmem:[%s4 + $0x4] sm:$0xf]
      %v665 = vld [vmem:[%s4 + $0x8] sm:$0xf]
      %v666 = vld [vmem:[%s4 + $0xc] sm:$0xf]
      %v667 = vld [vmem:[%s4 + $0x10] sm:$0xf]
      %v668 = vld [vmem:[%s4 + $0x14] sm:$0xf]
      %v669 = vld [vmem:[%s4 + $0x18] sm:$0xf]
      %v670 = vld [vmem:[%s4 + $0x1c] sm:$0xf]
      %v671 = vld [vmem:[%s4 + $0x20] sm:$0xf]
      %vm672 = vsmask.f32 7424
      %v674 = vshrl.u32 0, 16
      %v676 = vshll.u32 0, 16
      %v678 = vrot.slane %v676, 1
      %v679 = vor.u32 %v674, %v678
      %v680 = vsel %vm672, %v679, %v678
      %v682 = vshrl.u32 %v631, 16
      %v684 = vshll.u32 %v631, 16
      %v686 = vrot.slane %v684, 1
      %v687 = vor.u32 %v682, %v686
      %v689 = vshll.u32 %v647, 16
      %v691 = vrot.slane %v689, 1
      %v692 = vsel %vm672, %v687, %v691
      %v694 = vshrl.u32 %v632, 16
      %v696 = vshll.u32 %v632, 16
      %v698 = vrot.slane %v696, 1
      %v699 = vor.u32 %v694, %v698
      %v701 = vshll.u32 %v648, 16
      %v703 = vrot.slane %v701, 1
      %v704 = vsel %vm672, %v699, %v703
      %v706 = vshrl.u32 %v633, 16
      %v708 = vshll.u32 %v633, 16
      %v710 = vrot.slane %v708, 1
      %v711 = vor.u32 %v706, %v710
      %v713 = vshll.u32 %v649, 16
      %v715 = vrot.slane %v713, 1
      %v716 = vsel %vm672, %v711, %v715
      %v718 = vshrl.u32 %v634, 16
      %v720 = vshll.u32 %v634, 16
      %v722 = vrot.slane %v720, 1
      %v723 = vor.u32 %v718, %v722
      %v725 = vshll.u32 %v650, 16
      %v727 = vrot.slane %v725, 1
      %v728 = vsel %vm672, %v723, %v727
      %v730 = vshrl.u32 %v635, 16
      %v732 = vshll.u32 %v635, 16
      %v734 = vrot.slane %v732, 1
      %v735 = vor.u32 %v730, %v734
      %v737 = vshll.u32 %v651, 16
      %v739 = vrot.slane %v737, 1
      %v740 = vsel %vm672, %v735, %v739
      %v742 = vshrl.u32 %v636, 16
      %v744 = vshll.u32 %v636, 16
      %v746 = vrot.slane %v744, 1
      %v747 = vor.u32 %v742, %v746
      %v749 = vshll.u32 %v652, 16
      %v751 = vrot.slane %v749, 1
      %v752 = vsel %vm672, %v747, %v751
      %v754 = vshrl.u32 %v637, 16
      %v756 = vshll.u32 %v637, 16
      %v758 = vrot.slane %v756, 1
      %v759 = vor.u32 %v754, %v758
      %v761 = vshll.u32 %v653, 16
      %v763 = vrot.slane %v761, 1
      %v764 = vsel %vm672, %v759, %v763
      %765 = vrot.lane.b32.xlu0 %v680, 8
      %v766 = vpop.permute.xlu0 %765
      %767 = vrot.lane.b32.xlu0 %v692, 8
      %v768 = vpop.permute.xlu0 %767
      %769 = vrot.lane.b32.xlu0 %v704, 8
      %v770 = vpop.permute.xlu0 %769
      %771 = vrot.lane.b32.xlu0 %v716, 8
      %v772 = vpop.permute.xlu0 %771
      %773 = vrot.lane.b32.xlu0 %v728, 8
      %v774 = vpop.permute.xlu0 %773
      %775 = vrot.lane.b32.xlu0 %v740, 8
      %v776 = vpop.permute.xlu0 %775
      %777 = vrot.lane.b32.xlu0 %v752, 8
      %v778 = vpop.permute.xlu0 %777
      %779 = vrot.lane.b32.xlu0 %v764, 8
      %v780 = vpop.permute.xlu0 %779
      %vm796 = vcmask 1046528
      %v797 = vrot.slane 0, 1
      %v798 = vsel %vm796, %v797, %v797
      %v799 = vrot.slane %v631, 1
      %v800 = vrot.slane %v647, 1
      %v801 = vsel %vm796, %v799, %v800
      %v802 = vrot.slane %v632, 1
      %v803 = vrot.slane %v648, 1
      %v804 = vsel %vm796, %v802, %v803
      %v805 = vrot.slane %v633, 1
      %v806 = vrot.slane %v649, 1
      %v807 = vsel %vm796, %v805, %v806
      %v808 = vrot.slane %v634, 1
      %v809 = vrot.slane %v650, 1
      %v810 = vsel %vm796, %v808, %v809
      %v811 = vrot.slane %v635, 1
      %v812 = vrot.slane %v651, 1
      %v813 = vsel %vm796, %v811, %v812
      %v814 = vrot.slane %v636, 1
      %v815 = vrot.slane %v652, 1
      %v816 = vsel %vm796, %v814, %v815
      %v817 = vrot.slane %v637, 1
      %v818 = vrot.slane %v653, 1
      %v819 = vsel %vm796, %v817, %v818
      %820 = vrot.lane.b32.xlu0 %v798, 16
      %v821 = vpop.permute.xlu0 %820
      %822 = vrot.lane.b32.xlu0 %v801, 16
      %v823 = vpop.permute.xlu0 %822
      %824 = vrot.lane.b32.xlu0 %v804, 16
      %v825 = vpop.permute.xlu0 %824
      %826 = vrot.lane.b32.xlu0 %v807, 16
      %v827 = vpop.permute.xlu0 %826
      %828 = vrot.lane.b32.xlu0 %v810, 16
      %v829 = vpop.permute.xlu0 %828
      %830 = vrot.lane.b32.xlu0 %v813, 16
      %v831 = vpop.permute.xlu0 %830
      %832 = vrot.lane.b32.xlu0 %v816, 16
      %v833 = vpop.permute.xlu0 %832
      %834 = vrot.lane.b32.xlu0 %v819, 16
      %v835 = vpop.permute.xlu0 %834
      %vm836 = vcmask 64512
      %v838 = vsel %vm836, 0, %v766
      %v840 = vsel %vm836, %v631, %v768
      %v842 = vsel %vm836, %v632, %v770
      %v844 = vsel %vm836, %v633, %v772
      %v846 = vsel %vm836, %v634, %v774
      %v848 = vsel %vm836, %v635, %v776
      %v850 = vsel %vm836, %v636, %v778
      %v852 = vsel %vm836, %v637, %v780
      %vm853 = vcmask 130048
      %v855 = vsel %vm853, %v838, %v821
      %v857 = vsel %vm853, %v840, %v823
      %v859 = vsel %vm853, %v842, %v825
      %v861 = vsel %vm853, %v844, %v827
      %v863 = vsel %vm853, %v846, %v829
      %v865 = vsel %vm853, %v848, %v831
      %v867 = vsel %vm853, %v850, %v833
      %v869 = vsel %vm853, %v852, %v835
      %v871 = vshrl.u32 %v638, 16
      %v873 = vshll.u32 %v638, 16
      %v875 = vrot.slane %v873, 1
      %v876 = vor.u32 %v871, %v875
      %v878 = vshll.u32 %v654, 16
      %v880 = vrot.slane %v878, 1
      %v881 = vsel %vm672, %v876, %v880
      %882 = vrot.lane.b32.xlu0 %v881, 8
      %v883 = vpop.permute.xlu0 %882
      %v886 = vrot.slane %v638, 1
      %v887 = vrot.slane %v654, 1
      %v888 = vsel %vm796, %v886, %v887
      %889 = vrot.lane.b32.xlu0 %v888, 16
      %v890 = vpop.permute.xlu0 %889
      %v892 = vsel %vm836, %v638, %v883
      %v894 = vsel %vm853, %v892, %v890
      %v898 = vunpack.c.l.b16 %v666
      %v899 = vunpack.c.l.b16 %v667
      %v900 = vunpack.c.l.b16 %v668
      %v901 = vpack.c.b16 %v899, %v898
      %v902 = vpack.c.b16 %v900, %v900
      %vm904 = vcmask 195584
      %v905 = vsel %vm904, %v857, 0
      %v907 = vsel %vm904, %v859, 0
      %v909 = vsel %vm904, %v861, 0
      %v911 = vsel %vm904, %v863, 0
      %v913 = vsel %vm904, %v865, 0
      %v915 = vsel %vm904, %v867, 0
      %v917 = vsel %vm904, %v869, 0
      %v919 = vsel %vm904, %v894, 0
      %vm921 = vcmask 1043456
      %v923 = vsel %vm921, %v902, 0
      %925 = vmatprep.subr.bf16.mxu0 0
      %926 = vmatpush1.bf16.msra.mxu0 %v901
      %927 = vmatprep.subr.bf16.mxu0 0
      %928 = vmatpush1.bf16.msra.mxu0 %v923
      %929 = vmatprep.subr.bf16.mxu0 0
      %930 = vmatpush1.bf16.msra.mxu0 0
      %931 = vmatprep.subr.bf16.mxu0 0
      %932 = vmatpush1.bf16.msra.mxu0 0
      %933 = vmatprep.subr.bf16.mxu0 0
      %934 = vmatpush1.bf16.msra.mxu0 0
      %935 = vmatprep.subr.bf16.mxu0 0
      %936 = vmatpush1.bf16.msra.mxu0 0
      %937 = vmatprep.subr.bf16.mxu0 0
      %938 = vmatpush1.bf16.msra.mxu0 0
      %939 = vmatprep.subr.bf16.mxu0 0
      %940 = vmatpush1.bf16.msra.mxu0 0
      %941 = vmatprep.subr.bf16.mxu0 0
      %942 = vmatpush1.bf16.msra.mxu0 0
      %943 = vmatprep.subr.bf16.mxu0 0
      %944 = vmatpush1.bf16.msra.mxu0 0
      %945 = vmatprep.subr.bf16.mxu0 0
      %946 = vmatpush1.bf16.msra.mxu0 0
      %947 = vmatprep.subr.bf16.mxu0 0
      %948 = vmatpush1.bf16.msra.mxu0 0
      %949 = vmatprep.subr.bf16.mxu0 0
      %950 = vmatpush1.bf16.msra.mxu0 0
      %951 = vmatprep.subr.bf16.mxu0 0
      %952 = vmatpush1.bf16.msra.mxu0 0
      %953 = vmatprep.subr.bf16.mxu0 0
      %954 = vmatpush1.bf16.msra.mxu0 0
      %955 = vmatprep.subr.bf16.mxu0 0
      %956 = vmatpush1.bf16.msra.mxu0 0
      %957 = vmatprep.mubr.bf16.mxu0 0
      %958 = vmatmul.mubr.bf16.gmra.mrb[0].mxu0 %v905
      %v959 = vpop.f32.mrb[0].mxu0
      %v960 = vadd.f32 0.0, %v959
      %v961 = vpop.f32.mrb[0].mxu0
      %v962 = vpop.f32.mrb[0].mxu0
      %v963 = vadd.f32 0.0, %v962
      %v964 = vpop.f32.mrb[0].mxu0
      %965 = vmatprep.mubr.bf16.mxu0 0
      %966 = vmatmul.mubr.bf16.gmra.mrb[0].mxu0 %v907
      %v967 = vpop.f32.mrb[0].mxu0
      %v968 = vadd.f32 0.0, %v967
      %v969 = vpop.f32.mrb[0].mxu0
      %v970 = vpop.f32.mrb[0].mxu0
      %v971 = vadd.f32 0.0, %v970
      %v972 = vpop.f32.mrb[0].mxu0
      %973 = vmatprep.mubr.bf16.mxu0 0
      %974 = vmatmul.mubr.bf16.gmra.mrb[0].mxu0 %v909
      %v975 = vpop.f32.mrb[0].mxu0
      %v976 = vadd.f32 0.0, %v975
      %v977 = vpop.f32.mrb[0].mxu0
      %v978 = vpop.f32.mrb[0].mxu0
      %v979 = vadd.f32 0.0, %v978
      %v980 = vpop.f32.mrb[0].mxu0
      %981 = vmatprep.mubr.bf16.mxu0 0
      %982 = vmatmul.mubr.bf16.gmra.mrb[0].mxu0 %v911
      %v983 = vpop.f32.mrb[0].mxu0
      %v984 = vadd.f32 0.0, %v983
      %v985 = vpop.f32.mrb[0].mxu0
      %v986 = vpop.f32.mrb[0].mxu0
      %v987 = vadd.f32 0.0, %v986
      %v988 = vpop.f32.mrb[0].mxu0
      %989 = vmatprep.mubr.bf16.mxu0 0
      %990 = vmatmul.mubr.bf16.gmra.mrb[0].mxu0 %v913
      %v991 = vpop.f32.mrb[0].mxu0
      %v992 = vadd.f32 0.0, %v991
      %v993 = vpop.f32.mrb[0].mxu0
      %v994 = vpop.f32.mrb[0].mxu0
      %v995 = vadd.f32 0.0, %v994
      %v996 = vpop.f32.mrb[0].mxu0
      %997 = vmatprep.mubr.bf16.mxu0 0
      %998 = vmatmul.mubr.bf16.gmra.mrb[0].mxu0 %v915
      %v999 = vpop.f32.mrb[0].mxu0
      %v1000 = vadd.f32 0.0, %v999
      %v1001 = vpop.f32.mrb[0].mxu0
      %v1002 = vpop.f32.mrb[0].mxu0
      %v1003 = vadd.f32 0.0, %v1002
      %v1004 = vpop.f32.mrb[0].mxu0
      %1005 = vmatprep.mubr.bf16.mxu0 0
      %1006 = vmatmul.mubr.bf16.gmra.mrb[0].mxu0 %v917
      %v1007 = vpop.f32.mrb[0].mxu0
      %v1008 = vadd.f32 0.0, %v1007
      %v1009 = vpop.f32.mrb[0].mxu0
      %v1010 = vpop.f32.mrb[0].mxu0
      %v1011 = vadd.f32 0.0, %v1010
      %v1012 = vpop.f32.mrb[0].mxu0
      %1013 = vmatprep.mubr.bf16.mxu0 0
      %1014 = vmatmul.mubr.bf16.gmra.mrb[0].mxu0 %v919
      %v1015 = vpop.f32.mrb[0].mxu0
      %v1016 = vadd.f32 0.0, %v1015
      %v1017 = vpop.f32.mrb[0].mxu0
      %v1018 = vpop.f32.mrb[0].mxu0
      %v1019 = vadd.f32 0.0, %v1018
      %v1020 = vpop.f32.mrb[0].mxu0
      %1021 = vdwg.mxu0
      %v1025 = vunpack.c.l.b16 %v663
      %v1026 = vunpack.c.l.b16 %v664
      %v1027 = vunpack.c.l.b16 %v665
      %v1028 = vpack.c.b16 %v1026, %v1025
      %v1029 = vpack.c.b16 %v1027, %v1027
      %v1031 = vsel %vm904, %v855, 0
      %v1034 = vsel %vm921, %v1029, 0
      %1036 = vmatprep.subr.bf16.mxu0 0
      %1037 = vmatpush1.bf16.msra.mxu0 %v1028
      %1038 = vmatprep.subr.bf16.mxu0 0
      %1039 = vmatpush1.bf16.msra.mxu0 %v1034
      %1040 = vmatprep.subr.bf16.mxu0 0
      %1041 = vmatpush1.bf16.msra.mxu0 0
      %1042 = vmatprep.subr.bf16.mxu0 0
      %1043 = vmatpush1.bf16.msra.mxu0 0
      %1044 = vmatprep.subr.bf16.mxu0 0
      %1045 = vmatpush1.bf16.msra.mxu0 0
      %1046 = vmatprep.subr.bf16.mxu0 0
      %1047 = vmatpush1.bf16.msra.mxu0 0
      %1048 = vmatprep.subr.bf16.mxu0 0
      %1049 = vmatpush1.bf16.msra.mxu0 0
      %1050 = vmatprep.subr.bf16.mxu0 0
      %1051 = vmatpush1.bf16.msra.mxu0 0
      %1052 = vmatprep.subr.bf16.mxu0 0
      %1053 = vmatpush1.bf16.msra.mxu0 0
      %1054 = vmatprep.subr.bf16.mxu0 0
      %1055 = vmatpush1.bf16.msra.mxu0 0
      %1056 = vmatprep.subr.bf16.mxu0 0
      %1057 = vmatpush1.bf16.msra.mxu0 0
      %1058 = vmatprep.subr.bf16.mxu0 0
      %1059 = vmatpush1.bf16.msra.mxu0 0
      %1060 = vmatprep.subr.bf16.mxu0 0
      %1061 = vmatpush1.bf16.msra.mxu0 0
      %1062 = vmatprep.subr.bf16.mxu0 0
      %1063 = vmatpush1.bf16.msra.mxu0 0
      %1064 = vmatprep.subr.bf16.mxu0 0
      %1065 = vmatpush1.bf16.msra.mxu0 0
      %1066 = vmatprep.subr.bf16.mxu0 0
      %1067 = vmatpush1.bf16.msra.mxu0 0
      %1068 = vmatprep.mubr.bf16.mxu0 0
      %1069 = vmatmul.mubr.bf16.gmra.mrb[0].mxu0 %v1031
      %v1070 = vpop.f32.mrb[0].mxu0
      %v1071 = vadd.f32 %v960, %v1070
      %v1072 = vpop.f32.mrb[0].mxu0
      %v1073 = vpop.f32.mrb[0].mxu0
      %v1074 = vadd.f32 %v963, %v1073
      %v1075 = vpop.f32.mrb[0].mxu0
      %1076 = vmatprep.mubr.bf16.mxu0 0
      %1077 = vmatmul.mubr.bf16.gmra.mrb[0].mxu0 %v905
      %v1078 = vpop.f32.mrb[0].mxu0
      %v1079 = vadd.f32 %v968, %v1078
      %v1080 = vpop.f32.mrb[0].mxu0
      %v1081 = vpop.f32.mrb[0].mxu0
      %v1082 = vadd.f32 %v971, %v1081
      %v1083 = vpop.f32.mrb[0].mxu0
      %1084 = vmatprep.mubr.bf16.mxu0 0
      %1085 = vmatmul.mubr.bf16.gmra.mrb[0].mxu0 %v907
      %v1086 = vpop.f32.mrb[0].mxu0
      %v1087 = vadd.f32 %v976, %v1086
      %v1088 = vpop.f32.mrb[0].mxu0
      %v1089 = vpop.f32.mrb[0].mxu0
      %v1090 = vadd.f32 %v979, %v1089
      %v1091 = vpop.f32.mrb[0].mxu0
      %1092 = vmatprep.mubr.bf16.mxu0 0
      %1093 = vmatmul.mubr.bf16.gmra.mrb[0].mxu0 %v909
      %v1094 = vpop.f32.mrb[0].mxu0
      %v1095 = vadd.f32 %v984, %v1094
      %v1096 = vpop.f32.mrb[0].mxu0
      %v1097 = vpop.f32.mrb[0].mxu0
      %v1098 = vadd.f32 %v987, %v1097
      %v1099 = vpop.f32.mrb[0].mxu0
      %1100 = vmatprep.mubr.bf16.mxu0 0
      %1101 = vmatmul.mubr.bf16.gmra.mrb[0].mxu0 %v911
      %v1102 = vpop.f32.mrb[0].mxu0
      %v1103 = vadd.f32 %v992, %v1102
      %v1104 = vpop.f32.mrb[0].mxu0
      %v1105 = vpop.f32.mrb[0].mxu0
      %v1106 = vadd.f32 %v995, %v1105
      %v1107 = vpop.f32.mrb[0].mxu0
      %1108 = vmatprep.mubr.bf16.mxu0 0
      %1109 = vmatmul.mubr.bf16.gmra.mrb[0].mxu0 %v913
      %v1110 = vpop.f32.mrb[0].mxu0
      %v1111 = vadd.f32 %v1000, %v1110
      %v1112 = vpop.f32.mrb[0].mxu0
      %v1113 = vpop.f32.mrb[0].mxu0
      %v1114 = vadd.f32 %v1003, %v1113
      %v1115 = vpop.f32.mrb[0].mxu0
      %1116 = vmatprep.mubr.bf16.mxu0 0
      %1117 = vmatmul.mubr.bf16.gmra.mrb[0].mxu0 %v915
      %v1118 = vpop.f32.mrb[0].mxu0
      %v1119 = vadd.f32 %v1008, %v1118
      %v1120 = vpop.f32.mrb[0].mxu0
      %v1121 = vpop.f32.mrb[0].mxu0
      %v1122 = vadd.f32 %v1011, %v1121
      %v1123 = vpop.f32.mrb[0].mxu0
      %1124 = vmatprep.mubr.bf16.mxu0 0
      %1125 = vmatmul.mubr.bf16.gmra.mrb[0].mxu0 %v917
      %v1126 = vpop.f32.mrb[0].mxu0
      %v1127 = vadd.f32 %v1016, %v1126
      %v1128 = vpop.f32.mrb[0].mxu0
      %v1129 = vpop.f32.mrb[0].mxu0
      %v1130 = vadd.f32 %v1019, %v1129
      %v1131 = vpop.f32.mrb[0].mxu0
      %1132 = vdwg.mxu0
      %v1134 = vshrl.u32 %v639, 16
      %v1136 = vshll.u32 %v639, 16
      %v1138 = vrot.slane %v1136, 1
      %v1139 = vor.u32 %v1134, %v1138
      %v1141 = vshll.u32 %v655, 16
      %v1143 = vrot.slane %v1141, 1
      %v1144 = vsel %vm672, %v1139, %v1143
      %1145 = vrot.lane.b32.xlu0 %v1144, 8
      %v1146 = vpop.permute.xlu0 %1145
      %v1149 = vrot.slane %v639, 1
      %v1150 = vrot.slane %v655, 1
      %v1151 = vsel %vm796, %v1149, %v1150
      %1152 = vrot.lane.b32.xlu0 %v1151, 16
      %v1153 = vpop.permute.xlu0 %1152
      %v1155 = vsel %vm836, %v639, %v1146
      %v1157 = vsel %vm853, %v1155, %v1153
      %v1161 = vunpack.c.l.b16 %v669
      %v1162 = vunpack.c.l.b16 %v670
      %v1163 = vunpack.c.l.b16 %v671
      %v1164 = vpack.c.b16 %v1162, %v1161
      %v1165 = vpack.c.b16 %v1163, %v1163
      %v1167 = vsel %vm904, %v1157, 0
      %v1170 = vsel %vm921, %v1165, 0
      %1172 = vmatprep.subr.bf16.mxu0 0
      %1173 = vmatpush1.bf16.msra.mxu0 %v1164
      %1174 = vmatprep.subr.bf16.mxu0 0
      %1175 = vmatpush1.bf16.msra.mxu0 %v1170
      %1176 = vmatprep.subr.bf16.mxu0 0
      %1177 = vmatpush1.bf16.msra.mxu0 0
      %1178 = vmatprep.subr.bf16.mxu0 0
      %1179 = vmatpush1.bf16.msra.mxu0 0
      %1180 = vmatprep.subr.bf16.mxu0 0
      %1181 = vmatpush1.bf16.msra.mxu0 0
      %1182 = vmatprep.subr.bf16.mxu0 0
      %1183 = vmatpush1.bf16.msra.mxu0 0
      %1184 = vmatprep.subr.bf16.mxu0 0
      %1185 = vmatpush1.bf16.msra.mxu0 0
      %1186 = vmatprep.subr.bf16.mxu0 0
      %1187 = vmatpush1.bf16.msra.mxu0 0
      %1188 = vmatprep.subr.bf16.mxu0 0
      %1189 = vmatpush1.bf16.msra.mxu0 0
      %1190 = vmatprep.subr.bf16.mxu0 0
      %1191 = vmatpush1.bf16.msra.mxu0 0
      %1192 = vmatprep.subr.bf16.mxu0 0
      %1193 = vmatpush1.bf16.msra.mxu0 0
      %1194 = vmatprep.subr.bf16.mxu0 0
      %1195 = vmatpush1.bf16.msra.mxu0 0
      %1196 = vmatprep.subr.bf16.mxu0 0
      %1197 = vmatpush1.bf16.msra.mxu0 0
      %1198 = vmatprep.subr.bf16.mxu0 0
      %1199 = vmatpush1.bf16.msra.mxu0 0
      %1200 = vmatprep.subr.bf16.mxu0 0
      %1201 = vmatpush1.bf16.msra.mxu0 0
      %1202 = vmatprep.subr.bf16.mxu0 0
      %1203 = vmatpush1.bf16.msra.mxu0 0
      %1204 = vmatprep.mubr.bf16.mxu0 0
      %1205 = vmatmul.mubr.bf16.gmra.mrb[0].mxu0 %v907
      %v1206 = vpop.f32.mrb[0].mxu0
      %v1207 = vadd.f32 0.0, %v1206
      %v1208 = vpop.f32.mrb[0].mxu0
      %v1209 = vpop.f32.mrb[0].mxu0
      %v1210 = vadd.f32 0.0, %v1209
      %v1211 = vpop.f32.mrb[0].mxu0
      %1212 = vmatprep.mubr.bf16.mxu0 0
      %1213 = vmatmul.mubr.bf16.gmra.mrb[0].mxu0 %v909
      %v1214 = vpop.f32.mrb[0].mxu0
      %v1215 = vadd.f32 0.0, %v1214
      %v1216 = vpop.f32.mrb[0].mxu0
      %v1217 = vpop.f32.mrb[0].mxu0
      %v1218 = vadd.f32 0.0, %v1217
      %v1219 = vpop.f32.mrb[0].mxu0
      %1220 = vmatprep.mubr.bf16.mxu0 0
      %1221 = vmatmul.mubr.bf16.gmra.mrb[0].mxu0 %v911
      %v1222 = vpop.f32.mrb[0].mxu0
      %v1223 = vadd.f32 0.0, %v1222
      %v1224 = vpop.f32.mrb[0].mxu0
      %v1225 = vpop.f32.mrb[0].mxu0
      %v1226 = vadd.f32 0.0, %v1225
      %v1227 = vpop.f32.mrb[0].mxu0
      %1228 = vmatprep.mubr.bf16.mxu0 0
      %1229 = vmatmul.mubr.bf16.gmra.mrb[0].mxu0 %v913
      %v1230 = vpop.f32.mrb[0].mxu0
      %v1231 = vadd.f32 0.0, %v1230
      %v1232 = vpop.f32.mrb[0].mxu0
      %v1233 = vpop.f32.mrb[0].mxu0
      %v1234 = vadd.f32 0.0, %v1233
      %v1235 = vpop.f32.mrb[0].mxu0
      %1236 = vmatprep.mubr.bf16.mxu0 0
      %1237 = vmatmul.mubr.bf16.gmra.mrb[0].mxu0 %v915
      %v1238 = vpop.f32.mrb[0].mxu0
      %v1239 = vadd.f32 0.0, %v1238
      %v1240 = vpop.f32.mrb[0].mxu0
      %v1241 = vpop.f32.mrb[0].mxu0
      %v1242 = vadd.f32 0.0, %v1241
      %v1243 = vpop.f32.mrb[0].mxu0
      %1244 = vmatprep.mubr.bf16.mxu0 0
      %1245 = vmatmul.mubr.bf16.gmra.mrb[0].mxu0 %v917
      %v1246 = vpop.f32.mrb[0].mxu0
      %v1247 = vadd.f32 0.0, %v1246
      %v1248 = vpop.f32.mrb[0].mxu0
      %v1249 = vpop.f32.mrb[0].mxu0
      %v1250 = vadd.f32 0.0, %v1249
      %v1251 = vpop.f32.mrb[0].mxu0
      %1252 = vmatprep.mubr.bf16.mxu0 0
      %1253 = vmatmul.mubr.bf16.gmra.mrb[0].mxu0 %v919
      %v1254 = vpop.f32.mrb[0].mxu0
      %v1255 = vadd.f32 0.0, %v1254
      %v1256 = vpop.f32.mrb[0].mxu0
      %v1257 = vpop.f32.mrb[0].mxu0
      %v1258 = vadd.f32 0.0, %v1257
      %v1259 = vpop.f32.mrb[0].mxu0
      %1260 = vmatprep.mubr.bf16.mxu0 0
      %1261 = vmatmul.mubr.bf16.gmra.mrb[0].mxu0 %v1167
      %v1262 = vpop.f32.mrb[0].mxu0
      %v1263 = vadd.f32 0.0, %v1262
      %v1264 = vpop.f32.mrb[0].mxu0
      %v1265 = vpop.f32.mrb[0].mxu0
      %v1266 = vadd.f32 0.0, %v1265
      %v1267 = vpop.f32.mrb[0].mxu0
      %1268 = vdwg.mxu0
      %v1269 = vadd.f32 %v1071, %v1207
      %v1270 = vadd.f32 %v1074, %v1210
      %v1271 = vadd.f32 %v1079, %v1215
      %v1272 = vadd.f32 %v1082, %v1218
      %v1273 = vadd.f32 %v1087, %v1223
      %v1274 = vadd.f32 %v1090, %v1226
      %v1275 = vadd.f32 %v1095, %v1231
      %v1276 = vadd.f32 %v1098, %v1234
      %v1277 = vadd.f32 %v1103, %v1239
      %v1278 = vadd.f32 %v1106, %v1242
      %v1279 = vadd.f32 %v1111, %v1247
      %v1280 = vadd.f32 %v1114, %v1250
      %v1281 = vadd.f32 %v1119, %v1255
      %v1282 = vadd.f32 %v1122, %v1258
      %v1283 = vadd.f32 %v1127, %v1263
      %v1284 = vadd.f32 %v1130, %v1266
      %v1285 = vpack.c.bf16 %v1270, %v1269
      %v1286 = vpack.c.bf16 %v1272, %v1271
      %v1287 = vpack.c.bf16 %v1274, %v1273
      %v1288 = vpack.c.bf16 %v1276, %v1275
      %v1289 = vpack.c.bf16 %v1278, %v1277
      %v1290 = vpack.c.bf16 %v1280, %v1279
      %v1291 = vpack.c.bf16 %v1282, %v1281
      %v1292 = vpack.c.bf16 %v1284, %v1283
      %v1301 = vunpack.c.l.b16 %v1285
      %v1302 = vunpack.c.h.b16 %v1285
      %v1303 = vunpack.c.l.b16 %v1286
      %v1304 = vunpack.c.h.b16 %v1286
      %v1305 = vunpack.c.l.b16 %v1287
      %v1306 = vunpack.c.h.b16 %v1287
      %v1307 = vunpack.c.l.b16 %v1288
      %v1308 = vunpack.c.h.b16 %v1288
      %v1309 = vunpack.c.l.b16 %v1289
      %v1310 = vunpack.c.h.b16 %v1289
      %v1311 = vunpack.c.l.b16 %v1290
      %v1312 = vunpack.c.h.b16 %v1290
      %v1313 = vunpack.c.l.b16 %v1291
      %v1314 = vunpack.c.h.b16 %v1291
      %v1315 = vunpack.c.l.b16 %v1292
      %v1316 = vunpack.c.h.b16 %v1292
      %v1317 = vpack.c.b16 %v1301, %v1301
      %v1318 = vpack.c.b16 %v1302, %v1302
      %v1319 = vpack.c.b16 %v1303, %v1303
      %v1320 = vpack.c.b16 %v1304, %v1304
      %v1321 = vpack.c.b16 %v1305, %v1305
      %v1322 = vpack.c.b16 %v1306, %v1306
      %v1323 = vpack.c.b16 %v1307, %v1307
      %v1324 = vpack.c.b16 %v1308, %v1308
      %v1325 = vpack.c.b16 %v1309, %v1309
      %v1326 = vpack.c.b16 %v1310, %v1310
      %v1327 = vpack.c.b16 %v1311, %v1311
      %v1328 = vpack.c.b16 %v1312, %v1312
      %v1329 = vpack.c.b16 %v1313, %v1313
      %v1330 = vpack.c.b16 %v1314, %v1314
      %v1331 = vpack.c.b16 %v1315, %v1315
      %v1332 = vpack.c.b16 %v1316, %v1316
      %vm1349 = vcmask 60416
      %1350 = vst.msk [vmem:[%s258] sm:$0xf] %vm1349, %v1317
      %1351 = vst.msk [vmem:[%s258 + $0x4] sm:$0xf] %vm1349, %v1318
      %1352 = vst.msk [vmem:[%s258 + $0x8] sm:$0xf] %vm1349, %v1319
      %1353 = vst.msk [vmem:[%s258 + $0xc] sm:$0xf] %vm1349, %v1320
      %1354 = vst.msk [vmem:[%s258 + $0x10] sm:$0xf] %vm1349, %v1321
      %1355 = vst.msk [vmem:[%s258 + $0x14] sm:$0xf] %vm1349, %v1322
      %1356 = vst.msk [vmem:[%s258 + $0x18] sm:$0xf] %vm1349, %v1323
      %1357 = vst.msk [vmem:[%s258 + $0x1c] sm:$0xf] %vm1349, %v1324
      %1358 = vst.msk [vmem:[%s258 + $0x20] sm:$0xf] %vm1349, %v1325
      %1359 = vst.msk [vmem:[%s258 + $0x24] sm:$0xf] %vm1349, %v1326
      %1360 = vst.msk [vmem:[%s258 + $0x28] sm:$0xf] %vm1349, %v1327
      %1361 = vst.msk [vmem:[%s258 + $0x2c] sm:$0xf] %vm1349, %v1328
      %1362 = vst.msk [vmem:[%s258 + $0x30] sm:$0xf] %vm1349, %v1329
      %1363 = vst.msk [vmem:[%s258 + $0x34] sm:$0xf] %vm1349, %v1330
      %1364 = vst.msk [vmem:[%s258 + $0x38] sm:$0xf] %vm1349, %v1331
      %1365 = vst.msk [vmem:[%s258 + $0x3c] sm:$0xf] %vm1349, %v1332
      %v1366 = vsel %vm836, %v1269, 0.0
      %v1367 = vsel %vm836, %v1270, 0.0
      %v1368 = vadd.f32 %v1366, %v1367
      %v1369 = vsel %vm836, %v1271, 0.0
      %v1370 = vadd.f32 %v1368, %v1369
      %v1371 = vsel %vm836, %v1272, 0.0
      %v1372 = vadd.f32 %v1370, %v1371
      %v1373 = vsel %vm836, %v1273, 0.0
      %v1374 = vadd.f32 %v1372, %v1373
      %v1375 = vsel %vm836, %v1274, 0.0
      %v1376 = vadd.f32 %v1374, %v1375
      %v1377 = vsel %vm836, %v1275, 0.0
      %v1378 = vadd.f32 %v1376, %v1377
      %v1379 = vsel %vm836, %v1276, 0.0
      %v1380 = vadd.f32 %v1378, %v1379
      %v1381 = vsel %vm836, %v1277, 0.0
      %v1382 = vadd.f32 %v1380, %v1381
      %v1383 = vsel %vm836, %v1278, 0.0
      %v1384 = vadd.f32 %v1382, %v1383
      %v1385 = vsel %vm836, %v1279, 0.0
      %v1386 = vadd.f32 %v1384, %v1385
      %v1387 = vsel %vm836, %v1280, 0.0
      %v1388 = vadd.f32 %v1386, %v1387
      %v1389 = vsel %vm836, %v1281, 0.0
      %v1390 = vadd.f32 %v1388, %v1389
      %v1391 = vsel %vm836, %v1282, 0.0
      %v1392 = vadd.f32 %v1390, %v1391
      %v1393 = vsel %vm836, %v1283, 0.0
      %v1394 = vadd.f32 %v1392, %v1393
      %v1395 = vsel %vm836, %v1284, 0.0
      %v1396 = vadd.f32 %v1394, %v1395
      %v1397 = vrot.slane %v1396, 4
      %v1398 = vadd.f32 %v1396, %v1397
      %v1399 = vrot.slane %v1398, 2
      %v1400 = vadd.f32 %v1398, %v1399
      %v1401 = vrot.slane %v1400, 1
      %v1402 = vadd.f32 %v1400, %v1401
      %v1403 = vmul.f32 %v1269, %v1269
      %v1404 = vmul.f32 %v1270, %v1270
      %v1405 = vmul.f32 %v1271, %v1271
      %v1406 = vmul.f32 %v1272, %v1272
      %v1407 = vmul.f32 %v1273, %v1273
      %v1408 = vmul.f32 %v1274, %v1274
      %v1409 = vmul.f32 %v1275, %v1275
      %v1410 = vmul.f32 %v1276, %v1276
      %v1411 = vmul.f32 %v1277, %v1277
      %v1412 = vmul.f32 %v1278, %v1278
      %v1413 = vmul.f32 %v1279, %v1279
      %v1414 = vmul.f32 %v1280, %v1280
      %v1415 = vmul.f32 %v1281, %v1281
      %v1416 = vmul.f32 %v1282, %v1282
      %v1417 = vmul.f32 %v1283, %v1283
      %v1418 = vmul.f32 %v1284, %v1284
      %v1419 = vsel %vm836, %v1403, 0.0
      %v1420 = vsel %vm836, %v1404, 0.0
      %v1421 = vadd.f32 %v1419, %v1420
      %v1422 = vsel %vm836, %v1405, 0.0
      %v1423 = vadd.f32 %v1421, %v1422
      %v1424 = vsel %vm836, %v1406, 0.0
      %v1425 = vadd.f32 %v1423, %v1424
      %v1426 = vsel %vm836, %v1407, 0.0
      %v1427 = vadd.f32 %v1425, %v1426
      %v1428 = vsel %vm836, %v1408, 0.0
      %v1429 = vadd.f32 %v1427, %v1428
      %v1430 = vsel %vm836, %v1409, 0.0
      %v1431 = vadd.f32 %v1429, %v1430
      %v1432 = vsel %vm836, %v1410, 0.0
      %v1433 = vadd.f32 %v1431, %v1432
      %v1434 = vsel %vm836, %v1411, 0.0
      %v1435 = vadd.f32 %v1433, %v1434
      %v1436 = vsel %vm836, %v1412, 0.0
      %v1437 = vadd.f32 %v1435, %v1436
      %v1438 = vsel %vm836, %v1413, 0.0
      %v1439 = vadd.f32 %v1437, %v1438
      %v1440 = vsel %vm836, %v1414, 0.0
      %v1441 = vadd.f32 %v1439, %v1440
      %v1442 = vsel %vm836, %v1415, 0.0
      %v1443 = vadd.f32 %v1441, %v1442
      %v1444 = vsel %vm836, %v1416, 0.0
      %v1445 = vadd.f32 %v1443, %v1444
      %v1446 = vsel %vm836, %v1417, 0.0
      %v1447 = vadd.f32 %v1445, %v1446
      %v1448 = vsel %vm836, %v1418, 0.0
      %v1449 = vadd.f32 %v1447, %v1448
      %v1450 = vrot.slane %v1449, 4
      %v1451 = vadd.f32 %v1449, %v1450
      %v1452 = vrot.slane %v1451, 2
      %v1453 = vadd.f32 %v1451, %v1452
      %v1454 = vrot.slane %v1453, 1
      %v1455 = vadd.f32 %v1453, %v1454
      %v1457 = vshrl.u32 %v640, 16
      %v1459 = vshll.u32 %v640, 16
      %v1461 = vrot.slane %v1459, 1
      %v1462 = vor.u32 %v1457, %v1461
      %v1464 = vshll.u32 %v656, 16
      %v1466 = vrot.slane %v1464, 1
      %v1467 = vsel %vm672, %v1462, %v1466
      %v1469 = vshrl.u32 %v641, 16
      %v1471 = vshll.u32 %v641, 16
      %v1473 = vrot.slane %v1471, 1
      %v1474 = vor.u32 %v1469, %v1473
      %v1476 = vshll.u32 %v657, 16
      %v1478 = vrot.slane %v1476, 1
      %v1479 = vsel %vm672, %v1474, %v1478
      %v1481 = vshrl.u32 %v642, 16
      %v1483 = vshll.u32 %v642, 16
      %v1485 = vrot.slane %v1483, 1
      %v1486 = vor.u32 %v1481, %v1485
      %v1488 = vshll.u32 %v658, 16
      %v1490 = vrot.slane %v1488, 1
      %v1491 = vsel %vm672, %v1486, %v1490
      %v1493 = vshrl.u32 %v643, 16
      %v1495 = vshll.u32 %v643, 16
      %v1497 = vrot.slane %v1495, 1
      %v1498 = vor.u32 %v1493, %v1497
      %v1500 = vshll.u32 %v659, 16
      %v1502 = vrot.slane %v1500, 1
      %v1503 = vsel %vm672, %v1498, %v1502
      %v1505 = vshrl.u32 %v644, 16
      %v1507 = vshll.u32 %v644, 16
      %v1509 = vrot.slane %v1507, 1
      %v1510 = vor.u32 %v1505, %v1509
      %v1512 = vshll.u32 %v660, 16
      %v1514 = vrot.slane %v1512, 1
      %v1515 = vsel %vm672, %v1510, %v1514
      %v1517 = vshrl.u32 %v645, 16
      %v1519 = vshll.u32 %v645, 16
      %v1521 = vrot.slane %v1519, 1
      %v1522 = vor.u32 %v1517, %v1521
      %v1524 = vshll.u32 %v661, 16
      %v1526 = vrot.slane %v1524, 1
      %v1527 = vsel %vm672, %v1522, %v1526
      %1528 = vrot.lane.b32.xlu0 %v1467, 8
      %v1529 = vpop.permute.xlu0 %1528
      %1530 = vrot.lane.b32.xlu0 %v1479, 8
      %v1531 = vpop.permute.xlu0 %1530
      %1532 = vrot.lane.b32.xlu0 %v1491, 8
      %v1533 = vpop.permute.xlu0 %1532
      %1534 = vrot.lane.b32.xlu0 %v1503, 8
      %v1535 = vpop.permute.xlu0 %1534
      %1536 = vrot.lane.b32.xlu0 %v1515, 8
      %v1537 = vpop.permute.xlu0 %1536
      %1538 = vrot.lane.b32.xlu0 %v1527, 8
      %v1539 = vpop.permute.xlu0 %1538
      %v1552 = vrot.slane %v640, 1
      %v1553 = vrot.slane %v656, 1
      %v1554 = vsel %vm796, %v1552, %v1553
      %v1555 = vrot.slane %v641, 1
      %v1556 = vrot.slane %v657, 1
      %v1557 = vsel %vm796, %v1555, %v1556
      %v1558 = vrot.slane %v642, 1
      %v1559 = vrot.slane %v658, 1
      %v1560 = vsel %vm796, %v1558, %v1559
      %v1561 = vrot.slane %v643, 1
      %v1562 = vrot.slane %v659, 1
      %v1563 = vsel %vm796, %v1561, %v1562
      %v1564 = vrot.slane %v644, 1
      %v1565 = vrot.slane %v660, 1
      %v1566 = vsel %vm796, %v1564, %v1565
      %v1567 = vrot.slane %v645, 1
      %v1568 = vrot.slane %v661, 1
      %v1569 = vsel %vm796, %v1567, %v1568
      %1570 = vrot.lane.b32.xlu0 %v1554, 16
      %v1571 = vpop.permute.xlu0 %1570
      %1572 = vrot.lane.b32.xlu0 %v1557, 16
      %v1573 = vpop.permute.xlu0 %1572
      %1574 = vrot.lane.b32.xlu0 %v1560, 16
      %v1575 = vpop.permute.xlu0 %1574
      %1576 = vrot.lane.b32.xlu0 %v1563, 16
      %v1577 = vpop.permute.xlu0 %1576
      %1578 = vrot.lane.b32.xlu0 %v1566, 16
      %v1579 = vpop.permute.xlu0 %1578
      %1580 = vrot.lane.b32.xlu0 %v1569, 16
      %v1581 = vpop.permute.xlu0 %1580
      %v1583 = vsel %vm836, %v640, %v1529
      %v1585 = vsel %vm836, %v641, %v1531
      %v1587 = vsel %vm836, %v642, %v1533
      %v1589 = vsel %vm836, %v643, %v1535
      %v1591 = vsel %vm836, %v644, %v1537
      %v1593 = vsel %vm836, %v645, %v1539
      %v1595 = vsel %vm853, %v1583, %v1571
      %v1597 = vsel %vm853, %v1585, %v1573
      %v1599 = vsel %vm853, %v1587, %v1575
      %v1601 = vsel %vm853, %v1589, %v1577
      %v1603 = vsel %vm853, %v1591, %v1579
      %v1605 = vsel %vm853, %v1593, %v1581
      %v1607 = vshrl.u32 %v646, 16
      %v1609 = vshll.u32 %v646, 16
      %v1611 = vrot.slane %v1609, 1
      %v1612 = vor.u32 %v1607, %v1611
      %v1614 = vshll.u32 %v662, 16
      %v1616 = vrot.slane %v1614, 1
      %v1617 = vsel %vm672, %v1612, %v1616
      %1618 = vrot.lane.b32.xlu0 %v1617, 8
      %v1619 = vpop.permute.xlu0 %1618
      %v1622 = vrot.slane %v646, 1
      %v1623 = vrot.slane %v662, 1
      %v1624 = vsel %vm796, %v1622, %v1623
      %1625 = vrot.lane.b32.xlu0 %v1624, 16
      %v1626 = vpop.permute.xlu0 %1625
      %v1628 = vsel %vm836, %v646, %v1619
      %v1630 = vsel %vm853, %v1628, %v1626
      %v1631 = vsel %vm904, %v1595, 0
      %v1633 = vsel %vm904, %v1597, 0
      %v1635 = vsel %vm904, %v1599, 0
      %v1637 = vsel %vm904, %v1601, 0
      %v1639 = vsel %vm904, %v1603, 0
      %v1641 = vsel %vm904, %v1605, 0
      %v1643 = vsel %vm904, %v1630, 0
      %1645 = vmatprep.subr.bf16.mxu0 0
      %1646 = vmatpush1.bf16.msra.mxu0 %v901
      %1647 = vmatprep.subr.bf16.mxu0 0
      %1648 = vmatpush1.bf16.msra.mxu0 %v923
      %1649 = vmatprep.subr.bf16.mxu0 0
      %1650 = vmatpush1.bf16.msra.mxu0 0
      %1651 = vmatprep.subr.bf16.mxu0 0
      %1652 = vmatpush1.bf16.msra.mxu0 0
      %1653 = vmatprep.subr.bf16.mxu0 0
      %1654 = vmatpush1.bf16.msra.mxu0 0
      %1655 = vmatprep.subr.bf16.mxu0 0
      %1656 = vmatpush1.bf16.msra.mxu0 0
      %1657 = vmatprep.subr.bf16.mxu0 0
      %1658 = vmatpush1.bf16.msra.mxu0 0
      %1659 = vmatprep.subr.bf16.mxu0 0
      %1660 = vmatpush1.bf16.msra.mxu0 0
      %1661 = vmatprep.subr.bf16.mxu0 0
      %1662 = vmatpush1.bf16.msra.mxu0 0
      %1663 = vmatprep.subr.bf16.mxu0 0
      %1664 = vmatpush1.bf16.msra.mxu0 0
      %1665 = vmatprep.subr.bf16.mxu0 0
      %1666 = vmatpush1.bf16.msra.mxu0 0
      %1667 = vmatprep.subr.bf16.mxu0 0
      %1668 = vmatpush1.bf16.msra.mxu0 0
      %1669 = vmatprep.subr.bf16.mxu0 0
      %1670 = vmatpush1.bf16.msra.mxu0 0
      %1671 = vmatprep.subr.bf16.mxu0 0
      %1672 = vmatpush1.bf16.msra.mxu0 0
      %1673 = vmatprep.subr.bf16.mxu0 0
      %1674 = vmatpush1.bf16.msra.mxu0 0
      %1675 = vmatprep.subr.bf16.mxu0 0
      %1676 = vmatpush1.bf16.msra.mxu0 0
      %1677 = vmatprep.mubr.bf16.mxu0 0
      %1678 = vmatmul.mubr.bf16.gmra.mrb[0].mxu0 %v1167
      %v1679 = vpop.f32.mrb[0].mxu0
      %v1680 = vadd.f32 0.0, %v1679
      %v1681 = vpop.f32.mrb[0].mxu0
      %v1682 = vpop.f32.mrb[0].mxu0
      %v1683 = vadd.f32 0.0, %v1682
      %v1684 = vpop.f32.mrb[0].mxu0
      %1685 = vmatprep.mubr.bf16.mxu0 0
      %1686 = vmatmul.mubr.bf16.gmra.mrb[0].mxu0 %v1631
      %v1687 = vpop.f32.mrb[0].mxu0
      %v1688 = vadd.f32 0.0, %v1687
      %v1689 = vpop.f32.mrb[0].mxu0
      %v1690 = vpop.f32.mrb[0].mxu0
      %v1691 = vadd.f32 0.0, %v1690
      %v1692 = vpop.f32.mrb[0].mxu0
      %1693 = vmatprep.mubr.bf16.mxu0 0
      %1694 = vmatmul.mubr.bf16.gmra.mrb[0].mxu0 %v1633
      %v1695 = vpop.f32.mrb[0].mxu0
      %v1696 = vadd.f32 0.0, %v1695
      %v1697 = vpop.f32.mrb[0].mxu0
      %v1698 = vpop.f32.mrb[0].mxu0
      %v1699 = vadd.f32 0.0, %v1698
      %v1700 = vpop.f32.mrb[0].mxu0
      %1701 = vmatprep.mubr.bf16.mxu0 0
      %1702 = vmatmul.mubr.bf16.gmra.mrb[0].mxu0 %v1635
      %v1703 = vpop.f32.mrb[0].mxu0
      %v1704 = vadd.f32 0.0, %v1703
      %v1705 = vpop.f32.mrb[0].mxu0
      %v1706 = vpop.f32.mrb[0].mxu0
      %v1707 = vadd.f32 0.0, %v1706
      %v1708 = vpop.f32.mrb[0].mxu0
      %1709 = vmatprep.mubr.bf16.mxu0 0
      %1710 = vmatmul.mubr.bf16.gmra.mrb[0].mxu0 %v1637
      %v1711 = vpop.f32.mrb[0].mxu0
      %v1712 = vadd.f32 0.0, %v1711
      %v1713 = vpop.f32.mrb[0].mxu0
      %v1714 = vpop.f32.mrb[0].mxu0
      %v1715 = vadd.f32 0.0, %v1714
      %v1716 = vpop.f32.mrb[0].mxu0
      %1717 = vmatprep.mubr.bf16.mxu0 0
      %1718 = vmatmul.mubr.bf16.gmra.mrb[0].mxu0 %v1639
      %v1719 = vpop.f32.mrb[0].mxu0
      %v1720 = vadd.f32 0.0, %v1719
      %v1721 = vpop.f32.mrb[0].mxu0
      %v1722 = vpop.f32.mrb[0].mxu0
      %v1723 = vadd.f32 0.0, %v1722
      %v1724 = vpop.f32.mrb[0].mxu0
      %1725 = vmatprep.mubr.bf16.mxu0 0
      %1726 = vmatmul.mubr.bf16.gmra.mrb[0].mxu0 %v1641
      %v1727 = vpop.f32.mrb[0].mxu0
      %v1728 = vadd.f32 0.0, %v1727
      %v1729 = vpop.f32.mrb[0].mxu0
      %v1730 = vpop.f32.mrb[0].mxu0
      %v1731 = vadd.f32 0.0, %v1730
      %v1732 = vpop.f32.mrb[0].mxu0
      %1733 = vmatprep.mubr.bf16.mxu0 0
      %1734 = vmatmul.mubr.bf16.gmra.mrb[0].mxu0 %v1643
      %v1735 = vpop.f32.mrb[0].mxu0
      %v1736 = vadd.f32 0.0, %v1735
      %v1737 = vpop.f32.mrb[0].mxu0
      %v1738 = vpop.f32.mrb[0].mxu0
      %v1739 = vadd.f32 0.0, %v1738
      %v1740 = vpop.f32.mrb[0].mxu0
      %1741 = vdwg.mxu0
      %1742 = vmatprep.subr.bf16.mxu0 0
      %1743 = vmatpush1.bf16.msra.mxu0 %v1028
      %1744 = vmatprep.subr.bf16.mxu0 0
      %1745 = vmatpush1.bf16.msra.mxu0 %v1034
      %1746 = vmatprep.subr.bf16.mxu0 0
      %1747 = vmatpush1.bf16.msra.mxu0 0
      %1748 = vmatprep.subr.bf16.mxu0 0
      %1749 = vmatpush1.bf16.msra.mxu0 0
      %1750 = vmatprep.subr.bf16.mxu0 0
      %1751 = vmatpush1.bf16.msra.mxu0 0
      %1752 = vmatprep.subr.bf16.mxu0 0
      %1753 = vmatpush1.bf16.msra.mxu0 0
      %1754 = vmatprep.subr.bf16.mxu0 0
      %1755 = vmatpush1.bf16.msra.mxu0 0
      %1756 = vmatprep.subr.bf16.mxu0 0
      %1757 = vmatpush1.bf16.msra.mxu0 0
      %1758 = vmatprep.subr.bf16.mxu0 0
      %1759 = vmatpush1.bf16.msra.mxu0 0
      %1760 = vmatprep.subr.bf16.mxu0 0
      %1761 = vmatpush1.bf16.msra.mxu0 0
      %1762 = vmatprep.subr.bf16.mxu0 0
      %1763 = vmatpush1.bf16.msra.mxu0 0
      %1764 = vmatprep.subr.bf16.mxu0 0
      %1765 = vmatpush1.bf16.msra.mxu0 0
      %1766 = vmatprep.subr.bf16.mxu0 0
      %1767 = vmatpush1.bf16.msra.mxu0 0
      %1768 = vmatprep.subr.bf16.mxu0 0
      %1769 = vmatpush1.bf16.msra.mxu0 0
      %1770 = vmatprep.subr.bf16.mxu0 0
      %1771 = vmatpush1.bf16.msra.mxu0 0
      %1772 = vmatprep.subr.bf16.mxu0 0
      %1773 = vmatpush1.bf16.msra.mxu0 0
      %1774 = vmatprep.mubr.bf16.mxu0 0
      %1775 = vmatmul.mubr.bf16.gmra.mrb[0].mxu0 %v919
      %v1776 = vpop.f32.mrb[0].mxu0
      %v1777 = vadd.f32 %v1680, %v1776
      %v1778 = vpop.f32.mrb[0].mxu0
      %v1779 = vpop.f32.mrb[0].mxu0
      %v1780 = vadd.f32 %v1683, %v1779
      %v1781 = vpop.f32.mrb[0].mxu0
      %1782 = vmatprep.mubr.bf16.mxu0 0
      %1783 = vmatmul.mubr.bf16.gmra.mrb[0].mxu0 %v1167
      %v1784 = vpop.f32.mrb[0].mxu0
      %v1785 = vadd.f32 %v1688, %v1784
      %v1786 = vpop.f32.mrb[0].mxu0
      %v1787 = vpop.f32.mrb[0].mxu0
      %v1788 = vadd.f32 %v1691, %v1787
      %v1789 = vpop.f32.mrb[0].mxu0
      %1790 = vmatprep.mubr.bf16.mxu0 0
      %1791 = vmatmul.mubr.bf16.gmra.mrb[0].mxu0 %v1631
      %v1792 = vpop.f32.mrb[0].mxu0
      %v1793 = vadd.f32 %v1696, %v1792
      %v1794 = vpop.f32.mrb[0].mxu0
      %v1795 = vpop.f32.mrb[0].mxu0
      %v1796 = vadd.f32 %v1699, %v1795
      %v1797 = vpop.f32.mrb[0].mxu0
      %1798 = vmatprep.mubr.bf16.mxu0 0
      %1799 = vmatmul.mubr.bf16.gmra.mrb[0].mxu0 %v1633
      %v1800 = vpop.f32.mrb[0].mxu0
      %v1801 = vadd.f32 %v1704, %v1800
      %v1802 = vpop.f32.mrb[0].mxu0
      %v1803 = vpop.f32.mrb[0].mxu0
      %v1804 = vadd.f32 %v1707, %v1803
      %v1805 = vpop.f32.mrb[0].mxu0
      %1806 = vmatprep.mubr.bf16.mxu0 0
      %1807 = vmatmul.mubr.bf16.gmra.mrb[0].mxu0 %v1635
      %v1808 = vpop.f32.mrb[0].mxu0
      %v1809 = vadd.f32 %v1712, %v1808
      %v1810 = vpop.f32.mrb[0].mxu0
      %v1811 = vpop.f32.mrb[0].mxu0
      %v1812 = vadd.f32 %v1715, %v1811
      %v1813 = vpop.f32.mrb[0].mxu0
      %1814 = vmatprep.mubr.bf16.mxu0 0
      %1815 = vmatmul.mubr.bf16.gmra.mrb[0].mxu0 %v1637
      %v1816 = vpop.f32.mrb[0].mxu0
      %v1817 = vadd.f32 %v1720, %v1816
      %v1818 = vpop.f32.mrb[0].mxu0
      %v1819 = vpop.f32.mrb[0].mxu0
      %v1820 = vadd.f32 %v1723, %v1819
      %v1821 = vpop.f32.mrb[0].mxu0
      %1822 = vmatprep.mubr.bf16.mxu0 0
      %1823 = vmatmul.mubr.bf16.gmra.mrb[0].mxu0 %v1639
      %v1824 = vpop.f32.mrb[0].mxu0
      %v1825 = vadd.f32 %v1728, %v1824
      %v1826 = vpop.f32.mrb[0].mxu0
      %v1827 = vpop.f32.mrb[0].mxu0
      %v1828 = vadd.f32 %v1731, %v1827
      %v1829 = vpop.f32.mrb[0].mxu0
      %1830 = vmatprep.mubr.bf16.mxu0 0
      %1831 = vmatmul.mubr.bf16.gmra.mrb[0].mxu0 %v1641
      %v1832 = vpop.f32.mrb[0].mxu0
      %v1833 = vadd.f32 %v1736, %v1832
      %v1834 = vpop.f32.mrb[0].mxu0
      %v1835 = vpop.f32.mrb[0].mxu0
      %v1836 = vadd.f32 %v1739, %v1835
      %v1837 = vpop.f32.mrb[0].mxu0
      %1838 = vdwg.mxu0
      %1839 = vmatprep.subr.bf16.mxu0 0
      %1840 = vmatpush1.bf16.msra.mxu0 %v1164
      %1841 = vmatprep.subr.bf16.mxu0 0
      %1842 = vmatpush1.bf16.msra.mxu0 %v1170
      %1843 = vmatprep.subr.bf16.mxu0 0
      %1844 = vmatpush1.bf16.msra.mxu0 0
      %1845 = vmatprep.subr.bf16.mxu0 0
      %1846 = vmatpush1.bf16.msra.mxu0 0
      %1847 = vmatprep.subr.bf16.mxu0 0
      %1848 = vmatpush1.bf16.msra.mxu0 0
      %1849 = vmatprep.subr.bf16.mxu0 0
      %1850 = vmatpush1.bf16.msra.mxu0 0
      %1851 = vmatprep.subr.bf16.mxu0 0
      %1852 = vmatpush1.bf16.msra.mxu0 0
      %1853 = vmatprep.subr.bf16.mxu0 0
      %1854 = vmatpush1.bf16.msra.mxu0 0
      %1855 = vmatprep.subr.bf16.mxu0 0
      %1856 = vmatpush1.bf16.msra.mxu0 0
      %1857 = vmatprep.subr.bf16.mxu0 0
      %1858 = vmatpush1.bf16.msra.mxu0 0
      %1859 = vmatprep.subr.bf16.mxu0 0
      %1860 = vmatpush1.bf16.msra.mxu0 0
      %1861 = vmatprep.subr.bf16.mxu0 0
      %1862 = vmatpush1.bf16.msra.mxu0 0
      %1863 = vmatprep.subr.bf16.mxu0 0
      %1864 = vmatpush1.bf16.msra.mxu0 0
      %1865 = vmatprep.subr.bf16.mxu0 0
      %1866 = vmatpush1.bf16.msra.mxu0 0
      %1867 = vmatprep.subr.bf16.mxu0 0
      %1868 = vmatpush1.bf16.msra.mxu0 0
      %1869 = vmatprep.subr.bf16.mxu0 0
      %1870 = vmatpush1.bf16.msra.mxu0 0
      %1871 = vmatprep.mubr.bf16.mxu0 0
      %1872 = vmatmul.mubr.bf16.gmra.mrb[0].mxu0 %v1631
      %v1873 = vpop.f32.mrb[0].mxu0
      %v1874 = vadd.f32 0.0, %v1873
      %v1875 = vpop.f32.mrb[0].mxu0
      %v1876 = vpop.f32.mrb[0].mxu0
      %v1877 = vadd.f32 0.0, %v1876
      %v1878 = vpop.f32.mrb[0].mxu0
      %1879 = vmatprep.mubr.bf16.mxu0 0
      %1880 = vmatmul.mubr.bf16.gmra.mrb[0].mxu0 %v1633
      %v1881 = vpop.f32.mrb[0].mxu0
      %v1882 = vadd.f32 0.0, %v1881
      %v1883 = vpop.f32.mrb[0].mxu0
      %v1884 = vpop.f32.mrb[0].mxu0
      %v1885 = vadd.f32 0.0, %v1884
      %v1886 = vpop.f32.mrb[0].mxu0
      %1887 = vmatprep.mubr.bf16.mxu0 0
      %1888 = vmatmul.mubr.bf16.gmra.mrb[0].mxu0 %v1635
      %v1889 = vpop.f32.mrb[0].mxu0
      %v1890 = vadd.f32 0.0, %v1889
      %v1891 = vpop.f32.mrb[0].mxu0
      %v1892 = vpop.f32.mrb[0].mxu0
      %v1893 = vadd.f32 0.0, %v1892
      %v1894 = vpop.f32.mrb[0].mxu0
      %1895 = vmatprep.mubr.bf16.mxu0 0
      %1896 = vmatmul.mubr.bf16.gmra.mrb[0].mxu0 %v1637
      %v1897 = vpop.f32.mrb[0].mxu0
      %v1898 = vadd.f32 0.0, %v1897
      %v1899 = vpop.f32.mrb[0].mxu0
      %v1900 = vpop.f32.mrb[0].mxu0
      %v1901 = vadd.f32 0.0, %v1900
      %v1902 = vpop.f32.mrb[0].mxu0
      %1903 = vmatprep.mubr.bf16.mxu0 0
      %1904 = vmatmul.mubr.bf16.gmra.mrb[0].mxu0 %v1639
      %v1905 = vpop.f32.mrb[0].mxu0
      %v1906 = vadd.f32 0.0, %v1905
      %v1907 = vpop.f32.mrb[0].mxu0
      %v1908 = vpop.f32.mrb[0].mxu0
      %v1909 = vadd.f32 0.0, %v1908
      %v1910 = vpop.f32.mrb[0].mxu0
      %1911 = vmatprep.mubr.bf16.mxu0 0
      %1912 = vmatmul.mubr.bf16.gmra.mrb[0].mxu0 %v1641
      %v1913 = vpop.f32.mrb[0].mxu0
      %v1914 = vadd.f32 0.0, %v1913
      %v1915 = vpop.f32.mrb[0].mxu0
      %v1916 = vpop.f32.mrb[0].mxu0
      %v1917 = vadd.f32 0.0, %v1916
      %v1918 = vpop.f32.mrb[0].mxu0
      %1919 = vmatprep.mubr.bf16.mxu0 0
      %1920 = vmatmul.mubr.bf16.gmra.mrb[0].mxu0 %v1643
      %v1921 = vpop.f32.mrb[0].mxu0
      %v1922 = vadd.f32 0.0, %v1921
      %v1923 = vpop.f32.mrb[0].mxu0
      %v1924 = vpop.f32.mrb[0].mxu0
      %v1925 = vadd.f32 0.0, %v1924
      %v1926 = vpop.f32.mrb[0].mxu0
      %1927 = vmatprep.mubr.bf16.mxu0 0
      %1928 = vmatmul.mubr.bf16.gmra.mrb[0].mxu0 %v1031
      %v1929 = vpop.f32.mrb[0].mxu0
      %v1930 = vadd.f32 0.0, %v1929
      %v1931 = vpop.f32.mrb[0].mxu0
      %v1932 = vpop.f32.mrb[0].mxu0
      %v1933 = vadd.f32 0.0, %v1932
      %v1934 = vpop.f32.mrb[0].mxu0
      %1935 = vdwg.mxu0
      %v1936 = vadd.f32 %v1777, %v1874
      %v1937 = vadd.f32 %v1780, %v1877
      %v1938 = vadd.f32 %v1785, %v1882
      %v1939 = vadd.f32 %v1788, %v1885
      %v1940 = vadd.f32 %v1793, %v1890
      %v1941 = vadd.f32 %v1796, %v1893
      %v1942 = vadd.f32 %v1801, %v1898
      %v1943 = vadd.f32 %v1804, %v1901
      %v1944 = vadd.f32 %v1809, %v1906
      %v1945 = vadd.f32 %v1812, %v1909
      %v1946 = vadd.f32 %v1817, %v1914
      %v1947 = vadd.f32 %v1820, %v1917
      %v1948 = vadd.f32 %v1825, %v1922
      %v1949 = vadd.f32 %v1828, %v1925
      %v1950 = vadd.f32 %v1833, %v1930
      %v1951 = vadd.f32 %v1836, %v1933
      %v1952 = vpack.c.bf16 %v1937, %v1936
      %v1953 = vpack.c.bf16 %v1939, %v1938
      %v1954 = vpack.c.bf16 %v1941, %v1940
      %v1955 = vpack.c.bf16 %v1943, %v1942
      %v1956 = vpack.c.bf16 %v1945, %v1944
      %v1957 = vpack.c.bf16 %v1947, %v1946
      %v1958 = vpack.c.bf16 %v1949, %v1948
      %v1959 = vpack.c.bf16 %v1951, %v1950
      %v1968 = vunpack.c.l.b16 %v1952
      %v1969 = vunpack.c.h.b16 %v1952
      %v1970 = vunpack.c.l.b16 %v1953
      %v1971 = vunpack.c.h.b16 %v1953
      %v1972 = vunpack.c.l.b16 %v1954
      %v1973 = vunpack.c.h.b16 %v1954
      %v1974 = vunpack.c.l.b16 %v1955
      %v1975 = vunpack.c.h.b16 %v1955
      %v1976 = vunpack.c.l.b16 %v1956
      %v1977 = vunpack.c.h.b16 %v1956
      %v1978 = vunpack.c.l.b16 %v1957
      %v1979 = vunpack.c.h.b16 %v1957
      %v1980 = vunpack.c.l.b16 %v1958
      %v1981 = vunpack.c.h.b16 %v1958
      %v1982 = vunpack.c.l.b16 %v1959
      %v1983 = vunpack.c.h.b16 %v1959
      %v1984 = vpack.c.b16 %v1968, %v1968
      %v1985 = vpack.c.b16 %v1969, %v1969
      %v1986 = vpack.c.b16 %v1970, %v1970
      %v1987 = vpack.c.b16 %v1971, %v1971
      %v1988 = vpack.c.b16 %v1972, %v1972
      %v1989 = vpack.c.b16 %v1973, %v1973
      %v1990 = vpack.c.b16 %v1974, %v1974
      %v1991 = vpack.c.b16 %v1975, %v1975
      %v1992 = vpack.c.b16 %v1976, %v1976
      %v1993 = vpack.c.b16 %v1977, %v1977
      %v1994 = vpack.c.b16 %v1978, %v1978
      %v1995 = vpack.c.b16 %v1979, %v1979
      %v1996 = vpack.c.b16 %v1980, %v1980
      %v1997 = vpack.c.b16 %v1981, %v1981
      %v1998 = vpack.c.b16 %v1982, %v1982
      %v1999 = vpack.c.b16 %v1983, %v1983
      %s2016 = scalar_lea.vmem %s258, 64
      %2017 = vst.msk [vmem:[%s2016] sm:$0xf] %vm1349, %v1984
      %2018 = vst.msk [vmem:[%s2016 + $0x4] sm:$0xf] %vm1349, %v1985
      %2019 = vst.msk [vmem:[%s2016 + $0x8] sm:$0xf] %vm1349, %v1986
      %2020 = vst.msk [vmem:[%s2016 + $0xc] sm:$0xf] %vm1349, %v1987
      %2021 = vst.msk [vmem:[%s2016 + $0x10] sm:$0xf] %vm1349, %v1988
      %2022 = vst.msk [vmem:[%s2016 + $0x14] sm:$0xf] %vm1349, %v1989
      %2023 = vst.msk [vmem:[%s2016 + $0x18] sm:$0xf] %vm1349, %v1990
      %2024 = vst.msk [vmem:[%s2016 + $0x1c] sm:$0xf] %vm1349, %v1991
      %2025 = vst.msk [vmem:[%s2016 + $0x20] sm:$0xf] %vm1349, %v1992
      %2026 = vst.msk [vmem:[%s2016 + $0x24] sm:$0xf] %vm1349, %v1993
      %2027 = vst.msk [vmem:[%s2016 + $0x28] sm:$0xf] %vm1349, %v1994
      %2028 = vst.msk [vmem:[%s2016 + $0x2c] sm:$0xf] %vm1349, %v1995
      %2029 = vst.msk [vmem:[%s2016 + $0x30] sm:$0xf] %vm1349, %v1996
      %2030 = vst.msk [vmem:[%s2016 + $0x34] sm:$0xf] %vm1349, %v1997
      %2031 = vst.msk [vmem:[%s2016 + $0x38] sm:$0xf] %vm1349, %v1998
      %2032 = vst.msk [vmem:[%s2016 + $0x3c] sm:$0xf] %vm1349, %v1999
      %v2033 = vsel %vm836, %v1936, 0.0
      %v2034 = vsel %vm836, %v1937, 0.0
      %v2035 = vadd.f32 %v2033, %v2034
      %v2036 = vsel %vm836, %v1938, 0.0
      %v2037 = vadd.f32 %v2035, %v2036
      %v2038 = vsel %vm836, %v1939, 0.0
      %v2039 = vadd.f32 %v2037, %v2038
      %v2040 = vsel %vm836, %v1940, 0.0
      %v2041 = vadd.f32 %v2039, %v2040
      %v2042 = vsel %vm836, %v1941, 0.0
      %v2043 = vadd.f32 %v2041, %v2042
      %v2044 = vsel %vm836, %v1942, 0.0
      %v2045 = vadd.f32 %v2043, %v2044
      %v2046 = vsel %vm836, %v1943, 0.0
      %v2047 = vadd.f32 %v2045, %v2046
      %v2048 = vsel %vm836, %v1944, 0.0
      %v2049 = vadd.f32 %v2047, %v2048
      %v2050 = vsel %vm836, %v1945, 0.0
      %v2051 = vadd.f32 %v2049, %v2050
      %v2052 = vsel %vm836, %v1946, 0.0
      %v2053 = vadd.f32 %v2051, %v2052
      %v2054 = vsel %vm836, %v1947, 0.0
      %v2055 = vadd.f32 %v2053, %v2054
      %v2056 = vsel %vm836, %v1948, 0.0
      %v2057 = vadd.f32 %v2055, %v2056
      %v2058 = vsel %vm836, %v1949, 0.0
      %v2059 = vadd.f32 %v2057, %v2058
      %v2060 = vsel %vm836, %v1950, 0.0
      %v2061 = vadd.f32 %v2059, %v2060
      %v2062 = vsel %vm836, %v1951, 0.0
      %v2063 = vadd.f32 %v2061, %v2062
      %v2064 = vrot.slane %v2063, 4
      %v2065 = vadd.f32 %v2063, %v2064
      %v2066 = vrot.slane %v2065, 2
      %v2067 = vadd.f32 %v2065, %v2066
      %v2068 = vrot.slane %v2067, 1
      %v2069 = vadd.f32 %v2067, %v2068
      %v2070 = vmul.f32 %v1936, %v1936
      %v2071 = vmul.f32 %v1937, %v1937
      %v2072 = vmul.f32 %v1938, %v1938
      %v2073 = vmul.f32 %v1939, %v1939
      %v2074 = vmul.f32 %v1940, %v1940
      %v2075 = vmul.f32 %v1941, %v1941
      %v2076 = vmul.f32 %v1942, %v1942
      %v2077 = vmul.f32 %v1943, %v1943
      %v2078 = vmul.f32 %v1944, %v1944
      %v2079 = vmul.f32 %v1945, %v1945
      %v2080 = vmul.f32 %v1946, %v1946
      %v2081 = vmul.f32 %v1947, %v1947
      %v2082 = vmul.f32 %v1948, %v1948
      %v2083 = vmul.f32 %v1949, %v1949
      %v2084 = vmul.f32 %v1950, %v1950
      %v2085 = vmul.f32 %v1951, %v1951
      %v2086 = vsel %vm836, %v2070, 0.0
      %v2087 = vsel %vm836, %v2071, 0.0
      %v2088 = vadd.f32 %v2086, %v2087
      %v2089 = vsel %vm836, %v2072, 0.0
      %v2090 = vadd.f32 %v2088, %v2089
      %v2091 = vsel %vm836, %v2073, 0.0
      %v2092 = vadd.f32 %v2090, %v2091
      %v2093 = vsel %vm836, %v2074, 0.0
      %v2094 = vadd.f32 %v2092, %v2093
      %v2095 = vsel %vm836, %v2075, 0.0
      %v2096 = vadd.f32 %v2094, %v2095
      %v2097 = vsel %vm836, %v2076, 0.0
      %v2098 = vadd.f32 %v2096, %v2097
      %v2099 = vsel %vm836, %v2077, 0.0
      %v2100 = vadd.f32 %v2098, %v2099
      %v2101 = vsel %vm836, %v2078, 0.0
      %v2102 = vadd.f32 %v2100, %v2101
      %v2103 = vsel %vm836, %v2079, 0.0
      %v2104 = vadd.f32 %v2102, %v2103
      %v2105 = vsel %vm836, %v2080, 0.0
      %v2106 = vadd.f32 %v2104, %v2105
      %v2107 = vsel %vm836, %v2081, 0.0
      %v2108 = vadd.f32 %v2106, %v2107
      %v2109 = vsel %vm836, %v2082, 0.0
      %v2110 = vadd.f32 %v2108, %v2109
      %v2111 = vsel %vm836, %v2083, 0.0
      %v2112 = vadd.f32 %v2110, %v2111
      %v2113 = vsel %vm836, %v2084, 0.0
      %v2114 = vadd.f32 %v2112, %v2113
      %v2115 = vsel %vm836, %v2085, 0.0
      %v2116 = vadd.f32 %v2114, %v2115
      %v2117 = vrot.slane %v2116, 4
      %v2118 = vadd.f32 %v2116, %v2117
      %v2119 = vrot.slane %v2118, 2
      %v2120 = vadd.f32 %v2118, %v2119
      %v2121 = vrot.slane %v2120, 1
      %v2122 = vadd.f32 %v2120, %v2121
      %v2123 = vadd.f32 %v1402, %v2069
      %v2124 = vadd.f32 %v1455, %v2122
      %vm2125 = vcmask 1040384
      %v2126 = vsel %vm2125, %v2123, %v2124
      %vm2127 = vcmask 58368
      %2128 = vst.msk [vmem:[%s262] sm:$0x3] %vm2127, %v2126
      %p2129 = scmp.lt.s32.totalorder %s18, 1
      %s2130 = scalar_select %p2129, %s18, 1
      %s2131 = smul.addr %s2130, 32
      %s2132 = smul.addr %s2131, 4
      %s2133 = scalar_lea.vmem %s5, %s2132
      %p2134 = scmp.lt.s32.totalorder %s18, 1
      %s2135 = scalar_select %p2134, %s18, 1
      %s2136 = smul.addr %s2135, 2
      %s2137 = scalar_lea.vmem %s6, %s2136
      // Predicated region
      $region41: #{inception_v3a_forward.6} parent=39 // pred_check
        %p2138 = pneg %p146
      $region42: #{inception_v3a_forward.6} parent=39 // pred_check_branch
        %2140 = sbr.rel (%p2138) target = $region44
      $region43: #{inception_v3a_forward.6} parent=39 // pred_region
        _
      $region44: #{inception_v3a_forward.6} parent=39 // pred_fallthru
        _
      // Predicated region
      $region45: #{inception_v3a_forward.6} parent=39 // pred_check
        %p2141 = pneg %p172
      $region46: #{inception_v3a_forward.6} parent=39 // pred_check_branch
        %2143 = sbr.rel (%p2141) target = $region48
      $region47: #{inception_v3a_forward.6} parent=39 // pred_region
        _
      $region48: #{inception_v3a_forward.6} parent=39 // pred_fallthru
        _
    $region40: #{inception_v3a_forward.6} parent=5 // pred_fallthru
      _
    %p2144 = scmp.le.s32.totalorder 2, %s13
    // Predicated region
    $region49: #{inception_v3a_forward.6} parent=5 // pred_check
      %p2145 = pneg %p2144
    $region50: #{inception_v3a_forward.6} parent=5 // pred_check_branch
      %2147 = sbr.rel (%p2145) target = $region52
    $region51: #{inception_v3a_forward.6} parent=5 // pred_region
      %s2148 = ssub.s32 %s13, 2
      // Predicated region
      $region53: #{inception_v3a_forward.6} parent=51 // pred_check
        %p2149 = pneg %p152
      $region54: #{inception_v3a_forward.6} parent=51 // pred_check_branch
        %2151 = sbr.rel (%p2149) target = $region56
      $region55: #{inception_v3a_forward.6} parent=51 // pred_region
        %p2152 = scmp.lt.s32.totalorder %s19, 1
        %s2153 = scalar_select %p2152, %s19, 1
        %s2154 = smul.addr %s2153, 32
        %s2155 = smul.addr %s2154, 4
        %s2156 = scalar_lea.vmem %s5, %s2155
      $region56: #{inception_v3a_forward.6} parent=51 // pred_fallthru
        _
      // Predicated region
      $region57: #{inception_v3a_forward.6} parent=51 // pred_check
        %p2157 = pneg %p178
      $region58: #{inception_v3a_forward.6} parent=51 // pred_check_branch
        %2159 = sbr.rel (%p2157) target = $region60
      $region59: #{inception_v3a_forward.6} parent=51 // pred_region
        %p2160 = scmp.lt.s32.totalorder %s19, 1
        %s2161 = scalar_select %p2160, %s19, 1
        %s2162 = smul.addr %s2161, 2
        %s2163 = scalar_lea.vmem %s6, %s2162
      $region60: #{inception_v3a_forward.6} parent=51 // pred_fallthru
        _
    $region52: #{inception_v3a_forward.6} parent=5 // pred_fallthru
      _
  $region6: #{inception_v3a_forward.6} parent=0 // loop_footer
    %s17 = sadd.s32 1, %s13
  $region7: #{inception_v3a_forward.6} parent=0 // loop_footer_branch
    %12 = sbr.rel target = $region3
  $region8: #{inception_v3a_forward.6} parent=0 // loop_exit
    _

// kernel: inception_v3a_forward.5
$region0: #{inception_v3a_forward.5}
  #allocation0 [shape = 'u32[]', space=smem, size = 0x4, offset = 0x4, fixed_abs, tag = 'smem constant byte address 0x4 - core index']
  #allocation1 [shape = 'u32[144,128]{1,0:T(1,128)}', space=vmem, size = 0x12000, scoped, tag = 'internal scratch']
  %s0 = inlined_call_operand.vmem [shape: bf16[2,16,16,8], index: 0, kind: input, shape index: {}]
  %s1 = inlined_call_operand.vmem [shape: f32[2,8], index: 1, kind: input, shape index: {}]
  %s2 = inlined_call_operand.vmem [shape: f32[1,8], index: 2, kind: input, shape index: {}]
  %s3 = inlined_call_operand.vmem [shape: f32[1,8], index: 3, kind: input, shape index: {}]
  %s4 = inlined_call_operand.vmem [shape: bf16[3,3,4,8], index: 4, kind: input, shape index: {}]
  %s5 = inlined_call_operand.vmem [shape: bf16[3,3,4,8], index: 5, kind: input, shape index: {}]
  %s6 = inlined_call_operand.vmem [shape: bf16[2,16,16,8], index: 6, kind: output, shape index: {0}]
  %s7 = inlined_call_operand.vmem [shape: f32[2,2,8], index: 7, kind: output, shape index: {1}]
  %s8 = inlined_call_operand.vmem [shape: bf16[2,16,16,8], index: 8, kind: output, shape index: {2}]
  %s9 = inlined_call_operand.vmem [shape: f32[2,2,8], index: 9, kind: output, shape index: {3}]
  %10 = xla_tuple %s6, %s7, %s8, %s9
  %s11 = sld [smem:[#allocation0]]
  $region81: #{inception_v3a_forward.5} parent=0
    _
  %s13 = ssub.s32 1, %s11
  %s14 = scalar_select 0, %s13, %s11
  loop: start=0, step=1, limit=4
  $region2: #{inception_v3a_forward.5} parent=0 // loop_pre_header
    _
  $region3: #{inception_v3a_forward.5} parent=0 // loop_header
    %s16 = sphi 0, %s20
    %p17 = scmp.ge.s32.totalorder %s16, 4
    %s26 = sphi 0, %s28
    %s29 = sphi 0, %s26
    %s30 = sphi 0, %s29
    %s46 = sphi 0, %s30
    %s50 = sphi 0, %s50
    %s52 = sphi 0, %s50
    %s53 = sphi 0, %s52
    %s67 = sphi 0, %s53
    %s71 = sphi 0, %s71
    %s73 = sphi 0, %s71
    %s74 = sphi 0, %s73
    %s88 = sphi 0, %s74
    %s92 = sphi 0, %s92
    %s94 = sphi 0, %s92
    %s95 = sphi 0, %s94
    %s109 = sphi 0, %s95
    %s113 = sphi 0, %s113
    %s115 = sphi 0, %s113
    %s116 = sphi 0, %s115
    %s130 = sphi 0, %s116
    %s134 = sphi 0, %s134
    %s136 = sphi 0, %s134
    %s137 = sphi 0, %s136
    %s151 = sphi 0, %s137
    %s157 = sphi 0, %s159
    %s160 = sphi 0, %s157
    %s161 = sphi 0, %s160
    %s177 = sphi 0, %s161
    %s183 = sphi 0, %s185
    %s186 = sphi 0, %s183
    %s187 = sphi 0, %s186
    %s203 = sphi 0, %s187
    %s209 = sphi 0, %s211
    %s212 = sphi 0, %s209
    %s213 = sphi 0, %s212
    %s229 = sphi 0, %s213
    %s235 = sphi 0, %s237
    %s238 = sphi 0, %s235
    %s239 = sphi 0, %s238
    %s255 = sphi 0, %s239
  $region4: #{inception_v3a_forward.5} parent=0 // loop_header_branch
    %19 = sbr.rel (%p17) target = $region8
  $region5: #{inception_v3a_forward.5} parent=0 // loop_body
    %s21 = ssub.s32 %s16, 1
    %s22 = ssub.s32 %s16, 2
    %s23 = sadd.s32 %s16, 1
    %s24 = ssub.s32 %s16, %s23
    %p25 = scmp.eq.s32.totalorder %s24, 0
    %s27 = sadd.s32 %s26, 1
    %s28 = scalar_select %p25, %s26, %s27
    %p31 = pneg %p25
    %p32 = scmp.eq.s32.totalorder %s16, 1
    %p33 = por %p31, %p32
    %p34 = scmp.ne.s32.totalorder %s26, %s29
    %p35 = scmp.eq.s32.totalorder %s16, 0
    %p36 = por %p34, %p35
    %p37 = scmp.ne.s32.totalorder %s26, %s29
    %p38 = scmp.eq.s32.totalorder %s21, 1
    %p39 = por %p37, %p38
    %p40 = scmp.ne.s32.totalorder %s29, %s30
    %p41 = scmp.eq.s32.totalorder %s21, 0
    %p42 = por %p40, %p41
    %p43 = scmp.ne.s32.totalorder %s29, %s30
    %p44 = scmp.eq.s32.totalorder %s22, 1
    %p45 = por %p43, %p44
    %p47 = scmp.ne.s32.totalorder %s30, %s46
    %p48 = scmp.eq.s32.totalorder %s22, 0
    %p49 = por %p47, %p48
    %s51 = sadd.s32 %s50, 1
    %p54 = scmp.eq.s32.totalorder %s16, 1
    %p55 = scmp.ne.s32.totalorder %s50, %s52
    %p56 = scmp.eq.s32.totalorder %s16, 0
    %p57 = por %p55, %p56
    %p58 = scmp.ne.s32.totalorder %s50, %s52
    %p59 = scmp.eq.s32.totalorder %s21, 1
    %p60 = por %p58, %p59
    %p61 = scmp.ne.s32.totalorder %s52, %s53
    %p62 = scmp.eq.s32.totalorder %s21, 0
    %p63 = por %p61, %p62
    %p64 = scmp.ne.s32.totalorder %s52, %s53
    %p65 = scmp.eq.s32.totalorder %s22, 1
    %p66 = por %p64, %p65
    %p68 = scmp.ne.s32.totalorder %s53, %s67
    %p69 = scmp.eq.s32.totalorder %s22, 0
    %p70 = por %p68, %p69
    %s72 = sadd.s32 %s71, 1
    %p75 = scmp.eq.s32.totalorder %s16, 1
    %p76 = scmp.ne.s32.totalorder %s71, %s73
    %p77 = scmp.eq.s32.totalorder %s16, 0
    %p78 = por %p76, %p77
    %p79 = scmp.ne.s32.totalorder %s71, %s73
    %p80 = scmp.eq.s32.totalorder %s21, 1
    %p81 = por %p79, %p80
    %p82 = scmp.ne.s32.totalorder %s73, %s74
    %p83 = scmp.eq.s32.totalorder %s21, 0
    %p84 = por %p82, %p83
    %p85 = scmp.ne.s32.totalorder %s73, %s74
    %p86 = scmp.eq.s32.totalorder %s22, 1
    %p87 = por %p85, %p86
    %p89 = scmp.ne.s32.totalorder %s74, %s88
    %p90 = scmp.eq.s32.totalorder %s22, 0
    %p91 = por %p89, %p90
    %s93 = sadd.s32 %s92, 1
    %p96 = scmp.eq.s32.totalorder %s16, 1
    %p97 = scmp.ne.s32.totalorder %s92, %s94
    %p98 = scmp.eq.s32.totalorder %s16, 0
    %p99 = por %p97, %p98
    %p100 = scmp.ne.s32.totalorder %s92, %s94
    %p101 = scmp.eq.s32.totalorder %s21, 1
    %p102 = por %p100, %p101
    %p103 = scmp.ne.s32.totalorder %s94, %s95
    %p104 = scmp.eq.s32.totalorder %s21, 0
    %p105 = por %p103, %p104
    %p106 = scmp.ne.s32.totalorder %s94, %s95
    %p107 = scmp.eq.s32.totalorder %s22, 1
    %p108 = por %p106, %p107
    %p110 = scmp.ne.s32.totalorder %s95, %s109
    %p111 = scmp.eq.s32.totalorder %s22, 0
    %p112 = por %p110, %p111
    %s114 = sadd.s32 %s113, 1
    %p117 = scmp.eq.s32.totalorder %s16, 1
    %p118 = scmp.ne.s32.totalorder %s113, %s115
    %p119 = scmp.eq.s32.totalorder %s16, 0
    %p120 = por %p118, %p119
    %p121 = scmp.ne.s32.totalorder %s113, %s115
    %p122 = scmp.eq.s32.totalorder %s21, 1
    %p123 = por %p121, %p122
    %p124 = scmp.ne.s32.totalorder %s115, %s116
    %p125 = scmp.eq.s32.totalorder %s21, 0
    %p126 = por %p124, %p125
    %p127 = scmp.ne.s32.totalorder %s115, %s116
    %p128 = scmp.eq.s32.totalorder %s22, 1
    %p129 = por %p127, %p128
    %p131 = scmp.ne.s32.totalorder %s116, %s130
    %p132 = scmp.eq.s32.totalorder %s22, 0
    %p133 = por %p131, %p132
    %s135 = sadd.s32 %s134, 1
    %p138 = scmp.eq.s32.totalorder %s16, 1
    %p139 = scmp.ne.s32.totalorder %s134, %s136
    %p140 = scmp.eq.s32.totalorder %s16, 0
    %p141 = por %p139, %p140
    %p142 = scmp.ne.s32.totalorder %s134, %s136
    %p143 = scmp.eq.s32.totalorder %s21, 1
    %p144 = por %p142, %p143
    %p145 = scmp.ne.s32.totalorder %s136, %s137
    %p146 = scmp.eq.s32.totalorder %s21, 0
    %p147 = por %p145, %p146
    %p148 = scmp.ne.s32.totalorder %s136, %s137
    %p149 = scmp.eq.s32.totalorder %s22, 1
    %p150 = por %p148, %p149
    %p152 = scmp.ne.s32.totalorder %s137, %s151
    %p153 = scmp.eq.s32.totalorder %s22, 0
    %p154 = por %p152, %p153
    %s155 = ssub.s32 %s16, %s23
    %p156 = scmp.eq.s32.totalorder %s155, 0
    %s158 = sadd.s32 %s157, 1
    %s159 = scalar_select %p156, %s157, %s158
    %p162 = pneg %p156
    %p163 = scmp.eq.s32.totalorder %s16, 1
    %p164 = por %p162, %p163
    %p165 = scmp.ne.s32.totalorder %s157, %s160
    %p166 = scmp.eq.s32.totalorder %s16, 0
    %p167 = por %p165, %p166
    %p168 = scmp.ne.s32.totalorder %s157, %s160
    %p169 = scmp.eq.s32.totalorder %s21, 1
    %p170 = por %p168, %p169
    %p171 = scmp.ne.s32.totalorder %s160, %s161
    %p172 = scmp.eq.s32.totalorder %s21, 0
    %p173 = por %p171, %p172
    %p174 = scmp.ne.s32.totalorder %s160, %s161
    %p175 = scmp.eq.s32.totalorder %s22, 1
    %p176 = por %p174, %p175
    %p178 = scmp.ne.s32.totalorder %s161, %s177
    %p179 = scmp.eq.s32.totalorder %s22, 0
    %p180 = por %p178, %p179
    %s181 = ssub.s32 %s16, %s23
    %p182 = scmp.eq.s32.totalorder %s181, 0
    %s184 = sadd.s32 %s183, 1
    %s185 = scalar_select %p182, %s183, %s184
    %p188 = pneg %p182
    %p189 = scmp.eq.s32.totalorder %s16, 1
    %p190 = por %p188, %p189
    %p191 = scmp.ne.s32.totalorder %s183, %s186
    %p192 = scmp.eq.s32.totalorder %s16, 0
    %p193 = por %p191, %p192
    %p194 = scmp.ne.s32.totalorder %s183, %s186
    %p195 = scmp.eq.s32.totalorder %s21, 1
    %p196 = por %p194, %p195
    %p197 = scmp.ne.s32.totalorder %s186, %s187
    %p198 = scmp.eq.s32.totalorder %s21, 0
    %p199 = por %p197, %p198
    %p200 = scmp.ne.s32.totalorder %s186, %s187
    %p201 = scmp.eq.s32.totalorder %s22, 1
    %p202 = por %p200, %p201
    %p204 = scmp.ne.s32.totalorder %s187, %s203
    %p205 = scmp.eq.s32.totalorder %s22, 0
    %p206 = por %p204, %p205
    %s207 = ssub.s32 %s16, %s23
    %p208 = scmp.eq.s32.totalorder %s207, 0
    %s210 = sadd.s32 %s209, 1
    %s211 = scalar_select %p208, %s209, %s210
    %p214 = pneg %p208
    %p215 = scmp.eq.s32.totalorder %s16, 1
    %p216 = por %p214, %p215
    %p217 = scmp.ne.s32.totalorder %s209, %s212
    %p218 = scmp.eq.s32.totalorder %s16, 0
    %p219 = por %p217, %p218
    %p220 = scmp.ne.s32.totalorder %s209, %s212
    %p221 = scmp.eq.s32.totalorder %s21, 1
    %p222 = por %p220, %p221
    %p223 = scmp.ne.s32.totalorder %s212, %s213
    %p224 = scmp.eq.s32.totalorder %s21, 0
    %p225 = por %p223, %p224
    %p226 = scmp.ne.s32.totalorder %s212, %s213
    %p227 = scmp.eq.s32.totalorder %s22, 1
    %p228 = por %p226, %p227
    %p230 = scmp.ne.s32.totalorder %s213, %s229
    %p231 = scmp.eq.s32.totalorder %s22, 0
    %p232 = por %p230, %p231
    %s233 = ssub.s32 %s16, %s23
    %p234 = scmp.eq.s32.totalorder %s233, 0
    %s236 = sadd.s32 %s235, 1
    %s237 = scalar_select %p234, %s235, %s236
    %p240 = pneg %p234
    %p241 = scmp.eq.s32.totalorder %s16, 1
    %p242 = por %p240, %p241
    %p243 = scmp.ne.s32.totalorder %s235, %s238
    %p244 = scmp.eq.s32.totalorder %s16, 0
    %p245 = por %p243, %p244
    %p246 = scmp.ne.s32.totalorder %s235, %s238
    %p247 = scmp.eq.s32.totalorder %s21, 1
    %p248 = por %p246, %p247
    %p249 = scmp.ne.s32.totalorder %s238, %s239
    %p250 = scmp.eq.s32.totalorder %s21, 0
    %p251 = por %p249, %p250
    %p252 = scmp.ne.s32.totalorder %s238, %s239
    %p253 = scmp.eq.s32.totalorder %s22, 1
    %p254 = por %p252, %p253
    %p256 = scmp.ne.s32.totalorder %s239, %s255
    %p257 = scmp.eq.s32.totalorder %s22, 0
    %p258 = por %p256, %p257
    %p259 = scmp.le.s32.totalorder 1, %s16
    %p260 = scmp.lt.s32.totalorder %s16, 3
    %p261 = pnand %p259, %p260
    %p262 = pneg %p261
    // Predicated region
    $region9: #{inception_v3a_forward.5} parent=5 // pred_check
      _
    $region10: #{inception_v3a_forward.5} parent=5 // pred_check_branch
      %264 = sbr.rel (%p261) target = $region12
    $region11: #{inception_v3a_forward.5} parent=5 // pred_region
      %s265 = ssub.s32 %s16, 1
      // Predicated region
      $region13: #{inception_v3a_forward.5} parent=11 // pred_check
        %p266 = pneg %p63
      $region14: #{inception_v3a_forward.5} parent=11 // pred_check_branch
        %268 = sbr.rel (%p266) target = $region16
      $region15: #{inception_v3a_forward.5} parent=11 // pred_region
        _
      $region16: #{inception_v3a_forward.5} parent=11 // pred_fallthru
        _
      // Predicated region
      $region17: #{inception_v3a_forward.5} parent=11 // pred_check
        %p269 = pneg %p84
      $region18: #{inception_v3a_forward.5} parent=11 // pred_check_branch
        %271 = sbr.rel (%p269) target = $region20
      $region19: #{inception_v3a_forward.5} parent=11 // pred_region
        _
      $region20: #{inception_v3a_forward.5} parent=11 // pred_fallthru
        _
      // Predicated region
      $region21: #{inception_v3a_forward.5} parent=11 // pred_check
        %p272 = pneg %p105
      $region22: #{inception_v3a_forward.5} parent=11 // pred_check_branch
        %274 = sbr.rel (%p272) target = $region24
      $region23: #{inception_v3a_forward.5} parent=11 // pred_region
        _
      $region24: #{inception_v3a_forward.5} parent=11 // pred_fallthru
        _
      // Predicated region
      $region25: #{inception_v3a_forward.5} parent=11 // pred_check
        %p275 = pneg %p126
      $region26: #{inception_v3a_forward.5} parent=11 // pred_check_branch
        %277 = sbr.rel (%p275) target = $region28
      $region27: #{inception_v3a_forward.5} parent=11 // pred_region
        _
      $region28: #{inception_v3a_forward.5} parent=11 // pred_fallthru
        _
      // Predicated region
      $region29: #{inception_v3a_forward.5} parent=11 // pred_check
        %p278 = pneg %p147
      $region30: #{inception_v3a_forward.5} parent=11 // pred_check_branch
        %280 = sbr.rel (%p278) target = $region32
      $region31: #{inception_v3a_forward.5} parent=11 // pred_region
        _
      $region32: #{inception_v3a_forward.5} parent=11 // pred_fallthru
        _
    $region12: #{inception_v3a_forward.5} parent=5 // pred_fallthru
      _
    %p281 = scmp.lt.s32.totalorder %s16, 2
    // Predicated region
    $region33: #{inception_v3a_forward.5} parent=5 // pred_check
      %p282 = pneg %p281
    $region34: #{inception_v3a_forward.5} parent=5 // pred_check_branch
      %284 = sbr.rel (%p282) target = $region36
    $region35: #{inception_v3a_forward.5} parent=5 // pred_region
      // Predicated region
      $region37: #{inception_v3a_forward.5} parent=35 // pred_check
        %p285 = pneg %p36
      $region38: #{inception_v3a_forward.5} parent=35 // pred_check_branch
        %287 = sbr.rel (%p285) target = $region40
      $region39: #{inception_v3a_forward.5} parent=35 // pred_region
        %p288 = scmp.lt.s32.totalorder %s16, 1
        %s289 = scalar_select %p288, %s16, 1
        %s290 = smul.addr %s289, 32
        %s291 = smul.addr %s290, 4
        %s292 = scalar_lea.vmem %s0, %s291
      $region40: #{inception_v3a_forward.5} parent=35 // pred_fallthru
        _
    $region36: #{inception_v3a_forward.5} parent=5 // pred_fallthru
      _
    %p293 = scmp.le.s32.totalorder 1, %s16
    %p294 = scmp.lt.s32.totalorder %s16, 3
    %p295 = pnand %p293, %p294
    %p296 = pneg %p295
    // Predicated region
    $region41: #{inception_v3a_forward.5} parent=5 // pred_check
      _
    $region42: #{inception_v3a_forward.5} parent=5 // pred_check_branch
      %298 = sbr.rel (%p295) target = $region44
    $region43: #{inception_v3a_forward.5} parent=5 // pred_region
      %s299 = ssub.s32 %s16, 1
      %p300 = scmp.lt.s32.totalorder %s21, 1
      %s301 = scalar_select %p300, %s21, 1
      %s302 = smul.addr %s301, 32
      %s303 = smul.addr %s302, 4
      %s304 = scalar_lea.vmem %s0, %s303
      %p305 = pneg %p42
      %p306 = pneg %p39
      %p307 = pneg %p63
      %p308 = pneg %p60
      %p309 = pneg %p84
      %p310 = pneg %p81
      %p311 = pneg %p105
      %p312 = pneg %p102
      %p313 = pneg %p126
      %p314 = pneg %p123
      %p315 = pneg %p147
      %p316 = pneg %p144
      %p317 = pneg %p173
      %p318 = pneg %p170
      %p319 = scmp.lt.s32.totalorder %s21, 1
      %s320 = scalar_select %p319, %s21, 1
      %s321 = smul.addr %s320, 32
      %s322 = smul.addr %s321, 4
      %s323 = scalar_lea.vmem %s6, %s322
      %p324 = pneg %p199
      %p325 = pneg %p196
      %p326 = scmp.lt.s32.totalorder %s21, 1
      %s327 = scalar_select %p326, %s21, 1
      %s328 = smul.addr %s327, 2
      %s329 = scalar_lea.vmem %s7, %s328
      %p330 = pneg %p225
      %p331 = pneg %p222
      %p332 = scmp.lt.s32.totalorder %s21, 1
      %s333 = scalar_select %p332, %s21, 1
      %s334 = smul.addr %s333, 32
      %s335 = smul.addr %s334, 4
      %s336 = scalar_lea.vmem %s8, %s335
      %p337 = pneg %p251
      %p338 = pneg %p248
      %p339 = scmp.lt.s32.totalorder %s21, 1
      %s340 = scalar_select %p339, %s21, 1
      %s341 = smul.addr %s340, 2
      %s342 = scalar_lea.vmem %s9, %s341
      %p343 = scmp.lt.s32.totalorder %s21, 1
      %s344 = scalar_select %p343, %s21, 1
      %s345 = smul.addr %s344, 32
      %s346 = smul.addr %s345, 4
      %s347 = scalar_lea.vmem %s0, %s346
      %p348 = scmp.lt.s32.totalorder %s21, 1
      %s349 = scalar_select %p348, %s21, 1
      %s350 = smul.addr %s349, 32
      %s351 = smul.addr %s350, 4
      %s352 = scalar_lea.vmem %s6, %s351
      %p353 = scmp.lt.s32.totalorder %s21, 1
      %s354 = scalar_select %p353, %s21, 1
      %s355 = smul.addr %s354, 2
      %s356 = scalar_lea.vmem %s7, %s355
      %p357 = scmp.lt.s32.totalorder %s21, 1
      %s358 = scalar_select %p357, %s21, 1
      %s359 = smul.addr %s358, 32
      %s360 = smul.addr %s359, 4
      %s361 = scalar_lea.vmem %s8, %s360
      %p362 = scmp.lt.s32.totalorder %s21, 1
      %s363 = scalar_select %p362, %s21, 1
      %s364 = smul.addr %s363, 2
      %s365 = scalar_lea.vmem %s9, %s364
      %v367 = vld [vmem:[%s1] sm:$0x3]
      %v368 = vld [vmem:[%s2] sm:$0x1]
      %v369 = vld [vmem:[%s3] sm:$0x1]
      %v370 = vmul.f32 %v367, 0.001953125
      %v371 = vmul.f32 %v370, %v370
      %v373 = vrot.slane %v371, 7
      %v375 = vsub.f32 %v370, %v373
      %v376 = vmax.f32 %v375, 0.0
      %v377 = vadd.f32 %v376, 1e-05
      %v378 = vrsqrt.pop %v377
      %v381 = vunpack.c.l.s4 1966171168
      %v382 = vunpack.c.0.s8 %v381
      %v383 = vlaneseq
      %v384 = vshrl.u32 %v383, 7
      %v385 = vsub.s32 %v382, %v384
      %v386 = vrot.slane %v378, %v385
      %v387 = vcombine.high %v386, %v386
      %v389 = vunpack.c.l.s4 1966171168
      %v390 = vunpack.c.0.s8 %v389
      %v391 = vlaneseq
      %v392 = vshrl.u32 %v391, 7
      %v393 = vsub.s32 %v390, %v392
      %v394 = vrot.slane %v387, %v393
      %v396 = vmul.f32 %v368, %v394
      %v397 = vmul.f32 %v370, %v396
      %v398 = vsub.f32 %v369, %v397
      %v399 = vld [vmem:[%s347] sm:$0xf]
      %v400 = vld [vmem:[%s347 + $0x4] sm:$0xf]
      %v401 = vld [vmem:[%s347 + $0x8] sm:$0xf]
      %v402 = vld [vmem:[%s347 + $0xc] sm:$0xf]
      %v403 = vld [vmem:[%s347 + $0x10] sm:$0xf]
      %v404 = vld [vmem:[%s347 + $0x14] sm:$0xf]
      %v405 = vld [vmem:[%s347 + $0x18] sm:$0xf]
      %v406 = vld [vmem:[%s347 + $0x1c] sm:$0xf]
      %v407 = vld [vmem:[%s347 + $0x20] sm:$0xf]
      %v408 = vld [vmem:[%s347 + $0x24] sm:$0xf]
      %v409 = vld [vmem:[%s347 + $0x28] sm:$0xf]
      %v410 = vld [vmem:[%s347 + $0x2c] sm:$0xf]
      %v411 = vld [vmem:[%s347 + $0x30] sm:$0xf]
      %v412 = vld [vmem:[%s347 + $0x34] sm:$0xf]
      %v413 = vld [vmem:[%s347 + $0x38] sm:$0xf]
      %v414 = vld [vmem:[%s347 + $0x3c] sm:$0xf]
      %v415 = vld [vmem:[%s347 + $0x40] sm:$0xf]
      %v416 = vld [vmem:[%s347 + $0x44] sm:$0xf]
      %v417 = vld [vmem:[%s347 + $0x48] sm:$0xf]
      %v418 = vld [vmem:[%s347 + $0x4c] sm:$0xf]
      %v419 = vld [vmem:[%s347 + $0x50] sm:$0xf]
      %v420 = vld [vmem:[%s347 + $0x54] sm:$0xf]
      %v421 = vld [vmem:[%s347 + $0x58] sm:$0xf]
      %v422 = vld [vmem:[%s347 + $0x5c] sm:$0xf]
      %v423 = vld [vmem:[%s347 + $0x60] sm:$0xf]
      %v424 = vld [vmem:[%s347 + $0x64] sm:$0xf]
      %v425 = vld [vmem:[%s347 + $0x68] sm:$0xf]
      %v426 = vld [vmem:[%s347 + $0x6c] sm:$0xf]
      %v427 = vld [vmem:[%s347 + $0x70] sm:$0xf]
      %v428 = vld [vmem:[%s347 + $0x74] sm:$0xf]
      %v429 = vld [vmem:[%s347 + $0x78] sm:$0xf]
      %v430 = vld [vmem:[%s347 + $0x7c] sm:$0xf]
      %v431 = vunpack.c.l.bf16 %v399
      %v432 = vunpack.c.l.bf16 %v400
      %v433 = vunpack.c.l.bf16 %v401
      %v434 = vunpack.c.l.bf16 %v402
      %v435 = vunpack.c.l.bf16 %v403
      %v436 = vunpack.c.l.bf16 %v404
      %v437 = vunpack.c.l.bf16 %v405
      %v438 = vunpack.c.l.bf16 %v406
      %v439 = vunpack.c.l.bf16 %v407
      %v440 = vunpack.c.l.bf16 %v408
      %v441 = vunpack.c.l.bf16 %v409
      %v442 = vunpack.c.l.bf16 %v410
      %v443 = vunpack.c.l.bf16 %v411
      %v444 = vunpack.c.l.bf16 %v412
      %v445 = vunpack.c.l.bf16 %v413
      %v446 = vunpack.c.l.bf16 %v414
      %v447 = vunpack.c.l.bf16 %v415
      %v448 = vunpack.c.l.bf16 %v416
      %v449 = vunpack.c.l.bf16 %v417
      %v450 = vunpack.c.l.bf16 %v418
      %v451 = vunpack.c.l.bf16 %v419
      %v452 = vunpack.c.l.bf16 %v420
      %v453 = vunpack.c.l.bf16 %v421
      %v454 = vunpack.c.l.bf16 %v422
      %v455 = vunpack.c.l.bf16 %v423
      %v456 = vunpack.c.l.bf16 %v424
      %v457 = vunpack.c.l.bf16 %v425
      %v458 = vunpack.c.l.bf16 %v426
      %v459 = vunpack.c.l.bf16 %v427
      %v460 = vunpack.c.l.bf16 %v428
      %v461 = vunpack.c.l.bf16 %v429
      %v462 = vunpack.c.l.bf16 %v430
      %v464 = vlaneseq
      %v465 = vshrl.u32 %v464, 7
      %v466 = vsub.s32 0, %v465
      %v467 = vrot.slane %v396, %v466
      %v469 = vmul.f32 %v431, %v467
      %v470 = vmul.f32 %v432, %v467
      %v471 = vmul.f32 %v433, %v467
      %v472 = vmul.f32 %v434, %v467
      %v473 = vmul.f32 %v435, %v467
      %v474 = vmul.f32 %v436, %v467
      %v475 = vmul.f32 %v437, %v467
      %v476 = vmul.f32 %v438, %v467
      %v477 = vmul.f32 %v439, %v467
      %v478 = vmul.f32 %v440, %v467
      %v479 = vmul.f32 %v441, %v467
      %v480 = vmul.f32 %v442, %v467
      %v481 = vmul.f32 %v443, %v467
      %v482 = vmul.f32 %v444, %v467
      %v483 = vmul.f32 %v445, %v467
      %v484 = vmul.f32 %v446, %v467
      %v485 = vmul.f32 %v447, %v467
      %v486 = vmul.f32 %v448, %v467
      %v487 = vmul.f32 %v449, %v467
      %v488 = vmul.f32 %v450, %v467
      %v489 = vmul.f32 %v451, %v467
      %v490 = vmul.f32 %v452, %v467
      %v491 = vmul.f32 %v453, %v467
      %v492 = vmul.f32 %v454, %v467
      %v493 = vmul.f32 %v455, %v467
      %v494 = vmul.f32 %v456, %v467
      %v495 = vmul.f32 %v457, %v467
      %v496 = vmul.f32 %v458, %v467
      %v497 = vmul.f32 %v459, %v467
      %v498 = vmul.f32 %v460, %v467
      %v499 = vmul.f32 %v461, %v467
      %v500 = vmul.f32 %v462, %v467
      %v502 = vlaneseq
      %v503 = vshrl.u32 %v502, 7
      %v504 = vsub.s32 0, %v503
      %v505 = vrot.slane %v398, %v504
      %v507 = vadd.f32 %v469, %v505
      %v508 = vadd.f32 %v470, %v505
      %v509 = vadd.f32 %v471, %v505
      %v510 = vadd.f32 %v472, %v505
      %v511 = vadd.f32 %v473, %v505
      %v512 = vadd.f32 %v474, %v505
      %v513 = vadd.f32 %v475, %v505
      %v514 = vadd.f32 %v476, %v505
      %v515 = vadd.f32 %v477, %v505
      %v516 = vadd.f32 %v478, %v505
      %v517 = vadd.f32 %v479, %v505
      %v518 = vadd.f32 %v480, %v505
      %v519 = vadd.f32 %v481, %v505
      %v520 = vadd.f32 %v482, %v505
      %v521 = vadd.f32 %v483, %v505
      %v522 = vadd.f32 %v484, %v505
      %v523 = vadd.f32 %v485, %v505
      %v524 = vadd.f32 %v486, %v505
      %v525 = vadd.f32 %v487, %v505
      %v526 = vadd.f32 %v488, %v505
      %v527 = vadd.f32 %v489, %v505
      %v528 = vadd.f32 %v490, %v505
      %v529 = vadd.f32 %v491, %v505
      %v530 = vadd.f32 %v492, %v505
      %v531 = vadd.f32 %v493, %v505
      %v532 = vadd.f32 %v494, %v505
      %v533 = vadd.f32 %v495, %v505
      %v534 = vadd.f32 %v496, %v505
      %v535 = vadd.f32 %v497, %v505
      %v536 = vadd.f32 %v498, %v505
      %v537 = vadd.f32 %v499, %v505
      %v538 = vadd.f32 %v500, %v505
      %v539 = vmax.f32 %v507, 0.0
      %v540 = vmax.f32 %v508, 0.0
      %v541 = vmax.f32 %v509, 0.0
      %v542 = vmax.f32 %v510, 0.0
      %v543 = vmax.f32 %v511, 0.0
      %v544 = vmax.f32 %v512, 0.0
      %v545 = vmax.f32 %v513, 0.0
      %v546 = vmax.f32 %v514, 0.0
      %v547 = vmax.f32 %v515, 0.0
      %v548 = vmax.f32 %v516, 0.0
      %v549 = vmax.f32 %v517, 0.0
      %v550 = vmax.f32 %v518, 0.0
      %v551 = vmax.f32 %v519, 0.0
      %v552 = vmax.f32 %v520, 0.0
      %v553 = vmax.f32 %v521, 0.0
      %v554 = vmax.f32 %v522, 0.0
      %v555 = vmax.f32 %v523, 0.0
      %v556 = vmax.f32 %v524, 0.0
      %v557 = vmax.f32 %v525, 0.0
      %v558 = vmax.f32 %v526, 0.0
      %v559 = vmax.f32 %v527, 0.0
      %v560 = vmax.f32 %v528, 0.0
      %v561 = vmax.f32 %v529, 0.0
      %v562 = vmax.f32 %v530, 0.0
      %v563 = vmax.f32 %v531, 0.0
      %v564 = vmax.f32 %v532, 0.0
      %v565 = vmax.f32 %v533, 0.0
      %v566 = vmax.f32 %v534, 0.0
      %v567 = vmax.f32 %v535, 0.0
      %v568 = vmax.f32 %v536, 0.0
      %v569 = vmax.f32 %v537, 0.0
      %v570 = vmax.f32 %v538, 0.0
      %v571 = vpack.c.bf16 %v540, %v539
      %v572 = vpack.c.bf16 %v542, %v541
      %v573 = vpack.c.bf16 %v544, %v543
      %v574 = vpack.c.bf16 %v546, %v545
      %v575 = vpack.c.bf16 %v548, %v547
      %v576 = vpack.c.bf16 %v550, %v549
      %v577 = vpack.c.bf16 %v552, %v551
      %v578 = vpack.c.bf16 %v554, %v553
      %v579 = vpack.c.bf16 %v556, %v555
      %v580 = vpack.c.bf16 %v558, %v557
      %v581 = vpack.c.bf16 %v560, %v559
      %v582 = vpack.c.bf16 %v562, %v561
      %v583 = vpack.c.bf16 %v564, %v563
      %v584 = vpack.c.bf16 %v566, %v565
      %v585 = vpack.c.bf16 %v568, %v567
      %v586 = vpack.c.bf16 %v570, %v569
      %v588 = vshrl.u32 %v571, 16
      %v590 = vrot.slane %v588, 7
      %v591 = vshll.u32 %v571, 16
      %v593 = vor.u32 %v590, %v591
      %v595 = vshrl.u32 %v572, 16
      %v597 = vrot.slane %v595, 7
      %v598 = vshll.u32 %v572, 16
      %v600 = vor.u32 %v597, %v598
      %v602 = vshrl.u32 %v573, 16
      %v604 = vrot.slane %v602, 7
      %v605 = vshll.u32 %v573, 16
      %v607 = vor.u32 %v604, %v605
      %v609 = vshrl.u32 %v574, 16
      %v611 = vrot.slane %v609, 7
      %v612 = vshll.u32 %v574, 16
      %v614 = vor.u32 %v611, %v612
      %v616 = vshrl.u32 %v575, 16
      %v618 = vrot.slane %v616, 7
      %v619 = vshll.u32 %v575, 16
      %v621 = vor.u32 %v618, %v619
      %v623 = vshrl.u32 %v576, 16
      %v625 = vrot.slane %v623, 7
      %v626 = vshll.u32 %v576, 16
      %v628 = vor.u32 %v625, %v626
      %v630 = vshrl.u32 %v577, 16
      %v632 = vrot.slane %v630, 7
      %v633 = vshll.u32 %v577, 16
      %v635 = vor.u32 %v632, %v633
      %v637 = vshrl.u32 %v578, 16
      %v639 = vrot.slane %v637, 7
      %v640 = vshll.u32 %v578, 16
      %v642 = vor.u32 %v639, %v640
      %v644 = vshrl.u32 %v579, 16
      %v646 = vrot.slane %v644, 7
      %v647 = vshll.u32 %v579, 16
      %v649 = vor.u32 %v646, %v647
      %v651 = vshrl.u32 %v580, 16
      %v653 = vrot.slane %v651, 7
      %v654 = vshll.u32 %v580, 16
      %v656 = vor.u32 %v653, %v654
      %v658 = vshrl.u32 %v581, 16
      %v660 = vrot.slane %v658, 7
      %v661 = vshll.u32 %v581, 16
      %v663 = vor.u32 %v660, %v661
      %v665 = vshrl.u32 %v582, 16
      %v667 = vrot.slane %v665, 7
      %v668 = vshll.u32 %v582, 16
      %v670 = vor.u32 %v667, %v668
      %v672 = vshrl.u32 %v583, 16
      %v674 = vrot.slane %v672, 7
      %v675 = vshll.u32 %v583, 16
      %v677 = vor.u32 %v674, %v675
      %v679 = vshrl.u32 %v584, 16
      %v681 = vrot.slane %v679, 7
      %v682 = vshll.u32 %v584, 16
      %v684 = vor.u32 %v681, %v682
      %v686 = vshrl.u32 %v585, 16
      %v688 = vrot.slane %v686, 7
      %v689 = vshll.u32 %v585, 16
      %v691 = vor.u32 %v688, %v689
      %v693 = vshrl.u32 %v586, 16
      %v695 = vrot.slane %v693, 7
      %v696 = vshll.u32 %v586, 16
      %v698 = vor.u32 %v695, %v696
      %vm731 = vcmask 1040384
      %vm732 = vsmask.f32 256
      %vm733 = vmand %vm731, %vm732
      %v734 = vsel %vm733, 0, %v593
      %v735 = vsel %vm733, 0, %v600
      %v736 = vsel %vm733, 0, %v607
      %v737 = vsel %vm733, 0, %v614
      %v738 = vsel %vm733, 0, %v621
      %v739 = vsel %vm733, 0, %v628
      %v740 = vsel %vm733, 0, %v635
      %v741 = vsel %vm733, 0, %v642
      %v742 = vsel %vm733, 0, %v649
      %v743 = vsel %vm733, 0, %v656
      %v744 = vsel %vm733, 0, %v663
      %v745 = vsel %vm733, 0, %v670
      %v746 = vsel %vm733, 0, %v677
      %v747 = vsel %vm733, 0, %v684
      %v748 = vsel %vm733, 0, %v691
      %v749 = vsel %vm733, 0, %v698
      %v750 = vsel %vm733, %v590, 0
      %v751 = vsel %vm733, %v597, 0
      %v752 = vsel %vm733, %v604, 0
      %v753 = vsel %vm733, %v611, 0
      %v754 = vsel %vm733, %v618, 0
      %v755 = vsel %vm733, %v625, 0
      %v756 = vsel %vm733, %v632, 0
      %v757 = vsel %vm733, %v639, 0
      %v758 = vsel %vm733, %v646, 0
      %v759 = vsel %vm733, %v653, 0
      %v760 = vsel %vm733, %v660, 0
      %v761 = vsel %vm733, %v667, 0
      %v762 = vsel %vm733, %v674, 0
      %v763 = vsel %vm733, %v681, 0
      %v764 = vsel %vm733, %v688, 0
      %v765 = vsel %vm733, %v695, 0
      %v766 = vld [vmem:[%s4] sm:$0x3]
      %v767 = vld [vmem:[%s4 + $0x2] sm:$0x3]
      %v768 = vld [vmem:[%s4 + $0x4] sm:$0x3]
      %v769 = vld [vmem:[%s4 + $0x6] sm:$0x3]
      %v770 = vld [vmem:[%s4 + $0x8] sm:$0x3]
      %v771 = vld [vmem:[%s4 + $0xa] sm:$0x3]
      %v772 = vld [vmem:[%s4 + $0xc] sm:$0x3]
      %v773 = vld [vmem:[%s4 + $0xe] sm:$0x3]
      %v774 = vld [vmem:[%s4 + $0x10] sm:$0x3]
      %vm775 = vsmask.f32 7424
      %v777 = vshrl.u32 0, 16
      %v779 = vshll.u32 0, 16
      %v781 = vrot.slane %v779, 1
      %v782 = vor.u32 %v777, %v781
      %v783 = vsel %vm775, %v782, %v781
      %v785 = vshrl.u32 %v734, 16
      %v787 = vshll.u32 %v734, 16
      %v789 = vrot.slane %v787, 1
      %v790 = vor.u32 %v785, %v789
      %v792 = vshll.u32 %v750, 16
      %v794 = vrot.slane %v792, 1
      %v795 = vsel %vm775, %v790, %v794
      %v797 = vshrl.u32 %v735, 16
      %v799 = vshll.u32 %v735, 16
      %v801 = vrot.slane %v799, 1
      %v802 = vor.u32 %v797, %v801
      %v804 = vshll.u32 %v751, 16
      %v806 = vrot.slane %v804, 1
      %v807 = vsel %vm775, %v802, %v806
      %v809 = vshrl.u32 %v736, 16
      %v811 = vshll.u32 %v736, 16
      %v813 = vrot.slane %v811, 1
      %v814 = vor.u32 %v809, %v813
      %v816 = vshll.u32 %v752, 16
      %v818 = vrot.slane %v816, 1
      %v819 = vsel %vm775, %v814, %v818
      %v821 = vshrl.u32 %v737, 16
      %v823 = vshll.u32 %v737, 16
      %v825 = vrot.slane %v823, 1
      %v826 = vor.u32 %v821, %v825
      %v828 = vshll.u32 %v753, 16
      %v830 = vrot.slane %v828, 1
      %v831 = vsel %vm775, %v826, %v830
      %v833 = vshrl.u32 %v738, 16
      %v835 = vshll.u32 %v738, 16
      %v837 = vrot.slane %v835, 1
      %v838 = vor.u32 %v833, %v837
      %v840 = vshll.u32 %v754, 16
      %v842 = vrot.slane %v840, 1
      %v843 = vsel %vm775, %v838, %v842
      %v845 = vshrl.u32 %v739, 16
      %v847 = vshll.u32 %v739, 16
      %v849 = vrot.slane %v847, 1
      %v850 = vor.u32 %v845, %v849
      %v852 = vshll.u32 %v755, 16
      %v854 = vrot.slane %v852, 1
      %v855 = vsel %vm775, %v850, %v854
      %v857 = vshrl.u32 %v740, 16
      %v859 = vshll.u32 %v740, 16
      %v861 = vrot.slane %v859, 1
      %v862 = vor.u32 %v857, %v861
      %v864 = vshll.u32 %v756, 16
      %v866 = vrot.slane %v864, 1
      %v867 = vsel %vm775, %v862, %v866
      %868 = vrot.lane.b32.xlu0 %v783, 4
      %v869 = vpop.permute.xlu0 %868
      %870 = vrot.lane.b32.xlu0 %v795, 4
      %v871 = vpop.permute.xlu0 %870
      %872 = vrot.lane.b32.xlu0 %v807, 4
      %v873 = vpop.permute.xlu0 %872
      %874 = vrot.lane.b32.xlu0 %v819, 4
      %v875 = vpop.permute.xlu0 %874
      %876 = vrot.lane.b32.xlu0 %v831, 4
      %v877 = vpop.permute.xlu0 %876
      %878 = vrot.lane.b32.xlu0 %v843, 4
      %v879 = vpop.permute.xlu0 %878
      %880 = vrot.lane.b32.xlu0 %v855, 4
      %v881 = vpop.permute.xlu0 %880
      %882 = vrot.lane.b32.xlu0 %v867, 4
      %v883 = vpop.permute.xlu0 %882
      %vm899 = vcmask 1046528
      %v900 = vrot.slane 0, 1
      %v901 = vsel %vm899, %v900, %v900
      %v902 = vrot.slane %v734, 1
      %v903 = vrot.slane %v750, 1
      %v904 = vsel %vm899, %v902, %v903
      %v905 = vrot.slane %v735, 1
      %v906 = vrot.slane %v751, 1
      %v907 = vsel %vm899, %v905, %v906
      %v908 = vrot.slane %v736, 1
      %v909 = vrot.slane %v752, 1
      %v910 = vsel %vm899, %v908, %v909
      %v911 = vrot.slane %v737, 1
      %v912 = vrot.slane %v753, 1
      %v913 = vsel %vm899, %v911, %v912
      %v914 = vrot.slane %v738, 1
      %v915 = vrot.slane %v754, 1
      %v916 = vsel %vm899, %v914, %v915
      %v917 = vrot.slane %v739, 1
      %v918 = vrot.slane %v755, 1
      %v919 = vsel %vm899, %v917, %v918
      %v920 = vrot.slane %v740, 1
      %v921 = vrot.slane %v756, 1
      %v922 = vsel %vm899, %v920, %v921
      %923 = vrot.lane.b32.xlu0 %v901, 8
      %v924 = vpop.permute.xlu0 %923
      %925 = vrot.lane.b32.xlu0 %v904, 8
      %v926 = vpop.permute.xlu0 %925
      %927 = vrot.lane.b32.xlu0 %v907, 8
      %v928 = vpop.permute.xlu0 %927
      %929 = vrot.lane.b32.xlu0 %v910, 8
      %v930 = vpop.permute.xlu0 %929
      %931 = vrot.lane.b32.xlu0 %v913, 8
      %v932 = vpop.permute.xlu0 %931
      %933 = vrot.lane.b32.xlu0 %v916, 8
      %v934 = vpop.permute.xlu0 %933
      %935 = vrot.lane.b32.xlu0 %v919, 8
      %v936 = vpop.permute.xlu0 %935
      %937 = vrot.lane.b32.xlu0 %v922, 8
      %v938 = vpop.permute.xlu0 %937
      %vm939 = vcmask 31744
      %v941 = vsel %vm939, 0, %v869
      %v943 = vsel %vm939, %v734, %v871
      %v945 = vsel %vm939, %v735, %v873
      %v947 = vsel %vm939, %v736, %v875
      %v949 = vsel %vm939, %v737, %v877
      %v951 = vsel %vm939, %v738, %v879
      %v953 = vsel %vm939, %v739, %v881
      %v955 = vsel %vm939, %v740, %v883
      %vm956 = vcmask 64512
      %v958 = vsel %vm956, %v941, %v924
      %v960 = vsel %vm956, %v943, %v926
      %v962 = vsel %vm956, %v945, %v928
      %v964 = vsel %vm956, %v947, %v930
      %v966 = vsel %vm956, %v949, %v932
      %v968 = vsel %vm956, %v951, %v934
      %v970 = vsel %vm956, %v953, %v936
      %v972 = vsel %vm956, %v955, %v938
      %v974 = vshrl.u32 %v741, 16
      %v976 = vshll.u32 %v741, 16
      %v978 = vrot.slane %v976, 1
      %v979 = vor.u32 %v974, %v978
      %v981 = vshll.u32 %v757, 16
      %v983 = vrot.slane %v981, 1
      %v984 = vsel %vm775, %v979, %v983
      %985 = vrot.lane.b32.xlu0 %v984, 4
      %v986 = vpop.permute.xlu0 %985
      %v989 = vrot.slane %v741, 1
      %v990 = vrot.slane %v757, 1
      %v991 = vsel %vm899, %v989, %v990
      %992 = vrot.lane.b32.xlu0 %v991, 8
      %v993 = vpop.permute.xlu0 %992
      %v995 = vsel %vm939, %v741, %v986
      %v997 = vsel %vm956, %v995, %v993
      %v1001 = vcombine.low %v769, %v770
      %v1003 = vunpack.c.l.s4 1983009808
      %v1004 = vunpack.c.0.s8 %v1003
      %v1005 = vlaneseq
      %v1006 = vshrl.u32 %v1005, 7
      %v1007 = vsub.s32 %v1004, %v1006
      %v1008 = vrot.slane %v1001, %v1007
      %v1010 = vunpack.c.l.s4 1983009808
      %v1011 = vunpack.c.0.s8 %v1010
      %v1012 = vlaneseq
      %v1013 = vshrl.u32 %v1012, 7
      %v1014 = vsub.s32 %v1011, %v1013
      %v1015 = vrot.slane %v771, %v1014
      %v1016 = vcombine.low %v1008, %v1015
      %vm1017 = vcmask 97280
      %v1018 = vsel %vm1017, %v960, 0
      %v1020 = vsel %vm1017, %v962, 0
      %v1022 = vsel %vm1017, %v964, 0
      %v1024 = vsel %vm1017, %v966, 0
      %v1026 = vsel %vm1017, %v968, 0
      %v1028 = vsel %vm1017, %v970, 0
      %v1030 = vsel %vm1017, %v972, 0
      %v1032 = vsel %vm1017, %v997, 0
      %vm1034 = vcmask 1045504
      %v1036 = vsel %vm1034, %v1016, 0
      %1038 = vmatprep.subr.bf16.mxu0 0
      %1039 = vmatpush1.bf16.msra.mxu0 %v1036
      %1040 = vmatprep.subr.bf16.mxu0 0
      %1041 = vmatpush1.bf16.msra.mxu0 0
      %1042 = vmatprep.subr.bf16.mxu0 0
      %1043 = vmatpush1.bf16.msra.mxu0 0
      %1044 = vmatprep.subr.bf16.mxu0 0
      %1045 = vmatpush1.bf16.msra.mxu0 0
      %1046 = vmatprep.subr.bf16.mxu0 0
      %1047 = vmatpush1.bf16.msra.mxu0 0
      %1048 = vmatprep.subr.bf16.mxu0 0
      %1049 = vmatpush1.bf16.msra.mxu0 0
      %1050 = vmatprep.subr.bf16.mxu0 0
      %1051 = vmatpush1.bf16.msra.mxu0 0
      %1052 = vmatprep.subr.bf16.mxu0 0
      %1053 = vmatpush1.bf16.msra.mxu0 0
      %1054 = vmatprep.subr.bf16.mxu0 0
      %1055 = vmatpush1.bf16.msra.mxu0 0
      %1056 = vmatprep.subr.bf16.mxu0 0
      %1057 = vmatpush1.bf16.msra.mxu0 0
      %1058 = vmatprep.subr.bf16.mxu0 0
      %1059 = vmatpush1.bf16.msra.mxu0 0
      %1060 = vmatprep.subr.bf16.mxu0 0
      %1061 = vmatpush1.bf16.msra.mxu0 0
      %1062 = vmatprep.subr.bf16.mxu0 0
      %1063 = vmatpush1.bf16.msra.mxu0 0
      %1064 = vmatprep.subr.bf16.mxu0 0
      %1065 = vmatpush1.bf16.msra.mxu0 0
      %1066 = vmatprep.subr.bf16.mxu0 0
      %1067 = vmatpush1.bf16.msra.mxu0 0
      %1068 = vmatprep.subr.bf16.mxu0 0
      %1069 = vmatpush1.bf16.msra.mxu0 0
      %1070 = vmatprep.mubr.bf16.mxu0 0
      %1071 = vmatmul.mubr.bf16.gmra.mrb[0].mxu0 %v1018
      %v1072 = vpop.f32.mrb[0].mxu0
      %v1073 = vadd.f32 0.0, %v1072
      %v1074 = vpop.f32.mrb[0].mxu0
      %v1075 = vpop.f32.mrb[0].mxu0
      %v1076 = vadd.f32 0.0, %v1075
      %v1077 = vpop.f32.mrb[0].mxu0
      %1078 = vmatprep.mubr.bf16.mxu0 0
      %1079 = vmatmul.mubr.bf16.gmra.mrb[0].mxu0 %v1020
      %v1080 = vpop.f32.mrb[0].mxu0
      %v1081 = vadd.f32 0.0, %v1080
      %v1082 = vpop.f32.mrb[0].mxu0
      %v1083 = vpop.f32.mrb[0].mxu0
      %v1084 = vadd.f32 0.0, %v1083
      %v1085 = vpop.f32.mrb[0].mxu0
      %1086 = vmatprep.mubr.bf16.mxu0 0
      %1087 = vmatmul.mubr.bf16.gmra.mrb[0].mxu0 %v1022
      %v1088 = vpop.f32.mrb[0].mxu0
      %v1089 = vadd.f32 0.0, %v1088
      %v1090 = vpop.f32.mrb[0].mxu0
      %v1091 = vpop.f32.mrb[0].mxu0
      %v1092 = vadd.f32 0.0, %v1091
      %v1093 = vpop.f32.mrb[0].mxu0
      %1094 = vmatprep.mubr.bf16.mxu0 0
      %1095 = vmatmul.mubr.bf16.gmra.mrb[0].mxu0 %v1024
      %v1096 = vpop.f32.mrb[0].mxu0
      %v1097 = vadd.f32 0.0, %v1096
      %v1098 = vpop.f32.mrb[0].mxu0
      %v1099 = vpop.f32.mrb[0].mxu0
      %v1100 = vadd.f32 0.0, %v1099
      %v1101 = vpop.f32.mrb[0].mxu0
      %1102 = vmatprep.mubr.bf16.mxu0 0
      %1103 = vmatmul.mubr.bf16.gmra.mrb[0].mxu0 %v1026
      %v1104 = vpop.f32.mrb[0].mxu0
      %v1105 = vadd.f32 0.0, %v1104
      %v1106 = vpop.f32.mrb[0].mxu0
      %v1107 = vpop.f32.mrb[0].mxu0
      %v1108 = vadd.f32 0.0, %v1107
      %v1109 = vpop.f32.mrb[0].mxu0
      %1110 = vmatprep.mubr.bf16.mxu0 0
      %1111 = vmatmul.mubr.bf16.gmra.mrb[0].mxu0 %v1028
      %v1112 = vpop.f32.mrb[0].mxu0
      %v1113 = vadd.f32 0.0, %v1112
      %v1114 = vpop.f32.mrb[0].mxu0
      %v1115 = vpop.f32.mrb[0].mxu0
      %v1116 = vadd.f32 0.0, %v1115
      %v1117 = vpop.f32.mrb[0].mxu0
      %1118 = vmatprep.mubr.bf16.mxu0 0
      %1119 = vmatmul.mubr.bf16.gmra.mrb[0].mxu0 %v1030
      %v1120 = vpop.f32.mrb[0].mxu0
      %v1121 = vadd.f32 0.0, %v1120
      %v1122 = vpop.f32.mrb[0].mxu0
      %v1123 = vpop.f32.mrb[0].mxu0
      %v1124 = vadd.f32 0.0, %v1123
      %v1125 = vpop.f32.mrb[0].mxu0
      %1126 = vmatprep.mubr.bf16.mxu0 0
      %1127 = vmatmul.mubr.bf16.gmra.mrb[0].mxu0 %v1032
      %v1128 = vpop.f32.mrb[0].mxu0
      %v1129 = vadd.f32 0.0, %v1128
      %v1130 = vpop.f32.mrb[0].mxu0
      %v1131 = vpop.f32.mrb[0].mxu0
      %v1132 = vadd.f32 0.0, %v1131
      %v1133 = vpop.f32.mrb[0].mxu0
      %1134 = vdwg.mxu0
      %v1138 = vcombine.low %v766, %v767
      %v1140 = vunpack.c.l.s4 1983009808
      %v1141 = vunpack.c.0.s8 %v1140
      %v1142 = vlaneseq
      %v1143 = vshrl.u32 %v1142, 7
      %v1144 = vsub.s32 %v1141, %v1143
      %v1145 = vrot.slane %v1138, %v1144
      %v1147 = vunpack.c.l.s4 1983009808
      %v1148 = vunpack.c.0.s8 %v1147
      %v1149 = vlaneseq
      %v1150 = vshrl.u32 %v1149, 7
      %v1151 = vsub.s32 %v1148, %v1150
      %v1152 = vrot.slane %v768, %v1151
      %v1153 = vcombine.low %v1145, %v1152
      %v1154 = vsel %vm1017, %v958, 0
      %v1157 = vsel %vm1034, %v1153, 0
      %1159 = vmatprep.subr.bf16.mxu0 0
      %1160 = vmatpush1.bf16.msra.mxu0 %v1157
      %1161 = vmatprep.subr.bf16.mxu0 0
      %1162 = vmatpush1.bf16.msra.mxu0 0
      %1163 = vmatprep.subr.bf16.mxu0 0
      %1164 = vmatpush1.bf16.msra.mxu0 0
      %1165 = vmatprep.subr.bf16.mxu0 0
      %1166 = vmatpush1.bf16.msra.mxu0 0
      %1167 = vmatprep.subr.bf16.mxu0 0
      %1168 = vmatpush1.bf16.msra.mxu0 0
      %1169 = vmatprep.subr.bf16.mxu0 0
      %1170 = vmatpush1.bf16.msra.mxu0 0
      %1171 = vmatprep.subr.bf16.mxu0 0
      %1172 = vmatpush1.bf16.msra.mxu0 0
      %1173 = vmatprep.subr.bf16.mxu0 0
      %1174 = vmatpush1.bf16.msra.mxu0 0
      %1175 = vmatprep.subr.bf16.mxu0 0
      %1176 = vmatpush1.bf16.msra.mxu0 0
      %1177 = vmatprep.subr.bf16.mxu0 0
      %1178 = vmatpush1.bf16.msra.mxu0 0
      %1179 = vmatprep.subr.bf16.mxu0 0
      %1180 = vmatpush1.bf16.msra.mxu0 0
      %1181 = vmatprep.subr.bf16.mxu0 0
      %1182 = vmatpush1.bf16.msra.mxu0 0
      %1183 = vmatprep.subr.bf16.mxu0 0
      %1184 = vmatpush1.bf16.msra.mxu0 0
      %1185 = vmatprep.subr.bf16.mxu0 0
      %1186 = vmatpush1.bf16.msra.mxu0 0
      %1187 = vmatprep.subr.bf16.mxu0 0
      %1188 = vmatpush1.bf16.msra.mxu0 0
      %1189 = vmatprep.subr.bf16.mxu0 0
      %1190 = vmatpush1.bf16.msra.mxu0 0
      %1191 = vmatprep.mubr.bf16.mxu0 0
      %1192 = vmatmul.mubr.bf16.gmra.mrb[0].mxu0 %v1154
      %v1193 = vpop.f32.mrb[0].mxu0
      %v1194 = vadd.f32 %v1073, %v1193
      %v1195 = vpop.f32.mrb[0].mxu0
      %v1196 = vpop.f32.mrb[0].mxu0
      %v1197 = vadd.f32 %v1076, %v1196
      %v1198 = vpop.f32.mrb[0].mxu0
      %1199 = vmatprep.mubr.bf16.mxu0 0
      %1200 = vmatmul.mubr.bf16.gmra.mrb[0].mxu0 %v1018
      %v1201 = vpop.f32.mrb[0].mxu0
      %v1202 = vadd.f32 %v1081, %v1201
      %v1203 = vpop.f32.mrb[0].mxu0
      %v1204 = vpop.f32.mrb[0].mxu0
      %v1205 = vadd.f32 %v1084, %v1204
      %v1206 = vpop.f32.mrb[0].mxu0
      %1207 = vmatprep.mubr.bf16.mxu0 0
      %1208 = vmatmul.mubr.bf16.gmra.mrb[0].mxu0 %v1020
      %v1209 = vpop.f32.mrb[0].mxu0
      %v1210 = vadd.f32 %v1089, %v1209
      %v1211 = vpop.f32.mrb[0].mxu0
      %v1212 = vpop.f32.mrb[0].mxu0
      %v1213 = vadd.f32 %v1092, %v1212
      %v1214 = vpop.f32.mrb[0].mxu0
      %1215 = vmatprep.mubr.bf16.mxu0 0
      %1216 = vmatmul.mubr.bf16.gmra.mrb[0].mxu0 %v1022
      %v1217 = vpop.f32.mrb[0].mxu0
      %v1218 = vadd.f32 %v1097, %v1217
      %v1219 = vpop.f32.mrb[0].mxu0
      %v1220 = vpop.f32.mrb[0].mxu0
      %v1221 = vadd.f32 %v1100, %v1220
      %v1222 = vpop.f32.mrb[0].mxu0
      %1223 = vmatprep.mubr.bf16.mxu0 0
      %1224 = vmatmul.mubr.bf16.gmra.mrb[0].mxu0 %v1024
      %v1225 = vpop.f32.mrb[0].mxu0
      %v1226 = vadd.f32 %v1105, %v1225
      %v1227 = vpop.f32.mrb[0].mxu0
      %v1228 = vpop.f32.mrb[0].mxu0
      %v1229 = vadd.f32 %v1108, %v1228
      %v1230 = vpop.f32.mrb[0].mxu0
      %1231 = vmatprep.mubr.bf16.mxu0 0
      %1232 = vmatmul.mubr.bf16.gmra.mrb[0].mxu0 %v1026
      %v1233 = vpop.f32.mrb[0].mxu0
      %v1234 = vadd.f32 %v1113, %v1233
      %v1235 = vpop.f32.mrb[0].mxu0
      %v1236 = vpop.f32.mrb[0].mxu0
      %v1237 = vadd.f32 %v1116, %v1236
      %v1238 = vpop.f32.mrb[0].mxu0
      %1239 = vmatprep.mubr.bf16.mxu0 0
      %1240 = vmatmul.mubr.bf16.gmra.mrb[0].mxu0 %v1028
      %v1241 = vpop.f32.mrb[0].mxu0
      %v1242 = vadd.f32 %v1121, %v1241
      %v1243 = vpop.f32.mrb[0].mxu0
      %v1244 = vpop.f32.mrb[0].mxu0
      %v1245 = vadd.f32 %v1124, %v1244
      %v1246 = vpop.f32.mrb[0].mxu0
      %1247 = vmatprep.mubr.bf16.mxu0 0
      %1248 = vmatmul.mubr.bf16.gmra.mrb[0].mxu0 %v1030
      %v1249 = vpop.f32.mrb[0].mxu0
      %v1250 = vadd.f32 %v1129, %v1249
      %v1251 = vpop.f32.mrb[0].mxu0
      %v1252 = vpop.f32.mrb[0].mxu0
      %v1253 = vadd.f32 %v1132, %v1252
      %v1254 = vpop.f32.mrb[0].mxu0
      %1255 = vdwg.mxu0
      %v1257 = vshrl.u32 %v742, 16
      %v1259 = vshll.u32 %v742, 16
      %v1261 = vrot.slane %v1259, 1
      %v1262 = vor.u32 %v1257, %v1261
      %v1264 = vshll.u32 %v758, 16
      %v1266 = vrot.slane %v1264, 1
      %v1267 = vsel %vm775, %v1262, %v1266
      %1268 = vrot.lane.b32.xlu0 %v1267, 4
      %v1269 = vpop.permute.xlu0 %1268
      %v1272 = vrot.slane %v742, 1
      %v1273 = vrot.slane %v758, 1
      %v1274 = vsel %vm899, %v1272, %v1273
      %1275 = vrot.lane.b32.xlu0 %v1274, 8
      %v1276 = vpop.permute.xlu0 %1275
      %v1278 = vsel %vm939, %v742, %v1269
      %v1280 = vsel %vm956, %v1278, %v1276
      %v1284 = vcombine.low %v772, %v773
      %v1286 = vunpack.c.l.s4 1983009808
      %v1287 = vunpack.c.0.s8 %v1286
      %v1288 = vlaneseq
      %v1289 = vshrl.u32 %v1288, 7
      %v1290 = vsub.s32 %v1287, %v1289
      %v1291 = vrot.slane %v1284, %v1290
      %v1293 = vunpack.c.l.s4 1983009808
      %v1294 = vunpack.c.0.s8 %v1293
      %v1295 = vlaneseq
      %v1296 = vshrl.u32 %v1295, 7
      %v1297 = vsub.s32 %v1294, %v1296
      %v1298 = vrot.slane %v774, %v1297
      %v1299 = vcombine.low %v1291, %v1298
      %v1300 = vsel %vm1017, %v1280, 0
      %v1303 = vsel %vm1034, %v1299, 0
      %1305 = vmatprep.subr.bf16.mxu0 0
      %1306 = vmatpush1.bf16.msra.mxu0 %v1303
      %1307 = vmatprep.subr.bf16.mxu0 0
      %1308 = vmatpush1.bf16.msra.mxu0 0
      %1309 = vmatprep.subr.bf16.mxu0 0
      %1310 = vmatpush1.bf16.msra.mxu0 0
      %1311 = vmatprep.subr.bf16.mxu0 0
      %1312 = vmatpush1.bf16.msra.mxu0 0
      %1313 = vmatprep.subr.bf16.mxu0 0
      %1314 = vmatpush1.bf16.msra.mxu0 0
      %1315 = vmatprep.subr.bf16.mxu0 0
      %1316 = vmatpush1.bf16.msra.mxu0 0
      %1317 = vmatprep.subr.bf16.mxu0 0
      %1318 = vmatpush1.bf16.msra.mxu0 0
      %1319 = vmatprep.subr.bf16.mxu0 0
      %1320 = vmatpush1.bf16.msra.mxu0 0
      %1321 = vmatprep.subr.bf16.mxu0 0
      %1322 = vmatpush1.bf16.msra.mxu0 0
      %1323 = vmatprep.subr.bf16.mxu0 0
      %1324 = vmatpush1.bf16.msra.mxu0 0
      %1325 = vmatprep.subr.bf16.mxu0 0
      %1326 = vmatpush1.bf16.msra.mxu0 0
      %1327 = vmatprep.subr.bf16.mxu0 0
      %1328 = vmatpush1.bf16.msra.mxu0 0
      %1329 = vmatprep.subr.bf16.mxu0 0
      %1330 = vmatpush1.bf16.msra.mxu0 0
      %1331 = vmatprep.subr.bf16.mxu0 0
      %1332 = vmatpush1.bf16.msra.mxu0 0
      %1333 = vmatprep.subr.bf16.mxu0 0
      %1334 = vmatpush1.bf16.msra.mxu0 0
      %1335 = vmatprep.subr.bf16.mxu0 0
      %1336 = vmatpush1.bf16.msra.mxu0 0
      %1337 = vmatprep.mubr.bf16.mxu0 0
      %1338 = vmatmul.mubr.bf16.gmra.mrb[0].mxu0 %v1020
      %v1339 = vpop.f32.mrb[0].mxu0
      %v1340 = vadd.f32 0.0, %v1339
      %v1341 = vpop.f32.mrb[0].mxu0
      %v1342 = vpop.f32.mrb[0].mxu0
      %v1343 = vadd.f32 0.0, %v1342
      %v1344 = vpop.f32.mrb[0].mxu0
      %1345 = vmatprep.mubr.bf16.mxu0 0
      %1346 = vmatmul.mubr.bf16.gmra.mrb[0].mxu0 %v1022
      %v1347 = vpop.f32.mrb[0].mxu0
      %v1348 = vadd.f32 0.0, %v1347
      %v1349 = vpop.f32.mrb[0].mxu0
      %v1350 = vpop.f32.mrb[0].mxu0
      %v1351 = vadd.f32 0.0, %v1350
      %v1352 = vpop.f32.mrb[0].mxu0
      %1353 = vmatprep.mubr.bf16.mxu0 0
      %1354 = vmatmul.mubr.bf16.gmra.mrb[0].mxu0 %v1024
      %v1355 = vpop.f32.mrb[0].mxu0
      %v1356 = vadd.f32 0.0, %v1355
      %v1357 = vpop.f32.mrb[0].mxu0
      %v1358 = vpop.f32.mrb[0].mxu0
      %v1359 = vadd.f32 0.0, %v1358
      %v1360 = vpop.f32.mrb[0].mxu0
      %1361 = vmatprep.mubr.bf16.mxu0 0
      %1362 = vmatmul.mubr.bf16.gmra.mrb[0].mxu0 %v1026
      %v1363 = vpop.f32.mrb[0].mxu0
      %v1364 = vadd.f32 0.0, %v1363
      %v1365 = vpop.f32.mrb[0].mxu0
      %v1366 = vpop.f32.mrb[0].mxu0
      %v1367 = vadd.f32 0.0, %v1366
      %v1368 = vpop.f32.mrb[0].mxu0
      %1369 = vmatprep.mubr.bf16.mxu0 0
      %1370 = vmatmul.mubr.bf16.gmra.mrb[0].mxu0 %v1028
      %v1371 = vpop.f32.mrb[0].mxu0
      %v1372 = vadd.f32 0.0, %v1371
      %v1373 = vpop.f32.mrb[0].mxu0
      %v1374 = vpop.f32.mrb[0].mxu0
      %v1375 = vadd.f32 0.0, %v1374
      %v1376 = vpop.f32.mrb[0].mxu0
      %1377 = vmatprep.mubr.bf16.mxu0 0
      %1378 = vmatmul.mubr.bf16.gmra.mrb[0].mxu0 %v1030
      %v1379 = vpop.f32.mrb[0].mxu0
      %v1380 = vadd.f32 0.0, %v1379
      %v1381 = vpop.f32.mrb[0].mxu0
      %v1382 = vpop.f32.mrb[0].mxu0
      %v1383 = vadd.f32 0.0, %v1382
      %v1384 = vpop.f32.mrb[0].mxu0
      %1385 = vmatprep.mubr.bf16.mxu0 0
      %1386 = vmatmul.mubr.bf16.gmra.mrb[0].mxu0 %v1032
      %v1387 = vpop.f32.mrb[0].mxu0
      %v1388 = vadd.f32 0.0, %v1387
      %v1389 = vpop.f32.mrb[0].mxu0
      %v1390 = vpop.f32.mrb[0].mxu0
      %v1391 = vadd.f32 0.0, %v1390
      %v1392 = vpop.f32.mrb[0].mxu0
      %1393 = vmatprep.mubr.bf16.mxu0 0
      %1394 = vmatmul.mubr.bf16.gmra.mrb[0].mxu0 %v1300
      %v1395 = vpop.f32.mrb[0].mxu0
      %v1396 = vadd.f32 0.0, %v1395
      %v1397 = vpop.f32.mrb[0].mxu0
      %v1398 = vpop.f32.mrb[0].mxu0
      %v1399 = vadd.f32 0.0, %v1398
      %v1400 = vpop.f32.mrb[0].mxu0
      %1401 = vdwg.mxu0
      %v1402 = vadd.f32 %v1194, %v1340
      %v1403 = vadd.f32 %v1197, %v1343
      %v1404 = vadd.f32 %v1202, %v1348
      %v1405 = vadd.f32 %v1205, %v1351
      %v1406 = vadd.f32 %v1210, %v1356
      %v1407 = vadd.f32 %v1213, %v1359
      %v1408 = vadd.f32 %v1218, %v1364
      %v1409 = vadd.f32 %v1221, %v1367
      %v1410 = vadd.f32 %v1226, %v1372
      %v1411 = vadd.f32 %v1229, %v1375
      %v1412 = vadd.f32 %v1234, %v1380
      %v1413 = vadd.f32 %v1237, %v1383
      %v1414 = vadd.f32 %v1242, %v1388
      %v1415 = vadd.f32 %v1245, %v1391
      %v1416 = vadd.f32 %v1250, %v1396
      %v1417 = vadd.f32 %v1253, %v1399
      %v1418 = vpack.c.bf16 %v1403, %v1402
      %v1419 = vpack.c.bf16 %v1405, %v1404
      %v1420 = vpack.c.bf16 %v1407, %v1406
      %v1421 = vpack.c.bf16 %v1409, %v1408
      %v1422 = vpack.c.bf16 %v1411, %v1410
      %v1423 = vpack.c.bf16 %v1413, %v1412
      %v1424 = vpack.c.bf16 %v1415, %v1414
      %v1425 = vpack.c.bf16 %v1417, %v1416
      %v1434 = vunpack.c.l.b16 %v1418
      %v1435 = vunpack.c.h.b16 %v1418
      %v1436 = vunpack.c.l.b16 %v1419
      %v1437 = vunpack.c.h.b16 %v1419
      %v1438 = vunpack.c.l.b16 %v1420
      %v1439 = vunpack.c.h.b16 %v1420
      %v1440 = vunpack.c.l.b16 %v1421
      %v1441 = vunpack.c.h.b16 %v1421
      %v1442 = vunpack.c.l.b16 %v1422
      %v1443 = vunpack.c.h.b16 %v1422
      %v1444 = vunpack.c.l.b16 %v1423
      %v1445 = vunpack.c.h.b16 %v1423
      %v1446 = vunpack.c.l.b16 %v1424
      %v1447 = vunpack.c.h.b16 %v1424
      %v1448 = vunpack.c.l.b16 %v1425
      %v1449 = vunpack.c.h.b16 %v1425
      %v1450 = vpack.c.b16 %v1434, %v1434
      %v1451 = vpack.c.b16 %v1435, %v1435
      %v1452 = vpack.c.b16 %v1436, %v1436
      %v1453 = vpack.c.b16 %v1437, %v1437
      %v1454 = vpack.c.b16 %v1438, %v1438
      %v1455 = vpack.c.b16 %v1439, %v1439
      %v1456 = vpack.c.b16 %v1440, %v1440
      %v1457 = vpack.c.b16 %v1441, %v1441
      %v1458 = vpack.c.b16 %v1442, %v1442
      %v1459 = vpack.c.b16 %v1443, %v1443
      %v1460 = vpack.c.b16 %v1444, %v1444
      %v1461 = vpack.c.b16 %v1445, %v1445
      %v1462 = vpack.c.b16 %v1446, %v1446
      %v1463 = vpack.c.b16 %v1447, %v1447
      %v1464 = vpack.c.b16 %v1448, %v1448
      %v1465 = vpack.c.b16 %v1449, %v1449
      %vm1482 = vcmask 60416
      %1483 = vst.msk [vmem:[%s352] sm:$0xf] %vm1482, %v1450
      %1484 = vst.msk [vmem:[%s352 + $0x4] sm:$0xf] %vm1482, %v1451
      %1485 = vst.msk [vmem:[%s352 + $0x8] sm:$0xf] %vm1482, %v1452
      %1486 = vst.msk [vmem:[%s352 + $0xc] sm:$0xf] %vm1482, %v1453
      %1487 = vst.msk [vmem:[%s352 + $0x10] sm:$0xf] %vm1482, %v1454
      %1488 = vst.msk [vmem:[%s352 + $0x14] sm:$0xf] %vm1482, %v1455
      %1489 = vst.msk [vmem:[%s352 + $0x18] sm:$0xf] %vm1482, %v1456
      %1490 = vst.msk [vmem:[%s352 + $0x1c] sm:$0xf] %vm1482, %v1457
      %1491 = vst.msk [vmem:[%s352 + $0x20] sm:$0xf] %vm1482, %v1458
      %1492 = vst.msk [vmem:[%s352 + $0x24] sm:$0xf] %vm1482, %v1459
      %1493 = vst.msk [vmem:[%s352 + $0x28] sm:$0xf] %vm1482, %v1460
      %1494 = vst.msk [vmem:[%s352 + $0x2c] sm:$0xf] %vm1482, %v1461
      %1495 = vst.msk [vmem:[%s352 + $0x30] sm:$0xf] %vm1482, %v1462
      %1496 = vst.msk [vmem:[%s352 + $0x34] sm:$0xf] %vm1482, %v1463
      %1497 = vst.msk [vmem:[%s352 + $0x38] sm:$0xf] %vm1482, %v1464
      %1498 = vst.msk [vmem:[%s352 + $0x3c] sm:$0xf] %vm1482, %v1465
      %v1499 = vsel %vm956, %v1402, 0.0
      %v1500 = vsel %vm956, %v1403, 0.0
      %v1501 = vadd.f32 %v1499, %v1500
      %v1502 = vsel %vm956, %v1404, 0.0
      %v1503 = vadd.f32 %v1501, %v1502
      %v1504 = vsel %vm956, %v1405, 0.0
      %v1505 = vadd.f32 %v1503, %v1504
      %v1506 = vsel %vm956, %v1406, 0.0
      %v1507 = vadd.f32 %v1505, %v1506
      %v1508 = vsel %vm956, %v1407, 0.0
      %v1509 = vadd.f32 %v1507, %v1508
      %v1510 = vsel %vm956, %v1408, 0.0
      %v1511 = vadd.f32 %v1509, %v1510
      %v1512 = vsel %vm956, %v1409, 0.0
      %v1513 = vadd.f32 %v1511, %v1512
      %v1514 = vsel %vm956, %v1410, 0.0
      %v1515 = vadd.f32 %v1513, %v1514
      %v1516 = vsel %vm956, %v1411, 0.0
      %v1517 = vadd.f32 %v1515, %v1516
      %v1518 = vsel %vm956, %v1412, 0.0
      %v1519 = vadd.f32 %v1517, %v1518
      %v1520 = vsel %vm956, %v1413, 0.0
      %v1521 = vadd.f32 %v1519, %v1520
      %v1522 = vsel %vm956, %v1414, 0.0
      %v1523 = vadd.f32 %v1521, %v1522
      %v1524 = vsel %vm956, %v1415, 0.0
      %v1525 = vadd.f32 %v1523, %v1524
      %v1526 = vsel %vm956, %v1416, 0.0
      %v1527 = vadd.f32 %v1525, %v1526
      %v1528 = vsel %vm956, %v1417, 0.0
      %v1529 = vadd.f32 %v1527, %v1528
      %v1530 = vrot.slane %v1529, 4
      %v1531 = vadd.f32 %v1529, %v1530
      %v1532 = vrot.slane %v1531, 2
      %v1533 = vadd.f32 %v1531, %v1532
      %v1534 = vrot.slane %v1533, 1
      %v1535 = vadd.f32 %v1533, %v1534
      %v1536 = vmul.f32 %v1402, %v1402
      %v1537 = vmul.f32 %v1403, %v1403
      %v1538 = vmul.f32 %v1404, %v1404
      %v1539 = vmul.f32 %v1405, %v1405
      %v1540 = vmul.f32 %v1406, %v1406
      %v1541 = vmul.f32 %v1407, %v1407
      %v1542 = vmul.f32 %v1408, %v1408
      %v1543 = vmul.f32 %v1409, %v1409
      %v1544 = vmul.f32 %v1410, %v1410
      %v1545 = vmul.f32 %v1411, %v1411
      %v1546 = vmul.f32 %v1412, %v1412
      %v1547 = vmul.f32 %v1413, %v1413
      %v1548 = vmul.f32 %v1414, %v1414
      %v1549 = vmul.f32 %v1415, %v1415
      %v1550 = vmul.f32 %v1416, %v1416
      %v1551 = vmul.f32 %v1417, %v1417
      %v1552 = vsel %vm956, %v1536, 0.0
      %v1553 = vsel %vm956, %v1537, 0.0
      %v1554 = vadd.f32 %v1552, %v1553
      %v1555 = vsel %vm956, %v1538, 0.0
      %v1556 = vadd.f32 %v1554, %v1555
      %v1557 = vsel %vm956, %v1539, 0.0
      %v1558 = vadd.f32 %v1556, %v1557
      %v1559 = vsel %vm956, %v1540, 0.0
      %v1560 = vadd.f32 %v1558, %v1559
      %v1561 = vsel %vm956, %v1541, 0.0
      %v1562 = vadd.f32 %v1560, %v1561
      %v1563 = vsel %vm956, %v1542, 0.0
      %v1564 = vadd.f32 %v1562, %v1563
      %v1565 = vsel %vm956, %v1543, 0.0
      %v1566 = vadd.f32 %v1564, %v1565
      %v1567 = vsel %vm956, %v1544, 0.0
      %v1568 = vadd.f32 %v1566, %v1567
      %v1569 = vsel %vm956, %v1545, 0.0
      %v1570 = vadd.f32 %v1568, %v1569
      %v1571 = vsel %vm956, %v1546, 0.0
      %v1572 = vadd.f32 %v1570, %v1571
      %v1573 = vsel %vm956, %v1547, 0.0
      %v1574 = vadd.f32 %v1572, %v1573
      %v1575 = vsel %vm956, %v1548, 0.0
      %v1576 = vadd.f32 %v1574, %v1575
      %v1577 = vsel %vm956, %v1549, 0.0
      %v1578 = vadd.f32 %v1576, %v1577
      %v1579 = vsel %vm956, %v1550, 0.0
      %v1580 = vadd.f32 %v1578, %v1579
      %v1581 = vsel %vm956, %v1551, 0.0
      %v1582 = vadd.f32 %v1580, %v1581
      %v1583 = vrot.slane %v1582, 4
      %v1584 = vadd.f32 %v1582, %v1583
      %v1585 = vrot.slane %v1584, 2
      %v1586 = vadd.f32 %v1584, %v1585
      %v1587 = vrot.slane %v1586, 1
      %v1588 = vadd.f32 %v1586, %v1587
      %v1590 = vshrl.u32 %v743, 16
      %v1592 = vshll.u32 %v743, 16
      %v1594 = vrot.slane %v1592, 1
      %v1595 = vor.u32 %v1590, %v1594
      %v1597 = vshll.u32 %v759, 16
      %v1599 = vrot.slane %v1597, 1
      %v1600 = vsel %vm775, %v1595, %v1599
      %v1602 = vshrl.u32 %v744, 16
      %v1604 = vshll.u32 %v744, 16
      %v1606 = vrot.slane %v1604, 1
      %v1607 = vor.u32 %v1602, %v1606
      %v1609 = vshll.u32 %v760, 16
      %v1611 = vrot.slane %v1609, 1
      %v1612 = vsel %vm775, %v1607, %v1611
      %v1614 = vshrl.u32 %v745, 16
      %v1616 = vshll.u32 %v745, 16
      %v1618 = vrot.slane %v1616, 1
      %v1619 = vor.u32 %v1614, %v1618
      %v1621 = vshll.u32 %v761, 16
      %v1623 = vrot.slane %v1621, 1
      %v1624 = vsel %vm775, %v1619, %v1623
      %v1626 = vshrl.u32 %v746, 16
      %v1628 = vshll.u32 %v746, 16
      %v1630 = vrot.slane %v1628, 1
      %v1631 = vor.u32 %v1626, %v1630
      %v1633 = vshll.u32 %v762, 16
      %v1635 = vrot.slane %v1633, 1
      %v1636 = vsel %vm775, %v1631, %v1635
      %v1638 = vshrl.u32 %v747, 16
      %v1640 = vshll.u32 %v747, 16
      %v1642 = vrot.slane %v1640, 1
      %v1643 = vor.u32 %v1638, %v1642
      %v1645 = vshll.u32 %v763, 16
      %v1647 = vrot.slane %v1645, 1
      %v1648 = vsel %vm775, %v1643, %v1647
      %v1650 = vshrl.u32 %v748, 16
      %v1652 = vshll.u32 %v748, 16
      %v1654 = vrot.slane %v1652, 1
      %v1655 = vor.u32 %v1650, %v1654
      %v1657 = vshll.u32 %v764, 16
      %v1659 = vrot.slane %v1657, 1
      %v1660 = vsel %vm775, %v1655, %v1659
      %1661 = vrot.lane.b32.xlu0 %v1600, 4
      %v1662 = vpop.permute.xlu0 %1661
      %1663 = vrot.lane.b32.xlu0 %v1612, 4
      %v1664 = vpop.permute.xlu0 %1663
      %1665 = vrot.lane.b32.xlu0 %v1624, 4
      %v1666 = vpop.permute.xlu0 %1665
      %1667 = vrot.lane.b32.xlu0 %v1636, 4
      %v1668 = vpop.permute.xlu0 %1667
      %1669 = vrot.lane.b32.xlu0 %v1648, 4
      %v1670 = vpop.permute.xlu0 %1669
      %1671 = vrot.lane.b32.xlu0 %v1660, 4
      %v1672 = vpop.permute.xlu0 %1671
      %v1685 = vrot.slane %v743, 1
      %v1686 = vrot.slane %v759, 1
      %v1687 = vsel %vm899, %v1685, %v1686
      %v1688 = vrot.slane %v744, 1
      %v1689 = vrot.slane %v760, 1
      %v1690 = vsel %vm899, %v1688, %v1689
      %v1691 = vrot.slane %v745, 1
      %v1692 = vrot.slane %v761, 1
      %v1693 = vsel %vm899, %v1691, %v1692
      %v1694 = vrot.slane %v746, 1
      %v1695 = vrot.slane %v762, 1
      %v1696 = vsel %vm899, %v1694, %v1695
      %v1697 = vrot.slane %v747, 1
      %v1698 = vrot.slane %v763, 1
      %v1699 = vsel %vm899, %v1697, %v1698
      %v1700 = vrot.slane %v748, 1
      %v1701 = vrot.slane %v764, 1
      %v1702 = vsel %vm899, %v1700, %v1701
      %1703 = vrot.lane.b32.xlu0 %v1687, 8
      %v1704 = vpop.permute.xlu0 %1703
      %1705 = vrot.lane.b32.xlu0 %v1690, 8
      %v1706 = vpop.permute.xlu0 %1705
      %1707 = vrot.lane.b32.xlu0 %v1693, 8
      %v1708 = vpop.permute.xlu0 %1707
      %1709 = vrot.lane.b32.xlu0 %v1696, 8
      %v1710 = vpop.permute.xlu0 %1709
      %1711 = vrot.lane.b32.xlu0 %v1699, 8
      %v1712 = vpop.permute.xlu0 %1711
      %1713 = vrot.lane.b32.xlu0 %v1702, 8
      %v1714 = vpop.permute.xlu0 %1713
      %v1716 = vsel %vm939, %v743, %v1662
      %v1718 = vsel %vm939, %v744, %v1664
      %v1720 = vsel %vm939, %v745, %v1666
      %v1722 = vsel %vm939, %v746, %v1668
      %v1724 = vsel %vm939, %v747, %v1670
      %v1726 = vsel %vm939, %v748, %v1672
      %v1728 = vsel %vm956, %v1716, %v1704
      %v1730 = vsel %vm956, %v1718, %v1706
      %v1732 = vsel %vm956, %v1720, %v1708
      %v1734 = vsel %vm956, %v1722, %v1710
      %v1736 = vsel %vm956, %v1724, %v1712
      %v1738 = vsel %vm956, %v1726, %v1714
      %v1740 = vshrl.u32 %v749, 16
      %v1742 = vshll.u32 %v749, 16
      %v1744 = vrot.slane %v1742, 1
      %v1745 = vor.u32 %v1740, %v1744
      %v1747 = vshll.u32 %v765, 16
      %v1749 = vrot.slane %v1747, 1
      %v1750 = vsel %vm775, %v1745, %v1749
      %1751 = vrot.lane.b32.xlu0 %v1750, 4
      %v1752 = vpop.permute.xlu0 %1751
      %v1755 = vrot.slane %v749, 1
      %v1756 = vrot.slane %v765, 1
      %v1757 = vsel %vm899, %v1755, %v1756
      %1758 = vrot.lane.b32.xlu0 %v1757, 8
      %v1759 = vpop.permute.xlu0 %1758
      %v1761 = vsel %vm939, %v749, %v1752
      %v1763 = vsel %vm956, %v1761, %v1759
      %v1764 = vsel %vm1017, %v1728, 0
      %v1766 = vsel %vm1017, %v1730, 0
      %v1768 = vsel %vm1017, %v1732, 0
      %v1770 = vsel %vm1017, %v1734, 0
      %v1772 = vsel %vm1017, %v1736, 0
      %v1774 = vsel %vm1017, %v1738, 0
      %v1776 = vsel %vm1017, %v1763, 0
      %1778 = vmatprep.subr.bf16.mxu0 0
      %1779 = vmatpush1.bf16.msra.mxu0 %v1036
      %1780 = vmatprep.subr.bf16.mxu0 0
      %1781 = vmatpush1.bf16.msra.mxu0 0
      %1782 = vmatprep.subr.bf16.mxu0 0
      %1783 = vmatpush1.bf16.msra.mxu0 0
      %1784 = vmatprep.subr.bf16.mxu0 0
      %1785 = vmatpush1.bf16.msra.mxu0 0
      %1786 = vmatprep.subr.bf16.mxu0 0
      %1787 = vmatpush1.bf16.msra.mxu0 0
      %1788 = vmatprep.subr.bf16.mxu0 0
      %1789 = vmatpush1.bf16.msra.mxu0 0
      %1790 = vmatprep.subr.bf16.mxu0 0
      %1791 = vmatpush1.bf16.msra.mxu0 0
      %1792 = vmatprep.subr.bf16.mxu0 0
      %1793 = vmatpush1.bf16.msra.mxu0 0
      %1794 = vmatprep.subr.bf16.mxu0 0
      %1795 = vmatpush1.bf16.msra.mxu0 0
      %1796 = vmatprep.subr.bf16.mxu0 0
      %1797 = vmatpush1.bf16.msra.mxu0 0
      %1798 = vmatprep.subr.bf16.mxu0 0
      %1799 = vmatpush1.bf16.msra.mxu0 0
      %1800 = vmatprep.subr.bf16.mxu0 0
      %1801 = vmatpush1.bf16.msra.mxu0 0
      %1802 = vmatprep.subr.bf16.mxu0 0
      %1803 = vmatpush1.bf16.msra.mxu0 0
      %1804 = vmatprep.subr.bf16.mxu0 0
      %1805 = vmatpush1.bf16.msra.mxu0 0
      %1806 = vmatprep.subr.bf16.mxu0 0
      %1807 = vmatpush1.bf16.msra.mxu0 0
      %1808 = vmatprep.subr.bf16.mxu0 0
      %1809 = vmatpush1.bf16.msra.mxu0 0
      %1810 = vmatprep.mubr.bf16.mxu0 0
      %1811 = vmatmul.mubr.bf16.gmra.mrb[0].mxu0 %v1300
      %v1812 = vpop.f32.mrb[0].mxu0
      %v1813 = vadd.f32 0.0, %v1812
      %v1814 = vpop.f32.mrb[0].mxu0
      %v1815 = vpop.f32.mrb[0].mxu0
      %v1816 = vadd.f32 0.0, %v1815
      %v1817 = vpop.f32.mrb[0].mxu0
      %1818 = vmatprep.mubr.bf16.mxu0 0
      %1819 = vmatmul.mubr.bf16.gmra.mrb[0].mxu0 %v1764
      %v1820 = vpop.f32.mrb[0].mxu0
      %v1821 = vadd.f32 0.0, %v1820
      %v1822 = vpop.f32.mrb[0].mxu0
      %v1823 = vpop.f32.mrb[0].mxu0
      %v1824 = vadd.f32 0.0, %v1823
      %v1825 = vpop.f32.mrb[0].mxu0
      %1826 = vmatprep.mubr.bf16.mxu0 0
      %1827 = vmatmul.mubr.bf16.gmra.mrb[0].mxu0 %v1766
      %v1828 = vpop.f32.mrb[0].mxu0
      %v1829 = vadd.f32 0.0, %v1828
      %v1830 = vpop.f32.mrb[0].mxu0
      %v1831 = vpop.f32.mrb[0].mxu0
      %v1832 = vadd.f32 0.0, %v1831
      %v1833 = vpop.f32.mrb[0].mxu0
      %1834 = vmatprep.mubr.bf16.mxu0 0
      %1835 = vmatmul.mubr.bf16.gmra.mrb[0].mxu0 %v1768
      %v1836 = vpop.f32.mrb[0].mxu0
      %v1837 = vadd.f32 0.0, %v1836
      %v1838 = vpop.f32.mrb[0].mxu0
      %v1839 = vpop.f32.mrb[0].mxu0
      %v1840 = vadd.f32 0.0, %v1839
      %v1841 = vpop.f32.mrb[0].mxu0
      %1842 = vmatprep.mubr.bf16.mxu0 0
      %1843 = vmatmul.mubr.bf16.gmra.mrb[0].mxu0 %v1770
      %v1844 = vpop.f32.mrb[0].mxu0
      %v1845 = vadd.f32 0.0, %v1844
      %v1846 = vpop.f32.mrb[0].mxu0
      %v1847 = vpop.f32.mrb[0].mxu0
      %v1848 = vadd.f32 0.0, %v1847
      %v1849 = vpop.f32.mrb[0].mxu0
      %1850 = vmatprep.mubr.bf16.mxu0 0
      %1851 = vmatmul.mubr.bf16.gmra.mrb[0].mxu0 %v1772
      %v1852 = vpop.f32.mrb[0].mxu0
      %v1853 = vadd.f32 0.0, %v1852
      %v1854 = vpop.f32.mrb[0].mxu0
      %v1855 = vpop.f32.mrb[0].mxu0
      %v1856 = vadd.f32 0.0, %v1855
      %v1857 = vpop.f32.mrb[0].mxu0
      %1858 = vmatprep.mubr.bf16.mxu0 0
      %1859 = vmatmul.mubr.bf16.gmra.mrb[0].mxu0 %v1774
      %v1860 = vpop.f32.mrb[0].mxu0
      %v1861 = vadd.f32 0.0, %v1860
      %v1862 = vpop.f32.mrb[0].mxu0
      %v1863 = vpop.f32.mrb[0].mxu0
      %v1864 = vadd.f32 0.0, %v1863
      %v1865 = vpop.f32.mrb[0].mxu0
      %1866 = vmatprep.mubr.bf16.mxu0 0
      %1867 = vmatmul.mubr.bf16.gmra.mrb[0].mxu0 %v1776
      %v1868 = vpop.f32.mrb[0].mxu0
      %v1869 = vadd.f32 0.0, %v1868
      %v1870 = vpop.f32.mrb[0].mxu0
      %v1871 = vpop.f32.mrb[0].mxu0
      %v1872 = vadd.f32 0.0, %v1871
      %v1873 = vpop.f32.mrb[0].mxu0
      %1874 = vdwg.mxu0
      %1875 = vmatprep.subr.bf16.mxu0 0
      %1876 = vmatpush1.bf16.msra.mxu0 %v1157
      %1877 = vmatprep.subr.bf16.mxu0 0
      %1878 = vmatpush1.bf16.msra.mxu0 0
      %1879 = vmatprep.subr.bf16.mxu0 0
      %1880 = vmatpush1.bf16.msra.mxu0 0
      %1881 = vmatprep.subr.bf16.mxu0 0
      %1882 = vmatpush1.bf16.msra.mxu0 0
      %1883 = vmatprep.subr.bf16.mxu0 0
      %1884 = vmatpush1.bf16.msra.mxu0 0
      %1885 = vmatprep.subr.bf16.mxu0 0
      %1886 = vmatpush1.bf16.msra.mxu0 0
      %1887 = vmatprep.subr.bf16.mxu0 0
      %1888 = vmatpush1.bf16.msra.mxu0 0
      %1889 = vmatprep.subr.bf16.mxu0 0
      %1890 = vmatpush1.bf16.msra.mxu0 0
      %1891 = vmatprep.subr.bf16.mxu0 0
      %1892 = vmatpush1.bf16.msra.mxu0 0
      %1893 = vmatprep.subr.bf16.mxu0 0
      %1894 = vmatpush1.bf16.msra.mxu0 0
      %1895 = vmatprep.subr.bf16.mxu0 0
      %1896 = vmatpush1.bf16.msra.mxu0 0
      %1897 = vmatprep.subr.bf16.mxu0 0
      %1898 = vmatpush1.bf16.msra.mxu0 0
      %1899 = vmatprep.subr.bf16.mxu0 0
      %1900 = vmatpush1.bf16.msra.mxu0 0
      %1901 = vmatprep.subr.bf16.mxu0 0
      %1902 = vmatpush1.bf16.msra.mxu0 0
      %1903 = vmatprep.subr.bf16.mxu0 0
      %1904 = vmatpush1.bf16.msra.mxu0 0
      %1905 = vmatprep.subr.bf16.mxu0 0
      %1906 = vmatpush1.bf16.msra.mxu0 0
      %1907 = vmatprep.mubr.bf16.mxu0 0
      %1908 = vmatmul.mubr.bf16.gmra.mrb[0].mxu0 %v1032
      %v1909 = vpop.f32.mrb[0].mxu0
      %v1910 = vadd.f32 %v1813, %v1909
      %v1911 = vpop.f32.mrb[0].mxu0
      %v1912 = vpop.f32.mrb[0].mxu0
      %v1913 = vadd.f32 %v1816, %v1912
      %v1914 = vpop.f32.mrb[0].mxu0
      %1915 = vmatprep.mubr.bf16.mxu0 0
      %1916 = vmatmul.mubr.bf16.gmra.mrb[0].mxu0 %v1300
      %v1917 = vpop.f32.mrb[0].mxu0
      %v1918 = vadd.f32 %v1821, %v1917
      %v1919 = vpop.f32.mrb[0].mxu0
      %v1920 = vpop.f32.mrb[0].mxu0
      %v1921 = vadd.f32 %v1824, %v1920
      %v1922 = vpop.f32.mrb[0].mxu0
      %1923 = vmatprep.mubr.bf16.mxu0 0
      %1924 = vmatmul.mubr.bf16.gmra.mrb[0].mxu0 %v1764
      %v1925 = vpop.f32.mrb[0].mxu0
      %v1926 = vadd.f32 %v1829, %v1925
      %v1927 = vpop.f32.mrb[0].mxu0
      %v1928 = vpop.f32.mrb[0].mxu0
      %v1929 = vadd.f32 %v1832, %v1928
      %v1930 = vpop.f32.mrb[0].mxu0
      %1931 = vmatprep.mubr.bf16.mxu0 0
      %1932 = vmatmul.mubr.bf16.gmra.mrb[0].mxu0 %v1766
      %v1933 = vpop.f32.mrb[0].mxu0
      %v1934 = vadd.f32 %v1837, %v1933
      %v1935 = vpop.f32.mrb[0].mxu0
      %v1936 = vpop.f32.mrb[0].mxu0
      %v1937 = vadd.f32 %v1840, %v1936
      %v1938 = vpop.f32.mrb[0].mxu0
      %1939 = vmatprep.mubr.bf16.mxu0 0
      %1940 = vmatmul.mubr.bf16.gmra.mrb[0].mxu0 %v1768
      %v1941 = vpop.f32.mrb[0].mxu0
      %v1942 = vadd.f32 %v1845, %v1941
      %v1943 = vpop.f32.mrb[0].mxu0
      %v1944 = vpop.f32.mrb[0].mxu0
      %v1945 = vadd.f32 %v1848, %v1944
      %v1946 = vpop.f32.mrb[0].mxu0
      %1947 = vmatprep.mubr.bf16.mxu0 0
      %1948 = vmatmul.mubr.bf16.gmra.mrb[0].mxu0 %v1770
      %v1949 = vpop.f32.mrb[0].mxu0
      %v1950 = vadd.f32 %v1853, %v1949
      %v1951 = vpop.f32.mrb[0].mxu0
      %v1952 = vpop.f32.mrb[0].mxu0
      %v1953 = vadd.f32 %v1856, %v1952
      %v1954 = vpop.f32.mrb[0].mxu0
      %1955 = vmatprep.mubr.bf16.mxu0 0
      %1956 = vmatmul.mubr.bf16.gmra.mrb[0].mxu0 %v1772
      %v1957 = vpop.f32.mrb[0].mxu0
      %v1958 = vadd.f32 %v1861, %v1957
      %v1959 = vpop.f32.mrb[0].mxu0
      %v1960 = vpop.f32.mrb[0].mxu0
      %v1961 = vadd.f32 %v1864, %v1960
      %v1962 = vpop.f32.mrb[0].mxu0
      %1963 = vmatprep.mubr.bf16.mxu0 0
      %1964 = vmatmul.mubr.bf16.gmra.mrb[0].mxu0 %v1774
      %v1965 = vpop.f32.mrb[0].mxu0
      %v1966 = vadd.f32 %v1869, %v1965
      %v1967 = vpop.f32.mrb[0].mxu0
      %v1968 = vpop.f32.mrb[0].mxu0
      %v1969 = vadd.f32 %v1872, %v1968
      %v1970 = vpop.f32.mrb[0].mxu0
      %1971 = vdwg.mxu0
      %1972 = vmatprep.subr.bf16.mxu0 0
      %1973 = vmatpush1.bf16.msra.mxu0 %v1303
      %1974 = vmatprep.subr.bf16.mxu0 0
      %1975 = vmatpush1.bf16.msra.mxu0 0
      %1976 = vmatprep.subr.bf16.mxu0 0
      %1977 = vmatpush1.bf16.msra.mxu0 0
      %1978 = vmatprep.subr.bf16.mxu0 0
      %1979 = vmatpush1.bf16.msra.mxu0 0
      %1980 = vmatprep.subr.bf16.mxu0 0
      %1981 = vmatpush1.bf16.msra.mxu0 0
      %1982 = vmatprep.subr.bf16.mxu0 0
      %1983 = vmatpush1.bf16.msra.mxu0 0
      %1984 = vmatprep.subr.bf16.mxu0 0
      %1985 = vmatpush1.bf16.msra.mxu0 0
      %1986 = vmatprep.subr.bf16.mxu0 0
      %1987 = vmatpush1.bf16.msra.mxu0 0
      %1988 = vmatprep.subr.bf16.mxu0 0
      %1989 = vmatpush1.bf16.msra.mxu0 0
      %1990 = vmatprep.subr.bf16.mxu0 0
      %1991 = vmatpush1.bf16.msra.mxu0 0
      %1992 = vmatprep.subr.bf16.mxu0 0
      %1993 = vmatpush1.bf16.msra.mxu0 0
      %1994 = vmatprep.subr.bf16.mxu0 0
      %1995 = vmatpush1.bf16.msra.mxu0 0
      %1996 = vmatprep.subr.bf16.mxu0 0
      %1997 = vmatpush1.bf16.msra.mxu0 0
      %1998 = vmatprep.subr.bf16.mxu0 0
      %1999 = vmatpush1.bf16.msra.mxu0 0
      %2000 = vmatprep.subr.bf16.mxu0 0
      %2001 = vmatpush1.bf16.msra.mxu0 0
      %2002 = vmatprep.subr.bf16.mxu0 0
      %2003 = vmatpush1.bf16.msra.mxu0 0
      %2004 = vmatprep.mubr.bf16.mxu0 0
      %2005 = vmatmul.mubr.bf16.gmra.mrb[0].mxu0 %v1764
      %v2006 = vpop.f32.mrb[0].mxu0
      %v2007 = vadd.f32 0.0, %v2006
      %v2008 = vpop.f32.mrb[0].mxu0
      %v2009 = vpop.f32.mrb[0].mxu0
      %v2010 = vadd.f32 0.0, %v2009
      %v2011 = vpop.f32.mrb[0].mxu0
      %2012 = vmatprep.mubr.bf16.mxu0 0
      %2013 = vmatmul.mubr.bf16.gmra.mrb[0].mxu0 %v1766
      %v2014 = vpop.f32.mrb[0].mxu0
      %v2015 = vadd.f32 0.0, %v2014
      %v2016 = vpop.f32.mrb[0].mxu0
      %v2017 = vpop.f32.mrb[0].mxu0
      %v2018 = vadd.f32 0.0, %v2017
      %v2019 = vpop.f32.mrb[0].mxu0
      %2020 = vmatprep.mubr.bf16.mxu0 0
      %2021 = vmatmul.mubr.bf16.gmra.mrb[0].mxu0 %v1768
      %v2022 = vpop.f32.mrb[0].mxu0
      %v2023 = vadd.f32 0.0, %v2022
      %v2024 = vpop.f32.mrb[0].mxu0
      %v2025 = vpop.f32.mrb[0].mxu0
      %v2026 = vadd.f32 0.0, %v2025
      %v2027 = vpop.f32.mrb[0].mxu0
      %2028 = vmatprep.mubr.bf16.mxu0 0
      %2029 = vmatmul.mubr.bf16.gmra.mrb[0].mxu0 %v1770
      %v2030 = vpop.f32.mrb[0].mxu0
      %v2031 = vadd.f32 0.0, %v2030
      %v2032 = vpop.f32.mrb[0].mxu0
      %v2033 = vpop.f32.mrb[0].mxu0
      %v2034 = vadd.f32 0.0, %v2033
      %v2035 = vpop.f32.mrb[0].mxu0
      %2036 = vmatprep.mubr.bf16.mxu0 0
      %2037 = vmatmul.mubr.bf16.gmra.mrb[0].mxu0 %v1772
      %v2038 = vpop.f32.mrb[0].mxu0
      %v2039 = vadd.f32 0.0, %v2038
      %v2040 = vpop.f32.mrb[0].mxu0
      %v2041 = vpop.f32.mrb[0].mxu0
      %v2042 = vadd.f32 0.0, %v2041
      %v2043 = vpop.f32.mrb[0].mxu0
      %2044 = vmatprep.mubr.bf16.mxu0 0
      %2045 = vmatmul.mubr.bf16.gmra.mrb[0].mxu0 %v1774
      %v2046 = vpop.f32.mrb[0].mxu0
      %v2047 = vadd.f32 0.0, %v2046
      %v2048 = vpop.f32.mrb[0].mxu0
      %v2049 = vpop.f32.mrb[0].mxu0
      %v2050 = vadd.f32 0.0, %v2049
      %v2051 = vpop.f32.mrb[0].mxu0
      %2052 = vmatprep.mubr.bf16.mxu0 0
      %2053 = vmatmul.mubr.bf16.gmra.mrb[0].mxu0 %v1776
      %v2054 = vpop.f32.mrb[0].mxu0
      %v2055 = vadd.f32 0.0, %v2054
      %v2056 = vpop.f32.mrb[0].mxu0
      %v2057 = vpop.f32.mrb[0].mxu0
      %v2058 = vadd.f32 0.0, %v2057
      %v2059 = vpop.f32.mrb[0].mxu0
      %2060 = vmatprep.mubr.bf16.mxu0 0
      %2061 = vmatmul.mubr.bf16.gmra.mrb[0].mxu0 %v1154
      %v2062 = vpop.f32.mrb[0].mxu0
      %v2063 = vadd.f32 0.0, %v2062
      %v2064 = vpop.f32.mrb[0].mxu0
      %v2065 = vpop.f32.mrb[0].mxu0
      %v2066 = vadd.f32 0.0, %v2065
      %v2067 = vpop.f32.mrb[0].mxu0
      %2068 = vdwg.mxu0
      %v2069 = vadd.f32 %v1910, %v2007
      %v2070 = vadd.f32 %v1913, %v2010
      %v2071 = vadd.f32 %v1918, %v2015
      %v2072 = vadd.f32 %v1921, %v2018
      %v2073 = vadd.f32 %v1926, %v2023
      %v2074 = vadd.f32 %v1929, %v2026
      %v2075 = vadd.f32 %v1934, %v2031
      %v2076 = vadd.f32 %v1937, %v2034
      %v2077 = vadd.f32 %v1942, %v2039
      %v2078 = vadd.f32 %v1945, %v2042
      %v2079 = vadd.f32 %v1950, %v2047
      %v2080 = vadd.f32 %v1953, %v2050
      %v2081 = vadd.f32 %v1958, %v2055
      %v2082 = vadd.f32 %v1961, %v2058
      %v2083 = vadd.f32 %v1966, %v2063
      %v2084 = vadd.f32 %v1969, %v2066
      %v2085 = vpack.c.bf16 %v2070, %v2069
      %v2086 = vpack.c.bf16 %v2072, %v2071
      %v2087 = vpack.c.bf16 %v2074, %v2073
      %v2088 = vpack.c.bf16 %v2076, %v2075
      %v2089 = vpack.c.bf16 %v2078, %v2077
      %v2090 = vpack.c.bf16 %v2080, %v2079
      %v2091 = vpack.c.bf16 %v2082, %v2081
      %v2092 = vpack.c.bf16 %v2084, %v2083
      %v2101 = vunpack.c.l.b16 %v2085
      %v2102 = vunpack.c.h.b16 %v2085
      %v2103 = vunpack.c.l.b16 %v2086
      %v2104 = vunpack.c.h.b16 %v2086
      %v2105 = vunpack.c.l.b16 %v2087
      %v2106 = vunpack.c.h.b16 %v2087
      %v2107 = vunpack.c.l.b16 %v2088
      %v2108 = vunpack.c.h.b16 %v2088
      %v2109 = vunpack.c.l.b16 %v2089
      %v2110 = vunpack.c.h.b16 %v2089
      %v2111 = vunpack.c.l.b16 %v2090
      %v2112 = vunpack.c.h.b16 %v2090
      %v2113 = vunpack.c.l.b16 %v2091
      %v2114 = vunpack.c.h.b16 %v2091
      %v2115 = vunpack.c.l.b16 %v2092
      %v2116 = vunpack.c.h.b16 %v2092
      %v2117 = vpack.c.b16 %v2101, %v2101
      %v2118 = vpack.c.b16 %v2102, %v2102
      %v2119 = vpack.c.b16 %v2103, %v2103
      %v2120 = vpack.c.b16 %v2104, %v2104
      %v2121 = vpack.c.b16 %v2105, %v2105
      %v2122 = vpack.c.b16 %v2106, %v2106
      %v2123 = vpack.c.b16 %v2107, %v2107
      %v2124 = vpack.c.b16 %v2108, %v2108
      %v2125 = vpack.c.b16 %v2109, %v2109
      %v2126 = vpack.c.b16 %v2110, %v2110
      %v2127 = vpack.c.b16 %v2111, %v2111
      %v2128 = vpack.c.b16 %v2112, %v2112
      %v2129 = vpack.c.b16 %v2113, %v2113
      %v2130 = vpack.c.b16 %v2114, %v2114
      %v2131 = vpack.c.b16 %v2115, %v2115
      %v2132 = vpack.c.b16 %v2116, %v2116
      %s2149 = scalar_lea.vmem %s352, 64
      %2150 = vst.msk [vmem:[%s2149] sm:$0xf] %vm1482, %v2117
      %2151 = vst.msk [vmem:[%s2149 + $0x4] sm:$0xf] %vm1482, %v2118
      %2152 = vst.msk [vmem:[%s2149 + $0x8] sm:$0xf] %vm1482, %v2119
      %2153 = vst.msk [vmem:[%s2149 + $0xc] sm:$0xf] %vm1482, %v2120
      %2154 = vst.msk [vmem:[%s2149 + $0x10] sm:$0xf] %vm1482, %v2121
      %2155 = vst.msk [vmem:[%s2149 + $0x14] sm:$0xf] %vm1482, %v2122
      %2156 = vst.msk [vmem:[%s2149 + $0x18] sm:$0xf] %vm1482, %v2123
      %2157 = vst.msk [vmem:[%s2149 + $0x1c] sm:$0xf] %vm1482, %v2124
      %2158 = vst.msk [vmem:[%s2149 + $0x20] sm:$0xf] %vm1482, %v2125
      %2159 = vst.msk [vmem:[%s2149 + $0x24] sm:$0xf] %vm1482, %v2126
      %2160 = vst.msk [vmem:[%s2149 + $0x28] sm:$0xf] %vm1482, %v2127
      %2161 = vst.msk [vmem:[%s2149 + $0x2c] sm:$0xf] %vm1482, %v2128
      %2162 = vst.msk [vmem:[%s2149 + $0x30] sm:$0xf] %vm1482, %v2129
      %2163 = vst.msk [vmem:[%s2149 + $0x34] sm:$0xf] %vm1482, %v2130
      %2164 = vst.msk [vmem:[%s2149 + $0x38] sm:$0xf] %vm1482, %v2131
      %2165 = vst.msk [vmem:[%s2149 + $0x3c] sm:$0xf] %vm1482, %v2132
      %v2166 = vsel %vm956, %v2069, 0.0
      %v2167 = vsel %vm956, %v2070, 0.0
      %v2168 = vadd.f32 %v2166, %v2167
      %v2169 = vsel %vm956, %v2071, 0.0
      %v2170 = vadd.f32 %v2168, %v2169
      %v2171 = vsel %vm956, %v2072, 0.0
      %v2172 = vadd.f32 %v2170, %v2171
      %v2173 = vsel %vm956, %v2073, 0.0
      %v2174 = vadd.f32 %v2172, %v2173
      %v2175 = vsel %vm956, %v2074, 0.0
      %v2176 = vadd.f32 %v2174, %v2175
      %v2177 = vsel %vm956, %v2075, 0.0
      %v2178 = vadd.f32 %v2176, %v2177
      %v2179 = vsel %vm956, %v2076, 0.0
      %v2180 = vadd.f32 %v2178, %v2179
      %v2181 = vsel %vm956, %v2077, 0.0
      %v2182 = vadd.f32 %v2180, %v2181
      %v2183 = vsel %vm956, %v2078, 0.0
      %v2184 = vadd.f32 %v2182, %v2183
      %v2185 = vsel %vm956, %v2079, 0.0
      %v2186 = vadd.f32 %v2184, %v2185
      %v2187 = vsel %vm956, %v2080, 0.0
      %v2188 = vadd.f32 %v2186, %v2187
      %v2189 = vsel %vm956, %v2081, 0.0
      %v2190 = vadd.f32 %v2188, %v2189
      %v2191 = vsel %vm956, %v2082, 0.0
      %v2192 = vadd.f32 %v2190, %v2191
      %v2193 = vsel %vm956, %v2083, 0.0
      %v2194 = vadd.f32 %v2192, %v2193
      %v2195 = vsel %vm956, %v2084, 0.0
      %v2196 = vadd.f32 %v2194, %v2195
      %v2197 = vrot.slane %v2196, 4
      %v2198 = vadd.f32 %v2196, %v2197
      %v2199 = vrot.slane %v2198, 2
      %v2200 = vadd.f32 %v2198, %v2199
      %v2201 = vrot.slane %v2200, 1
      %v2202 = vadd.f32 %v2200, %v2201
      %v2203 = vmul.f32 %v2069, %v2069
      %v2204 = vmul.f32 %v2070, %v2070
      %v2205 = vmul.f32 %v2071, %v2071
      %v2206 = vmul.f32 %v2072, %v2072
      %v2207 = vmul.f32 %v2073, %v2073
      %v2208 = vmul.f32 %v2074, %v2074
      %v2209 = vmul.f32 %v2075, %v2075
      %v2210 = vmul.f32 %v2076, %v2076
      %v2211 = vmul.f32 %v2077, %v2077
      %v2212 = vmul.f32 %v2078, %v2078
      %v2213 = vmul.f32 %v2079, %v2079
      %v2214 = vmul.f32 %v2080, %v2080
      %v2215 = vmul.f32 %v2081, %v2081
      %v2216 = vmul.f32 %v2082, %v2082
      %v2217 = vmul.f32 %v2083, %v2083
      %v2218 = vmul.f32 %v2084, %v2084
      %v2219 = vsel %vm956, %v2203, 0.0
      %v2220 = vsel %vm956, %v2204, 0.0
      %v2221 = vadd.f32 %v2219, %v2220
      %v2222 = vsel %vm956, %v2205, 0.0
      %v2223 = vadd.f32 %v2221, %v2222
      %v2224 = vsel %vm956, %v2206, 0.0
      %v2225 = vadd.f32 %v2223, %v2224
      %v2226 = vsel %vm956, %v2207, 0.0
      %v2227 = vadd.f32 %v2225, %v2226
      %v2228 = vsel %vm956, %v2208, 0.0
      %v2229 = vadd.f32 %v2227, %v2228
      %v2230 = vsel %vm956, %v2209, 0.0
      %v2231 = vadd.f32 %v2229, %v2230
      %v2232 = vsel %vm956, %v2210, 0.0
      %v2233 = vadd.f32 %v2231, %v2232
      %v2234 = vsel %vm956, %v2211, 0.0
      %v2235 = vadd.f32 %v2233, %v2234
      %v2236 = vsel %vm956, %v2212, 0.0
      %v2237 = vadd.f32 %v2235, %v2236
      %v2238 = vsel %vm956, %v2213, 0.0
      %v2239 = vadd.f32 %v2237, %v2238
      %v2240 = vsel %vm956, %v2214, 0.0
      %v2241 = vadd.f32 %v2239, %v2240
      %v2242 = vsel %vm956, %v2215, 0.0
      %v2243 = vadd.f32 %v2241, %v2242
      %v2244 = vsel %vm956, %v2216, 0.0
      %v2245 = vadd.f32 %v2243, %v2244
      %v2246 = vsel %vm956, %v2217, 0.0
      %v2247 = vadd.f32 %v2245, %v2246
      %v2248 = vsel %vm956, %v2218, 0.0
      %v2249 = vadd.f32 %v2247, %v2248
      %v2250 = vrot.slane %v2249, 4
      %v2251 = vadd.f32 %v2249, %v2250
      %v2252 = vrot.slane %v2251, 2
      %v2253 = vadd.f32 %v2251, %v2252
      %v2254 = vrot.slane %v2253, 1
      %v2255 = vadd.f32 %v2253, %v2254
      %v2256 = vadd.f32 %v1535, %v2202
      %v2257 = vadd.f32 %v1588, %v2255
      %vm2258 = vcmask 1040384
      %v2259 = vsel %vm2258, %v2256, %v2257
      %vm2260 = vcmask 58368
      %2261 = vst.msk [vmem:[%s356] sm:$0x3] %vm2260, %v2259
      %2262 = vrot.lane.b32.xlu0 %v593, 124
      %v2263 = vpop.permute.xlu0 %2262
      %2264 = vrot.lane.b32.xlu0 %v590, 124
      %v2265 = vpop.permute.xlu0 %2264
      %2266 = vrot.lane.b32.xlu0 %v600, 124
      %v2267 = vpop.permute.xlu0 %2266
      %2268 = vrot.lane.b32.xlu0 %v597, 124
      %v2269 = vpop.permute.xlu0 %2268
      %2270 = vrot.lane.b32.xlu0 %v607, 124
      %v2271 = vpop.permute.xlu0 %2270
      %2272 = vrot.lane.b32.xlu0 %v604, 124
      %v2273 = vpop.permute.xlu0 %2272
      %2274 = vrot.lane.b32.xlu0 %v614, 124
      %v2275 = vpop.permute.xlu0 %2274
      %2276 = vrot.lane.b32.xlu0 %v611, 124
      %v2277 = vpop.permute.xlu0 %2276
      %2278 = vrot.lane.b32.xlu0 %v621, 124
      %v2279 = vpop.permute.xlu0 %2278
      %2280 = vrot.lane.b32.xlu0 %v618, 124
      %v2281 = vpop.permute.xlu0 %2280
      %2282 = vrot.lane.b32.xlu0 %v628, 124
      %v2283 = vpop.permute.xlu0 %2282
      %2284 = vrot.lane.b32.xlu0 %v625, 124
      %v2285 = vpop.permute.xlu0 %2284
      %2286 = vrot.lane.b32.xlu0 %v635, 124
      %v2287 = vpop.permute.xlu0 %2286
      %2288 = vrot.lane.b32.xlu0 %v632, 124
      %v2289 = vpop.permute.xlu0 %2288
      %2290 = vrot.lane.b32.xlu0 %v642, 124
      %v2291 = vpop.permute.xlu0 %2290
      %2292 = vrot.lane.b32.xlu0 %v639, 124
      %v2293 = vpop.permute.xlu0 %2292
      %2294 = vrot.lane.b32.xlu0 %v649, 124
      %v2295 = vpop.permute.xlu0 %2294
      %2296 = vrot.lane.b32.xlu0 %v646, 124
      %v2297 = vpop.permute.xlu0 %2296
      %2298 = vrot.lane.b32.xlu0 %v656, 124
      %v2299 = vpop.permute.xlu0 %2298
      %2300 = vrot.lane.b32.xlu0 %v653, 124
      %v2301 = vpop.permute.xlu0 %2300
      %2302 = vrot.lane.b32.xlu0 %v663, 124
      %v2303 = vpop.permute.xlu0 %2302
      %2304 = vrot.lane.b32.xlu0 %v660, 124
      %v2305 = vpop.permute.xlu0 %2304
      %2306 = vrot.lane.b32.xlu0 %v670, 124
      %v2307 = vpop.permute.xlu0 %2306
      %2308 = vrot.lane.b32.xlu0 %v667, 124
      %v2309 = vpop.permute.xlu0 %2308
      %2310 = vrot.lane.b32.xlu0 %v677, 124
      %v2311 = vpop.permute.xlu0 %2310
      %2312 = vrot.lane.b32.xlu0 %v674, 124
      %v2313 = vpop.permute.xlu0 %2312
      %2314 = vrot.lane.b32.xlu0 %v684, 124
      %v2315 = vpop.permute.xlu0 %2314
      %2316 = vrot.lane.b32.xlu0 %v681, 124
      %v2317 = vpop.permute.xlu0 %2316
      %2318 = vrot.lane.b32.xlu0 %v691, 124
      %v2319 = vpop.permute.xlu0 %2318
      %2320 = vrot.lane.b32.xlu0 %v688, 124
      %v2321 = vpop.permute.xlu0 %2320
      %2322 = vrot.lane.b32.xlu0 %v698, 124
      %v2323 = vpop.permute.xlu0 %2322
      %2324 = vrot.lane.b32.xlu0 %v695, 124
      %v2325 = vpop.permute.xlu0 %2324
      %v2358 = vsel %vm733, 0, %v2263
      %v2359 = vsel %vm733, 0, %v2267
      %v2360 = vsel %vm733, 0, %v2271
      %v2361 = vsel %vm733, 0, %v2275
      %v2362 = vsel %vm733, 0, %v2279
      %v2363 = vsel %vm733, 0, %v2283
      %v2364 = vsel %vm733, 0, %v2287
      %v2365 = vsel %vm733, 0, %v2291
      %v2366 = vsel %vm733, 0, %v2295
      %v2367 = vsel %vm733, 0, %v2299
      %v2368 = vsel %vm733, 0, %v2303
      %v2369 = vsel %vm733, 0, %v2307
      %v2370 = vsel %vm733, 0, %v2311
      %v2371 = vsel %vm733, 0, %v2315
      %v2372 = vsel %vm733, 0, %v2319
      %v2373 = vsel %vm733, 0, %v2323
      %v2374 = vsel %vm733, %v2265, 0
      %v2375 = vsel %vm733, %v2269, 0
      %v2376 = vsel %vm733, %v2273, 0
      %v2377 = vsel %vm733, %v2277, 0
      %v2378 = vsel %vm733, %v2281, 0
      %v2379 = vsel %vm733, %v2285, 0
      %v2380 = vsel %vm733, %v2289, 0
      %v2381 = vsel %vm733, %v2293, 0
      %v2382 = vsel %vm733, %v2297, 0
      %v2383 = vsel %vm733, %v2301, 0
      %v2384 = vsel %vm733, %v2305, 0
      %v2385 = vsel %vm733, %v2309, 0
      %v2386 = vsel %vm733, %v2313, 0
      %v2387 = vsel %vm733, %v2317, 0
      %v2388 = vsel %vm733, %v2321, 0
      %v2389 = vsel %vm733, %v2325, 0
      %v2390 = vld [vmem:[%s5] sm:$0x3]
      %v2391 = vld [vmem:[%s5 + $0x2] sm:$0x3]
      %v2392 = vld [vmem:[%s5 + $0x4] sm:$0x3]
      %v2393 = vld [vmem:[%s5 + $0x6] sm:$0x3]
      %v2394 = vld [vmem:[%s5 + $0x8] sm:$0x3]
      %v2395 = vld [vmem:[%s5 + $0xa] sm:$0x3]
      %v2396 = vld [vmem:[%s5 + $0xc] sm:$0x3]
      %v2397 = vld [vmem:[%s5 + $0xe] sm:$0x3]
      %v2398 = vld [vmem:[%s5 + $0x10] sm:$0x3]
      %v2400 = vshrl.u32 %v2358, 16
      %v2402 = vshll.u32 %v2358, 16
      %v2404 = vrot.slane %v2402, 1
      %v2405 = vor.u32 %v2400, %v2404
      %v2407 = vshll.u32 %v2374, 16
      %v2409 = vrot.slane %v2407, 1
      %v2410 = vsel %vm775, %v2405, %v2409
      %v2412 = vshrl.u32 %v2359, 16
      %v2414 = vshll.u32 %v2359, 16
      %v2416 = vrot.slane %v2414, 1
      %v2417 = vor.u32 %v2412, %v2416
      %v2419 = vshll.u32 %v2375, 16
      %v2421 = vrot.slane %v2419, 1
      %v2422 = vsel %vm775, %v2417, %v2421
      %v2424 = vshrl.u32 %v2360, 16
      %v2426 = vshll.u32 %v2360, 16
      %v2428 = vrot.slane %v2426, 1
      %v2429 = vor.u32 %v2424, %v2428
      %v2431 = vshll.u32 %v2376, 16
      %v2433 = vrot.slane %v2431, 1
      %v2434 = vsel %vm775, %v2429, %v2433
      %v2436 = vshrl.u32 %v2361, 16
      %v2438 = vshll.u32 %v2361, 16
      %v2440 = vrot.slane %v2438, 1
      %v2441 = vor.u32 %v2436, %v2440
      %v2443 = vshll.u32 %v2377, 16
      %v2445 = vrot.slane %v2443, 1
      %v2446 = vsel %vm775, %v2441, %v2445
      %v2448 = vshrl.u32 %v2362, 16
      %v2450 = vshll.u32 %v2362, 16
      %v2452 = vrot.slane %v2450, 1
      %v2453 = vor.u32 %v2448, %v2452
      %v2455 = vshll.u32 %v2378, 16
      %v2457 = vrot.slane %v2455, 1
      %v2458 = vsel %vm775, %v2453, %v2457
      %v2460 = vshrl.u32 %v2363, 16
      %v2462 = vshll.u32 %v2363, 16
      %v2464 = vrot.slane %v2462, 1
      %v2465 = vor.u32 %v2460, %v2464
      %v2467 = vshll.u32 %v2379, 16
      %v2469 = vrot.slane %v2467, 1
      %v2470 = vsel %vm775, %v2465, %v2469
      %v2472 = vshrl.u32 %v2364, 16
      %v2474 = vshll.u32 %v2364, 16
      %v2476 = vrot.slane %v2474, 1
      %v2477 = vor.u32 %v2472, %v2476
      %v2479 = vshll.u32 %v2380, 16
      %v2481 = vrot.slane %v2479, 1
      %v2482 = vsel %vm775, %v2477, %v2481
      %2483 = vrot.lane.b32.xlu0 %v2410, 4
      %v2484 = vpop.permute.xlu0 %2483
      %2485 = vrot.lane.b32.xlu0 %v2422, 4
      %v2486 = vpop.permute.xlu0 %2485
      %2487 = vrot.lane.b32.xlu0 %v2434, 4
      %v2488 = vpop.permute.xlu0 %2487
      %2489 = vrot.lane.b32.xlu0 %v2446, 4
      %v2490 = vpop.permute.xlu0 %2489
      %2491 = vrot.lane.b32.xlu0 %v2458, 4
      %v2492 = vpop.permute.xlu0 %2491
      %2493 = vrot.lane.b32.xlu0 %v2470, 4
      %v2494 = vpop.permute.xlu0 %2493
      %2495 = vrot.lane.b32.xlu0 %v2482, 4
      %v2496 = vpop.permute.xlu0 %2495
      %v2511 = vrot.slane %v2358, 1
      %v2512 = vrot.slane %v2374, 1
      %v2513 = vsel %vm899, %v2511, %v2512
      %v2514 = vrot.slane %v2359, 1
      %v2515 = vrot.slane %v2375, 1
      %v2516 = vsel %vm899, %v2514, %v2515
      %v2517 = vrot.slane %v2360, 1
      %v2518 = vrot.slane %v2376, 1
      %v2519 = vsel %vm899, %v2517, %v2518
      %v2520 = vrot.slane %v2361, 1
      %v2521 = vrot.slane %v2377, 1
      %v2522 = vsel %vm899, %v2520, %v2521
      %v2523 = vrot.slane %v2362, 1
      %v2524 = vrot.slane %v2378, 1
      %v2525 = vsel %vm899, %v2523, %v2524
      %v2526 = vrot.slane %v2363, 1
      %v2527 = vrot.slane %v2379, 1
      %v2528 = vsel %vm899, %v2526, %v2527
      %v2529 = vrot.slane %v2364, 1
      %v2530 = vrot.slane %v2380, 1
      %v2531 = vsel %vm899, %v2529, %v2530
      %2532 = vrot.lane.b32.xlu0 %v2513, 8
      %v2533 = vpop.permute.xlu0 %2532
      %2534 = vrot.lane.b32.xlu0 %v2516, 8
      %v2535 = vpop.permute.xlu0 %2534
      %2536 = vrot.lane.b32.xlu0 %v2519, 8
      %v2537 = vpop.permute.xlu0 %2536
      %2538 = vrot.lane.b32.xlu0 %v2522, 8
      %v2539 = vpop.permute.xlu0 %2538
      %2540 = vrot.lane.b32.xlu0 %v2525, 8
      %v2541 = vpop.permute.xlu0 %2540
      %2542 = vrot.lane.b32.xlu0 %v2528, 8
      %v2543 = vpop.permute.xlu0 %2542
      %2544 = vrot.lane.b32.xlu0 %v2531, 8
      %v2545 = vpop.permute.xlu0 %2544
      %v2547 = vsel %vm939, %v2358, %v2484
      %v2549 = vsel %vm939, %v2359, %v2486
      %v2551 = vsel %vm939, %v2360, %v2488
      %v2553 = vsel %vm939, %v2361, %v2490
      %v2555 = vsel %vm939, %v2362, %v2492
      %v2557 = vsel %vm939, %v2363, %v2494
      %v2559 = vsel %vm939, %v2364, %v2496
      %v2561 = vsel %vm956, %v2547, %v2533
      %v2563 = vsel %vm956, %v2549, %v2535
      %v2565 = vsel %vm956, %v2551, %v2537
      %v2567 = vsel %vm956, %v2553, %v2539
      %v2569 = vsel %vm956, %v2555, %v2541
      %v2571 = vsel %vm956, %v2557, %v2543
      %v2573 = vsel %vm956, %v2559, %v2545
      %v2575 = vshrl.u32 %v2365, 16
      %v2577 = vshll.u32 %v2365, 16
      %v2579 = vrot.slane %v2577, 1
      %v2580 = vor.u32 %v2575, %v2579
      %v2582 = vshll.u32 %v2381, 16
      %v2584 = vrot.slane %v2582, 1
      %v2585 = vsel %vm775, %v2580, %v2584
      %2586 = vrot.lane.b32.xlu0 %v2585, 4
      %v2587 = vpop.permute.xlu0 %2586
      %v2590 = vrot.slane %v2365, 1
      %v2591 = vrot.slane %v2381, 1
      %v2592 = vsel %vm899, %v2590, %v2591
      %2593 = vrot.lane.b32.xlu0 %v2592, 8
      %v2594 = vpop.permute.xlu0 %2593
      %v2596 = vsel %vm939, %v2365, %v2587
      %v2598 = vsel %vm956, %v2596, %v2594
      %v2602 = vcombine.low %v2393, %v2394
      %v2604 = vunpack.c.l.s4 1983009808
      %v2605 = vunpack.c.0.s8 %v2604
      %v2606 = vlaneseq
      %v2607 = vshrl.u32 %v2606, 7
      %v2608 = vsub.s32 %v2605, %v2607
      %v2609 = vrot.slane %v2602, %v2608
      %v2611 = vunpack.c.l.s4 1983009808
      %v2612 = vunpack.c.0.s8 %v2611
      %v2613 = vlaneseq
      %v2614 = vshrl.u32 %v2613, 7
      %v2615 = vsub.s32 %v2612, %v2614
      %v2616 = vrot.slane %v2395, %v2615
      %v2617 = vcombine.low %v2609, %v2616
      %v2618 = vsel %vm1017, %v2561, 0
      %v2620 = vsel %vm1017, %v2563, 0
      %v2622 = vsel %vm1017, %v2565, 0
      %v2624 = vsel %vm1017, %v2567, 0
      %v2626 = vsel %vm1017, %v2569, 0
      %v2628 = vsel %vm1017, %v2571, 0
      %v2630 = vsel %vm1017, %v2573, 0
      %v2632 = vsel %vm1017, %v2598, 0
      %v2635 = vsel %vm1034, %v2617, 0
      %2637 = vmatprep.subr.bf16.mxu0 0
      %2638 = vmatpush1.bf16.msra.mxu0 %v2635
      %2639 = vmatprep.subr.bf16.mxu0 0
      %2640 = vmatpush1.bf16.msra.mxu0 0
      %2641 = vmatprep.subr.bf16.mxu0 0
      %2642 = vmatpush1.bf16.msra.mxu0 0
      %2643 = vmatprep.subr.bf16.mxu0 0
      %2644 = vmatpush1.bf16.msra.mxu0 0
      %2645 = vmatprep.subr.bf16.mxu0 0
      %2646 = vmatpush1.bf16.msra.mxu0 0
      %2647 = vmatprep.subr.bf16.mxu0 0
      %2648 = vmatpush1.bf16.msra.mxu0 0
      %2649 = vmatprep.subr.bf16.mxu0 0
      %2650 = vmatpush1.bf16.msra.mxu0 0
      %2651 = vmatprep.subr.bf16.mxu0 0
      %2652 = vmatpush1.bf16.msra.mxu0 0
      %2653 = vmatprep.subr.bf16.mxu0 0
      %2654 = vmatpush1.bf16.msra.mxu0 0
      %2655 = vmatprep.subr.bf16.mxu0 0
      %2656 = vmatpush1.bf16.msra.mxu0 0
      %2657 = vmatprep.subr.bf16.mxu0 0
      %2658 = vmatpush1.bf16.msra.mxu0 0
      %2659 = vmatprep.subr.bf16.mxu0 0
      %2660 = vmatpush1.bf16.msra.mxu0 0
      %2661 = vmatprep.subr.bf16.mxu0 0
      %2662 = vmatpush1.bf16.msra.mxu0 0
      %2663 = vmatprep.subr.bf16.mxu0 0
      %2664 = vmatpush1.bf16.msra.mxu0 0
      %2665 = vmatprep.subr.bf16.mxu0 0
      %2666 = vmatpush1.bf16.msra.mxu0 0
      %2667 = vmatprep.subr.bf16.mxu0 0
      %2668 = vmatpush1.bf16.msra.mxu0 0
      %2669 = vmatprep.mubr.bf16.mxu0 0
      %2670 = vmatmul.mubr.bf16.gmra.mrb[0].mxu0 %v2618
      %v2671 = vpop.f32.mrb[0].mxu0
      %v2672 = vadd.f32 0.0, %v2671
      %v2673 = vpop.f32.mrb[0].mxu0
      %v2674 = vpop.f32.mrb[0].mxu0
      %v2675 = vadd.f32 0.0, %v2674
      %v2676 = vpop.f32.mrb[0].mxu0
      %2677 = vmatprep.mubr.bf16.mxu0 0
      %2678 = vmatmul.mubr.bf16.gmra.mrb[0].mxu0 %v2620
      %v2679 = vpop.f32.mrb[0].mxu0
      %v2680 = vadd.f32 0.0, %v2679
      %v2681 = vpop.f32.mrb[0].mxu0
      %v2682 = vpop.f32.mrb[0].mxu0
      %v2683 = vadd.f32 0.0, %v2682
      %v2684 = vpop.f32.mrb[0].mxu0
      %2685 = vmatprep.mubr.bf16.mxu0 0
      %2686 = vmatmul.mubr.bf16.gmra.mrb[0].mxu0 %v2622
      %v2687 = vpop.f32.mrb[0].mxu0
      %v2688 = vadd.f32 0.0, %v2687
      %v2689 = vpop.f32.mrb[0].mxu0
      %v2690 = vpop.f32.mrb[0].mxu0
      %v2691 = vadd.f32 0.0, %v2690
      %v2692 = vpop.f32.mrb[0].mxu0
      %2693 = vmatprep.mubr.bf16.mxu0 0
      %2694 = vmatmul.mubr.bf16.gmra.mrb[0].mxu0 %v2624
      %v2695 = vpop.f32.mrb[0].mxu0
      %v2696 = vadd.f32 0.0, %v2695
      %v2697 = vpop.f32.mrb[0].mxu0
      %v2698 = vpop.f32.mrb[0].mxu0
      %v2699 = vadd.f32 0.0, %v2698
      %v2700 = vpop.f32.mrb[0].mxu0
      %2701 = vmatprep.mubr.bf16.mxu0 0
      %2702 = vmatmul.mubr.bf16.gmra.mrb[0].mxu0 %v2626
      %v2703 = vpop.f32.mrb[0].mxu0
      %v2704 = vadd.f32 0.0, %v2703
      %v2705 = vpop.f32.mrb[0].mxu0
      %v2706 = vpop.f32.mrb[0].mxu0
      %v2707 = vadd.f32 0.0, %v2706
      %v2708 = vpop.f32.mrb[0].mxu0
      %2709 = vmatprep.mubr.bf16.mxu0 0
      %2710 = vmatmul.mubr.bf16.gmra.mrb[0].mxu0 %v2628
      %v2711 = vpop.f32.mrb[0].mxu0
      %v2712 = vadd.f32 0.0, %v2711
      %v2713 = vpop.f32.mrb[0].mxu0
      %v2714 = vpop.f32.mrb[0].mxu0
      %v2715 = vadd.f32 0.0, %v2714
      %v2716 = vpop.f32.mrb[0].mxu0
      %2717 = vmatprep.mubr.bf16.mxu0 0
      %2718 = vmatmul.mubr.bf16.gmra.mrb[0].mxu0 %v2630
      %v2719 = vpop.f32.mrb[0].mxu0
      %v2720 = vadd.f32 0.0, %v2719
      %v2721 = vpop.f32.mrb[0].mxu0
      %v2722 = vpop.f32.mrb[0].mxu0
      %v2723 = vadd.f32 0.0, %v2722
      %v2724 = vpop.f32.mrb[0].mxu0
      %2725 = vmatprep.mubr.bf16.mxu0 0
      %2726 = vmatmul.mubr.bf16.gmra.mrb[0].mxu0 %v2632
      %v2727 = vpop.f32.mrb[0].mxu0
      %v2728 = vadd.f32 0.0, %v2727
      %v2729 = vpop.f32.mrb[0].mxu0
      %v2730 = vpop.f32.mrb[0].mxu0
      %v2731 = vadd.f32 0.0, %v2730
      %v2732 = vpop.f32.mrb[0].mxu0
      %2733 = vdwg.mxu0
      %v2737 = vcombine.low %v2390, %v2391
      %v2739 = vunpack.c.l.s4 1983009808
      %v2740 = vunpack.c.0.s8 %v2739
      %v2741 = vlaneseq
      %v2742 = vshrl.u32 %v2741, 7
      %v2743 = vsub.s32 %v2740, %v2742
      %v2744 = vrot.slane %v2737, %v2743
      %v2746 = vunpack.c.l.s4 1983009808
      %v2747 = vunpack.c.0.s8 %v2746
      %v2748 = vlaneseq
      %v2749 = vshrl.u32 %v2748, 7
      %v2750 = vsub.s32 %v2747, %v2749
      %v2751 = vrot.slane %v2392, %v2750
      %v2752 = vcombine.low %v2744, %v2751
      %v2754 = vsel %vm1034, %v2752, 0
      %2756 = vmatprep.subr.bf16.mxu0 0
      %2757 = vmatpush1.bf16.msra.mxu0 %v2754
      %2758 = vmatprep.subr.bf16.mxu0 0
      %2759 = vmatpush1.bf16.msra.mxu0 0
      %2760 = vmatprep.subr.bf16.mxu0 0
      %2761 = vmatpush1.bf16.msra.mxu0 0
      %2762 = vmatprep.subr.bf16.mxu0 0
      %2763 = vmatpush1.bf16.msra.mxu0 0
      %2764 = vmatprep.subr.bf16.mxu0 0
      %2765 = vmatpush1.bf16.msra.mxu0 0
      %2766 = vmatprep.subr.bf16.mxu0 0
      %2767 = vmatpush1.bf16.msra.mxu0 0
      %2768 = vmatprep.subr.bf16.mxu0 0
      %2769 = vmatpush1.bf16.msra.mxu0 0
      %2770 = vmatprep.subr.bf16.mxu0 0
      %2771 = vmatpush1.bf16.msra.mxu0 0
      %2772 = vmatprep.subr.bf16.mxu0 0
      %2773 = vmatpush1.bf16.msra.mxu0 0
      %2774 = vmatprep.subr.bf16.mxu0 0
      %2775 = vmatpush1.bf16.msra.mxu0 0
      %2776 = vmatprep.subr.bf16.mxu0 0
      %2777 = vmatpush1.bf16.msra.mxu0 0
      %2778 = vmatprep.subr.bf16.mxu0 0
      %2779 = vmatpush1.bf16.msra.mxu0 0
      %2780 = vmatprep.subr.bf16.mxu0 0
      %2781 = vmatpush1.bf16.msra.mxu0 0
      %2782 = vmatprep.subr.bf16.mxu0 0
      %2783 = vmatpush1.bf16.msra.mxu0 0
      %2784 = vmatprep.subr.bf16.mxu0 0
      %2785 = vmatpush1.bf16.msra.mxu0 0
      %2786 = vmatprep.subr.bf16.mxu0 0
      %2787 = vmatpush1.bf16.msra.mxu0 0
      %2788 = vmatprep.mubr.bf16.mxu0 0
      %2789 = vmatmul.mubr.bf16.gmra.mrb[0].mxu0 %v1154
      %v2790 = vpop.f32.mrb[0].mxu0
      %v2791 = vadd.f32 %v2672, %v2790
      %v2792 = vpop.f32.mrb[0].mxu0
      %v2793 = vpop.f32.mrb[0].mxu0
      %v2794 = vadd.f32 %v2675, %v2793
      %v2795 = vpop.f32.mrb[0].mxu0
      %2796 = vmatprep.mubr.bf16.mxu0 0
      %2797 = vmatmul.mubr.bf16.gmra.mrb[0].mxu0 %v2618
      %v2798 = vpop.f32.mrb[0].mxu0
      %v2799 = vadd.f32 %v2680, %v2798
      %v2800 = vpop.f32.mrb[0].mxu0
      %v2801 = vpop.f32.mrb[0].mxu0
      %v2802 = vadd.f32 %v2683, %v2801
      %v2803 = vpop.f32.mrb[0].mxu0
      %2804 = vmatprep.mubr.bf16.mxu0 0
      %2805 = vmatmul.mubr.bf16.gmra.mrb[0].mxu0 %v2620
      %v2806 = vpop.f32.mrb[0].mxu0
      %v2807 = vadd.f32 %v2688, %v2806
      %v2808 = vpop.f32.mrb[0].mxu0
      %v2809 = vpop.f32.mrb[0].mxu0
      %v2810 = vadd.f32 %v2691, %v2809
      %v2811 = vpop.f32.mrb[0].mxu0
      %2812 = vmatprep.mubr.bf16.mxu0 0
      %2813 = vmatmul.mubr.bf16.gmra.mrb[0].mxu0 %v2622
      %v2814 = vpop.f32.mrb[0].mxu0
      %v2815 = vadd.f32 %v2696, %v2814
      %v2816 = vpop.f32.mrb[0].mxu0
      %v2817 = vpop.f32.mrb[0].mxu0
      %v2818 = vadd.f32 %v2699, %v2817
      %v2819 = vpop.f32.mrb[0].mxu0
      %2820 = vmatprep.mubr.bf16.mxu0 0
      %2821 = vmatmul.mubr.bf16.gmra.mrb[0].mxu0 %v2624
      %v2822 = vpop.f32.mrb[0].mxu0
      %v2823 = vadd.f32 %v2704, %v2822
      %v2824 = vpop.f32.mrb[0].mxu0
      %v2825 = vpop.f32.mrb[0].mxu0
      %v2826 = vadd.f32 %v2707, %v2825
      %v2827 = vpop.f32.mrb[0].mxu0
      %2828 = vmatprep.mubr.bf16.mxu0 0
      %2829 = vmatmul.mubr.bf16.gmra.mrb[0].mxu0 %v2626
      %v2830 = vpop.f32.mrb[0].mxu0
      %v2831 = vadd.f32 %v2712, %v2830
      %v2832 = vpop.f32.mrb[0].mxu0
      %v2833 = vpop.f32.mrb[0].mxu0
      %v2834 = vadd.f32 %v2715, %v2833
      %v2835 = vpop.f32.mrb[0].mxu0
      %2836 = vmatprep.mubr.bf16.mxu0 0
      %2837 = vmatmul.mubr.bf16.gmra.mrb[0].mxu0 %v2628
      %v2838 = vpop.f32.mrb[0].mxu0
      %v2839 = vadd.f32 %v2720, %v2838
      %v2840 = vpop.f32.mrb[0].mxu0
      %v2841 = vpop.f32.mrb[0].mxu0
      %v2842 = vadd.f32 %v2723, %v2841
      %v2843 = vpop.f32.mrb[0].mxu0
      %2844 = vmatprep.mubr.bf16.mxu0 0
      %2845 = vmatmul.mubr.bf16.gmra.mrb[0].mxu0 %v2630
      %v2846 = vpop.f32.mrb[0].mxu0
      %v2847 = vadd.f32 %v2728, %v2846
      %v2848 = vpop.f32.mrb[0].mxu0
      %v2849 = vpop.f32.mrb[0].mxu0
      %v2850 = vadd.f32 %v2731, %v2849
      %v2851 = vpop.f32.mrb[0].mxu0
      %2852 = vdwg.mxu0
      %v2854 = vshrl.u32 %v2366, 16
      %v2856 = vshll.u32 %v2366, 16
      %v2858 = vrot.slane %v2856, 1
      %v2859 = vor.u32 %v2854, %v2858
      %v2861 = vshll.u32 %v2382, 16
      %v2863 = vrot.slane %v2861, 1
      %v2864 = vsel %vm775, %v2859, %v2863
      %2865 = vrot.lane.b32.xlu0 %v2864, 4
      %v2866 = vpop.permute.xlu0 %2865
      %v2869 = vrot.slane %v2366, 1
      %v2870 = vrot.slane %v2382, 1
      %v2871 = vsel %vm899, %v2869, %v2870
      %2872 = vrot.lane.b32.xlu0 %v2871, 8
      %v2873 = vpop.permute.xlu0 %2872
      %v2875 = vsel %vm939, %v2366, %v2866
      %v2877 = vsel %vm956, %v2875, %v2873
      %v2881 = vcombine.low %v2396, %v2397
      %v2883 = vunpack.c.l.s4 1983009808
      %v2884 = vunpack.c.0.s8 %v2883
      %v2885 = vlaneseq
      %v2886 = vshrl.u32 %v2885, 7
      %v2887 = vsub.s32 %v2884, %v2886
      %v2888 = vrot.slane %v2881, %v2887
      %v2890 = vunpack.c.l.s4 1983009808
      %v2891 = vunpack.c.0.s8 %v2890
      %v2892 = vlaneseq
      %v2893 = vshrl.u32 %v2892, 7
      %v2894 = vsub.s32 %v2891, %v2893
      %v2895 = vrot.slane %v2398, %v2894
      %v2896 = vcombine.low %v2888, %v2895
      %v2897 = vsel %vm1017, %v2877, 0
      %v2900 = vsel %vm1034, %v2896, 0
      %2902 = vmatprep.subr.bf16.mxu0 0
      %2903 = vmatpush1.bf16.msra.mxu0 %v2900
      %2904 = vmatprep.subr.bf16.mxu0 0
      %2905 = vmatpush1.bf16.msra.mxu0 0
      %2906 = vmatprep.subr.bf16.mxu0 0
      %2907 = vmatpush1.bf16.msra.mxu0 0
      %2908 = vmatprep.subr.bf16.mxu0 0
      %2909 = vmatpush1.bf16.msra.mxu0 0
      %2910 = vmatprep.subr.bf16.mxu0 0
      %2911 = vmatpush1.bf16.msra.mxu0 0
      %2912 = vmatprep.subr.bf16.mxu0 0
      %2913 = vmatpush1.bf16.msra.mxu0 0
      %2914 = vmatprep.subr.bf16.mxu0 0
      %2915 = vmatpush1.bf16.msra.mxu0 0
      %2916 = vmatprep.subr.bf16.mxu0 0
      %2917 = vmatpush1.bf16.msra.mxu0 0
      %2918 = vmatprep.subr.bf16.mxu0 0
      %2919 = vmatpush1.bf16.msra.mxu0 0
      %2920 = vmatprep.subr.bf16.mxu0 0
      %2921 = vmatpush1.bf16.msra.mxu0 0
      %2922 = vmatprep.subr.bf16.mxu0 0
      %2923 = vmatpush1.bf16.msra.mxu0 0
      %2924 = vmatprep.subr.bf16.mxu0 0
      %2925 = vmatpush1.bf16.msra.mxu0 0
      %2926 = vmatprep.subr.bf16.mxu0 0
      %2927 = vmatpush1.bf16.msra.mxu0 0
      %2928 = vmatprep.subr.bf16.mxu0 0
      %2929 = vmatpush1.bf16.msra.mxu0 0
      %2930 = vmatprep.subr.bf16.mxu0 0
      %2931 = vmatpush1.bf16.msra.mxu0 0
      %2932 = vmatprep.subr.bf16.mxu0 0
      %2933 = vmatpush1.bf16.msra.mxu0 0
      %2934 = vmatprep.mubr.bf16.mxu0 0
      %2935 = vmatmul.mubr.bf16.gmra.mrb[0].mxu0 %v2620
      %v2936 = vpop.f32.mrb[0].mxu0
      %v2937 = vadd.f32 0.0, %v2936
      %v2938 = vpop.f32.mrb[0].mxu0
      %v2939 = vpop.f32.mrb[0].mxu0
      %v2940 = vadd.f32 0.0, %v2939
      %v2941 = vpop.f32.mrb[0].mxu0
      %2942 = vmatprep.mubr.bf16.mxu0 0
      %2943 = vmatmul.mubr.bf16.gmra.mrb[0].mxu0 %v2622
      %v2944 = vpop.f32.mrb[0].mxu0
      %v2945 = vadd.f32 0.0, %v2944
      %v2946 = vpop.f32.mrb[0].mxu0
      %v2947 = vpop.f32.mrb[0].mxu0
      %v2948 = vadd.f32 0.0, %v2947
      %v2949 = vpop.f32.mrb[0].mxu0
      %2950 = vmatprep.mubr.bf16.mxu0 0
      %2951 = vmatmul.mubr.bf16.gmra.mrb[0].mxu0 %v2624
      %v2952 = vpop.f32.mrb[0].mxu0
      %v2953 = vadd.f32 0.0, %v2952
      %v2954 = vpop.f32.mrb[0].mxu0
      %v2955 = vpop.f32.mrb[0].mxu0
      %v2956 = vadd.f32 0.0, %v2955
      %v2957 = vpop.f32.mrb[0].mxu0
      %2958 = vmatprep.mubr.bf16.mxu0 0
      %2959 = vmatmul.mubr.bf16.gmra.mrb[0].mxu0 %v2626
      %v2960 = vpop.f32.mrb[0].mxu0
      %v2961 = vadd.f32 0.0, %v2960
      %v2962 = vpop.f32.mrb[0].mxu0
      %v2963 = vpop.f32.mrb[0].mxu0
      %v2964 = vadd.f32 0.0, %v2963
      %v2965 = vpop.f32.mrb[0].mxu0
      %2966 = vmatprep.mubr.bf16.mxu0 0
      %2967 = vmatmul.mubr.bf16.gmra.mrb[0].mxu0 %v2628
      %v2968 = vpop.f32.mrb[0].mxu0
      %v2969 = vadd.f32 0.0, %v2968
      %v2970 = vpop.f32.mrb[0].mxu0
      %v2971 = vpop.f32.mrb[0].mxu0
      %v2972 = vadd.f32 0.0, %v2971
      %v2973 = vpop.f32.mrb[0].mxu0
      %2974 = vmatprep.mubr.bf16.mxu0 0
      %2975 = vmatmul.mubr.bf16.gmra.mrb[0].mxu0 %v2630
      %v2976 = vpop.f32.mrb[0].mxu0
      %v2977 = vadd.f32 0.0, %v2976
      %v2978 = vpop.f32.mrb[0].mxu0
      %v2979 = vpop.f32.mrb[0].mxu0
      %v2980 = vadd.f32 0.0, %v2979
      %v2981 = vpop.f32.mrb[0].mxu0
      %2982 = vmatprep.mubr.bf16.mxu0 0
      %2983 = vmatmul.mubr.bf16.gmra.mrb[0].mxu0 %v2632
      %v2984 = vpop.f32.mrb[0].mxu0
      %v2985 = vadd.f32 0.0, %v2984
      %v2986 = vpop.f32.mrb[0].mxu0
      %v2987 = vpop.f32.mrb[0].mxu0
      %v2988 = vadd.f32 0.0, %v2987
      %v2989 = vpop.f32.mrb[0].mxu0
      %2990 = vmatprep.mubr.bf16.mxu0 0
      %2991 = vmatmul.mubr.bf16.gmra.mrb[0].mxu0 %v2897
      %v2992 = vpop.f32.mrb[0].mxu0
      %v2993 = vadd.f32 0.0, %v2992
      %v2994 = vpop.f32.mrb[0].mxu0
      %v2995 = vpop.f32.mrb[0].mxu0
      %v2996 = vadd.f32 0.0, %v2995
      %v2997 = vpop.f32.mrb[0].mxu0
      %2998 = vdwg.mxu0
      %v2999 = vadd.f32 %v2791, %v2937
      %v3000 = vadd.f32 %v2794, %v2940
      %v3001 = vadd.f32 %v2799, %v2945
      %v3002 = vadd.f32 %v2802, %v2948
      %v3003 = vadd.f32 %v2807, %v2953
      %v3004 = vadd.f32 %v2810, %v2956
      %v3005 = vadd.f32 %v2815, %v2961
      %v3006 = vadd.f32 %v2818, %v2964
      %v3007 = vadd.f32 %v2823, %v2969
      %v3008 = vadd.f32 %v2826, %v2972
      %v3009 = vadd.f32 %v2831, %v2977
      %v3010 = vadd.f32 %v2834, %v2980
      %v3011 = vadd.f32 %v2839, %v2985
      %v3012 = vadd.f32 %v2842, %v2988
      %v3013 = vadd.f32 %v2847, %v2993
      %v3014 = vadd.f32 %v2850, %v2996
      %v3015 = vpack.c.bf16 %v3000, %v2999
      %v3016 = vpack.c.bf16 %v3002, %v3001
      %v3017 = vpack.c.bf16 %v3004, %v3003
      %v3018 = vpack.c.bf16 %v3006, %v3005
      %v3019 = vpack.c.bf16 %v3008, %v3007
      %v3020 = vpack.c.bf16 %v3010, %v3009
      %v3021 = vpack.c.bf16 %v3012, %v3011
      %v3022 = vpack.c.bf16 %v3014, %v3013
      %v3031 = vunpack.c.l.b16 %v3015
      %v3032 = vunpack.c.h.b16 %v3015
      %v3033 = vunpack.c.l.b16 %v3016
      %v3034 = vunpack.c.h.b16 %v3016
      %v3035 = vunpack.c.l.b16 %v3017
      %v3036 = vunpack.c.h.b16 %v3017
      %v3037 = vunpack.c.l.b16 %v3018
      %v3038 = vunpack.c.h.b16 %v3018
      %v3039 = vunpack.c.l.b16 %v3019
      %v3040 = vunpack.c.h.b16 %v3019
      %v3041 = vunpack.c.l.b16 %v3020
      %v3042 = vunpack.c.h.b16 %v3020
      %v3043 = vunpack.c.l.b16 %v3021
      %v3044 = vunpack.c.h.b16 %v3021
      %v3045 = vunpack.c.l.b16 %v3022
      %v3046 = vunpack.c.h.b16 %v3022
      %v3047 = vpack.c.b16 %v3031, %v3031
      %v3048 = vpack.c.b16 %v3032, %v3032
      %v3049 = vpack.c.b16 %v3033, %v3033
      %v3050 = vpack.c.b16 %v3034, %v3034
      %v3051 = vpack.c.b16 %v3035, %v3035
      %v3052 = vpack.c.b16 %v3036, %v3036
      %v3053 = vpack.c.b16 %v3037, %v3037
      %v3054 = vpack.c.b16 %v3038, %v3038
      %v3055 = vpack.c.b16 %v3039, %v3039
      %v3056 = vpack.c.b16 %v3040, %v3040
      %v3057 = vpack.c.b16 %v3041, %v3041
      %v3058 = vpack.c.b16 %v3042, %v3042
      %v3059 = vpack.c.b16 %v3043, %v3043
      %v3060 = vpack.c.b16 %v3044, %v3044
      %v3061 = vpack.c.b16 %v3045, %v3045
      %v3062 = vpack.c.b16 %v3046, %v3046
      %3079 = vst.msk [vmem:[%s361] sm:$0xf] %vm1482, %v3047
      %3080 = vst.msk [vmem:[%s361 + $0x4] sm:$0xf] %vm1482, %v3048
      %3081 = vst.msk [vmem:[%s361 + $0x8] sm:$0xf] %vm1482, %v3049
      %3082 = vst.msk [vmem:[%s361 + $0xc] sm:$0xf] %vm1482, %v3050
      %3083 = vst.msk [vmem:[%s361 + $0x10] sm:$0xf] %vm1482, %v3051
      %3084 = vst.msk [vmem:[%s361 + $0x14] sm:$0xf] %vm1482, %v3052
      %3085 = vst.msk [vmem:[%s361 + $0x18] sm:$0xf] %vm1482, %v3053
      %3086 = vst.msk [vmem:[%s361 + $0x1c] sm:$0xf] %vm1482, %v3054
      %3087 = vst.msk [vmem:[%s361 + $0x20] sm:$0xf] %vm1482, %v3055
      %3088 = vst.msk [vmem:[%s361 + $0x24] sm:$0xf] %vm1482, %v3056
      %3089 = vst.msk [vmem:[%s361 + $0x28] sm:$0xf] %vm1482, %v3057
      %3090 = vst.msk [vmem:[%s361 + $0x2c] sm:$0xf] %vm1482, %v3058
      %3091 = vst.msk [vmem:[%s361 + $0x30] sm:$0xf] %vm1482, %v3059
      %3092 = vst.msk [vmem:[%s361 + $0x34] sm:$0xf] %vm1482, %v3060
      %3093 = vst.msk [vmem:[%s361 + $0x38] sm:$0xf] %vm1482, %v3061
      %3094 = vst.msk [vmem:[%s361 + $0x3c] sm:$0xf] %vm1482, %v3062
      %v3095 = vsel %vm956, %v2999, 0.0
      %v3096 = vsel %vm956, %v3000, 0.0
      %v3097 = vadd.f32 %v3095, %v3096
      %v3098 = vsel %vm956, %v3001, 0.0
      %v3099 = vadd.f32 %v3097, %v3098
      %v3100 = vsel %vm956, %v3002, 0.0
      %v3101 = vadd.f32 %v3099, %v3100
      %v3102 = vsel %vm956, %v3003, 0.0
      %v3103 = vadd.f32 %v3101, %v3102
      %v3104 = vsel %vm956, %v3004, 0.0
      %v3105 = vadd.f32 %v3103, %v3104
      %v3106 = vsel %vm956, %v3005, 0.0
      %v3107 = vadd.f32 %v3105, %v3106
      %v3108 = vsel %vm956, %v3006, 0.0
      %v3109 = vadd.f32 %v3107, %v3108
      %v3110 = vsel %vm956, %v3007, 0.0
      %v3111 = vadd.f32 %v3109, %v3110
      %v3112 = vsel %vm956, %v3008, 0.0
      %v3113 = vadd.f32 %v3111, %v3112
      %v3114 = vsel %vm956, %v3009, 0.0
      %v3115 = vadd.f32 %v3113, %v3114
      %v3116 = vsel %vm956, %v3010, 0.0
      %v3117 = vadd.f32 %v3115, %v3116
      %v3118 = vsel %vm956, %v3011, 0.0
      %v3119 = vadd.f32 %v3117, %v3118
      %v3120 = vsel %vm956, %v3012, 0.0
      %v3121 = vadd.f32 %v3119, %v3120
      %v3122 = vsel %vm956, %v3013, 0.0
      %v3123 = vadd.f32 %v3121, %v3122
      %v3124 = vsel %vm956, %v3014, 0.0
      %v3125 = vadd.f32 %v3123, %v3124
      %v3126 = vrot.slane %v3125, 4
      %v3127 = vadd.f32 %v3125, %v3126
      %v3128 = vrot.slane %v3127, 2
      %v3129 = vadd.f32 %v3127, %v3128
      %v3130 = vrot.slane %v3129, 1
      %v3131 = vadd.f32 %v3129, %v3130
      %v3132 = vmul.f32 %v2999, %v2999
      %v3133 = vmul.f32 %v3000, %v3000
      %v3134 = vmul.f32 %v3001, %v3001
      %v3135 = vmul.f32 %v3002, %v3002
      %v3136 = vmul.f32 %v3003, %v3003
      %v3137 = vmul.f32 %v3004, %v3004
      %v3138 = vmul.f32 %v3005, %v3005
      %v3139 = vmul.f32 %v3006, %v3006
      %v3140 = vmul.f32 %v3007, %v3007
      %v3141 = vmul.f32 %v3008, %v3008
      %v3142 = vmul.f32 %v3009, %v3009
      %v3143 = vmul.f32 %v3010, %v3010
      %v3144 = vmul.f32 %v3011, %v3011
      %v3145 = vmul.f32 %v3012, %v3012
      %v3146 = vmul.f32 %v3013, %v3013
      %v3147 = vmul.f32 %v3014, %v3014
      %v3148 = vsel %vm956, %v3132, 0.0
      %v3149 = vsel %vm956, %v3133, 0.0
      %v3150 = vadd.f32 %v3148, %v3149
      %v3151 = vsel %vm956, %v3134, 0.0
      %v3152 = vadd.f32 %v3150, %v3151
      %v3153 = vsel %vm956, %v3135, 0.0
      %v3154 = vadd.f32 %v3152, %v3153
      %v3155 = vsel %vm956, %v3136, 0.0
      %v3156 = vadd.f32 %v3154, %v3155
      %v3157 = vsel %vm956, %v3137, 0.0
      %v3158 = vadd.f32 %v3156, %v3157
      %v3159 = vsel %vm956, %v3138, 0.0
      %v3160 = vadd.f32 %v3158, %v3159
      %v3161 = vsel %vm956, %v3139, 0.0
      %v3162 = vadd.f32 %v3160, %v3161
      %v3163 = vsel %vm956, %v3140, 0.0
      %v3164 = vadd.f32 %v3162, %v3163
      %v3165 = vsel %vm956, %v3141, 0.0
      %v3166 = vadd.f32 %v3164, %v3165
      %v3167 = vsel %vm956, %v3142, 0.0
      %v3168 = vadd.f32 %v3166, %v3167
      %v3169 = vsel %vm956, %v3143, 0.0
      %v3170 = vadd.f32 %v3168, %v3169
      %v3171 = vsel %vm956, %v3144, 0.0
      %v3172 = vadd.f32 %v3170, %v3171
      %v3173 = vsel %vm956, %v3145, 0.0
      %v3174 = vadd.f32 %v3172, %v3173
      %v3175 = vsel %vm956, %v3146, 0.0
      %v3176 = vadd.f32 %v3174, %v3175
      %v3177 = vsel %vm956, %v3147, 0.0
      %v3178 = vadd.f32 %v3176, %v3177
      %v3179 = vrot.slane %v3178, 4
      %v3180 = vadd.f32 %v3178, %v3179
      %v3181 = vrot.slane %v3180, 2
      %v3182 = vadd.f32 %v3180, %v3181
      %v3183 = vrot.slane %v3182, 1
      %v3184 = vadd.f32 %v3182, %v3183
      %v3186 = vshrl.u32 %v2367, 16
      %v3188 = vshll.u32 %v2367, 16
      %v3190 = vrot.slane %v3188, 1
      %v3191 = vor.u32 %v3186, %v3190
      %v3193 = vshll.u32 %v2383, 16
      %v3195 = vrot.slane %v3193, 1
      %v3196 = vsel %vm775, %v3191, %v3195
      %v3198 = vshrl.u32 %v2368, 16
      %v3200 = vshll.u32 %v2368, 16
      %v3202 = vrot.slane %v3200, 1
      %v3203 = vor.u32 %v3198, %v3202
      %v3205 = vshll.u32 %v2384, 16
      %v3207 = vrot.slane %v3205, 1
      %v3208 = vsel %vm775, %v3203, %v3207
      %v3210 = vshrl.u32 %v2369, 16
      %v3212 = vshll.u32 %v2369, 16
      %v3214 = vrot.slane %v3212, 1
      %v3215 = vor.u32 %v3210, %v3214
      %v3217 = vshll.u32 %v2385, 16
      %v3219 = vrot.slane %v3217, 1
      %v3220 = vsel %vm775, %v3215, %v3219
      %v3222 = vshrl.u32 %v2370, 16
      %v3224 = vshll.u32 %v2370, 16
      %v3226 = vrot.slane %v3224, 1
      %v3227 = vor.u32 %v3222, %v3226
      %v3229 = vshll.u32 %v2386, 16
      %v3231 = vrot.slane %v3229, 1
      %v3232 = vsel %vm775, %v3227, %v3231
      %v3234 = vshrl.u32 %v2371, 16
      %v3236 = vshll.u32 %v2371, 16
      %v3238 = vrot.slane %v3236, 1
      %v3239 = vor.u32 %v3234, %v3238
      %v3241 = vshll.u32 %v2387, 16
      %v3243 = vrot.slane %v3241, 1
      %v3244 = vsel %vm775, %v3239, %v3243
      %v3246 = vshrl.u32 %v2372, 16
      %v3248 = vshll.u32 %v2372, 16
      %v3250 = vrot.slane %v3248, 1
      %v3251 = vor.u32 %v3246, %v3250
      %v3253 = vshll.u32 %v2388, 16
      %v3255 = vrot.slane %v3253, 1
      %v3256 = vsel %vm775, %v3251, %v3255
      %3257 = vrot.lane.b32.xlu0 %v3196, 4
      %v3258 = vpop.permute.xlu0 %3257
      %3259 = vrot.lane.b32.xlu0 %v3208, 4
      %v3260 = vpop.permute.xlu0 %3259
      %3261 = vrot.lane.b32.xlu0 %v3220, 4
      %v3262 = vpop.permute.xlu0 %3261
      %3263 = vrot.lane.b32.xlu0 %v3232, 4
      %v3264 = vpop.permute.xlu0 %3263
      %3265 = vrot.lane.b32.xlu0 %v3244, 4
      %v3266 = vpop.permute.xlu0 %3265
      %3267 = vrot.lane.b32.xlu0 %v3256, 4
      %v3268 = vpop.permute.xlu0 %3267
      %v3281 = vrot.slane %v2367, 1
      %v3282 = vrot.slane %v2383, 1
      %v3283 = vsel %vm899, %v3281, %v3282
      %v3284 = vrot.slane %v2368, 1
      %v3285 = vrot.slane %v2384, 1
      %v3286 = vsel %vm899, %v3284, %v3285
      %v3287 = vrot.slane %v2369, 1
      %v3288 = vrot.slane %v2385, 1
      %v3289 = vsel %vm899, %v3287, %v3288
      %v3290 = vrot.slane %v2370, 1
      %v3291 = vrot.slane %v2386, 1
      %v3292 = vsel %vm899, %v3290, %v3291
      %v3293 = vrot.slane %v2371, 1
      %v3294 = vrot.slane %v2387, 1
      %v3295 = vsel %vm899, %v3293, %v3294
      %v3296 = vrot.slane %v2372, 1
      %v3297 = vrot.slane %v2388, 1
      %v3298 = vsel %vm899, %v3296, %v3297
      %3299 = vrot.lane.b32.xlu0 %v3283, 8
      %v3300 = vpop.permute.xlu0 %3299
      %3301 = vrot.lane.b32.xlu0 %v3286, 8
      %v3302 = vpop.permute.xlu0 %3301
      %3303 = vrot.lane.b32.xlu0 %v3289, 8
      %v3304 = vpop.permute.xlu0 %3303
      %3305 = vrot.lane.b32.xlu0 %v3292, 8
      %v3306 = vpop.permute.xlu0 %3305
      %3307 = vrot.lane.b32.xlu0 %v3295, 8
      %v3308 = vpop.permute.xlu0 %3307
      %3309 = vrot.lane.b32.xlu0 %v3298, 8
      %v3310 = vpop.permute.xlu0 %3309
      %v3312 = vsel %vm939, %v2367, %v3258
      %v3314 = vsel %vm939, %v2368, %v3260
      %v3316 = vsel %vm939, %v2369, %v3262
      %v3318 = vsel %vm939, %v2370, %v3264
      %v3320 = vsel %vm939, %v2371, %v3266
      %v3322 = vsel %vm939, %v2372, %v3268
      %v3324 = vsel %vm956, %v3312, %v3300
      %v3326 = vsel %vm956, %v3314, %v3302
      %v3328 = vsel %vm956, %v3316, %v3304
      %v3330 = vsel %vm956, %v3318, %v3306
      %v3332 = vsel %vm956, %v3320, %v3308
      %v3334 = vsel %vm956, %v3322, %v3310
      %v3336 = vshrl.u32 %v2373, 16
      %v3338 = vshll.u32 %v2373, 16
      %v3340 = vrot.slane %v3338, 1
      %v3341 = vor.u32 %v3336, %v3340
      %v3343 = vshll.u32 %v2389, 16
      %v3345 = vrot.slane %v3343, 1
      %v3346 = vsel %vm775, %v3341, %v3345
      %3347 = vrot.lane.b32.xlu0 %v3346, 4
      %v3348 = vpop.permute.xlu0 %3347
      %v3351 = vrot.slane %v2373, 1
      %v3352 = vrot.slane %v2389, 1
      %v3353 = vsel %vm899, %v3351, %v3352
      %3354 = vrot.lane.b32.xlu0 %v3353, 8
      %v3355 = vpop.permute.xlu0 %3354
      %v3357 = vsel %vm939, %v2373, %v3348
      %v3359 = vsel %vm956, %v3357, %v3355
      %v3360 = vsel %vm1017, %v3324, 0
      %v3362 = vsel %vm1017, %v3326, 0
      %v3364 = vsel %vm1017, %v3328, 0
      %v3366 = vsel %vm1017, %v3330, 0
      %v3368 = vsel %vm1017, %v3332, 0
      %v3370 = vsel %vm1017, %v3334, 0
      %v3372 = vsel %vm1017, %v3359, 0
      %3374 = vmatprep.subr.bf16.mxu0 0
      %3375 = vmatpush1.bf16.msra.mxu0 %v2635
      %3376 = vmatprep.subr.bf16.mxu0 0
      %3377 = vmatpush1.bf16.msra.mxu0 0
      %3378 = vmatprep.subr.bf16.mxu0 0
      %3379 = vmatpush1.bf16.msra.mxu0 0
      %3380 = vmatprep.subr.bf16.mxu0 0
      %3381 = vmatpush1.bf16.msra.mxu0 0
      %3382 = vmatprep.subr.bf16.mxu0 0
      %3383 = vmatpush1.bf16.msra.mxu0 0
      %3384 = vmatprep.subr.bf16.mxu0 0
      %3385 = vmatpush1.bf16.msra.mxu0 0
      %3386 = vmatprep.subr.bf16.mxu0 0
      %3387 = vmatpush1.bf16.msra.mxu0 0
      %3388 = vmatprep.subr.bf16.mxu0 0
      %3389 = vmatpush1.bf16.msra.mxu0 0
      %3390 = vmatprep.subr.bf16.mxu0 0
      %3391 = vmatpush1.bf16.msra.mxu0 0
      %3392 = vmatprep.subr.bf16.mxu0 0
      %3393 = vmatpush1.bf16.msra.mxu0 0
      %3394 = vmatprep.subr.bf16.mxu0 0
      %3395 = vmatpush1.bf16.msra.mxu0 0
      %3396 = vmatprep.subr.bf16.mxu0 0
      %3397 = vmatpush1.bf16.msra.mxu0 0
      %3398 = vmatprep.subr.bf16.mxu0 0
      %3399 = vmatpush1.bf16.msra.mxu0 0
      %3400 = vmatprep.subr.bf16.mxu0 0
      %3401 = vmatpush1.bf16.msra.mxu0 0
      %3402 = vmatprep.subr.bf16.mxu0 0
      %3403 = vmatpush1.bf16.msra.mxu0 0
      %3404 = vmatprep.subr.bf16.mxu0 0
      %3405 = vmatpush1.bf16.msra.mxu0 0
      %3406 = vmatprep.mubr.bf16.mxu0 0
      %3407 = vmatmul.mubr.bf16.gmra.mrb[0].mxu0 %v2897
      %v3408 = vpop.f32.mrb[0].mxu0
      %v3409 = vadd.f32 0.0, %v3408
      %v3410 = vpop.f32.mrb[0].mxu0
      %v3411 = vpop.f32.mrb[0].mxu0
      %v3412 = vadd.f32 0.0, %v3411
      %v3413 = vpop.f32.mrb[0].mxu0
      %3414 = vmatprep.mubr.bf16.mxu0 0
      %3415 = vmatmul.mubr.bf16.gmra.mrb[0].mxu0 %v3360
      %v3416 = vpop.f32.mrb[0].mxu0
      %v3417 = vadd.f32 0.0, %v3416
      %v3418 = vpop.f32.mrb[0].mxu0
      %v3419 = vpop.f32.mrb[0].mxu0
      %v3420 = vadd.f32 0.0, %v3419
      %v3421 = vpop.f32.mrb[0].mxu0
      %3422 = vmatprep.mubr.bf16.mxu0 0
      %3423 = vmatmul.mubr.bf16.gmra.mrb[0].mxu0 %v3362
      %v3424 = vpop.f32.mrb[0].mxu0
      %v3425 = vadd.f32 0.0, %v3424
      %v3426 = vpop.f32.mrb[0].mxu0
      %v3427 = vpop.f32.mrb[0].mxu0
      %v3428 = vadd.f32 0.0, %v3427
      %v3429 = vpop.f32.mrb[0].mxu0
      %3430 = vmatprep.mubr.bf16.mxu0 0
      %3431 = vmatmul.mubr.bf16.gmra.mrb[0].mxu0 %v3364
      %v3432 = vpop.f32.mrb[0].mxu0
      %v3433 = vadd.f32 0.0, %v3432
      %v3434 = vpop.f32.mrb[0].mxu0
      %v3435 = vpop.f32.mrb[0].mxu0
      %v3436 = vadd.f32 0.0, %v3435
      %v3437 = vpop.f32.mrb[0].mxu0
      %3438 = vmatprep.mubr.bf16.mxu0 0
      %3439 = vmatmul.mubr.bf16.gmra.mrb[0].mxu0 %v3366
      %v3440 = vpop.f32.mrb[0].mxu0
      %v3441 = vadd.f32 0.0, %v3440
      %v3442 = vpop.f32.mrb[0].mxu0
      %v3443 = vpop.f32.mrb[0].mxu0
      %v3444 = vadd.f32 0.0, %v3443
      %v3445 = vpop.f32.mrb[0].mxu0
      %3446 = vmatprep.mubr.bf16.mxu0 0
      %3447 = vmatmul.mubr.bf16.gmra.mrb[0].mxu0 %v3368
      %v3448 = vpop.f32.mrb[0].mxu0
      %v3449 = vadd.f32 0.0, %v3448
      %v3450 = vpop.f32.mrb[0].mxu0
      %v3451 = vpop.f32.mrb[0].mxu0
      %v3452 = vadd.f32 0.0, %v3451
      %v3453 = vpop.f32.mrb[0].mxu0
      %3454 = vmatprep.mubr.bf16.mxu0 0
      %3455 = vmatmul.mubr.bf16.gmra.mrb[0].mxu0 %v3370
      %v3456 = vpop.f32.mrb[0].mxu0
      %v3457 = vadd.f32 0.0, %v3456
      %v3458 = vpop.f32.mrb[0].mxu0
      %v3459 = vpop.f32.mrb[0].mxu0
      %v3460 = vadd.f32 0.0, %v3459
      %v3461 = vpop.f32.mrb[0].mxu0
      %3462 = vmatprep.mubr.bf16.mxu0 0
      %3463 = vmatmul.mubr.bf16.gmra.mrb[0].mxu0 %v3372
      %v3464 = vpop.f32.mrb[0].mxu0
      %v3465 = vadd.f32 0.0, %v3464
      %v3466 = vpop.f32.mrb[0].mxu0
      %v3467 = vpop.f32.mrb[0].mxu0
      %v3468 = vadd.f32 0.0, %v3467
      %v3469 = vpop.f32.mrb[0].mxu0
      %3470 = vdwg.mxu0
      %3471 = vmatprep.subr.bf16.mxu0 0
      %3472 = vmatpush1.bf16.msra.mxu0 %v2754
      %3473 = vmatprep.subr.bf16.mxu0 0
      %3474 = vmatpush1.bf16.msra.mxu0 0
      %3475 = vmatprep.subr.bf16.mxu0 0
      %3476 = vmatpush1.bf16.msra.mxu0 0
      %3477 = vmatprep.subr.bf16.mxu0 0
      %3478 = vmatpush1.bf16.msra.mxu0 0
      %3479 = vmatprep.subr.bf16.mxu0 0
      %3480 = vmatpush1.bf16.msra.mxu0 0
      %3481 = vmatprep.subr.bf16.mxu0 0
      %3482 = vmatpush1.bf16.msra.mxu0 0
      %3483 = vmatprep.subr.bf16.mxu0 0
      %3484 = vmatpush1.bf16.msra.mxu0 0
      %3485 = vmatprep.subr.bf16.mxu0 0
      %3486 = vmatpush1.bf16.msra.mxu0 0
      %3487 = vmatprep.subr.bf16.mxu0 0
      %3488 = vmatpush1.bf16.msra.mxu0 0
      %3489 = vmatprep.subr.bf16.mxu0 0
      %3490 = vmatpush1.bf16.msra.mxu0 0
      %3491 = vmatprep.subr.bf16.mxu0 0
      %3492 = vmatpush1.bf16.msra.mxu0 0
      %3493 = vmatprep.subr.bf16.mxu0 0
      %3494 = vmatpush1.bf16.msra.mxu0 0
      %3495 = vmatprep.subr.bf16.mxu0 0
      %3496 = vmatpush1.bf16.msra.mxu0 0
      %3497 = vmatprep.subr.bf16.mxu0 0
      %3498 = vmatpush1.bf16.msra.mxu0 0
      %3499 = vmatprep.subr.bf16.mxu0 0
      %3500 = vmatpush1.bf16.msra.mxu0 0
      %3501 = vmatprep.subr.bf16.mxu0 0
      %3502 = vmatpush1.bf16.msra.mxu0 0
      %3503 = vmatprep.mubr.bf16.mxu0 0
      %3504 = vmatmul.mubr.bf16.gmra.mrb[0].mxu0 %v2632
      %v3505 = vpop.f32.mrb[0].mxu0
      %v3506 = vadd.f32 %v3409, %v3505
      %v3507 = vpop.f32.mrb[0].mxu0
      %v3508 = vpop.f32.mrb[0].mxu0
      %v3509 = vadd.f32 %v3412, %v3508
      %v3510 = vpop.f32.mrb[0].mxu0
      %3511 = vmatprep.mubr.bf16.mxu0 0
      %3512 = vmatmul.mubr.bf16.gmra.mrb[0].mxu0 %v2897
      %v3513 = vpop.f32.mrb[0].mxu0
      %v3514 = vadd.f32 %v3417, %v3513
      %v3515 = vpop.f32.mrb[0].mxu0
      %v3516 = vpop.f32.mrb[0].mxu0
      %v3517 = vadd.f32 %v3420, %v3516
      %v3518 = vpop.f32.mrb[0].mxu0
      %3519 = vmatprep.mubr.bf16.mxu0 0
      %3520 = vmatmul.mubr.bf16.gmra.mrb[0].mxu0 %v3360
      %v3521 = vpop.f32.mrb[0].mxu0
      %v3522 = vadd.f32 %v3425, %v3521
      %v3523 = vpop.f32.mrb[0].mxu0
      %v3524 = vpop.f32.mrb[0].mxu0
      %v3525 = vadd.f32 %v3428, %v3524
      %v3526 = vpop.f32.mrb[0].mxu0
      %3527 = vmatprep.mubr.bf16.mxu0 0
      %3528 = vmatmul.mubr.bf16.gmra.mrb[0].mxu0 %v3362
      %v3529 = vpop.f32.mrb[0].mxu0
      %v3530 = vadd.f32 %v3433, %v3529
      %v3531 = vpop.f32.mrb[0].mxu0
      %v3532 = vpop.f32.mrb[0].mxu0
      %v3533 = vadd.f32 %v3436, %v3532
      %v3534 = vpop.f32.mrb[0].mxu0
      %3535 = vmatprep.mubr.bf16.mxu0 0
      %3536 = vmatmul.mubr.bf16.gmra.mrb[0].mxu0 %v3364
      %v3537 = vpop.f32.mrb[0].mxu0
      %v3538 = vadd.f32 %v3441, %v3537
      %v3539 = vpop.f32.mrb[0].mxu0
      %v3540 = vpop.f32.mrb[0].mxu0
      %v3541 = vadd.f32 %v3444, %v3540
      %v3542 = vpop.f32.mrb[0].mxu0
      %3543 = vmatprep.mubr.bf16.mxu0 0
      %3544 = vmatmul.mubr.bf16.gmra.mrb[0].mxu0 %v3366
      %v3545 = vpop.f32.mrb[0].mxu0
      %v3546 = vadd.f32 %v3449, %v3545
      %v3547 = vpop.f32.mrb[0].mxu0
      %v3548 = vpop.f32.mrb[0].mxu0
      %v3549 = vadd.f32 %v3452, %v3548
      %v3550 = vpop.f32.mrb[0].mxu0
      %3551 = vmatprep.mubr.bf16.mxu0 0
      %3552 = vmatmul.mubr.bf16.gmra.mrb[0].mxu0 %v3368
      %v3553 = vpop.f32.mrb[0].mxu0
      %v3554 = vadd.f32 %v3457, %v3553
      %v3555 = vpop.f32.mrb[0].mxu0
      %v3556 = vpop.f32.mrb[0].mxu0
      %v3557 = vadd.f32 %v3460, %v3556
      %v3558 = vpop.f32.mrb[0].mxu0
      %3559 = vmatprep.mubr.bf16.mxu0 0
      %3560 = vmatmul.mubr.bf16.gmra.mrb[0].mxu0 %v3370
      %v3561 = vpop.f32.mrb[0].mxu0
      %v3562 = vadd.f32 %v3465, %v3561
      %v3563 = vpop.f32.mrb[0].mxu0
      %v3564 = vpop.f32.mrb[0].mxu0
      %v3565 = vadd.f32 %v3468, %v3564
      %v3566 = vpop.f32.mrb[0].mxu0
      %3567 = vdwg.mxu0
      %3568 = vmatprep.subr.bf16.mxu0 0
      %3569 = vmatpush1.bf16.msra.mxu0 %v2900
      %3570 = vmatprep.subr.bf16.mxu0 0
      %3571 = vmatpush1.bf16.msra.mxu0 0
      %3572 = vmatprep.subr.bf16.mxu0 0
      %3573 = vmatpush1.bf16.msra.mxu0 0
      %3574 = vmatprep.subr.bf16.mxu0 0
      %3575 = vmatpush1.bf16.msra.mxu0 0
      %3576 = vmatprep.subr.bf16.mxu0 0
      %3577 = vmatpush1.bf16.msra.mxu0 0
      %3578 = vmatprep.subr.bf16.mxu0 0
      %3579 = vmatpush1.bf16.msra.mxu0 0
      %3580 = vmatprep.subr.bf16.mxu0 0
      %3581 = vmatpush1.bf16.msra.mxu0 0
      %3582 = vmatprep.subr.bf16.mxu0 0
      %3583 = vmatpush1.bf16.msra.mxu0 0
      %3584 = vmatprep.subr.bf16.mxu0 0
      %3585 = vmatpush1.bf16.msra.mxu0 0
      %3586 = vmatprep.subr.bf16.mxu0 0
      %3587 = vmatpush1.bf16.msra.mxu0 0
      %3588 = vmatprep.subr.bf16.mxu0 0
      %3589 = vmatpush1.bf16.msra.mxu0 0
      %3590 = vmatprep.subr.bf16.mxu0 0
      %3591 = vmatpush1.bf16.msra.mxu0 0
      %3592 = vmatprep.subr.bf16.mxu0 0
      %3593 = vmatpush1.bf16.msra.mxu0 0
      %3594 = vmatprep.subr.bf16.mxu0 0
      %3595 = vmatpush1.bf16.msra.mxu0 0
      %3596 = vmatprep.subr.bf16.mxu0 0
      %3597 = vmatpush1.bf16.msra.mxu0 0
      %3598 = vmatprep.subr.bf16.mxu0 0
      %3599 = vmatpush1.bf16.msra.mxu0 0
      %3600 = vmatprep.mubr.bf16.mxu0 0
      %3601 = vmatmul.mubr.bf16.gmra.mrb[0].mxu0 %v3360
      %v3602 = vpop.f32.mrb[0].mxu0
      %v3603 = vadd.f32 0.0, %v3602
      %v3604 = vpop.f32.mrb[0].mxu0
      %v3605 = vpop.f32.mrb[0].mxu0
      %v3606 = vadd.f32 0.0, %v3605
      %v3607 = vpop.f32.mrb[0].mxu0
      %3608 = vmatprep.mubr.bf16.mxu0 0
      %3609 = vmatmul.mubr.bf16.gmra.mrb[0].mxu0 %v3362
      %v3610 = vpop.f32.mrb[0].mxu0
      %v3611 = vadd.f32 0.0, %v3610
      %v3612 = vpop.f32.mrb[0].mxu0
      %v3613 = vpop.f32.mrb[0].mxu0
      %v3614 = vadd.f32 0.0, %v3613
      %v3615 = vpop.f32.mrb[0].mxu0
      %3616 = vmatprep.mubr.bf16.mxu0 0
      %3617 = vmatmul.mubr.bf16.gmra.mrb[0].mxu0 %v3364
      %v3618 = vpop.f32.mrb[0].mxu0
      %v3619 = vadd.f32 0.0, %v3618
      %v3620 = vpop.f32.mrb[0].mxu0
      %v3621 = vpop.f32.mrb[0].mxu0
      %v3622 = vadd.f32 0.0, %v3621
      %v3623 = vpop.f32.mrb[0].mxu0
      %3624 = vmatprep.mubr.bf16.mxu0 0
      %3625 = vmatmul.mubr.bf16.gmra.mrb[0].mxu0 %v3366
      %v3626 = vpop.f32.mrb[0].mxu0
      %v3627 = vadd.f32 0.0, %v3626
      %v3628 = vpop.f32.mrb[0].mxu0
      %v3629 = vpop.f32.mrb[0].mxu0
      %v3630 = vadd.f32 0.0, %v3629
      %v3631 = vpop.f32.mrb[0].mxu0
      %3632 = vmatprep.mubr.bf16.mxu0 0
      %3633 = vmatmul.mubr.bf16.gmra.mrb[0].mxu0 %v3368
      %v3634 = vpop.f32.mrb[0].mxu0
      %v3635 = vadd.f32 0.0, %v3634
      %v3636 = vpop.f32.mrb[0].mxu0
      %v3637 = vpop.f32.mrb[0].mxu0
      %v3638 = vadd.f32 0.0, %v3637
      %v3639 = vpop.f32.mrb[0].mxu0
      %3640 = vmatprep.mubr.bf16.mxu0 0
      %3641 = vmatmul.mubr.bf16.gmra.mrb[0].mxu0 %v3370
      %v3642 = vpop.f32.mrb[0].mxu0
      %v3643 = vadd.f32 0.0, %v3642
      %v3644 = vpop.f32.mrb[0].mxu0
      %v3645 = vpop.f32.mrb[0].mxu0
      %v3646 = vadd.f32 0.0, %v3645
      %v3647 = vpop.f32.mrb[0].mxu0
      %3648 = vmatprep.mubr.bf16.mxu0 0
      %3649 = vmatmul.mubr.bf16.gmra.mrb[0].mxu0 %v3372
      %v3650 = vpop.f32.mrb[0].mxu0
      %v3651 = vadd.f32 0.0, %v3650
      %v3652 = vpop.f32.mrb[0].mxu0
      %v3653 = vpop.f32.mrb[0].mxu0
      %v3654 = vadd.f32 0.0, %v3653
      %v3655 = vpop.f32.mrb[0].mxu0
      %3656 = vmatprep.mubr.bf16.mxu0 0
      %3657 = vmatmul.mubr.bf16.gmra.mrb[0].mxu0 %v1154
      %v3658 = vpop.f32.mrb[0].mxu0
      %v3659 = vadd.f32 0.0, %v3658
      %v3660 = vpop.f32.mrb[0].mxu0
      %v3661 = vpop.f32.mrb[0].mxu0
      %v3662 = vadd.f32 0.0, %v3661
      %v3663 = vpop.f32.mrb[0].mxu0
      %3664 = vdwg.mxu0
      %v3665 = vadd.f32 %v3506, %v3603
      %v3666 = vadd.f32 %v3509, %v3606
      %v3667 = vadd.f32 %v3514, %v3611
      %v3668 = vadd.f32 %v3517, %v3614
      %v3669 = vadd.f32 %v3522, %v3619
      %v3670 = vadd.f32 %v3525, %v3622
      %v3671 = vadd.f32 %v3530, %v3627
      %v3672 = vadd.f32 %v3533, %v3630
      %v3673 = vadd.f32 %v3538, %v3635
      %v3674 = vadd.f32 %v3541, %v3638
      %v3675 = vadd.f32 %v3546, %v3643
      %v3676 = vadd.f32 %v3549, %v3646
      %v3677 = vadd.f32 %v3554, %v3651
      %v3678 = vadd.f32 %v3557, %v3654
      %v3679 = vadd.f32 %v3562, %v3659
      %v3680 = vadd.f32 %v3565, %v3662
      %v3681 = vpack.c.bf16 %v3666, %v3665
      %v3682 = vpack.c.bf16 %v3668, %v3667
      %v3683 = vpack.c.bf16 %v3670, %v3669
      %v3684 = vpack.c.bf16 %v3672, %v3671
      %v3685 = vpack.c.bf16 %v3674, %v3673
      %v3686 = vpack.c.bf16 %v3676, %v3675
      %v3687 = vpack.c.bf16 %v3678, %v3677
      %v3688 = vpack.c.bf16 %v3680, %v3679
      %v3697 = vunpack.c.l.b16 %v3681
      %v3698 = vunpack.c.h.b16 %v3681
      %v3699 = vunpack.c.l.b16 %v3682
      %v3700 = vunpack.c.h.b16 %v3682
      %v3701 = vunpack.c.l.b16 %v3683
      %v3702 = vunpack.c.h.b16 %v3683
      %v3703 = vunpack.c.l.b16 %v3684
      %v3704 = vunpack.c.h.b16 %v3684
      %v3705 = vunpack.c.l.b16 %v3685
      %v3706 = vunpack.c.h.b16 %v3685
      %v3707 = vunpack.c.l.b16 %v3686
      %v3708 = vunpack.c.h.b16 %v3686
      %v3709 = vunpack.c.l.b16 %v3687
      %v3710 = vunpack.c.h.b16 %v3687
      %v3711 = vunpack.c.l.b16 %v3688
      %v3712 = vunpack.c.h.b16 %v3688
      %v3713 = vpack.c.b16 %v3697, %v3697
      %v3714 = vpack.c.b16 %v3698, %v3698
      %v3715 = vpack.c.b16 %v3699, %v3699
      %v3716 = vpack.c.b16 %v3700, %v3700
      %v3717 = vpack.c.b16 %v3701, %v3701
      %v3718 = vpack.c.b16 %v3702, %v3702
      %v3719 = vpack.c.b16 %v3703, %v3703
      %v3720 = vpack.c.b16 %v3704, %v3704
      %v3721 = vpack.c.b16 %v3705, %v3705
      %v3722 = vpack.c.b16 %v3706, %v3706
      %v3723 = vpack.c.b16 %v3707, %v3707
      %v3724 = vpack.c.b16 %v3708, %v3708
      %v3725 = vpack.c.b16 %v3709, %v3709
      %v3726 = vpack.c.b16 %v3710, %v3710
      %v3727 = vpack.c.b16 %v3711, %v3711
      %v3728 = vpack.c.b16 %v3712, %v3712
      %s3745 = scalar_lea.vmem %s361, 64
      %3746 = vst.msk [vmem:[%s3745] sm:$0xf] %vm1482, %v3713
      %3747 = vst.msk [vmem:[%s3745 + $0x4] sm:$0xf] %vm1482, %v3714
      %3748 = vst.msk [vmem:[%s3745 + $0x8] sm:$0xf] %vm1482, %v3715
      %3749 = vst.msk [vmem:[%s3745 + $0xc] sm:$0xf] %vm1482, %v3716
      %3750 = vst.msk [vmem:[%s3745 + $0x10] sm:$0xf] %vm1482, %v3717
      %3751 = vst.msk [vmem:[%s3745 + $0x14] sm:$0xf] %vm1482, %v3718
      %3752 = vst.msk [vmem:[%s3745 + $0x18] sm:$0xf] %vm1482, %v3719
      %3753 = vst.msk [vmem:[%s3745 + $0x1c] sm:$0xf] %vm1482, %v3720
      %3754 = vst.msk [vmem:[%s3745 + $0x20] sm:$0xf] %vm1482, %v3721
      %3755 = vst.msk [vmem:[%s3745 + $0x24] sm:$0xf] %vm1482, %v3722
      %3756 = vst.msk [vmem:[%s3745 + $0x28] sm:$0xf] %vm1482, %v3723
      %3757 = vst.msk [vmem:[%s3745 + $0x2c] sm:$0xf] %vm1482, %v3724
      %3758 = vst.msk [vmem:[%s3745 + $0x30] sm:$0xf] %vm1482, %v3725
      %3759 = vst.msk [vmem:[%s3745 + $0x34] sm:$0xf] %vm1482, %v3726
      %3760 = vst.msk [vmem:[%s3745 + $0x38] sm:$0xf] %vm1482, %v3727
      %3761 = vst.msk [vmem:[%s3745 + $0x3c] sm:$0xf] %vm1482, %v3728
      %v3762 = vsel %vm956, %v3665, 0.0
      %v3763 = vsel %vm956, %v3666, 0.0
      %v3764 = vadd.f32 %v3762, %v3763
      %v3765 = vsel %vm956, %v3667, 0.0
      %v3766 = vadd.f32 %v3764, %v3765
      %v3767 = vsel %vm956, %v3668, 0.0
      %v3768 = vadd.f32 %v3766, %v3767
      %v3769 = vsel %vm956, %v3669, 0.0
      %v3770 = vadd.f32 %v3768, %v3769
      %v3771 = vsel %vm956, %v3670, 0.0
      %v3772 = vadd.f32 %v3770, %v3771
      %v3773 = vsel %vm956, %v3671, 0.0
      %v3774 = vadd.f32 %v3772, %v3773
      %v3775 = vsel %vm956, %v3672, 0.0
      %v3776 = vadd.f32 %v3774, %v3775
      %v3777 = vsel %vm956, %v3673, 0.0
      %v3778 = vadd.f32 %v3776, %v3777
      %v3779 = vsel %vm956, %v3674, 0.0
      %v3780 = vadd.f32 %v3778, %v3779
      %v3781 = vsel %vm956, %v3675, 0.0
      %v3782 = vadd.f32 %v3780, %v3781
      %v3783 = vsel %vm956, %v3676, 0.0
      %v3784 = vadd.f32 %v3782, %v3783
      %v3785 = vsel %vm956, %v3677, 0.0
      %v3786 = vadd.f32 %v3784, %v3785
      %v3787 = vsel %vm956, %v3678, 0.0
      %v3788 = vadd.f32 %v3786, %v3787
      %v3789 = vsel %vm956, %v3679, 0.0
      %v3790 = vadd.f32 %v3788, %v3789
      %v3791 = vsel %vm956, %v3680, 0.0
      %v3792 = vadd.f32 %v3790, %v3791
      %v3793 = vrot.slane %v3792, 4
      %v3794 = vadd.f32 %v3792, %v3793
      %v3795 = vrot.slane %v3794, 2
      %v3796 = vadd.f32 %v3794, %v3795
      %v3797 = vrot.slane %v3796, 1
      %v3798 = vadd.f32 %v3796, %v3797
      %v3799 = vmul.f32 %v3665, %v3665
      %v3800 = vmul.f32 %v3666, %v3666
      %v3801 = vmul.f32 %v3667, %v3667
      %v3802 = vmul.f32 %v3668, %v3668
      %v3803 = vmul.f32 %v3669, %v3669
      %v3804 = vmul.f32 %v3670, %v3670
      %v3805 = vmul.f32 %v3671, %v3671
      %v3806 = vmul.f32 %v3672, %v3672
      %v3807 = vmul.f32 %v3673, %v3673
      %v3808 = vmul.f32 %v3674, %v3674
      %v3809 = vmul.f32 %v3675, %v3675
      %v3810 = vmul.f32 %v3676, %v3676
      %v3811 = vmul.f32 %v3677, %v3677
      %v3812 = vmul.f32 %v3678, %v3678
      %v3813 = vmul.f32 %v3679, %v3679
      %v3814 = vmul.f32 %v3680, %v3680
      %v3815 = vsel %vm956, %v3799, 0.0
      %v3816 = vsel %vm956, %v3800, 0.0
      %v3817 = vadd.f32 %v3815, %v3816
      %v3818 = vsel %vm956, %v3801, 0.0
      %v3819 = vadd.f32 %v3817, %v3818
      %v3820 = vsel %vm956, %v3802, 0.0
      %v3821 = vadd.f32 %v3819, %v3820
      %v3822 = vsel %vm956, %v3803, 0.0
      %v3823 = vadd.f32 %v3821, %v3822
      %v3824 = vsel %vm956, %v3804, 0.0
      %v3825 = vadd.f32 %v3823, %v3824
      %v3826 = vsel %vm956, %v3805, 0.0
      %v3827 = vadd.f32 %v3825, %v3826
      %v3828 = vsel %vm956, %v3806, 0.0
      %v3829 = vadd.f32 %v3827, %v3828
      %v3830 = vsel %vm956, %v3807, 0.0
      %v3831 = vadd.f32 %v3829, %v3830
      %v3832 = vsel %vm956, %v3808, 0.0
      %v3833 = vadd.f32 %v3831, %v3832
      %v3834 = vsel %vm956, %v3809, 0.0
      %v3835 = vadd.f32 %v3833, %v3834
      %v3836 = vsel %vm956, %v3810, 0.0
      %v3837 = vadd.f32 %v3835, %v3836
      %v3838 = vsel %vm956, %v3811, 0.0
      %v3839 = vadd.f32 %v3837, %v3838
      %v3840 = vsel %vm956, %v3812, 0.0
      %v3841 = vadd.f32 %v3839, %v3840
      %v3842 = vsel %vm956, %v3813, 0.0
      %v3843 = vadd.f32 %v3841, %v3842
      %v3844 = vsel %vm956, %v3814, 0.0
      %v3845 = vadd.f32 %v3843, %v3844
      %v3846 = vrot.slane %v3845, 4
      %v3847 = vadd.f32 %v3845, %v3846
      %v3848 = vrot.slane %v3847, 2
      %v3849 = vadd.f32 %v3847, %v3848
      %v3850 = vrot.slane %v3849, 1
      %v3851 = vadd.f32 %v3849, %v3850
      %v3852 = vadd.f32 %v3131, %v3798
      %v3853 = vadd.f32 %v3184, %v3851
      %v3854 = vsel %vm2258, %v3852, %v3853
      %3855 = vst.msk [vmem:[%s365] sm:$0x3] %vm2260, %v3854
      %p3856 = scmp.lt.s32.totalorder %s21, 1
      %s3857 = scalar_select %p3856, %s21, 1
      %s3858 = smul.addr %s3857, 32
      %s3859 = smul.addr %s3858, 4
      %s3860 = scalar_lea.vmem %s6, %s3859
      %p3861 = scmp.lt.s32.totalorder %s21, 1
      %s3862 = scalar_select %p3861, %s21, 1
      %s3863 = smul.addr %s3862, 2
      %s3864 = scalar_lea.vmem %s7, %s3863
      %p3865 = scmp.lt.s32.totalorder %s21, 1
      %s3866 = scalar_select %p3865, %s21, 1
      %s3867 = smul.addr %s3866, 32
      %s3868 = smul.addr %s3867, 4
      %s3869 = scalar_lea.vmem %s8, %s3868
      %p3870 = scmp.lt.s32.totalorder %s21, 1
      %s3871 = scalar_select %p3870, %s21, 1
      %s3872 = smul.addr %s3871, 2
      %s3873 = scalar_lea.vmem %s9, %s3872
      // Predicated region
      $region45: #{inception_v3a_forward.5} parent=43 // pred_check
        %p3874 = pneg %p170
      $region46: #{inception_v3a_forward.5} parent=43 // pred_check_branch
        %3876 = sbr.rel (%p3874) target = $region48
      $region47: #{inception_v3a_forward.5} parent=43 // pred_region
        _
      $region48: #{inception_v3a_forward.5} parent=43 // pred_fallthru
        _
      // Predicated region
      $region49: #{inception_v3a_forward.5} parent=43 // pred_check
        %p3877 = pneg %p196
      $region50: #{inception_v3a_forward.5} parent=43 // pred_check_branch
        %3879 = sbr.rel (%p3877) target = $region52
      $region51: #{inception_v3a_forward.5} parent=43 // pred_region
        _
      $region52: #{inception_v3a_forward.5} parent=43 // pred_fallthru
        _
      // Predicated region
      $region53: #{inception_v3a_forward.5} parent=43 // pred_check
        %p3880 = pneg %p222
      $region54: #{inception_v3a_forward.5} parent=43 // pred_check_branch
        %3882 = sbr.rel (%p3880) target = $region56
      $region55: #{inception_v3a_forward.5} parent=43 // pred_region
        _
      $region56: #{inception_v3a_forward.5} parent=43 // pred_fallthru
        _
      // Predicated region
      $region57: #{inception_v3a_forward.5} parent=43 // pred_check
        %p3883 = pneg %p248
      $region58: #{inception_v3a_forward.5} parent=43 // pred_check_branch
        %3885 = sbr.rel (%p3883) target = $region60
      $region59: #{inception_v3a_forward.5} parent=43 // pred_region
        _
      $region60: #{inception_v3a_forward.5} parent=43 // pred_fallthru
        _
    $region44: #{inception_v3a_forward.5} parent=5 // pred_fallthru
      _
    %p3886 = scmp.le.s32.totalorder 2, %s16
    // Predicated region
    $region61: #{inception_v3a_forward.5} parent=5 // pred_check
      %p3887 = pneg %p3886
    $region62: #{inception_v3a_forward.5} parent=5 // pred_check_branch
      %3889 = sbr.rel (%p3887) target = $region64
    $region63: #{inception_v3a_forward.5} parent=5 // pred_region
      %s3890 = ssub.s32 %s16, 2
      // Predicated region
      $region65: #{inception_v3a_forward.5} parent=63 // pred_check
        %p3891 = pneg %p176
      $region66: #{inception_v3a_forward.5} parent=63 // pred_check_branch
        %3893 = sbr.rel (%p3891) target = $region68
      $region67: #{inception_v3a_forward.5} parent=63 // pred_region
        %p3894 = scmp.lt.s32.totalorder %s22, 1
        %s3895 = scalar_select %p3894, %s22, 1
        %s3896 = smul.addr %s3895, 32
        %s3897 = smul.addr %s3896, 4
        %s3898 = scalar_lea.vmem %s6, %s3897
      $region68: #{inception_v3a_forward.5} parent=63 // pred_fallthru
        _
      // Predicated region
      $region69: #{inception_v3a_forward.5} parent=63 // pred_check
        %p3899 = pneg %p202
      $region70: #{inception_v3a_forward.5} parent=63 // pred_check_branch
        %3901 = sbr.rel (%p3899) target = $region72
      $region71: #{inception_v3a_forward.5} parent=63 // pred_region
        %p3902 = scmp.lt.s32.totalorder %s22, 1
        %s3903 = scalar_select %p3902, %s22, 1
        %s3904 = smul.addr %s3903, 2
        %s3905 = scalar_lea.vmem %s7, %s3904
      $region72: #{inception_v3a_forward.5} parent=63 // pred_fallthru
        _
      // Predicated region
      $region73: #{inception_v3a_forward.5} parent=63 // pred_check
        %p3906 = pneg %p228
      $region74: #{inception_v3a_forward.5} parent=63 // pred_check_branch
        %3908 = sbr.rel (%p3906) target = $region76
      $region75: #{inception_v3a_forward.5} parent=63 // pred_region
        %p3909 = scmp.lt.s32.totalorder %s22, 1
        %s3910 = scalar_select %p3909, %s22, 1
        %s3911 = smul.addr %s3910, 32
        %s3912 = smul.addr %s3911, 4
        %s3913 = scalar_lea.vmem %s8, %s3912
      $region76: #{inception_v3a_forward.5} parent=63 // pred_fallthru
        _
      // Predicated region
      $region77: #{inception_v3a_forward.5} parent=63 // pred_check
        %p3914 = pneg %p254
      $region78: #{inception_v3a_forward.5} parent=63 // pred_check_branch
        %3916 = sbr.rel (%p3914) target = $region80
      $region79: #{inception_v3a_forward.5} parent=63 // pred_region
        %p3917 = scmp.lt.s32.totalorder %s22, 1
        %s3918 = scalar_select %p3917, %s22, 1
        %s3919 = smul.addr %s3918, 2
        %s3920 = scalar_lea.vmem %s9, %s3919
      $region80: #{inception_v3a_forward.5} parent=63 // pred_fallthru
        _
    $region64: #{inception_v3a_forward.5} parent=5 // pred_fallthru
      _
  $region6: #{inception_v3a_forward.5} parent=0 // loop_footer
    %s20 = sadd.s32 1, %s16
  $region7: #{inception_v3a_forward.5} parent=0 // loop_footer_branch
    %15 = sbr.rel target = $region3
  $region8: #{inception_v3a_forward.5} parent=0 // loop_exit
    _

</llo_original>
